<compile_context>
chip_gen: v6e
topology: v6e:2x2x1
jax: 0.10.0
libtpu: 0.0.40
codegen_flags: <defaults>
</compile_context>

<pallas_src>
import functools

import jax
import jax.numpy as jnp
from jax.experimental import pallas as pl
from jax.experimental.pallas import tpu as pltpu

# Matmul-operand dtype (accumulation is always f32 via preferred_element_type).
MXU_DTYPE = jnp.bfloat16


# ------------------------------ Pallas kernels ------------------------------

def _ln_gate_qkv_kernel(x_ref, lnw_ref, lnb_ref, gw_ref, gb_ref,
                        qkvw_ref, qkvb_ref, g_ref, qkv_ref):
    """Fused WithBias-LayerNorm + gate 1x1 conv (pre-GELU) + qkv 1x1 conv.

    x: (TP, C) pixel tile.  LN stats in f32; matmul operands in bf16, f32 acc.
    """
    x = x_ref[...]
    mu = jnp.mean(x, axis=-1, keepdims=True)
    var = jnp.mean((x - mu) ** 2, axis=-1, keepdims=True)          # unbiased=False
    xn = (x - mu) * jax.lax.rsqrt(var + 1e-5)                      # EUP rsqrt
    xn = xn * lnw_ref[...] + lnb_ref[...]
    xn_m = xn.astype(gw_ref.dtype)                                 # bf16 MXU feed
    g_ref[...] = (jnp.dot(xn_m, gw_ref[...], preferred_element_type=jnp.float32)
                  + gb_ref[...]).astype(g_ref.dtype)
    qkv_ref[...] = (jnp.dot(xn_m, qkvw_ref[...], preferred_element_type=jnp.float32)
                    + qkvb_ref[...]).astype(qkv_ref.dtype)


def _channel_attn_kernel(temp_ref, qkv_ref, o_ref, *, num_heads, dim):
    """Restormer channel attention, all heads of one batch per grid step.

    qkv block: (1, hw, 3*dim), pixel-major (no (c, hw) relayout).
    temp_ref: (num_heads,) f32 in SMEM.
    """
    c = dim // num_heads
    for h in range(num_heads):                      # unrolled over heads (static)
        q = qkv_ref[0, :, h * c:(h + 1) * c]                        # (hw, c)
        k = qkv_ref[0, :, dim + h * c:dim + (h + 1) * c]
        v = qkv_ref[0, :, 2 * dim + h * c:2 * dim + (h + 1) * c]
        # F.normalize(dim=-1) in the torch (head, c, hw) layout == per-channel
        # unit L2 norm over pixels.  Sums in f32; rsqrt(max(ssq, 1e-24)) == the
        # torch max(||x||, 1e-12) clamp.
        qn = q * jax.lax.rsqrt(jnp.maximum(
            jnp.sum(q * q, axis=0, keepdims=True), 1e-24))
        kn = k * jax.lax.rsqrt(jnp.maximum(
            jnp.sum(k * k, axis=0, keepdims=True), 1e-24))
        # attn[cq, ck] = sum_p qn[p, cq] * kn[p, ck]  (contract the pixel axis;
        # MXU takes the transposed lhs directly, no explicit transpose).
        attn = jax.lax.dot_general(
            qn.astype(MXU_DTYPE), kn.astype(MXU_DTYPE),
            dimension_numbers=(((0,), (0,)), ((), ())),
            preferred_element_type=jnp.float32)
        attn = jnp.maximum(attn * temp_ref[h], 0.0)                 # temp (SMEM) + relu
        # out[p, cq] = sum_ck v[p, ck] * attn[cq, ck]  ==  v @ attn^T ; stays
        # pixel-major so the result writes straight back in NHWC order.
        out_h = jax.lax.dot_general(
            v.astype(MXU_DTYPE), attn.astype(MXU_DTYPE),
            dimension_numbers=(((1,), (1,)), ((), ())),
            preferred_element_type=jnp.float32)
        o_ref[0, :, h * c:(h + 1) * c] = out_h.astype(o_ref.dtype)
    # TODO(synk): for very large hw (e.g. 256x256 on v7x with its 64 MiB VMEM)
    # tile the hw axis and accumulate sum(q*q)/sum(k*k)/q@k^T over hw tiles.


def _gate_proj_kernel(attn_ref, g_ref, pw_ref, pb_ref, o_ref):
    """Fused gating multiply (out * gelu(gate)) + project_out 1x1 conv."""
    xg = (attn_ref[...] * g_ref[...]).astype(pw_ref.dtype)          # bf16 MXU feed
    o_ref[...] = (jnp.dot(xg, pw_ref[...], preferred_element_type=jnp.float32)
                  + pb_ref[...]).astype(o_ref.dtype)


# ------------------------------- XLA glue ops --------------------------------

# TODO(synk): 3x3 depthwise conv stays on XLA conv_general_dilated; a fused
# pltpu.roll-based depthwise Pallas kernel is the remaining HBM roundtrip to
# remove.  Exact-erf GELU is likewise kept as an XLA op rather than relying on
# erf lowering inside Mosaic.
def depthwise_conv3x3(x, w, b=None):
    out = jax.lax.conv_general_dilated(
        x, w, window_strides=(1, 1), padding=((1, 1), (1, 1)),
        dimension_numbers=('NHWC', 'HWIO', 'NHWC'),
        feature_group_count=x.shape[-1])
    if b is not None:
        out = out + b
    return out


def _pick_row_tile(n_rows, target=1024):
    """Largest divisor of n_rows that is a multiple of 8 and <= target."""
    if n_rows <= target:
        return n_rows
    best = 0
    for t in range(8, target + 1, 8):
        if n_rows % t == 0:
            best = t
    return best if best > 0 else n_rows


# ------------------------------ module forward -------------------------------

def attention_c_m_forward(x_nchw, params, num_heads):
    B, C, H, W = x_nchw.shape
    assert C % num_heads == 0
    x = jnp.transpose(x_nchw, (0, 2, 3, 1)).astype(jnp.float32)      # NHWC
    P = B * H * W
    hw = H * W
    TP = _pick_row_tile(P)

    lnw = params['norm_w'].reshape(1, C).astype(jnp.float32)
    lnb = params['norm_b'].reshape(1, C).astype(jnp.float32)
    gw = params['gate_w'].astype(MXU_DTYPE)
    gb = params['gate_b'].reshape(1, C).astype(jnp.float32)
    qkvw = params['qkv_w'].astype(MXU_DTYPE)
    qkvb = params.get('qkv_b', jnp.zeros((3 * C,), jnp.float32)).reshape(1, 3 * C)
    qkvb = qkvb.astype(jnp.float32)
    pw = params['proj_w'].astype(MXU_DTYPE)
    pb = params.get('proj_b', jnp.zeros((C,), jnp.float32)).reshape(1, C)
    pb = pb.astype(jnp.float32)

    xf = x.reshape(P, C)
    grid = (P // TP,)
    row_c = pl.BlockSpec((TP, C), lambda i: (i, 0))
    row_3c = pl.BlockSpec((TP, 3 * C), lambda i: (i, 0))
    const = lambda shape: pl.BlockSpec(shape, lambda i: (0, 0))      # resident weights
    par1 = pltpu.CompilerParams(dimension_semantics=("parallel",))

    # Kernel A: fused LN + gate conv (pre-GELU) + qkv conv, pixel-tiled.
    g_pre, qkv_flat = pl.pallas_call(
        _ln_gate_qkv_kernel,
        out_shape=(jax.ShapeDtypeStruct((P, C), jnp.float32),
                   jax.ShapeDtypeStruct((P, 3 * C), jnp.float32)),
        grid=grid,
        in_specs=[row_c, const((1, C)), const((1, C)),
                  const((C, C)), const((1, C)),
                  const((C, 3 * C)), const((1, 3 * C))],
        out_specs=(row_c, row_3c),
        compiler_params=par1,
    )(xf, lnw, lnb, gw, gb, qkvw, qkvb)

    # Exact-erf GELU (matches torch nn.GELU default); gating multiply itself is
    # fused into kernel C below.
    g_act = jax.nn.gelu(g_pre, approximate=False)

    qkv = depthwise_conv3x3(qkv_flat.reshape(B, H, W, 3 * C), params['qkv_dw'],
                            params.get('qkv_dw_b'))
    qkv3 = qkv.reshape(B, hw, 3 * C)

    # Kernel B: channel attention, one grid step per batch, all heads per step,
    # temperature as SMEM scalars (no per-step VMEM DMA for a 4-float array).
    attn_out = pl.pallas_call(
        functools.partial(_channel_attn_kernel, num_heads=num_heads, dim=C),
        out_shape=jax.ShapeDtypeStruct((B, hw, C), jnp.float32),
        grid=(B,),
        in_specs=[pl.BlockSpec(memory_space=pltpu.MemorySpace.SMEM),
                  pl.BlockSpec((1, hw, 3 * C), lambda b: (b, 0, 0))],
        out_specs=pl.BlockSpec((1, hw, C), lambda b: (b, 0, 0)),
        compiler_params=par1,
    )(params['temperature'].astype(jnp.float32), qkv3)

    # Kernel C: fused out * gelu(gate) + project_out, pixel-tiled.
    out_flat = pl.pallas_call(
        _gate_proj_kernel,
        out_shape=jax.ShapeDtypeStruct((P, C), jnp.float32),
        grid=grid,
        in_specs=[row_c, row_c, const((C, C)), const((1, C))],
        out_specs=row_c,
        compiler_params=par1,
    )(attn_out.reshape(P, C), g_act, pw, pb)

    return jnp.transpose(out_flat.reshape(B, H, W, C), (0, 3, 1, 2))  # back to NCHW


# ----------------------------- pure-JAX reference ----------------------------

def attention_c_m_reference(x_nchw, params, num_heads):
    x = jnp.transpose(x_nchw, (0, 2, 3, 1)).astype(jnp.float32)
    B, H, W, C = x.shape
    mu = jnp.mean(x, -1, keepdims=True)
    var = jnp.mean((x - mu) ** 2, -1, keepdims=True)
    xn = (x - mu) / jnp.sqrt(var + 1e-5) * params['norm_w'] + params['norm_b']
    g = jax.nn.gelu(jnp.einsum('bhwc,cd->bhwd', xn, params['gate_w'])
                    + params['gate_b'], approximate=False)
    qkv = jnp.einsum('bhwc,cd->bhwd', xn, params['qkv_w'])
    if 'qkv_b' in params:
        qkv = qkv + params['qkv_b']
    qkv = depthwise_conv3x3(qkv, params['qkv_dw'], params.get('qkv_dw_b'))
    hw = H * W
    qkv = qkv.reshape(B, hw, 3 * C)
    c = C // num_heads
    outs = []
    for h in range(num_heads):
        q = qkv[:, :, h * c:(h + 1) * c]
        k = qkv[:, :, C + h * c:C + (h + 1) * c]
        v = qkv[:, :, 2 * C + h * c:2 * C + (h + 1) * c]
        qn = q / jnp.maximum(jnp.linalg.norm(q, axis=1, keepdims=True), 1e-12)
        kn = k / jnp.maximum(jnp.linalg.norm(k, axis=1, keepdims=True), 1e-12)
        attn = jnp.einsum('bpi,bpj->bij', qn, kn) * params['temperature'][h]
        attn = jnp.maximum(attn, 0.0)
        outs.append(jnp.einsum('bpj,bij->bpi', v, attn))
    out = jnp.concatenate(outs, axis=-1) * g.reshape(B, hw, C)
    out = jnp.einsum('bpc,cd->bpd', out, params['proj_w'])
    if 'proj_b' in params:
        out = out + params['proj_b']
    return jnp.transpose(out.reshape(B, H, W, C), (0, 3, 1, 2))


# --------------------------------- params ------------------------------------

def init_attention_c_m_params(key, dim, num_heads, bias=False, scale=0.1):
    ks = jax.random.split(key, 10)
    nrm = lambda k, shape: jax.random.normal(k, shape, jnp.float32) * scale
    p = dict(
        norm_w=jnp.ones((dim,), jnp.float32),
        norm_b=jnp.zeros((dim,), jnp.float32),
        temperature=1.0 + 0.1 * jax.random.normal(ks[0], (num_heads,), jnp.float32),
        gate_w=nrm(ks[1], (dim, dim)),
        gate_b=nrm(ks[2], (dim,)),
        qkv_w=nrm(ks[3], (dim, 3 * dim)),
        qkv_dw=nrm(ks[4], (3, 3, 1, 3 * dim)),
        proj_w=nrm(ks[5], (dim, dim)),
    )
    if bias:
        p['qkv_b'] = nrm(ks[6], (3 * dim,))
        p['qkv_dw_b'] = nrm(ks[7], (3 * dim,))
        p['proj_b'] = nrm(ks[8], (dim,))
    return p


# ---------------------------------- main --------------------------------------

if __name__ == "__main__":
    B, dim, H, W = 2, 64, 16, 16
    num_heads = 4

    key = jax.random.PRNGKey(0)
    k_param, k_x = jax.random.split(key)
    params = init_attention_c_m_params(k_param, dim, num_heads, bias=False)
    x = jax.random.normal(k_x, (B, dim, H, W), jnp.float32)          # NCHW like torch

    fwd = jax.jit(functools.partial(attention_c_m_forward, num_heads=num_heads))
    out = jax.block_until_ready(fwd(x, params))

    assert out.shape == (B, dim, H, W)
    assert out.dtype == jnp.float32
    assert bool(jnp.all(jnp.isfinite(out)))

    # Sanity check against a pure-JAX f32 reference (loose tolerance: kernel
    # matmul operands are bf16 with f32 accumulation).
    ref = jax.block_until_ready(
        jax.jit(functools.partial(attention_c_m_reference, num_heads=num_heads))(x, params))
    max_err = float(jnp.max(jnp.abs(out - ref)))
    ref_scale = float(jnp.max(jnp.abs(ref)))
    assert max_err <= 0.05 * ref_scale + 1e-3, (max_err, ref_scale)

    print("KERNEL_OK")
</pallas_src>

<mosaic_0001>
module attributes {stable_mosaic.version = 11 : i64} {
  func.func @_ln_gate_qkv_kernel(%arg0: i32, %arg1: memref<512x64xf32, #tpu.memory_space<vmem>>, %arg2: memref<1x64xf32, #tpu.memory_space<vmem>>, %arg3: memref<1x64xf32, #tpu.memory_space<vmem>>, %arg4: memref<64x64xbf16, #tpu.memory_space<vmem>>, %arg5: memref<1x64xf32, #tpu.memory_space<vmem>>, %arg6: memref<64x192xbf16, #tpu.memory_space<vmem>>, %arg7: memref<1x192xf32, #tpu.memory_space<vmem>>, %arg8: memref<512x64xf32, #tpu.memory_space<vmem>>, %arg9: memref<512x192xf32, #tpu.memory_space<vmem>>) attributes {dimension_semantics = [#tpu.dimension_semantics<parallel>], iteration_bounds = array<i64: 1>, scalar_prefetch = 0 : i64, scratch_operands = 0 : i64, tpu.core_type = #tpu.core_type<tc>, window_params = [{transform_indices = @transform_0, window_bounds = array<i64: 512, 64>}, {pipeline_mode = #tpu.pipeline_mode<synchronous>, transform_indices = @transform_1, window_bounds = array<i64: 1, 64>}, {pipeline_mode = #tpu.pipeline_mode<synchronous>, transform_indices = @transform_2, window_bounds = array<i64: 1, 64>}, {pipeline_mode = #tpu.pipeline_mode<synchronous>, transform_indices = @transform_3, window_bounds = array<i64: 64, 64>}, {pipeline_mode = #tpu.pipeline_mode<synchronous>, transform_indices = @transform_4, window_bounds = array<i64: 1, 64>}, {pipeline_mode = #tpu.pipeline_mode<synchronous>, transform_indices = @transform_5, window_bounds = array<i64: 64, 192>}, {pipeline_mode = #tpu.pipeline_mode<synchronous>, transform_indices = @transform_6, window_bounds = array<i64: 1, 192>}, {transform_indices = @transform_7, window_bounds = array<i64: 512, 64>}, {transform_indices = @transform_8, window_bounds = array<i64: 512, 192>}]} {
    %c0 = arith.constant 0 : index
    %c0_0 = arith.constant 0 : index
    %0 = vector.load %arg1[%c0, %c0_0] : memref<512x64xf32, #tpu.memory_space<vmem>>, vector<512x64xf32>
    %cst = arith.constant dense<0.000000e+00> : vector<512xf32>
    %1 = vector.multi_reduction <add>, %0, %cst [1] : vector<512x64xf32> to vector<512xf32>
    %2 = vector.shape_cast %1 : vector<512xf32> to vector<512x1xf32>
    %cst_1 = arith.constant 6.400000e+01 : f32
    %3 = vector.broadcast %cst_1 : f32 to vector<512x1xf32>
    %4 = arith.divf %2, %3 : vector<512x1xf32>
    %5 = vector.broadcast %4 : vector<512x1xf32> to vector<512x64xf32>
    %6 = arith.subf %0, %5 : vector<512x64xf32>
    %7 = arith.mulf %6, %6 : vector<512x64xf32>
    %cst_2 = arith.constant dense<0.000000e+00> : vector<512xf32>
    %8 = vector.multi_reduction <add>, %7, %cst_2 [1] : vector<512x64xf32> to vector<512xf32>
    %9 = vector.shape_cast %8 : vector<512xf32> to vector<512x1xf32>
    %cst_3 = arith.constant 6.400000e+01 : f32
    %10 = vector.broadcast %cst_3 : f32 to vector<512x1xf32>
    %11 = arith.divf %9, %10 : vector<512x1xf32>
    %12 = vector.broadcast %4 : vector<512x1xf32> to vector<512x64xf32>
    %13 = arith.subf %0, %12 : vector<512x64xf32>
    %cst_4 = arith.constant 9.99999974E-6 : f32
    %14 = vector.broadcast %cst_4 : f32 to vector<512x1xf32>
    %15 = arith.addf %11, %14 : vector<512x1xf32>
    %16 = math.rsqrt %15 : vector<512x1xf32>
    %17 = vector.broadcast %16 : vector<512x1xf32> to vector<512x64xf32>
    %18 = arith.mulf %13, %17 : vector<512x64xf32>
    %c0_5 = arith.constant 0 : index
    %c0_6 = arith.constant 0 : index
    %19 = vector.load %arg2[%c0_5, %c0_6] : memref<1x64xf32, #tpu.memory_space<vmem>>, vector<1x64xf32>
    %20 = vector.broadcast %19 : vector<1x64xf32> to vector<512x64xf32>
    %21 = arith.mulf %18, %20 : vector<512x64xf32>
    %c0_7 = arith.constant 0 : index
    %c0_8 = arith.constant 0 : index
    %22 = vector.load %arg3[%c0_7, %c0_8] : memref<1x64xf32, #tpu.memory_space<vmem>>, vector<1x64xf32>
    %23 = vector.broadcast %22 : vector<1x64xf32> to vector<512x64xf32>
    %24 = arith.addf %21, %23 : vector<512x64xf32>
    %25 = arith.truncf %24 : vector<512x64xf32> to vector<512x64xbf16>
    %c0_9 = arith.constant 0 : index
    %c0_10 = arith.constant 0 : index
    %26 = vector.load %arg4[%c0_9, %c0_10] : memref<64x64xbf16, #tpu.memory_space<vmem>>, vector<64x64xbf16>
    %cst_11 = arith.constant dense<0.000000e+00> : vector<512x64xf32>
    %27 = tpu.matmul %25, %26, %cst_11 {dimension_numbers = #tpu.dot_dimension_numbers<[1], [0], [0], [1], [0, 0, 1, 1], [], []>} : vector<512x64xbf16>, vector<64x64xbf16>, vector<512x64xf32> -> vector<512x64xf32>
    %c0_12 = arith.constant 0 : index
    %c0_13 = arith.constant 0 : index
    %28 = vector.load %arg5[%c0_12, %c0_13] : memref<1x64xf32, #tpu.memory_space<vmem>>, vector<1x64xf32>
    %29 = vector.broadcast %28 : vector<1x64xf32> to vector<512x64xf32>
    %30 = arith.addf %27, %29 : vector<512x64xf32>
    %c0_14 = arith.constant 0 : index
    %c0_15 = arith.constant 0 : index
    %31 = vector.load %arg8[%c0_14, %c0_15] : memref<512x64xf32, #tpu.memory_space<vmem>>, vector<512x64xf32>
    tpu.vector_store %arg8[%c0_14, %c0_15], %30 {strides = array<i32>} : memref<512x64xf32, #tpu.memory_space<vmem>>, vector<512x64xf32>,
    %c0_16 = arith.constant 0 : index
    %c0_17 = arith.constant 0 : index
    %32 = vector.load %arg6[%c0_16, %c0_17] : memref<64x192xbf16, #tpu.memory_space<vmem>>, vector<64x192xbf16>
    %cst_18 = arith.constant dense<0.000000e+00> : vector<512x192xf32>
    %33 = tpu.matmul %25, %32, %cst_18 {dimension_numbers = #tpu.dot_dimension_numbers<[1], [0], [0], [1], [0, 0, 1, 1], [], []>} : vector<512x64xbf16>, vector<64x192xbf16>, vector<512x192xf32> -> vector<512x192xf32>
    %c0_19 = arith.constant 0 : index
    %c0_20 = arith.constant 0 : index
    %34 = vector.load %arg7[%c0_19, %c0_20] : memref<1x192xf32, #tpu.memory_space<vmem>>, vector<1x192xf32>
    %35 = vector.broadcast %34 : vector<1x192xf32> to vector<512x192xf32>
    %36 = arith.addf %33, %35 : vector<512x192xf32>
    %c0_21 = arith.constant 0 : index
    %c0_22 = arith.constant 0 : index
    %37 = vector.load %arg9[%c0_21, %c0_22] : memref<512x192xf32, #tpu.memory_space<vmem>>, vector<512x192xf32>
    tpu.vector_store %arg9[%c0_21, %c0_22], %36 {strides = array<i32>} : memref<512x192xf32, #tpu.memory_space<vmem>>, vector<512x192xf32>,
    return
  }
  func.func @transform_0(%arg0: i32) -> (i32, i32) {
    %c0_i32 = arith.constant 0 : i32
    %c0_i32_0 = arith.constant 0 : i32
    return %arg0, %c0_i32 : i32, i32
  }
  func.func @transform_1(%arg0: i32) -> (i32, i32) {
    %c0_i32 = arith.constant 0 : i32
    %c0_i32_0 = arith.constant 0 : i32
    %c0_i32_1 = arith.constant 0 : i32
    return %c0_i32, %c0_i32_0 : i32, i32
  }
  func.func @transform_2(%arg0: i32) -> (i32, i32) {
    %c0_i32 = arith.constant 0 : i32
    %c0_i32_0 = arith.constant 0 : i32
    %c0_i32_1 = arith.constant 0 : i32
    return %c0_i32, %c0_i32_0 : i32, i32
  }
  func.func @transform_3(%arg0: i32) -> (i32, i32) {
    %c0_i32 = arith.constant 0 : i32
    %c0_i32_0 = arith.constant 0 : i32
    %c0_i32_1 = arith.constant 0 : i32
    return %c0_i32, %c0_i32_0 : i32, i32
  }
  func.func @transform_4(%arg0: i32) -> (i32, i32) {
    %c0_i32 = arith.constant 0 : i32
    %c0_i32_0 = arith.constant 0 : i32
    %c0_i32_1 = arith.constant 0 : i32
    return %c0_i32, %c0_i32_0 : i32, i32
  }
  func.func @transform_5(%arg0: i32) -> (i32, i32) {
    %c0_i32 = arith.constant 0 : i32
    %c0_i32_0 = arith.constant 0 : i32
    %c0_i32_1 = arith.constant 0 : i32
    return %c0_i32, %c0_i32_0 : i32, i32
  }
  func.func @transform_6(%arg0: i32) -> (i32, i32) {
    %c0_i32 = arith.constant 0 : i32
    %c0_i32_0 = arith.constant 0 : i32
    %c0_i32_1 = arith.constant 0 : i32
    return %c0_i32, %c0_i32_0 : i32, i32
  }
  func.func @transform_7(%arg0: i32) -> (i32, i32) {
    %c0_i32 = arith.constant 0 : i32
    %c0_i32_0 = arith.constant 0 : i32
    return %arg0, %c0_i32 : i32, i32
  }
  func.func @transform_8(%arg0: i32) -> (i32, i32) {
    %c0_i32 = arith.constant 0 : i32
    %c0_i32_0 = arith.constant 0 : i32
    return %arg0, %c0_i32 : i32, i32
  }
}

module attributes {stable_mosaic.version = 11 : i64} {
  func.func @_channel_attn_kernel(%arg0: i32, %arg1: memref<4xf32, #tpu.memory_space<smem>>, %arg2: memref<1x256x192xf32, #tpu.memory_space<vmem>>, %arg3: memref<1x256x64xf32, #tpu.memory_space<vmem>>) attributes {dimension_semantics = [#tpu.dimension_semantics<parallel>], iteration_bounds = array<i64: 2>, scalar_prefetch = 0 : i64, scratch_operands = 0 : i64, tpu.core_type = #tpu.core_type<tc>, window_params = [{transform_indices = @transform_0, window_bounds = array<i64: 4>}, {transform_indices = @transform_1, window_bounds = array<i64: 1, 256, 192>}, {transform_indices = @transform_2, window_bounds = array<i64: 1, 256, 64>}]} {
    %c0 = arith.constant 0 : index
    %c0_0 = arith.constant 0 : index
    %c0_1 = arith.constant 0 : index
    %0 = vector.load %arg2[%c0, %c0_0, %c0_1] : memref<1x256x192xf32, #tpu.memory_space<vmem>>, vector<1x256x16xf32>
    %1 = vector.shape_cast %0 : vector<1x256x16xf32> to vector<256x16xf32>
    %c0_2 = arith.constant 0 : index
    %c0_3 = arith.constant 0 : index
    %c64 = arith.constant 64 : index
    %2 = vector.load %arg2[%c0_2, %c0_3, %c64] : memref<1x256x192xf32, #tpu.memory_space<vmem>>, vector<1x256x16xf32>
    %3 = vector.shape_cast %2 : vector<1x256x16xf32> to vector<256x16xf32>
    %c0_4 = arith.constant 0 : index
    %c0_5 = arith.constant 0 : index
    %c128 = arith.constant 128 : index
    %4 = vector.load %arg2[%c0_4, %c0_5, %c128] : memref<1x256x192xf32, #tpu.memory_space<vmem>>, vector<1x256x16xf32>
    %5 = vector.shape_cast %4 : vector<1x256x16xf32> to vector<256x16xf32>
    %6 = arith.mulf %1, %1 : vector<256x16xf32>
    %cst = arith.constant dense<0.000000e+00> : vector<16xf32>
    %7 = vector.multi_reduction <add>, %6, %cst [0] : vector<256x16xf32> to vector<16xf32>
    %8 = vector.shape_cast %7 : vector<16xf32> to vector<1x16xf32>
    %cst_6 = arith.constant 1.000000e-24 : f32
    %9 = vector.broadcast %cst_6 : f32 to vector<1x16xf32>
    %10 = arith.maximumf %8, %9 : vector<1x16xf32>
    %11 = math.rsqrt %10 : vector<1x16xf32>
    %12 = vector.broadcast %11 : vector<1x16xf32> to vector<256x16xf32>
    %13 = arith.mulf %1, %12 : vector<256x16xf32>
    %14 = arith.mulf %3, %3 : vector<256x16xf32>
    %cst_7 = arith.constant dense<0.000000e+00> : vector<16xf32>
    %15 = vector.multi_reduction <add>, %14, %cst_7 [0] : vector<256x16xf32> to vector<16xf32>
    %16 = vector.shape_cast %15 : vector<16xf32> to vector<1x16xf32>
    %cst_8 = arith.constant 1.000000e-24 : f32
    %17 = vector.broadcast %cst_8 : f32 to vector<1x16xf32>
    %18 = arith.maximumf %16, %17 : vector<1x16xf32>
    %19 = math.rsqrt %18 : vector<1x16xf32>
    %20 = vector.broadcast %19 : vector<1x16xf32> to vector<256x16xf32>
    %21 = arith.mulf %3, %20 : vector<256x16xf32>
    %22 = arith.truncf %13 : vector<256x16xf32> to vector<256x16xbf16>
    %23 = arith.truncf %21 : vector<256x16xf32> to vector<256x16xbf16>
    %cst_9 = arith.constant dense<0.000000e+00> : vector<16x16xf32>
    %24 = tpu.matmul %22, %23, %cst_9 {dimension_numbers = #tpu.dot_dimension_numbers<[0], [0], [1], [1], [0, 1, 1, 1], [], []>} : vector<256x16xbf16>, vector<256x16xbf16>, vector<16x16xf32> -> vector<16x16xf32>
    %c0_10 = arith.constant 0 : index
    %25 = memref.load %arg1[%c0_10] : memref<4xf32, #tpu.memory_space<smem>>
    %26 = vector.broadcast %25 : f32 to vector<16x16xf32>
    %27 = arith.mulf %24, %26 : vector<16x16xf32>
    %cst_11 = arith.constant 0.000000e+00 : f32
    %28 = vector.broadcast %cst_11 : f32 to vector<16x16xf32>
    %29 = arith.maximumf %27, %28 : vector<16x16xf32>
    %30 = arith.truncf %5 : vector<256x16xf32> to vector<256x16xbf16>
    %31 = arith.truncf %29 : vector<16x16xf32> to vector<16x16xbf16>
    %cst_12 = arith.constant dense<0.000000e+00> : vector<256x16xf32>
    %32 = tpu.matmul %30, %31, %cst_12 {dimension_numbers = #tpu.dot_dimension_numbers<[1], [1], [0], [0], [0, 0, 1, 0], [], []>} : vector<256x16xbf16>, vector<16x16xbf16>, vector<256x16xf32> -> vector<256x16xf32>
    %c0_13 = arith.constant 0 : index
    %c0_14 = arith.constant 0 : index
    %c0_15 = arith.constant 0 : index
    %33 = vector.load %arg3[%c0_13, %c0_14, %c0_15] : memref<1x256x64xf32, #tpu.memory_space<vmem>>, vector<1x256x16xf32>
    %34 = vector.shape_cast %33 : vector<1x256x16xf32> to vector<256x16xf32>
    %35 = vector.shape_cast %32 : vector<256x16xf32> to vector<1x256x16xf32>
    tpu.vector_store %arg3[%c0_13, %c0_14, %c0_15], %35 {strides = array<i32>} : memref<1x256x64xf32, #tpu.memory_space<vmem>>, vector<1x256x16xf32>,
    %c0_16 = arith.constant 0 : index
    %c0_17 = arith.constant 0 : index
    %c16 = arith.constant 16 : index
    %36 = vector.load %arg2[%c0_16, %c0_17, %c16] : memref<1x256x192xf32, #tpu.memory_space<vmem>>, vector<1x256x16xf32>
    %37 = vector.shape_cast %36 : vector<1x256x16xf32> to vector<256x16xf32>
    %c0_18 = arith.constant 0 : index
    %c0_19 = arith.constant 0 : index
    %c80 = arith.constant 80 : index
    %38 = vector.load %arg2[%c0_18, %c0_19, %c80] : memref<1x256x192xf32, #tpu.memory_space<vmem>>, vector<1x256x16xf32>
    %39 = vector.shape_cast %38 : vector<1x256x16xf32> to vector<256x16xf32>
    %c0_20 = arith.constant 0 : index
    %c0_21 = arith.constant 0 : index
    %c144 = arith.constant 144 : index
    %40 = vector.load %arg2[%c0_20, %c0_21, %c144] : memref<1x256x192xf32, #tpu.memory_space<vmem>>, vector<1x256x16xf32>
    %41 = vector.shape_cast %40 : vector<1x256x16xf32> to vector<256x16xf32>
    %42 = arith.mulf %37, %37 : vector<256x16xf32>
    %cst_22 = arith.constant dense<0.000000e+00> : vector<16xf32>
    %43 = vector.multi_reduction <add>, %42, %cst_22 [0] : vector<256x16xf32> to vector<16xf32>
    %44 = vector.shape_cast %43 : vector<16xf32> to vector<1x16xf32>
    %cst_23 = arith.constant 1.000000e-24 : f32
    %45 = vector.broadcast %cst_23 : f32 to vector<1x16xf32>
    %46 = arith.maximumf %44, %45 : vector<1x16xf32>
    %47 = math.rsqrt %46 : vector<1x16xf32>
    %48 = vector.broadcast %47 : vector<1x16xf32> to vector<256x16xf32>
    %49 = arith.mulf %37, %48 : vector<256x16xf32>
    %50 = arith.mulf %39, %39 : vector<256x16xf32>
    %cst_24 = arith.constant dense<0.000000e+00> : vector<16xf32>
    %51 = vector.multi_reduction <add>, %50, %cst_24 [0] : vector<256x16xf32> to vector<16xf32>
    %52 = vector.shape_cast %51 : vector<16xf32> to vector<1x16xf32>
    %cst_25 = arith.constant 1.000000e-24 : f32
    %53 = vector.broadcast %cst_25 : f32 to vector<1x16xf32>
    %54 = arith.maximumf %52, %53 : vector<1x16xf32>
    %55 = math.rsqrt %54 : vector<1x16xf32>
    %56 = vector.broadcast %55 : vector<1x16xf32> to vector<256x16xf32>
    %57 = arith.mulf %39, %56 : vector<256x16xf32>
    %58 = arith.truncf %49 : vector<256x16xf32> to vector<256x16xbf16>
    %59 = arith.truncf %57 : vector<256x16xf32> to vector<256x16xbf16>
    %cst_26 = arith.constant dense<0.000000e+00> : vector<16x16xf32>
    %60 = tpu.matmul %58, %59, %cst_26 {dimension_numbers = #tpu.dot_dimension_numbers<[0], [0], [1], [1], [0, 1, 1, 1], [], []>} : vector<256x16xbf16>, vector<256x16xbf16>, vector<16x16xf32> -> vector<16x16xf32>
    %c1 = arith.constant 1 : index
    %61 = memref.load %arg1[%c1] : memref<4xf32, #tpu.memory_space<smem>>
    %62 = vector.broadcast %61 : f32 to vector<16x16xf32>
    %63 = arith.mulf %60, %62 : vector<16x16xf32>
    %cst_27 = arith.constant 0.000000e+00 : f32
    %64 = vector.broadcast %cst_27 : f32 to vector<16x16xf32>
    %65 = arith.maximumf %63, %64 : vector<16x16xf32>
    %66 = arith.truncf %41 : vector<256x16xf32> to vector<256x16xbf16>
    %67 = arith.truncf %65 : vector<16x16xf32> to vector<16x16xbf16>
    %cst_28 = arith.constant dense<0.000000e+00> : vector<256x16xf32>
    %68 = tpu.matmul %66, %67, %cst_28 {dimension_numbers = #tpu.dot_dimension_numbers<[1], [1], [0], [0], [0, 0, 1, 0], [], []>} : vector<256x16xbf16>, vector<16x16xbf16>, vector<256x16xf32> -> vector<256x16xf32>
    %c0_29 = arith.constant 0 : index
    %c0_30 = arith.constant 0 : index
    %c16_31 = arith.constant 16 : index
    %69 = vector.load %arg3[%c0_29, %c0_30, %c16_31] : memref<1x256x64xf32, #tpu.memory_space<vmem>>, vector<1x256x16xf32>
    %70 = vector.shape_cast %69 : vector<1x256x16xf32> to vector<256x16xf32>
    %71 = vector.shape_cast %68 : vector<256x16xf32> to vector<1x256x16xf32>
    tpu.vector_store %arg3[%c0_29, %c0_30, %c16_31], %71 {strides = array<i32>} : memref<1x256x64xf32, #tpu.memory_space<vmem>>, vector<1x256x16xf32>,
    %c0_32 = arith.constant 0 : index
    %c0_33 = arith.constant 0 : index
    %c32 = arith.constant 32 : index
    %72 = vector.load %arg2[%c0_32, %c0_33, %c32] : memref<1x256x192xf32, #tpu.memory_space<vmem>>, vector<1x256x16xf32>
    %73 = vector.shape_cast %72 : vector<1x256x16xf32> to vector<256x16xf32>
    %c0_34 = arith.constant 0 : index
    %c0_35 = arith.constant 0 : index
    %c96 = arith.constant 96 : index
    %74 = vector.load %arg2[%c0_34, %c0_35, %c96] : memref<1x256x192xf32, #tpu.memory_space<vmem>>, vector<1x256x16xf32>
    %75 = vector.shape_cast %74 : vector<1x256x16xf32> to vector<256x16xf32>
    %c0_36 = arith.constant 0 : index
    %c0_37 = arith.constant 0 : index
    %c160 = arith.constant 160 : index
    %76 = vector.load %arg2[%c0_36, %c0_37, %c160] : memref<1x256x192xf32, #tpu.memory_space<vmem>>, vector<1x256x16xf32>
    %77 = vector.shape_cast %76 : vector<1x256x16xf32> to vector<256x16xf32>
    %78 = arith.mulf %73, %73 : vector<256x16xf32>
    %cst_38 = arith.constant dense<0.000000e+00> : vector<16xf32>
    %79 = vector.multi_reduction <add>, %78, %cst_38 [0] : vector<256x16xf32> to vector<16xf32>
    %80 = vector.shape_cast %79 : vector<16xf32> to vector<1x16xf32>
    %cst_39 = arith.constant 1.000000e-24 : f32
    %81 = vector.broadcast %cst_39 : f32 to vector<1x16xf32>
    %82 = arith.maximumf %80, %81 : vector<1x16xf32>
    %83 = math.rsqrt %82 : vector<1x16xf32>
    %84 = vector.broadcast %83 : vector<1x16xf32> to vector<256x16xf32>
    %85 = arith.mulf %73, %84 : vector<256x16xf32>
    %86 = arith.mulf %75, %75 : vector<256x16xf32>
    %cst_40 = arith.constant dense<0.000000e+00> : vector<16xf32>
    %87 = vector.multi_reduction <add>, %86, %cst_40 [0] : vector<256x16xf32> to vector<16xf32>
    %88 = vector.shape_cast %87 : vector<16xf32> to vector<1x16xf32>
    %cst_41 = arith.constant 1.000000e-24 : f32
    %89 = vector.broadcast %cst_41 : f32 to vector<1x16xf32>
    %90 = arith.maximumf %88, %89 : vector<1x16xf32>
    %91 = math.rsqrt %90 : vector<1x16xf32>
    %92 = vector.broadcast %91 : vector<1x16xf32> to vector<256x16xf32>
    %93 = arith.mulf %75, %92 : vector<256x16xf32>
    %94 = arith.truncf %85 : vector<256x16xf32> to vector<256x16xbf16>
    %95 = arith.truncf %93 : vector<256x16xf32> to vector<256x16xbf16>
    %cst_42 = arith.constant dense<0.000000e+00> : vector<16x16xf32>
    %96 = tpu.matmul %94, %95, %cst_42 {dimension_numbers = #tpu.dot_dimension_numbers<[0], [0], [1], [1], [0, 1, 1, 1], [], []>} : vector<256x16xbf16>, vector<256x16xbf16>, vector<16x16xf32> -> vector<16x16xf32>
    %c2 = arith.constant 2 : index
    %97 = memref.load %arg1[%c2] : memref<4xf32, #tpu.memory_space<smem>>
    %98 = vector.broadcast %97 : f32 to vector<16x16xf32>
    %99 = arith.mulf %96, %98 : vector<16x16xf32>
    %cst_43 = arith.constant 0.000000e+00 : f32
    %100 = vector.broadcast %cst_43 : f32 to vector<16x16xf32>
    %101 = arith.maximumf %99, %100 : vector<16x16xf32>
    %102 = arith.truncf %77 : vector<256x16xf32> to vector<256x16xbf16>
    %103 = arith.truncf %101 : vector<16x16xf32> to vector<16x16xbf16>
    %cst_44 = arith.constant dense<0.000000e+00> : vector<256x16xf32>
    %104 = tpu.matmul %102, %103, %cst_44 {dimension_numbers = #tpu.dot_dimension_numbers<[1], [1], [0], [0], [0, 0, 1, 0], [], []>} : vector<256x16xbf16>, vector<16x16xbf16>, vector<256x16xf32> -> vector<256x16xf32>
    %c0_45 = arith.constant 0 : index
    %c0_46 = arith.constant 0 : index
    %c32_47 = arith.constant 32 : index
    %105 = vector.load %arg3[%c0_45, %c0_46, %c32_47] : memref<1x256x64xf32, #tpu.memory_space<vmem>>, vector<1x256x16xf32>
    %106 = vector.shape_cast %105 : vector<1x256x16xf32> to vector<256x16xf32>
    %107 = vector.shape_cast %104 : vector<256x16xf32> to vector<1x256x16xf32>
    tpu.vector_store %arg3[%c0_45, %c0_46, %c32_47], %107 {strides = array<i32>} : memref<1x256x64xf32, #tpu.memory_space<vmem>>, vector<1x256x16xf32>,
    %c0_48 = arith.constant 0 : index
    %c0_49 = arith.constant 0 : index
    %c48 = arith.constant 48 : index
    %108 = vector.load %arg2[%c0_48, %c0_49, %c48] : memref<1x256x192xf32, #tpu.memory_space<vmem>>, vector<1x256x16xf32>
    %109 = vector.shape_cast %108 : vector<1x256x16xf32> to vector<256x16xf32>
    %c0_50 = arith.constant 0 : index
    %c0_51 = arith.constant 0 : index
    %c112 = arith.constant 112 : index
    %110 = vector.load %arg2[%c0_50, %c0_51, %c112] : memref<1x256x192xf32, #tpu.memory_space<vmem>>, vector<1x256x16xf32>
    %111 = vector.shape_cast %110 : vector<1x256x16xf32> to vector<256x16xf32>
    %c0_52 = arith.constant 0 : index
    %c0_53 = arith.constant 0 : index
    %c176 = arith.constant 176 : index
    %112 = vector.load %arg2[%c0_52, %c0_53, %c176] : memref<1x256x192xf32, #tpu.memory_space<vmem>>, vector<1x256x16xf32>
    %113 = vector.shape_cast %112 : vector<1x256x16xf32> to vector<256x16xf32>
    %114 = arith.mulf %109, %109 : vector<256x16xf32>
    %cst_54 = arith.constant dense<0.000000e+00> : vector<16xf32>
    %115 = vector.multi_reduction <add>, %114, %cst_54 [0] : vector<256x16xf32> to vector<16xf32>
    %116 = vector.shape_cast %115 : vector<16xf32> to vector<1x16xf32>
    %cst_55 = arith.constant 1.000000e-24 : f32
    %117 = vector.broadcast %cst_55 : f32 to vector<1x16xf32>
    %118 = arith.maximumf %116, %117 : vector<1x16xf32>
    %119 = math.rsqrt %118 : vector<1x16xf32>
    %120 = vector.broadcast %119 : vector<1x16xf32> to vector<256x16xf32>
    %121 = arith.mulf %109, %120 : vector<256x16xf32>
    %122 = arith.mulf %111, %111 : vector<256x16xf32>
    %cst_56 = arith.constant dense<0.000000e+00> : vector<16xf32>
    %123 = vector.multi_reduction <add>, %122, %cst_56 [0] : vector<256x16xf32> to vector<16xf32>
    %124 = vector.shape_cast %123 : vector<16xf32> to vector<1x16xf32>
    %cst_57 = arith.constant 1.000000e-24 : f32
    %125 = vector.broadcast %cst_57 : f32 to vector<1x16xf32>
    %126 = arith.maximumf %124, %125 : vector<1x16xf32>
    %127 = math.rsqrt %126 : vector<1x16xf32>
    %128 = vector.broadcast %127 : vector<1x16xf32> to vector<256x16xf32>
    %129 = arith.mulf %111, %128 : vector<256x16xf32>
    %130 = arith.truncf %121 : vector<256x16xf32> to vector<256x16xbf16>
    %131 = arith.truncf %129 : vector<256x16xf32> to vector<256x16xbf16>
    %cst_58 = arith.constant dense<0.000000e+00> : vector<16x16xf32>
    %132 = tpu.matmul %130, %131, %cst_58 {dimension_numbers = #tpu.dot_dimension_numbers<[0], [0], [1], [1], [0, 1, 1, 1], [], []>} : vector<256x16xbf16>, vector<256x16xbf16>, vector<16x16xf32> -> vector<16x16xf32>
    %c3 = arith.constant 3 : index
    %133 = memref.load %arg1[%c3] : memref<4xf32, #tpu.memory_space<smem>>
    %134 = vector.broadcast %133 : f32 to vector<16x16xf32>
    %135 = arith.mulf %132, %134 : vector<16x16xf32>
    %cst_59 = arith.constant 0.000000e+00 : f32
    %136 = vector.broadcast %cst_59 : f32 to vector<16x16xf32>
    %137 = arith.maximumf %135, %136 : vector<16x16xf32>
    %138 = arith.truncf %113 : vector<256x16xf32> to vector<256x16xbf16>
    %139 = arith.truncf %137 : vector<16x16xf32> to vector<16x16xbf16>
    %cst_60 = arith.constant dense<0.000000e+00> : vector<256x16xf32>
    %140 = tpu.matmul %138, %139, %cst_60 {dimension_numbers = #tpu.dot_dimension_numbers<[1], [1], [0], [0], [0, 0, 1, 0], [], []>} : vector<256x16xbf16>, vector<16x16xbf16>, vector<256x16xf32> -> vector<256x16xf32>
    %c0_61 = arith.constant 0 : index
    %c0_62 = arith.constant 0 : index
    %c48_63 = arith.constant 48 : index
    %141 = vector.load %arg3[%c0_61, %c0_62, %c48_63] : memref<1x256x64xf32, #tpu.memory_space<vmem>>, vector<1x256x16xf32>
    %142 = vector.shape_cast %141 : vector<1x256x16xf32> to vector<256x16xf32>
    %143 = vector.shape_cast %140 : vector<256x16xf32> to vector<1x256x16xf32>
    tpu.vector_store %arg3[%c0_61, %c0_62, %c48_63], %143 {strides = array<i32>} : memref<1x256x64xf32, #tpu.memory_space<vmem>>, vector<1x256x16xf32>,
    return
  }
  func.func @transform_0(%arg0: i32) -> i32 {
    %c0_i32 = arith.constant 0 : i32
    %c0_i32_0 = arith.constant 0 : i32
    return %c0_i32 : i32
  }
  func.func @transform_1(%arg0: i32) -> (i32, i32, i32) {
    %c0_i32 = arith.constant 0 : i32
    %c0_i32_0 = arith.constant 0 : i32
    %c0_i32_1 = arith.constant 0 : i32
    return %arg0, %c0_i32, %c0_i32_0 : i32, i32, i32
  }
  func.func @transform_2(%arg0: i32) -> (i32, i32, i32) {
    %c0_i32 = arith.constant 0 : i32
    %c0_i32_0 = arith.constant 0 : i32
    %c0_i32_1 = arith.constant 0 : i32
    return %arg0, %c0_i32, %c0_i32_0 : i32, i32, i32
  }
}

module attributes {stable_mosaic.version = 11 : i64} {
  func.func @_gate_proj_kernel(%arg0: i32, %arg1: memref<512x64xf32, #tpu.memory_space<vmem>>, %arg2: memref<512x64xf32, #tpu.memory_space<vmem>>, %arg3: memref<64x64xbf16, #tpu.memory_space<vmem>>, %arg4: memref<1x64xf32, #tpu.memory_space<vmem>>, %arg5: memref<512x64xf32, #tpu.memory_space<vmem>>) attributes {dimension_semantics = [#tpu.dimension_semantics<parallel>], iteration_bounds = array<i64: 1>, scalar_prefetch = 0 : i64, scratch_operands = 0 : i64, tpu.core_type = #tpu.core_type<tc>, window_params = [{transform_indices = @transform_0, window_bounds = array<i64: 512, 64>}, {transform_indices = @transform_1, window_bounds = array<i64: 512, 64>}, {pipeline_mode = #tpu.pipeline_mode<synchronous>, transform_indices = @transform_2, window_bounds = array<i64: 64, 64>}, {pipeline_mode = #tpu.pipeline_mode<synchronous>, transform_indices = @transform_3, window_bounds = array<i64: 1, 64>}, {transform_indices = @transform_4, window_bounds = array<i64: 512, 64>}]} {
    %c0 = arith.constant 0 : index
    %c0_0 = arith.constant 0 : index
    %0 = vector.load %arg1[%c0, %c0_0] : memref<512x64xf32, #tpu.memory_space<vmem>>, vector<512x64xf32>
    %c0_1 = arith.constant 0 : index
    %c0_2 = arith.constant 0 : index
    %1 = vector.load %arg2[%c0_1, %c0_2] : memref<512x64xf32, #tpu.memory_space<vmem>>, vector<512x64xf32>
    %2 = arith.mulf %0, %1 : vector<512x64xf32>
    %3 = arith.truncf %2 : vector<512x64xf32> to vector<512x64xbf16>
    %c0_3 = arith.constant 0 : index
    %c0_4 = arith.constant 0 : index
    %4 = vector.load %arg3[%c0_3, %c0_4] : memref<64x64xbf16, #tpu.memory_space<vmem>>, vector<64x64xbf16>
    %cst = arith.constant dense<0.000000e+00> : vector<512x64xf32>
    %5 = tpu.matmul %3, %4, %cst {dimension_numbers = #tpu.dot_dimension_numbers<[1], [0], [0], [1], [0, 0, 1, 1], [], []>} : vector<512x64xbf16>, vector<64x64xbf16>, vector<512x64xf32> -> vector<512x64xf32>
    %c0_5 = arith.constant 0 : index
    %c0_6 = arith.constant 0 : index
    %6 = vector.load %arg4[%c0_5, %c0_6] : memref<1x64xf32, #tpu.memory_space<vmem>>, vector<1x64xf32>
    %7 = vector.broadcast %6 : vector<1x64xf32> to vector<512x64xf32>
    %8 = arith.addf %5, %7 : vector<512x64xf32>
    %c0_7 = arith.constant 0 : index
    %c0_8 = arith.constant 0 : index
    %9 = vector.load %arg5[%c0_7, %c0_8] : memref<512x64xf32, #tpu.memory_space<vmem>>, vector<512x64xf32>
    tpu.vector_store %arg5[%c0_7, %c0_8], %8 {strides = array<i32>} : memref<512x64xf32, #tpu.memory_space<vmem>>, vector<512x64xf32>,
    return
  }
  func.func @transform_0(%arg0: i32) -> (i32, i32) {
    %c0_i32 = arith.constant 0 : i32
    %c0_i32_0 = arith.constant 0 : i32
    return %arg0, %c0_i32 : i32, i32
  }
  func.func @transform_1(%arg0: i32) -> (i32, i32) {
    %c0_i32 = arith.constant 0 : i32
    %c0_i32_0 = arith.constant 0 : i32
    return %arg0, %c0_i32 : i32, i32
  }
  func.func @transform_2(%arg0: i32) -> (i32, i32) {
    %c0_i32 = arith.constant 0 : i32
    %c0_i32_0 = arith.constant 0 : i32
    %c0_i32_1 = arith.constant 0 : i32
    return %c0_i32, %c0_i32_0 : i32, i32
  }
  func.func @transform_3(%arg0: i32) -> (i32, i32) {
    %c0_i32 = arith.constant 0 : i32
    %c0_i32_0 = arith.constant 0 : i32
    %c0_i32_1 = arith.constant 0 : i32
    return %c0_i32, %c0_i32_0 : i32, i32
  }
  func.func @transform_4(%arg0: i32) -> (i32, i32) {
    %c0_i32 = arith.constant 0 : i32
    %c0_i32_0 = arith.constant 0 : i32
    return %arg0, %c0_i32 : i32, i32
  }
}

</mosaic_0001>

<llo_original>
// kernel: attention_c_m_forward.3
$region0: #{attention_c_m_forward.3}
  #allocation0 [shape = 'u32[]', space=smem, size = 0x4, offset = 0x4, fixed_abs, tag = 'smem constant byte address 0x4 - core index']
  #allocation1 [shape = 'u32[144,128]{1,0:T(1,128)}', space=vmem, size = 0x12000, scoped, tag = 'internal scratch']
  %s0 = inlined_call_operand.hbm [shape: f32[512,64], index: 0, kind: input, shape index: {}]
  %s1 = inlined_call_operand.vmem [shape: f32[1,64], index: 1, kind: input, shape index: {}]
  %s2 = inlined_call_operand.vmem [shape: f32[1,64], index: 2, kind: input, shape index: {}]
  %s3 = inlined_call_operand.vmem [shape: bf16[64,64], index: 3, kind: input, shape index: {}]
  %s4 = inlined_call_operand.vmem [shape: f32[1,64], index: 4, kind: input, shape index: {}]
  %s5 = inlined_call_operand.vmem [shape: bf16[64,192], index: 5, kind: input, shape index: {}]
  %s6 = inlined_call_operand.vmem [shape: f32[1,192], index: 6, kind: input, shape index: {}]
  %s7 = inlined_call_operand.vmem [shape: f32[512,64], index: 7, kind: output, shape index: {0}]
  %s8 = inlined_call_operand.vmem [shape: f32[512,192], index: 8, kind: output, shape index: {1}]
  %9 = xla_tuple %s7, %s8
  %s10 = sld [smem:[#allocation0]]
  $region50: #{attention_c_m_forward.3} parent=0
    _
  %s12 = ssub.s32 1, %s10
  %s13 = scalar_select 0, %s12, %s10
  $region1: #{attention_c_m_forward.3} parent=0
    #allocation2 [shape = 'u8[262144]{0}', space=vmem, size = 0x40000, scoped, tag = 'input window, operand 0, single buffered']
    #allocation3 [shape = 's32[1]{0}', space=sflag, size = 0x4, scoped, tag = 'scoped memory for attention_c_m_forward.3']
    %14 = vsyncpa [#allocation3], 0
    // Predicated region
    $region2: #{attention_c_m_forward.3} parent=1 // pred_check
      _
    $region3: #{attention_c_m_forward.3} parent=1 // pred_check_branch
      %16 = sbr.rel (0) target = $region5
    $region4: #{attention_c_m_forward.3} parent=1 // pred_region
      %s18 = ssub.s32 8192, 8192
      %19 = vsyncadd [#allocation3], %s18
      %s20 = sshll.u32 [#allocation2], 4
      %s21 = int_to_ptr.vmem [resolvable:$true] %s20
      %26 = dma.hbm_to_vmem [thread:$0]  %s0, 8192, %s21, [#allocation3], 128, 128, 8
    $region5: #{attention_c_m_forward.3} parent=1 // pred_fallthru
      _
    // Predicated region
    $region6: #{attention_c_m_forward.3} parent=1 // pred_check
      _
    $region7: #{attention_c_m_forward.3} parent=1 // pred_check_branch
      %28 = sbr.rel (0) target = $region9
    $region8: #{attention_c_m_forward.3} parent=1 // pred_region
      _
    $region9: #{attention_c_m_forward.3} parent=1 // pred_fallthru
      _
    // Predicated region
    $region10: #{attention_c_m_forward.3} parent=1 // pred_check
      _
    $region11: #{attention_c_m_forward.3} parent=1 // pred_check_branch
      %30 = sbr.rel (0) target = $region13
    $region12: #{attention_c_m_forward.3} parent=1 // pred_region
      _
    $region13: #{attention_c_m_forward.3} parent=1 // pred_fallthru
      _
    // Predicated region
    $region14: #{attention_c_m_forward.3} parent=1 // pred_check
      _
    $region15: #{attention_c_m_forward.3} parent=1 // pred_check_branch
      %32 = sbr.rel (0) target = $region17
    $region16: #{attention_c_m_forward.3} parent=1 // pred_region
      _
    $region17: #{attention_c_m_forward.3} parent=1 // pred_fallthru
      _
    // Predicated region
    $region18: #{attention_c_m_forward.3} parent=1 // pred_check
      _
    $region19: #{attention_c_m_forward.3} parent=1 // pred_check_branch
      %34 = sbr.rel (0) target = $region21
    $region20: #{attention_c_m_forward.3} parent=1 // pred_region
      _
    $region21: #{attention_c_m_forward.3} parent=1 // pred_fallthru
      _
    // Predicated region
    $region22: #{attention_c_m_forward.3} parent=1 // pred_check
      _
    $region23: #{attention_c_m_forward.3} parent=1 // pred_check_branch
      %36 = sbr.rel (0) target = $region25
    $region24: #{attention_c_m_forward.3} parent=1 // pred_region
      _
    $region25: #{attention_c_m_forward.3} parent=1 // pred_fallthru
      _
    // Predicated region
    $region26: #{attention_c_m_forward.3} parent=1 // pred_check
      _
    $region27: #{attention_c_m_forward.3} parent=1 // pred_check_branch
      %38 = sbr.rel (0) target = $region29
    $region28: #{attention_c_m_forward.3} parent=1 // pred_region
      _
    $region29: #{attention_c_m_forward.3} parent=1 // pred_fallthru
      _
    // Predicated region
    $region30: #{attention_c_m_forward.3} parent=1 // pred_check
      _
    $region31: #{attention_c_m_forward.3} parent=1 // pred_check_branch
      %40 = sbr.rel (0) target = $region33
    $region32: #{attention_c_m_forward.3} parent=1 // pred_region
      %41 = dma.done [#allocation3], 8192
    $region33: #{attention_c_m_forward.3} parent=1 // pred_fallthru
      _
    %v43 = vld [vmem:[#allocation2] sm:$0xff]
    %v44 = vld [vmem:[#allocation2 + $0x8] sm:$0xff]
    %v45 = vld [vmem:[#allocation2 + $0x10] sm:$0xff]
    %v46 = vld [vmem:[#allocation2 + $0x18] sm:$0xff]
    %v47 = vld [vmem:[#allocation2 + $0x20] sm:$0xff]
    %v48 = vld [vmem:[#allocation2 + $0x28] sm:$0xff]
    %v49 = vld [vmem:[#allocation2 + $0x30] sm:$0xff]
    %v50 = vld [vmem:[#allocation2 + $0x38] sm:$0xff]
    %v51 = vld [vmem:[#allocation2 + $0x40] sm:$0xff]
    %v52 = vld [vmem:[#allocation2 + $0x48] sm:$0xff]
    %v53 = vld [vmem:[#allocation2 + $0x50] sm:$0xff]
    %v54 = vld [vmem:[#allocation2 + $0x58] sm:$0xff]
    %v55 = vld [vmem:[#allocation2 + $0x60] sm:$0xff]
    %v56 = vld [vmem:[#allocation2 + $0x68] sm:$0xff]
    %v57 = vld [vmem:[#allocation2 + $0x70] sm:$0xff]
    %v58 = vld [vmem:[#allocation2 + $0x78] sm:$0xff]
    %v59 = vld [vmem:[#allocation2 + $0x80] sm:$0xff]
    %v60 = vld [vmem:[#allocation2 + $0x88] sm:$0xff]
    %v61 = vld [vmem:[#allocation2 + $0x90] sm:$0xff]
    %v62 = vld [vmem:[#allocation2 + $0x98] sm:$0xff]
    %v63 = vld [vmem:[#allocation2 + $0xa0] sm:$0xff]
    %v64 = vld [vmem:[#allocation2 + $0xa8] sm:$0xff]
    %v65 = vld [vmem:[#allocation2 + $0xb0] sm:$0xff]
    %v66 = vld [vmem:[#allocation2 + $0xb8] sm:$0xff]
    %v67 = vld [vmem:[#allocation2 + $0xc0] sm:$0xff]
    %v68 = vld [vmem:[#allocation2 + $0xc8] sm:$0xff]
    %v69 = vld [vmem:[#allocation2 + $0xd0] sm:$0xff]
    %v70 = vld [vmem:[#allocation2 + $0xd8] sm:$0xff]
    %v71 = vld [vmem:[#allocation2 + $0xe0] sm:$0xff]
    %v72 = vld [vmem:[#allocation2 + $0xe8] sm:$0xff]
    %v73 = vld [vmem:[#allocation2 + $0xf0] sm:$0xff]
    %v74 = vld [vmem:[#allocation2 + $0xf8] sm:$0xff]
    %v75 = vld [vmem:[#allocation2 + $0x100] sm:$0xff]
    %v76 = vld [vmem:[#allocation2 + $0x108] sm:$0xff]
    %v77 = vld [vmem:[#allocation2 + $0x110] sm:$0xff]
    %v78 = vld [vmem:[#allocation2 + $0x118] sm:$0xff]
    %v79 = vld [vmem:[#allocation2 + $0x120] sm:$0xff]
    %v80 = vld [vmem:[#allocation2 + $0x128] sm:$0xff]
    %v81 = vld [vmem:[#allocation2 + $0x130] sm:$0xff]
    %v82 = vld [vmem:[#allocation2 + $0x138] sm:$0xff]
    %v83 = vld [vmem:[#allocation2 + $0x140] sm:$0xff]
    %v84 = vld [vmem:[#allocation2 + $0x148] sm:$0xff]
    %v85 = vld [vmem:[#allocation2 + $0x150] sm:$0xff]
    %v86 = vld [vmem:[#allocation2 + $0x158] sm:$0xff]
    %v87 = vld [vmem:[#allocation2 + $0x160] sm:$0xff]
    %v88 = vld [vmem:[#allocation2 + $0x168] sm:$0xff]
    %v89 = vld [vmem:[#allocation2 + $0x170] sm:$0xff]
    %v90 = vld [vmem:[#allocation2 + $0x178] sm:$0xff]
    %v91 = vld [vmem:[#allocation2 + $0x180] sm:$0xff]
    %v92 = vld [vmem:[#allocation2 + $0x188] sm:$0xff]
    %v93 = vld [vmem:[#allocation2 + $0x190] sm:$0xff]
    %v94 = vld [vmem:[#allocation2 + $0x198] sm:$0xff]
    %v95 = vld [vmem:[#allocation2 + $0x1a0] sm:$0xff]
    %v96 = vld [vmem:[#allocation2 + $0x1a8] sm:$0xff]
    %v97 = vld [vmem:[#allocation2 + $0x1b0] sm:$0xff]
    %v98 = vld [vmem:[#allocation2 + $0x1b8] sm:$0xff]
    %v99 = vld [vmem:[#allocation2 + $0x1c0] sm:$0xff]
    %v100 = vld [vmem:[#allocation2 + $0x1c8] sm:$0xff]
    %v101 = vld [vmem:[#allocation2 + $0x1d0] sm:$0xff]
    %v102 = vld [vmem:[#allocation2 + $0x1d8] sm:$0xff]
    %v103 = vld [vmem:[#allocation2 + $0x1e0] sm:$0xff]
    %v104 = vld [vmem:[#allocation2 + $0x1e8] sm:$0xff]
    %v105 = vld [vmem:[#allocation2 + $0x1f0] sm:$0xff]
    %v106 = vld [vmem:[#allocation2 + $0x1f8] sm:$0xff]
    %vm107 = vcmask 523264
    %v108 = vsel %vm107, %v43, 0.0
    %109 = vadd.xlane.f32.xlu0 %v108
    %v110 = vpop.xlane.xlu0 %109
    %v111 = vsel %vm107, %v44, 0.0
    %112 = vadd.xlane.f32.xlu0 %v111
    %v113 = vpop.xlane.xlu0 %112
    %v114 = vsel %vm107, %v45, 0.0
    %115 = vadd.xlane.f32.xlu0 %v114
    %v116 = vpop.xlane.xlu0 %115
    %v117 = vsel %vm107, %v46, 0.0
    %118 = vadd.xlane.f32.xlu0 %v117
    %v119 = vpop.xlane.xlu0 %118
    %v120 = vsel %vm107, %v47, 0.0
    %121 = vadd.xlane.f32.xlu0 %v120
    %v122 = vpop.xlane.xlu0 %121
    %v123 = vsel %vm107, %v48, 0.0
    %124 = vadd.xlane.f32.xlu0 %v123
    %v125 = vpop.xlane.xlu0 %124
    %v126 = vsel %vm107, %v49, 0.0
    %127 = vadd.xlane.f32.xlu0 %v126
    %v128 = vpop.xlane.xlu0 %127
    %v129 = vsel %vm107, %v50, 0.0
    %130 = vadd.xlane.f32.xlu0 %v129
    %v131 = vpop.xlane.xlu0 %130
    %v132 = vsel %vm107, %v51, 0.0
    %133 = vadd.xlane.f32.xlu0 %v132
    %v134 = vpop.xlane.xlu0 %133
    %v135 = vsel %vm107, %v52, 0.0
    %136 = vadd.xlane.f32.xlu0 %v135
    %v137 = vpop.xlane.xlu0 %136
    %v138 = vsel %vm107, %v53, 0.0
    %139 = vadd.xlane.f32.xlu0 %v138
    %v140 = vpop.xlane.xlu0 %139
    %v141 = vsel %vm107, %v54, 0.0
    %142 = vadd.xlane.f32.xlu0 %v141
    %v143 = vpop.xlane.xlu0 %142
    %v144 = vsel %vm107, %v55, 0.0
    %145 = vadd.xlane.f32.xlu0 %v144
    %v146 = vpop.xlane.xlu0 %145
    %v147 = vsel %vm107, %v56, 0.0
    %148 = vadd.xlane.f32.xlu0 %v147
    %v149 = vpop.xlane.xlu0 %148
    %v150 = vsel %vm107, %v57, 0.0
    %151 = vadd.xlane.f32.xlu0 %v150
    %v152 = vpop.xlane.xlu0 %151
    %v153 = vsel %vm107, %v58, 0.0
    %154 = vadd.xlane.f32.xlu0 %v153
    %v155 = vpop.xlane.xlu0 %154
    %v156 = vsel %vm107, %v59, 0.0
    %157 = vadd.xlane.f32.xlu0 %v156
    %v158 = vpop.xlane.xlu0 %157
    %v159 = vsel %vm107, %v60, 0.0
    %160 = vadd.xlane.f32.xlu0 %v159
    %v161 = vpop.xlane.xlu0 %160
    %v162 = vsel %vm107, %v61, 0.0
    %163 = vadd.xlane.f32.xlu0 %v162
    %v164 = vpop.xlane.xlu0 %163
    %v165 = vsel %vm107, %v62, 0.0
    %166 = vadd.xlane.f32.xlu0 %v165
    %v167 = vpop.xlane.xlu0 %166
    %v168 = vsel %vm107, %v63, 0.0
    %169 = vadd.xlane.f32.xlu0 %v168
    %v170 = vpop.xlane.xlu0 %169
    %v171 = vsel %vm107, %v64, 0.0
    %172 = vadd.xlane.f32.xlu0 %v171
    %v173 = vpop.xlane.xlu0 %172
    %v174 = vsel %vm107, %v65, 0.0
    %175 = vadd.xlane.f32.xlu0 %v174
    %v176 = vpop.xlane.xlu0 %175
    %v177 = vsel %vm107, %v66, 0.0
    %178 = vadd.xlane.f32.xlu0 %v177
    %v179 = vpop.xlane.xlu0 %178
    %v180 = vsel %vm107, %v67, 0.0
    %181 = vadd.xlane.f32.xlu0 %v180
    %v182 = vpop.xlane.xlu0 %181
    %v183 = vsel %vm107, %v68, 0.0
    %184 = vadd.xlane.f32.xlu0 %v183
    %v185 = vpop.xlane.xlu0 %184
    %v186 = vsel %vm107, %v69, 0.0
    %187 = vadd.xlane.f32.xlu0 %v186
    %v188 = vpop.xlane.xlu0 %187
    %v189 = vsel %vm107, %v70, 0.0
    %190 = vadd.xlane.f32.xlu0 %v189
    %v191 = vpop.xlane.xlu0 %190
    %v192 = vsel %vm107, %v71, 0.0
    %193 = vadd.xlane.f32.xlu0 %v192
    %v194 = vpop.xlane.xlu0 %193
    %v195 = vsel %vm107, %v72, 0.0
    %196 = vadd.xlane.f32.xlu0 %v195
    %v197 = vpop.xlane.xlu0 %196
    %v198 = vsel %vm107, %v73, 0.0
    %199 = vadd.xlane.f32.xlu0 %v198
    %v200 = vpop.xlane.xlu0 %199
    %v201 = vsel %vm107, %v74, 0.0
    %202 = vadd.xlane.f32.xlu0 %v201
    %v203 = vpop.xlane.xlu0 %202
    %v204 = vsel %vm107, %v75, 0.0
    %205 = vadd.xlane.f32.xlu0 %v204
    %v206 = vpop.xlane.xlu0 %205
    %v207 = vsel %vm107, %v76, 0.0
    %208 = vadd.xlane.f32.xlu0 %v207
    %v209 = vpop.xlane.xlu0 %208
    %v210 = vsel %vm107, %v77, 0.0
    %211 = vadd.xlane.f32.xlu0 %v210
    %v212 = vpop.xlane.xlu0 %211
    %v213 = vsel %vm107, %v78, 0.0
    %214 = vadd.xlane.f32.xlu0 %v213
    %v215 = vpop.xlane.xlu0 %214
    %v216 = vsel %vm107, %v79, 0.0
    %217 = vadd.xlane.f32.xlu0 %v216
    %v218 = vpop.xlane.xlu0 %217
    %v219 = vsel %vm107, %v80, 0.0
    %220 = vadd.xlane.f32.xlu0 %v219
    %v221 = vpop.xlane.xlu0 %220
    %v222 = vsel %vm107, %v81, 0.0
    %223 = vadd.xlane.f32.xlu0 %v222
    %v224 = vpop.xlane.xlu0 %223
    %v225 = vsel %vm107, %v82, 0.0
    %226 = vadd.xlane.f32.xlu0 %v225
    %v227 = vpop.xlane.xlu0 %226
    %v228 = vsel %vm107, %v83, 0.0
    %229 = vadd.xlane.f32.xlu0 %v228
    %v230 = vpop.xlane.xlu0 %229
    %v231 = vsel %vm107, %v84, 0.0
    %232 = vadd.xlane.f32.xlu0 %v231
    %v233 = vpop.xlane.xlu0 %232
    %v234 = vsel %vm107, %v85, 0.0
    %235 = vadd.xlane.f32.xlu0 %v234
    %v236 = vpop.xlane.xlu0 %235
    %v237 = vsel %vm107, %v86, 0.0
    %238 = vadd.xlane.f32.xlu0 %v237
    %v239 = vpop.xlane.xlu0 %238
    %v240 = vsel %vm107, %v87, 0.0
    %241 = vadd.xlane.f32.xlu0 %v240
    %v242 = vpop.xlane.xlu0 %241
    %v243 = vsel %vm107, %v88, 0.0
    %244 = vadd.xlane.f32.xlu0 %v243
    %v245 = vpop.xlane.xlu0 %244
    %v246 = vsel %vm107, %v89, 0.0
    %247 = vadd.xlane.f32.xlu0 %v246
    %v248 = vpop.xlane.xlu0 %247
    %v249 = vsel %vm107, %v90, 0.0
    %250 = vadd.xlane.f32.xlu0 %v249
    %v251 = vpop.xlane.xlu0 %250
    %v252 = vsel %vm107, %v91, 0.0
    %253 = vadd.xlane.f32.xlu0 %v252
    %v254 = vpop.xlane.xlu0 %253
    %v255 = vsel %vm107, %v92, 0.0
    %256 = vadd.xlane.f32.xlu0 %v255
    %v257 = vpop.xlane.xlu0 %256
    %v258 = vsel %vm107, %v93, 0.0
    %259 = vadd.xlane.f32.xlu0 %v258
    %v260 = vpop.xlane.xlu0 %259
    %v261 = vsel %vm107, %v94, 0.0
    %262 = vadd.xlane.f32.xlu0 %v261
    %v263 = vpop.xlane.xlu0 %262
    %v264 = vsel %vm107, %v95, 0.0
    %265 = vadd.xlane.f32.xlu0 %v264
    %v266 = vpop.xlane.xlu0 %265
    %v267 = vsel %vm107, %v96, 0.0
    %268 = vadd.xlane.f32.xlu0 %v267
    %v269 = vpop.xlane.xlu0 %268
    %v270 = vsel %vm107, %v97, 0.0
    %271 = vadd.xlane.f32.xlu0 %v270
    %v272 = vpop.xlane.xlu0 %271
    %v273 = vsel %vm107, %v98, 0.0
    %274 = vadd.xlane.f32.xlu0 %v273
    %v275 = vpop.xlane.xlu0 %274
    %v276 = vsel %vm107, %v99, 0.0
    %277 = vadd.xlane.f32.xlu0 %v276
    %v278 = vpop.xlane.xlu0 %277
    %v279 = vsel %vm107, %v100, 0.0
    %280 = vadd.xlane.f32.xlu0 %v279
    %v281 = vpop.xlane.xlu0 %280
    %v282 = vsel %vm107, %v101, 0.0
    %283 = vadd.xlane.f32.xlu0 %v282
    %v284 = vpop.xlane.xlu0 %283
    %v285 = vsel %vm107, %v102, 0.0
    %286 = vadd.xlane.f32.xlu0 %v285
    %v287 = vpop.xlane.xlu0 %286
    %v288 = vsel %vm107, %v103, 0.0
    %289 = vadd.xlane.f32.xlu0 %v288
    %v290 = vpop.xlane.xlu0 %289
    %v291 = vsel %vm107, %v104, 0.0
    %292 = vadd.xlane.f32.xlu0 %v291
    %v293 = vpop.xlane.xlu0 %292
    %v294 = vsel %vm107, %v105, 0.0
    %295 = vadd.xlane.f32.xlu0 %v294
    %v296 = vpop.xlane.xlu0 %295
    %v297 = vsel %vm107, %v106, 0.0
    %298 = vadd.xlane.f32.xlu0 %v297
    %v299 = vpop.xlane.xlu0 %298
    %v300 = vrcp.pop 64.0
    %v301 = vmul.f32 %v110, %v300
    %v302 = vmul.f32 %v113, %v300
    %v303 = vmul.f32 %v116, %v300
    %v304 = vmul.f32 %v119, %v300
    %v305 = vmul.f32 %v122, %v300
    %v306 = vmul.f32 %v125, %v300
    %v307 = vmul.f32 %v128, %v300
    %v308 = vmul.f32 %v131, %v300
    %v309 = vmul.f32 %v134, %v300
    %v310 = vmul.f32 %v137, %v300
    %v311 = vmul.f32 %v140, %v300
    %v312 = vmul.f32 %v143, %v300
    %v313 = vmul.f32 %v146, %v300
    %v314 = vmul.f32 %v149, %v300
    %v315 = vmul.f32 %v152, %v300
    %v316 = vmul.f32 %v155, %v300
    %v317 = vmul.f32 %v158, %v300
    %v318 = vmul.f32 %v161, %v300
    %v319 = vmul.f32 %v164, %v300
    %v320 = vmul.f32 %v167, %v300
    %v321 = vmul.f32 %v170, %v300
    %v322 = vmul.f32 %v173, %v300
    %v323 = vmul.f32 %v176, %v300
    %v324 = vmul.f32 %v179, %v300
    %v325 = vmul.f32 %v182, %v300
    %v326 = vmul.f32 %v185, %v300
    %v327 = vmul.f32 %v188, %v300
    %v328 = vmul.f32 %v191, %v300
    %v329 = vmul.f32 %v194, %v300
    %v330 = vmul.f32 %v197, %v300
    %v331 = vmul.f32 %v200, %v300
    %v332 = vmul.f32 %v203, %v300
    %v333 = vmul.f32 %v206, %v300
    %v334 = vmul.f32 %v209, %v300
    %v335 = vmul.f32 %v212, %v300
    %v336 = vmul.f32 %v215, %v300
    %v337 = vmul.f32 %v218, %v300
    %v338 = vmul.f32 %v221, %v300
    %v339 = vmul.f32 %v224, %v300
    %v340 = vmul.f32 %v227, %v300
    %v341 = vmul.f32 %v230, %v300
    %v342 = vmul.f32 %v233, %v300
    %v343 = vmul.f32 %v236, %v300
    %v344 = vmul.f32 %v239, %v300
    %v345 = vmul.f32 %v242, %v300
    %v346 = vmul.f32 %v245, %v300
    %v347 = vmul.f32 %v248, %v300
    %v348 = vmul.f32 %v251, %v300
    %v349 = vmul.f32 %v254, %v300
    %v350 = vmul.f32 %v257, %v300
    %v351 = vmul.f32 %v260, %v300
    %v352 = vmul.f32 %v263, %v300
    %v353 = vmul.f32 %v266, %v300
    %v354 = vmul.f32 %v269, %v300
    %v355 = vmul.f32 %v272, %v300
    %v356 = vmul.f32 %v275, %v300
    %v357 = vmul.f32 %v278, %v300
    %v358 = vmul.f32 %v281, %v300
    %v359 = vmul.f32 %v284, %v300
    %v360 = vmul.f32 %v287, %v300
    %v361 = vmul.f32 %v290, %v300
    %v362 = vmul.f32 %v293, %v300
    %v363 = vmul.f32 %v296, %v300
    %v364 = vmul.f32 %v299, %v300
    %v365 = vsub.f32 %v43, %v301
    %v366 = vsub.f32 %v44, %v302
    %v367 = vsub.f32 %v45, %v303
    %v368 = vsub.f32 %v46, %v304
    %v369 = vsub.f32 %v47, %v305
    %v370 = vsub.f32 %v48, %v306
    %v371 = vsub.f32 %v49, %v307
    %v372 = vsub.f32 %v50, %v308
    %v373 = vsub.f32 %v51, %v309
    %v374 = vsub.f32 %v52, %v310
    %v375 = vsub.f32 %v53, %v311
    %v376 = vsub.f32 %v54, %v312
    %v377 = vsub.f32 %v55, %v313
    %v378 = vsub.f32 %v56, %v314
    %v379 = vsub.f32 %v57, %v315
    %v380 = vsub.f32 %v58, %v316
    %v381 = vsub.f32 %v59, %v317
    %v382 = vsub.f32 %v60, %v318
    %v383 = vsub.f32 %v61, %v319
    %v384 = vsub.f32 %v62, %v320
    %v385 = vsub.f32 %v63, %v321
    %v386 = vsub.f32 %v64, %v322
    %v387 = vsub.f32 %v65, %v323
    %v388 = vsub.f32 %v66, %v324
    %v389 = vsub.f32 %v67, %v325
    %v390 = vsub.f32 %v68, %v326
    %v391 = vsub.f32 %v69, %v327
    %v392 = vsub.f32 %v70, %v328
    %v393 = vsub.f32 %v71, %v329
    %v394 = vsub.f32 %v72, %v330
    %v395 = vsub.f32 %v73, %v331
    %v396 = vsub.f32 %v74, %v332
    %v397 = vsub.f32 %v75, %v333
    %v398 = vsub.f32 %v76, %v334
    %v399 = vsub.f32 %v77, %v335
    %v400 = vsub.f32 %v78, %v336
    %v401 = vsub.f32 %v79, %v337
    %v402 = vsub.f32 %v80, %v338
    %v403 = vsub.f32 %v81, %v339
    %v404 = vsub.f32 %v82, %v340
    %v405 = vsub.f32 %v83, %v341
    %v406 = vsub.f32 %v84, %v342
    %v407 = vsub.f32 %v85, %v343
    %v408 = vsub.f32 %v86, %v344
    %v409 = vsub.f32 %v87, %v345
    %v410 = vsub.f32 %v88, %v346
    %v411 = vsub.f32 %v89, %v347
    %v412 = vsub.f32 %v90, %v348
    %v413 = vsub.f32 %v91, %v349
    %v414 = vsub.f32 %v92, %v350
    %v415 = vsub.f32 %v93, %v351
    %v416 = vsub.f32 %v94, %v352
    %v417 = vsub.f32 %v95, %v353
    %v418 = vsub.f32 %v96, %v354
    %v419 = vsub.f32 %v97, %v355
    %v420 = vsub.f32 %v98, %v356
    %v421 = vsub.f32 %v99, %v357
    %v422 = vsub.f32 %v100, %v358
    %v423 = vsub.f32 %v101, %v359
    %v424 = vsub.f32 %v102, %v360
    %v425 = vsub.f32 %v103, %v361
    %v426 = vsub.f32 %v104, %v362
    %v427 = vsub.f32 %v105, %v363
    %v428 = vsub.f32 %v106, %v364
    %v429 = vmul.f32 %v365, %v365
    %v430 = vmul.f32 %v366, %v366
    %v431 = vmul.f32 %v367, %v367
    %v432 = vmul.f32 %v368, %v368
    %v433 = vmul.f32 %v369, %v369
    %v434 = vmul.f32 %v370, %v370
    %v435 = vmul.f32 %v371, %v371
    %v436 = vmul.f32 %v372, %v372
    %v437 = vmul.f32 %v373, %v373
    %v438 = vmul.f32 %v374, %v374
    %v439 = vmul.f32 %v375, %v375
    %v440 = vmul.f32 %v376, %v376
    %v441 = vmul.f32 %v377, %v377
    %v442 = vmul.f32 %v378, %v378
    %v443 = vmul.f32 %v379, %v379
    %v444 = vmul.f32 %v380, %v380
    %v445 = vmul.f32 %v381, %v381
    %v446 = vmul.f32 %v382, %v382
    %v447 = vmul.f32 %v383, %v383
    %v448 = vmul.f32 %v384, %v384
    %v449 = vmul.f32 %v385, %v385
    %v450 = vmul.f32 %v386, %v386
    %v451 = vmul.f32 %v387, %v387
    %v452 = vmul.f32 %v388, %v388
    %v453 = vmul.f32 %v389, %v389
    %v454 = vmul.f32 %v390, %v390
    %v455 = vmul.f32 %v391, %v391
    %v456 = vmul.f32 %v392, %v392
    %v457 = vmul.f32 %v393, %v393
    %v458 = vmul.f32 %v394, %v394
    %v459 = vmul.f32 %v395, %v395
    %v460 = vmul.f32 %v396, %v396
    %v461 = vmul.f32 %v397, %v397
    %v462 = vmul.f32 %v398, %v398
    %v463 = vmul.f32 %v399, %v399
    %v464 = vmul.f32 %v400, %v400
    %v465 = vmul.f32 %v401, %v401
    %v466 = vmul.f32 %v402, %v402
    %v467 = vmul.f32 %v403, %v403
    %v468 = vmul.f32 %v404, %v404
    %v469 = vmul.f32 %v405, %v405
    %v470 = vmul.f32 %v406, %v406
    %v471 = vmul.f32 %v407, %v407
    %v472 = vmul.f32 %v408, %v408
    %v473 = vmul.f32 %v409, %v409
    %v474 = vmul.f32 %v410, %v410
    %v475 = vmul.f32 %v411, %v411
    %v476 = vmul.f32 %v412, %v412
    %v477 = vmul.f32 %v413, %v413
    %v478 = vmul.f32 %v414, %v414
    %v479 = vmul.f32 %v415, %v415
    %v480 = vmul.f32 %v416, %v416
    %v481 = vmul.f32 %v417, %v417
    %v482 = vmul.f32 %v418, %v418
    %v483 = vmul.f32 %v419, %v419
    %v484 = vmul.f32 %v420, %v420
    %v485 = vmul.f32 %v421, %v421
    %v486 = vmul.f32 %v422, %v422
    %v487 = vmul.f32 %v423, %v423
    %v488 = vmul.f32 %v424, %v424
    %v489 = vmul.f32 %v425, %v425
    %v490 = vmul.f32 %v426, %v426
    %v491 = vmul.f32 %v427, %v427
    %v492 = vmul.f32 %v428, %v428
    %v493 = vsel %vm107, %v429, 0.0
    %494 = vadd.xlane.f32.xlu0 %v493
    %v495 = vpop.xlane.xlu0 %494
    %v496 = vsel %vm107, %v430, 0.0
    %497 = vadd.xlane.f32.xlu0 %v496
    %v498 = vpop.xlane.xlu0 %497
    %v499 = vsel %vm107, %v431, 0.0
    %500 = vadd.xlane.f32.xlu0 %v499
    %v501 = vpop.xlane.xlu0 %500
    %v502 = vsel %vm107, %v432, 0.0
    %503 = vadd.xlane.f32.xlu0 %v502
    %v504 = vpop.xlane.xlu0 %503
    %v505 = vsel %vm107, %v433, 0.0
    %506 = vadd.xlane.f32.xlu0 %v505
    %v507 = vpop.xlane.xlu0 %506
    %v508 = vsel %vm107, %v434, 0.0
    %509 = vadd.xlane.f32.xlu0 %v508
    %v510 = vpop.xlane.xlu0 %509
    %v511 = vsel %vm107, %v435, 0.0
    %512 = vadd.xlane.f32.xlu0 %v511
    %v513 = vpop.xlane.xlu0 %512
    %v514 = vsel %vm107, %v436, 0.0
    %515 = vadd.xlane.f32.xlu0 %v514
    %v516 = vpop.xlane.xlu0 %515
    %v517 = vsel %vm107, %v437, 0.0
    %518 = vadd.xlane.f32.xlu0 %v517
    %v519 = vpop.xlane.xlu0 %518
    %v520 = vsel %vm107, %v438, 0.0
    %521 = vadd.xlane.f32.xlu0 %v520
    %v522 = vpop.xlane.xlu0 %521
    %v523 = vsel %vm107, %v439, 0.0
    %524 = vadd.xlane.f32.xlu0 %v523
    %v525 = vpop.xlane.xlu0 %524
    %v526 = vsel %vm107, %v440, 0.0
    %527 = vadd.xlane.f32.xlu0 %v526
    %v528 = vpop.xlane.xlu0 %527
    %v529 = vsel %vm107, %v441, 0.0
    %530 = vadd.xlane.f32.xlu0 %v529
    %v531 = vpop.xlane.xlu0 %530
    %v532 = vsel %vm107, %v442, 0.0
    %533 = vadd.xlane.f32.xlu0 %v532
    %v534 = vpop.xlane.xlu0 %533
    %v535 = vsel %vm107, %v443, 0.0
    %536 = vadd.xlane.f32.xlu0 %v535
    %v537 = vpop.xlane.xlu0 %536
    %v538 = vsel %vm107, %v444, 0.0
    %539 = vadd.xlane.f32.xlu0 %v538
    %v540 = vpop.xlane.xlu0 %539
    %v541 = vsel %vm107, %v445, 0.0
    %542 = vadd.xlane.f32.xlu0 %v541
    %v543 = vpop.xlane.xlu0 %542
    %v544 = vsel %vm107, %v446, 0.0
    %545 = vadd.xlane.f32.xlu0 %v544
    %v546 = vpop.xlane.xlu0 %545
    %v547 = vsel %vm107, %v447, 0.0
    %548 = vadd.xlane.f32.xlu0 %v547
    %v549 = vpop.xlane.xlu0 %548
    %v550 = vsel %vm107, %v448, 0.0
    %551 = vadd.xlane.f32.xlu0 %v550
    %v552 = vpop.xlane.xlu0 %551
    %v553 = vsel %vm107, %v449, 0.0
    %554 = vadd.xlane.f32.xlu0 %v553
    %v555 = vpop.xlane.xlu0 %554
    %v556 = vsel %vm107, %v450, 0.0
    %557 = vadd.xlane.f32.xlu0 %v556
    %v558 = vpop.xlane.xlu0 %557
    %v559 = vsel %vm107, %v451, 0.0
    %560 = vadd.xlane.f32.xlu0 %v559
    %v561 = vpop.xlane.xlu0 %560
    %v562 = vsel %vm107, %v452, 0.0
    %563 = vadd.xlane.f32.xlu0 %v562
    %v564 = vpop.xlane.xlu0 %563
    %v565 = vsel %vm107, %v453, 0.0
    %566 = vadd.xlane.f32.xlu0 %v565
    %v567 = vpop.xlane.xlu0 %566
    %v568 = vsel %vm107, %v454, 0.0
    %569 = vadd.xlane.f32.xlu0 %v568
    %v570 = vpop.xlane.xlu0 %569
    %v571 = vsel %vm107, %v455, 0.0
    %572 = vadd.xlane.f32.xlu0 %v571
    %v573 = vpop.xlane.xlu0 %572
    %v574 = vsel %vm107, %v456, 0.0
    %575 = vadd.xlane.f32.xlu0 %v574
    %v576 = vpop.xlane.xlu0 %575
    %v577 = vsel %vm107, %v457, 0.0
    %578 = vadd.xlane.f32.xlu0 %v577
    %v579 = vpop.xlane.xlu0 %578
    %v580 = vsel %vm107, %v458, 0.0
    %581 = vadd.xlane.f32.xlu0 %v580
    %v582 = vpop.xlane.xlu0 %581
    %v583 = vsel %vm107, %v459, 0.0
    %584 = vadd.xlane.f32.xlu0 %v583
    %v585 = vpop.xlane.xlu0 %584
    %v586 = vsel %vm107, %v460, 0.0
    %587 = vadd.xlane.f32.xlu0 %v586
    %v588 = vpop.xlane.xlu0 %587
    %v589 = vsel %vm107, %v461, 0.0
    %590 = vadd.xlane.f32.xlu0 %v589
    %v591 = vpop.xlane.xlu0 %590
    %v592 = vsel %vm107, %v462, 0.0
    %593 = vadd.xlane.f32.xlu0 %v592
    %v594 = vpop.xlane.xlu0 %593
    %v595 = vsel %vm107, %v463, 0.0
    %596 = vadd.xlane.f32.xlu0 %v595
    %v597 = vpop.xlane.xlu0 %596
    %v598 = vsel %vm107, %v464, 0.0
    %599 = vadd.xlane.f32.xlu0 %v598
    %v600 = vpop.xlane.xlu0 %599
    %v601 = vsel %vm107, %v465, 0.0
    %602 = vadd.xlane.f32.xlu0 %v601
    %v603 = vpop.xlane.xlu0 %602
    %v604 = vsel %vm107, %v466, 0.0
    %605 = vadd.xlane.f32.xlu0 %v604
    %v606 = vpop.xlane.xlu0 %605
    %v607 = vsel %vm107, %v467, 0.0
    %608 = vadd.xlane.f32.xlu0 %v607
    %v609 = vpop.xlane.xlu0 %608
    %v610 = vsel %vm107, %v468, 0.0
    %611 = vadd.xlane.f32.xlu0 %v610
    %v612 = vpop.xlane.xlu0 %611
    %v613 = vsel %vm107, %v469, 0.0
    %614 = vadd.xlane.f32.xlu0 %v613
    %v615 = vpop.xlane.xlu0 %614
    %v616 = vsel %vm107, %v470, 0.0
    %617 = vadd.xlane.f32.xlu0 %v616
    %v618 = vpop.xlane.xlu0 %617
    %v619 = vsel %vm107, %v471, 0.0
    %620 = vadd.xlane.f32.xlu0 %v619
    %v621 = vpop.xlane.xlu0 %620
    %v622 = vsel %vm107, %v472, 0.0
    %623 = vadd.xlane.f32.xlu0 %v622
    %v624 = vpop.xlane.xlu0 %623
    %v625 = vsel %vm107, %v473, 0.0
    %626 = vadd.xlane.f32.xlu0 %v625
    %v627 = vpop.xlane.xlu0 %626
    %v628 = vsel %vm107, %v474, 0.0
    %629 = vadd.xlane.f32.xlu0 %v628
    %v630 = vpop.xlane.xlu0 %629
    %v631 = vsel %vm107, %v475, 0.0
    %632 = vadd.xlane.f32.xlu0 %v631
    %v633 = vpop.xlane.xlu0 %632
    %v634 = vsel %vm107, %v476, 0.0
    %635 = vadd.xlane.f32.xlu0 %v634
    %v636 = vpop.xlane.xlu0 %635
    %v637 = vsel %vm107, %v477, 0.0
    %638 = vadd.xlane.f32.xlu0 %v637
    %v639 = vpop.xlane.xlu0 %638
    %v640 = vsel %vm107, %v478, 0.0
    %641 = vadd.xlane.f32.xlu0 %v640
    %v642 = vpop.xlane.xlu0 %641
    %v643 = vsel %vm107, %v479, 0.0
    %644 = vadd.xlane.f32.xlu0 %v643
    %v645 = vpop.xlane.xlu0 %644
    %v646 = vsel %vm107, %v480, 0.0
    %647 = vadd.xlane.f32.xlu0 %v646
    %v648 = vpop.xlane.xlu0 %647
    %v649 = vsel %vm107, %v481, 0.0
    %650 = vadd.xlane.f32.xlu0 %v649
    %v651 = vpop.xlane.xlu0 %650
    %v652 = vsel %vm107, %v482, 0.0
    %653 = vadd.xlane.f32.xlu0 %v652
    %v654 = vpop.xlane.xlu0 %653
    %v655 = vsel %vm107, %v483, 0.0
    %656 = vadd.xlane.f32.xlu0 %v655
    %v657 = vpop.xlane.xlu0 %656
    %v658 = vsel %vm107, %v484, 0.0
    %659 = vadd.xlane.f32.xlu0 %v658
    %v660 = vpop.xlane.xlu0 %659
    %v661 = vsel %vm107, %v485, 0.0
    %662 = vadd.xlane.f32.xlu0 %v661
    %v663 = vpop.xlane.xlu0 %662
    %v664 = vsel %vm107, %v486, 0.0
    %665 = vadd.xlane.f32.xlu0 %v664
    %v666 = vpop.xlane.xlu0 %665
    %v667 = vsel %vm107, %v487, 0.0
    %668 = vadd.xlane.f32.xlu0 %v667
    %v669 = vpop.xlane.xlu0 %668
    %v670 = vsel %vm107, %v488, 0.0
    %671 = vadd.xlane.f32.xlu0 %v670
    %v672 = vpop.xlane.xlu0 %671
    %v673 = vsel %vm107, %v489, 0.0
    %674 = vadd.xlane.f32.xlu0 %v673
    %v675 = vpop.xlane.xlu0 %674
    %v676 = vsel %vm107, %v490, 0.0
    %677 = vadd.xlane.f32.xlu0 %v676
    %v678 = vpop.xlane.xlu0 %677
    %v679 = vsel %vm107, %v491, 0.0
    %680 = vadd.xlane.f32.xlu0 %v679
    %v681 = vpop.xlane.xlu0 %680
    %v682 = vsel %vm107, %v492, 0.0
    %683 = vadd.xlane.f32.xlu0 %v682
    %v684 = vpop.xlane.xlu0 %683
    %v685 = vmul.f32 %v495, %v300
    %v686 = vmul.f32 %v498, %v300
    %v687 = vmul.f32 %v501, %v300
    %v688 = vmul.f32 %v504, %v300
    %v689 = vmul.f32 %v507, %v300
    %v690 = vmul.f32 %v510, %v300
    %v691 = vmul.f32 %v513, %v300
    %v692 = vmul.f32 %v516, %v300
    %v693 = vmul.f32 %v519, %v300
    %v694 = vmul.f32 %v522, %v300
    %v695 = vmul.f32 %v525, %v300
    %v696 = vmul.f32 %v528, %v300
    %v697 = vmul.f32 %v531, %v300
    %v698 = vmul.f32 %v534, %v300
    %v699 = vmul.f32 %v537, %v300
    %v700 = vmul.f32 %v540, %v300
    %v701 = vmul.f32 %v543, %v300
    %v702 = vmul.f32 %v546, %v300
    %v703 = vmul.f32 %v549, %v300
    %v704 = vmul.f32 %v552, %v300
    %v705 = vmul.f32 %v555, %v300
    %v706 = vmul.f32 %v558, %v300
    %v707 = vmul.f32 %v561, %v300
    %v708 = vmul.f32 %v564, %v300
    %v709 = vmul.f32 %v567, %v300
    %v710 = vmul.f32 %v570, %v300
    %v711 = vmul.f32 %v573, %v300
    %v712 = vmul.f32 %v576, %v300
    %v713 = vmul.f32 %v579, %v300
    %v714 = vmul.f32 %v582, %v300
    %v715 = vmul.f32 %v585, %v300
    %v716 = vmul.f32 %v588, %v300
    %v717 = vmul.f32 %v591, %v300
    %v718 = vmul.f32 %v594, %v300
    %v719 = vmul.f32 %v597, %v300
    %v720 = vmul.f32 %v600, %v300
    %v721 = vmul.f32 %v603, %v300
    %v722 = vmul.f32 %v606, %v300
    %v723 = vmul.f32 %v609, %v300
    %v724 = vmul.f32 %v612, %v300
    %v725 = vmul.f32 %v615, %v300
    %v726 = vmul.f32 %v618, %v300
    %v727 = vmul.f32 %v621, %v300
    %v728 = vmul.f32 %v624, %v300
    %v729 = vmul.f32 %v627, %v300
    %v730 = vmul.f32 %v630, %v300
    %v731 = vmul.f32 %v633, %v300
    %v732 = vmul.f32 %v636, %v300
    %v733 = vmul.f32 %v639, %v300
    %v734 = vmul.f32 %v642, %v300
    %v735 = vmul.f32 %v645, %v300
    %v736 = vmul.f32 %v648, %v300
    %v737 = vmul.f32 %v651, %v300
    %v738 = vmul.f32 %v654, %v300
    %v739 = vmul.f32 %v657, %v300
    %v740 = vmul.f32 %v660, %v300
    %v741 = vmul.f32 %v663, %v300
    %v742 = vmul.f32 %v666, %v300
    %v743 = vmul.f32 %v669, %v300
    %v744 = vmul.f32 %v672, %v300
    %v745 = vmul.f32 %v675, %v300
    %v746 = vmul.f32 %v678, %v300
    %v747 = vmul.f32 %v681, %v300
    %v748 = vmul.f32 %v684, %v300
    %v749 = vadd.f32 %v685, 1e-05
    %v750 = vadd.f32 %v686, 1e-05
    %v751 = vadd.f32 %v687, 1e-05
    %v752 = vadd.f32 %v688, 1e-05
    %v753 = vadd.f32 %v689, 1e-05
    %v754 = vadd.f32 %v690, 1e-05
    %v755 = vadd.f32 %v691, 1e-05
    %v756 = vadd.f32 %v692, 1e-05
    %v757 = vadd.f32 %v693, 1e-05
    %v758 = vadd.f32 %v694, 1e-05
    %v759 = vadd.f32 %v695, 1e-05
    %v760 = vadd.f32 %v696, 1e-05
    %v761 = vadd.f32 %v697, 1e-05
    %v762 = vadd.f32 %v698, 1e-05
    %v763 = vadd.f32 %v699, 1e-05
    %v764 = vadd.f32 %v700, 1e-05
    %v765 = vadd.f32 %v701, 1e-05
    %v766 = vadd.f32 %v702, 1e-05
    %v767 = vadd.f32 %v703, 1e-05
    %v768 = vadd.f32 %v704, 1e-05
    %v769 = vadd.f32 %v705, 1e-05
    %v770 = vadd.f32 %v706, 1e-05
    %v771 = vadd.f32 %v707, 1e-05
    %v772 = vadd.f32 %v708, 1e-05
    %v773 = vadd.f32 %v709, 1e-05
    %v774 = vadd.f32 %v710, 1e-05
    %v775 = vadd.f32 %v711, 1e-05
    %v776 = vadd.f32 %v712, 1e-05
    %v777 = vadd.f32 %v713, 1e-05
    %v778 = vadd.f32 %v714, 1e-05
    %v779 = vadd.f32 %v715, 1e-05
    %v780 = vadd.f32 %v716, 1e-05
    %v781 = vadd.f32 %v717, 1e-05
    %v782 = vadd.f32 %v718, 1e-05
    %v783 = vadd.f32 %v719, 1e-05
    %v784 = vadd.f32 %v720, 1e-05
    %v785 = vadd.f32 %v721, 1e-05
    %v786 = vadd.f32 %v722, 1e-05
    %v787 = vadd.f32 %v723, 1e-05
    %v788 = vadd.f32 %v724, 1e-05
    %v789 = vadd.f32 %v725, 1e-05
    %v790 = vadd.f32 %v726, 1e-05
    %v791 = vadd.f32 %v727, 1e-05
    %v792 = vadd.f32 %v728, 1e-05
    %v793 = vadd.f32 %v729, 1e-05
    %v794 = vadd.f32 %v730, 1e-05
    %v795 = vadd.f32 %v731, 1e-05
    %v796 = vadd.f32 %v732, 1e-05
    %v797 = vadd.f32 %v733, 1e-05
    %v798 = vadd.f32 %v734, 1e-05
    %v799 = vadd.f32 %v735, 1e-05
    %v800 = vadd.f32 %v736, 1e-05
    %v801 = vadd.f32 %v737, 1e-05
    %v802 = vadd.f32 %v738, 1e-05
    %v803 = vadd.f32 %v739, 1e-05
    %v804 = vadd.f32 %v740, 1e-05
    %v805 = vadd.f32 %v741, 1e-05
    %v806 = vadd.f32 %v742, 1e-05
    %v807 = vadd.f32 %v743, 1e-05
    %v808 = vadd.f32 %v744, 1e-05
    %v809 = vadd.f32 %v745, 1e-05
    %v810 = vadd.f32 %v746, 1e-05
    %v811 = vadd.f32 %v747, 1e-05
    %v812 = vadd.f32 %v748, 1e-05
    %v813 = vrsqrt.pop %v749
    %v814 = vrsqrt.pop %v750
    %v815 = vrsqrt.pop %v751
    %v816 = vrsqrt.pop %v752
    %v817 = vrsqrt.pop %v753
    %v818 = vrsqrt.pop %v754
    %v819 = vrsqrt.pop %v755
    %v820 = vrsqrt.pop %v756
    %v821 = vrsqrt.pop %v757
    %v822 = vrsqrt.pop %v758
    %v823 = vrsqrt.pop %v759
    %v824 = vrsqrt.pop %v760
    %v825 = vrsqrt.pop %v761
    %v826 = vrsqrt.pop %v762
    %v827 = vrsqrt.pop %v763
    %v828 = vrsqrt.pop %v764
    %v829 = vrsqrt.pop %v765
    %v830 = vrsqrt.pop %v766
    %v831 = vrsqrt.pop %v767
    %v832 = vrsqrt.pop %v768
    %v833 = vrsqrt.pop %v769
    %v834 = vrsqrt.pop %v770
    %v835 = vrsqrt.pop %v771
    %v836 = vrsqrt.pop %v772
    %v837 = vrsqrt.pop %v773
    %v838 = vrsqrt.pop %v774
    %v839 = vrsqrt.pop %v775
    %v840 = vrsqrt.pop %v776
    %v841 = vrsqrt.pop %v777
    %v842 = vrsqrt.pop %v778
    %v843 = vrsqrt.pop %v779
    %v844 = vrsqrt.pop %v780
    %v845 = vrsqrt.pop %v781
    %v846 = vrsqrt.pop %v782
    %v847 = vrsqrt.pop %v783
    %v848 = vrsqrt.pop %v784
    %v849 = vrsqrt.pop %v785
    %v850 = vrsqrt.pop %v786
    %v851 = vrsqrt.pop %v787
    %v852 = vrsqrt.pop %v788
    %v853 = vrsqrt.pop %v789
    %v854 = vrsqrt.pop %v790
    %v855 = vrsqrt.pop %v791
    %v856 = vrsqrt.pop %v792
    %v857 = vrsqrt.pop %v793
    %v858 = vrsqrt.pop %v794
    %v859 = vrsqrt.pop %v795
    %v860 = vrsqrt.pop %v796
    %v861 = vrsqrt.pop %v797
    %v862 = vrsqrt.pop %v798
    %v863 = vrsqrt.pop %v799
    %v864 = vrsqrt.pop %v800
    %v865 = vrsqrt.pop %v801
    %v866 = vrsqrt.pop %v802
    %v867 = vrsqrt.pop %v803
    %v868 = vrsqrt.pop %v804
    %v869 = vrsqrt.pop %v805
    %v870 = vrsqrt.pop %v806
    %v871 = vrsqrt.pop %v807
    %v872 = vrsqrt.pop %v808
    %v873 = vrsqrt.pop %v809
    %v874 = vrsqrt.pop %v810
    %v875 = vrsqrt.pop %v811
    %v876 = vrsqrt.pop %v812
    %v877 = vmul.f32 %v365, %v813
    %v878 = vmul.f32 %v366, %v814
    %v879 = vmul.f32 %v367, %v815
    %v880 = vmul.f32 %v368, %v816
    %v881 = vmul.f32 %v369, %v817
    %v882 = vmul.f32 %v370, %v818
    %v883 = vmul.f32 %v371, %v819
    %v884 = vmul.f32 %v372, %v820
    %v885 = vmul.f32 %v373, %v821
    %v886 = vmul.f32 %v374, %v822
    %v887 = vmul.f32 %v375, %v823
    %v888 = vmul.f32 %v376, %v824
    %v889 = vmul.f32 %v377, %v825
    %v890 = vmul.f32 %v378, %v826
    %v891 = vmul.f32 %v379, %v827
    %v892 = vmul.f32 %v380, %v828
    %v893 = vmul.f32 %v381, %v829
    %v894 = vmul.f32 %v382, %v830
    %v895 = vmul.f32 %v383, %v831
    %v896 = vmul.f32 %v384, %v832
    %v897 = vmul.f32 %v385, %v833
    %v898 = vmul.f32 %v386, %v834
    %v899 = vmul.f32 %v387, %v835
    %v900 = vmul.f32 %v388, %v836
    %v901 = vmul.f32 %v389, %v837
    %v902 = vmul.f32 %v390, %v838
    %v903 = vmul.f32 %v391, %v839
    %v904 = vmul.f32 %v392, %v840
    %v905 = vmul.f32 %v393, %v841
    %v906 = vmul.f32 %v394, %v842
    %v907 = vmul.f32 %v395, %v843
    %v908 = vmul.f32 %v396, %v844
    %v909 = vmul.f32 %v397, %v845
    %v910 = vmul.f32 %v398, %v846
    %v911 = vmul.f32 %v399, %v847
    %v912 = vmul.f32 %v400, %v848
    %v913 = vmul.f32 %v401, %v849
    %v914 = vmul.f32 %v402, %v850
    %v915 = vmul.f32 %v403, %v851
    %v916 = vmul.f32 %v404, %v852
    %v917 = vmul.f32 %v405, %v853
    %v918 = vmul.f32 %v406, %v854
    %v919 = vmul.f32 %v407, %v855
    %v920 = vmul.f32 %v408, %v856
    %v921 = vmul.f32 %v409, %v857
    %v922 = vmul.f32 %v410, %v858
    %v923 = vmul.f32 %v411, %v859
    %v924 = vmul.f32 %v412, %v860
    %v925 = vmul.f32 %v413, %v861
    %v926 = vmul.f32 %v414, %v862
    %v927 = vmul.f32 %v415, %v863
    %v928 = vmul.f32 %v416, %v864
    %v929 = vmul.f32 %v417, %v865
    %v930 = vmul.f32 %v418, %v866
    %v931 = vmul.f32 %v419, %v867
    %v932 = vmul.f32 %v420, %v868
    %v933 = vmul.f32 %v421, %v869
    %v934 = vmul.f32 %v422, %v870
    %v935 = vmul.f32 %v423, %v871
    %v936 = vmul.f32 %v424, %v872
    %v937 = vmul.f32 %v425, %v873
    %v938 = vmul.f32 %v426, %v874
    %v939 = vmul.f32 %v427, %v875
    %v940 = vmul.f32 %v428, %v876
    %v941 = vld [vmem:[%s1] sm:$0x1]
    %v943 = vlaneseq
    %v944 = vshrl.u32 %v943, 7
    %v945 = vsub.s32 0, %v944
    %v946 = vrot.slane %v941, %v945
    %v948 = vmul.f32 %v877, %v946
    %v949 = vmul.f32 %v878, %v946
    %v950 = vmul.f32 %v879, %v946
    %v951 = vmul.f32 %v880, %v946
    %v952 = vmul.f32 %v881, %v946
    %v953 = vmul.f32 %v882, %v946
    %v954 = vmul.f32 %v883, %v946
    %v955 = vmul.f32 %v884, %v946
    %v956 = vmul.f32 %v885, %v946
    %v957 = vmul.f32 %v886, %v946
    %v958 = vmul.f32 %v887, %v946
    %v959 = vmul.f32 %v888, %v946
    %v960 = vmul.f32 %v889, %v946
    %v961 = vmul.f32 %v890, %v946
    %v962 = vmul.f32 %v891, %v946
    %v963 = vmul.f32 %v892, %v946
    %v964 = vmul.f32 %v893, %v946
    %v965 = vmul.f32 %v894, %v946
    %v966 = vmul.f32 %v895, %v946
    %v967 = vmul.f32 %v896, %v946
    %v968 = vmul.f32 %v897, %v946
    %v969 = vmul.f32 %v898, %v946
    %v970 = vmul.f32 %v899, %v946
    %v971 = vmul.f32 %v900, %v946
    %v972 = vmul.f32 %v901, %v946
    %v973 = vmul.f32 %v902, %v946
    %v974 = vmul.f32 %v903, %v946
    %v975 = vmul.f32 %v904, %v946
    %v976 = vmul.f32 %v905, %v946
    %v977 = vmul.f32 %v906, %v946
    %v978 = vmul.f32 %v907, %v946
    %v979 = vmul.f32 %v908, %v946
    %v980 = vmul.f32 %v909, %v946
    %v981 = vmul.f32 %v910, %v946
    %v982 = vmul.f32 %v911, %v946
    %v983 = vmul.f32 %v912, %v946
    %v984 = vmul.f32 %v913, %v946
    %v985 = vmul.f32 %v914, %v946
    %v986 = vmul.f32 %v915, %v946
    %v987 = vmul.f32 %v916, %v946
    %v988 = vmul.f32 %v917, %v946
    %v989 = vmul.f32 %v918, %v946
    %v990 = vmul.f32 %v919, %v946
    %v991 = vmul.f32 %v920, %v946
    %v992 = vmul.f32 %v921, %v946
    %v993 = vmul.f32 %v922, %v946
    %v994 = vmul.f32 %v923, %v946
    %v995 = vmul.f32 %v924, %v946
    %v996 = vmul.f32 %v925, %v946
    %v997 = vmul.f32 %v926, %v946
    %v998 = vmul.f32 %v927, %v946
    %v999 = vmul.f32 %v928, %v946
    %v1000 = vmul.f32 %v929, %v946
    %v1001 = vmul.f32 %v930, %v946
    %v1002 = vmul.f32 %v931, %v946
    %v1003 = vmul.f32 %v932, %v946
    %v1004 = vmul.f32 %v933, %v946
    %v1005 = vmul.f32 %v934, %v946
    %v1006 = vmul.f32 %v935, %v946
    %v1007 = vmul.f32 %v936, %v946
    %v1008 = vmul.f32 %v937, %v946
    %v1009 = vmul.f32 %v938, %v946
    %v1010 = vmul.f32 %v939, %v946
    %v1011 = vmul.f32 %v940, %v946
    %v1012 = vld [vmem:[%s2] sm:$0x1]
    %v1014 = vlaneseq
    %v1015 = vshrl.u32 %v1014, 7
    %v1016 = vsub.s32 0, %v1015
    %v1017 = vrot.slane %v1012, %v1016
    %v1019 = vadd.f32 %v948, %v1017
    %v1020 = vadd.f32 %v949, %v1017
    %v1021 = vadd.f32 %v950, %v1017
    %v1022 = vadd.f32 %v951, %v1017
    %v1023 = vadd.f32 %v952, %v1017
    %v1024 = vadd.f32 %v953, %v1017
    %v1025 = vadd.f32 %v954, %v1017
    %v1026 = vadd.f32 %v955, %v1017
    %v1027 = vadd.f32 %v956, %v1017
    %v1028 = vadd.f32 %v957, %v1017
    %v1029 = vadd.f32 %v958, %v1017
    %v1030 = vadd.f32 %v959, %v1017
    %v1031 = vadd.f32 %v960, %v1017
    %v1032 = vadd.f32 %v961, %v1017
    %v1033 = vadd.f32 %v962, %v1017
    %v1034 = vadd.f32 %v963, %v1017
    %v1035 = vadd.f32 %v964, %v1017
    %v1036 = vadd.f32 %v965, %v1017
    %v1037 = vadd.f32 %v966, %v1017
    %v1038 = vadd.f32 %v967, %v1017
    %v1039 = vadd.f32 %v968, %v1017
    %v1040 = vadd.f32 %v969, %v1017
    %v1041 = vadd.f32 %v970, %v1017
    %v1042 = vadd.f32 %v971, %v1017
    %v1043 = vadd.f32 %v972, %v1017
    %v1044 = vadd.f32 %v973, %v1017
    %v1045 = vadd.f32 %v974, %v1017
    %v1046 = vadd.f32 %v975, %v1017
    %v1047 = vadd.f32 %v976, %v1017
    %v1048 = vadd.f32 %v977, %v1017
    %v1049 = vadd.f32 %v978, %v1017
    %v1050 = vadd.f32 %v979, %v1017
    %v1051 = vadd.f32 %v980, %v1017
    %v1052 = vadd.f32 %v981, %v1017
    %v1053 = vadd.f32 %v982, %v1017
    %v1054 = vadd.f32 %v983, %v1017
    %v1055 = vadd.f32 %v984, %v1017
    %v1056 = vadd.f32 %v985, %v1017
    %v1057 = vadd.f32 %v986, %v1017
    %v1058 = vadd.f32 %v987, %v1017
    %v1059 = vadd.f32 %v988, %v1017
    %v1060 = vadd.f32 %v989, %v1017
    %v1061 = vadd.f32 %v990, %v1017
    %v1062 = vadd.f32 %v991, %v1017
    %v1063 = vadd.f32 %v992, %v1017
    %v1064 = vadd.f32 %v993, %v1017
    %v1065 = vadd.f32 %v994, %v1017
    %v1066 = vadd.f32 %v995, %v1017
    %v1067 = vadd.f32 %v996, %v1017
    %v1068 = vadd.f32 %v997, %v1017
    %v1069 = vadd.f32 %v998, %v1017
    %v1070 = vadd.f32 %v999, %v1017
    %v1071 = vadd.f32 %v1000, %v1017
    %v1072 = vadd.f32 %v1001, %v1017
    %v1073 = vadd.f32 %v1002, %v1017
    %v1074 = vadd.f32 %v1003, %v1017
    %v1075 = vadd.f32 %v1004, %v1017
    %v1076 = vadd.f32 %v1005, %v1017
    %v1077 = vadd.f32 %v1006, %v1017
    %v1078 = vadd.f32 %v1007, %v1017
    %v1079 = vadd.f32 %v1008, %v1017
    %v1080 = vadd.f32 %v1009, %v1017
    %v1081 = vadd.f32 %v1010, %v1017
    %v1082 = vadd.f32 %v1011, %v1017
    %v1083 = vpack.c.bf16 %v1020, %v1019
    %v1084 = vpack.c.bf16 %v1022, %v1021
    %v1085 = vpack.c.bf16 %v1024, %v1023
    %v1086 = vpack.c.bf16 %v1026, %v1025
    %v1087 = vpack.c.bf16 %v1028, %v1027
    %v1088 = vpack.c.bf16 %v1030, %v1029
    %v1089 = vpack.c.bf16 %v1032, %v1031
    %v1090 = vpack.c.bf16 %v1034, %v1033
    %v1091 = vpack.c.bf16 %v1036, %v1035
    %v1092 = vpack.c.bf16 %v1038, %v1037
    %v1093 = vpack.c.bf16 %v1040, %v1039
    %v1094 = vpack.c.bf16 %v1042, %v1041
    %v1095 = vpack.c.bf16 %v1044, %v1043
    %v1096 = vpack.c.bf16 %v1046, %v1045
    %v1097 = vpack.c.bf16 %v1048, %v1047
    %v1098 = vpack.c.bf16 %v1050, %v1049
    %v1099 = vpack.c.bf16 %v1052, %v1051
    %v1100 = vpack.c.bf16 %v1054, %v1053
    %v1101 = vpack.c.bf16 %v1056, %v1055
    %v1102 = vpack.c.bf16 %v1058, %v1057
    %v1103 = vpack.c.bf16 %v1060, %v1059
    %v1104 = vpack.c.bf16 %v1062, %v1061
    %v1105 = vpack.c.bf16 %v1064, %v1063
    %v1106 = vpack.c.bf16 %v1066, %v1065
    %v1107 = vpack.c.bf16 %v1068, %v1067
    %v1108 = vpack.c.bf16 %v1070, %v1069
    %v1109 = vpack.c.bf16 %v1072, %v1071
    %v1110 = vpack.c.bf16 %v1074, %v1073
    %v1111 = vpack.c.bf16 %v1076, %v1075
    %v1112 = vpack.c.bf16 %v1078, %v1077
    %v1113 = vpack.c.bf16 %v1080, %v1079
    %v1114 = vpack.c.bf16 %v1082, %v1081
    %v1115 = vld [vmem:[%s3] sm:$0xf]
    %v1116 = vld [vmem:[%s3 + $0x4] sm:$0xf]
    %v1117 = vld [vmem:[%s3 + $0x8] sm:$0xf]
    %v1118 = vld [vmem:[%s3 + $0xc] sm:$0xf]
    %v1119 = vld [vmem:[%s3 + $0x10] sm:$0xf]
    %v1120 = vld [vmem:[%s3 + $0x14] sm:$0xf]
    %v1121 = vld [vmem:[%s3 + $0x18] sm:$0xf]
    %v1122 = vld [vmem:[%s3 + $0x1c] sm:$0xf]
    %v1123 = vld [vmem:[%s4] sm:$0x1]
    %v1125 = vlaneseq
    %v1126 = vshrl.u32 %v1125, 7
    %v1127 = vsub.s32 0, %v1126
    %v1128 = vrot.slane %v1123, %v1127
    %v1138 = vunpack.c.l.b16 %v1115
    %v1139 = vunpack.c.l.b16 %v1116
    %v1140 = vunpack.c.l.b16 %v1117
    %v1141 = vunpack.c.l.b16 %v1118
    %v1142 = vunpack.c.l.b16 %v1119
    %v1143 = vunpack.c.l.b16 %v1120
    %v1144 = vunpack.c.l.b16 %v1121
    %v1145 = vunpack.c.l.b16 %v1122
    %v1146 = vpack.c.b16 %v1139, %v1138
    %v1147 = vpack.c.b16 %v1141, %v1140
    %v1148 = vpack.c.b16 %v1143, %v1142
    %v1149 = vpack.c.b16 %v1145, %v1144
    %v1155 = vsel %vm107, %v1083, 0
    %v1158 = vsel %vm107, %v1084, 0
    %v1161 = vsel %vm107, %v1085, 0
    %v1164 = vsel %vm107, %v1086, 0
    %v1167 = vsel %vm107, %v1087, 0
    %v1170 = vsel %vm107, %v1088, 0
    %v1173 = vsel %vm107, %v1089, 0
    %v1176 = vsel %vm107, %v1090, 0
    %v1179 = vsel %vm107, %v1091, 0
    %v1182 = vsel %vm107, %v1092, 0
    %v1185 = vsel %vm107, %v1093, 0
    %v1188 = vsel %vm107, %v1094, 0
    %v1191 = vsel %vm107, %v1095, 0
    %v1194 = vsel %vm107, %v1096, 0
    %v1197 = vsel %vm107, %v1097, 0
    %v1200 = vsel %vm107, %v1098, 0
    %v1203 = vsel %vm107, %v1099, 0
    %v1206 = vsel %vm107, %v1100, 0
    %v1209 = vsel %vm107, %v1101, 0
    %v1212 = vsel %vm107, %v1102, 0
    %v1215 = vsel %vm107, %v1103, 0
    %v1218 = vsel %vm107, %v1104, 0
    %v1221 = vsel %vm107, %v1105, 0
    %v1224 = vsel %vm107, %v1106, 0
    %v1227 = vsel %vm107, %v1107, 0
    %v1230 = vsel %vm107, %v1108, 0
    %v1233 = vsel %vm107, %v1109, 0
    %v1236 = vsel %vm107, %v1110, 0
    %v1239 = vsel %vm107, %v1111, 0
    %v1242 = vsel %vm107, %v1112, 0
    %v1245 = vsel %vm107, %v1113, 0
    %v1248 = vsel %vm107, %v1114, 0
    %1250 = vmatprep.subr.bf16.mxu0 0
    %1251 = vmatpush1.bf16.msra.mxu0 0
    %1252 = vmatprep.subr.bf16.mxu0 0
    %1253 = vmatpush1.bf16.msra.mxu0 0
    %1254 = vmatprep.subr.bf16.mxu0 0
    %1255 = vmatpush1.bf16.msra.mxu0 0
    %1256 = vmatprep.subr.bf16.mxu0 0
    %1257 = vmatpush1.bf16.msra.mxu0 0
    %1258 = vmatprep.subr.bf16.mxu0 0
    %1259 = vmatpush1.bf16.msra.mxu0 %v1149
    %1260 = vmatprep.subr.bf16.mxu0 0
    %1261 = vmatpush1.bf16.msra.mxu0 %v1148
    %1262 = vmatprep.subr.bf16.mxu0 0
    %1263 = vmatpush1.bf16.msra.mxu0 %v1147
    %1264 = vmatprep.subr.bf16.mxu0 0
    %1265 = vmatpush1.bf16.msra.mxu0 %v1146
    %1266 = vmatprep.subr.bf16.mxu0 0
    %1267 = vmatpush2.bf16.msra.mxu0 0
    %1268 = vmatprep.subr.bf16.mxu0 0
    %1269 = vmatpush2.bf16.msra.mxu0 0
    %1270 = vmatprep.subr.bf16.mxu0 0
    %1271 = vmatpush2.bf16.msra.mxu0 0
    %1272 = vmatprep.subr.bf16.mxu0 0
    %1273 = vmatpush2.bf16.msra.mxu0 0
    %1274 = vmatprep.subr.bf16.mxu0 0
    %1275 = vmatpush2.bf16.msra.mxu0 0
    %1276 = vmatprep.subr.bf16.mxu0 0
    %1277 = vmatpush2.bf16.msra.mxu0 0
    %1278 = vmatprep.subr.bf16.mxu0 0
    %1279 = vmatpush2.bf16.msra.mxu0 0
    %1280 = vmatprep.subr.bf16.mxu0 0
    %1281 = vmatpush2.bf16.msra.mxu0 0
    %1282 = vmatprep.mubr.bf16.mxu0 0
    %1283 = vmatmul.mubr.bf16.gmra.mxu0 %v1155
    %v1284 = vpop.f32.mrf.mxu0
    %v1285 = vadd.f32 %v1128, %v1284
    %v1286 = vpop.f32.mrf.mxu0
    %v1287 = vpop.f32.mrf.mxu0
    %v1288 = vadd.f32 %v1128, %v1287
    %v1289 = vpop.f32.mrf.mxu0
    %1290 = vmatprep.mubr.bf16.mxu0 0
    %1291 = vmatmul.mubr.bf16.gmra.mxu0 %v1158
    %v1292 = vpop.f32.mrf.mxu0
    %v1293 = vadd.f32 %v1128, %v1292
    %v1294 = vpop.f32.mrf.mxu0
    %v1295 = vpop.f32.mrf.mxu0
    %v1296 = vadd.f32 %v1128, %v1295
    %v1297 = vpop.f32.mrf.mxu0
    %1298 = vmatprep.mubr.bf16.mxu0 0
    %1299 = vmatmul.mubr.bf16.gmra.mxu0 %v1161
    %v1300 = vpop.f32.mrf.mxu0
    %v1301 = vadd.f32 %v1128, %v1300
    %v1302 = vpop.f32.mrf.mxu0
    %v1303 = vpop.f32.mrf.mxu0
    %v1304 = vadd.f32 %v1128, %v1303
    %v1305 = vpop.f32.mrf.mxu0
    %1306 = vmatprep.mubr.bf16.mxu0 0
    %1307 = vmatmul.mubr.bf16.gmra.mxu0 %v1164
    %v1308 = vpop.f32.mrf.mxu0
    %v1309 = vadd.f32 %v1128, %v1308
    %v1310 = vpop.f32.mrf.mxu0
    %v1311 = vpop.f32.mrf.mxu0
    %v1312 = vadd.f32 %v1128, %v1311
    %v1313 = vpop.f32.mrf.mxu0
    %1314 = vmatprep.mubr.bf16.mxu0 0
    %1315 = vmatmul.mubr.bf16.gmra.mxu0 %v1167
    %v1316 = vpop.f32.mrf.mxu0
    %v1317 = vadd.f32 %v1128, %v1316
    %v1318 = vpop.f32.mrf.mxu0
    %v1319 = vpop.f32.mrf.mxu0
    %v1320 = vadd.f32 %v1128, %v1319
    %v1321 = vpop.f32.mrf.mxu0
    %1322 = vmatprep.mubr.bf16.mxu0 0
    %1323 = vmatmul.mubr.bf16.gmra.mxu0 %v1170
    %v1324 = vpop.f32.mrf.mxu0
    %v1325 = vadd.f32 %v1128, %v1324
    %v1326 = vpop.f32.mrf.mxu0
    %v1327 = vpop.f32.mrf.mxu0
    %v1328 = vadd.f32 %v1128, %v1327
    %v1329 = vpop.f32.mrf.mxu0
    %1330 = vmatprep.mubr.bf16.mxu0 0
    %1331 = vmatmul.mubr.bf16.gmra.mxu0 %v1173
    %v1332 = vpop.f32.mrf.mxu0
    %v1333 = vadd.f32 %v1128, %v1332
    %v1334 = vpop.f32.mrf.mxu0
    %v1335 = vpop.f32.mrf.mxu0
    %v1336 = vadd.f32 %v1128, %v1335
    %v1337 = vpop.f32.mrf.mxu0
    %1338 = vmatprep.mubr.bf16.mxu0 0
    %1339 = vmatmul.mubr.bf16.gmra.mxu0 %v1176
    %v1340 = vpop.f32.mrf.mxu0
    %v1341 = vadd.f32 %v1128, %v1340
    %v1342 = vpop.f32.mrf.mxu0
    %v1343 = vpop.f32.mrf.mxu0
    %v1344 = vadd.f32 %v1128, %v1343
    %v1345 = vpop.f32.mrf.mxu0
    %1346 = vmatprep.mubr.bf16.mxu0 0
    %1347 = vmatmul.mubr.bf16.gmra.mxu0 %v1179
    %v1348 = vpop.f32.mrf.mxu0
    %v1349 = vadd.f32 %v1128, %v1348
    %v1350 = vpop.f32.mrf.mxu0
    %v1351 = vpop.f32.mrf.mxu0
    %v1352 = vadd.f32 %v1128, %v1351
    %v1353 = vpop.f32.mrf.mxu0
    %1354 = vmatprep.mubr.bf16.mxu0 0
    %1355 = vmatmul.mubr.bf16.gmra.mxu0 %v1182
    %v1356 = vpop.f32.mrf.mxu0
    %v1357 = vadd.f32 %v1128, %v1356
    %v1358 = vpop.f32.mrf.mxu0
    %v1359 = vpop.f32.mrf.mxu0
    %v1360 = vadd.f32 %v1128, %v1359
    %v1361 = vpop.f32.mrf.mxu0
    %1362 = vmatprep.mubr.bf16.mxu0 0
    %1363 = vmatmul.mubr.bf16.gmra.mxu0 %v1185
    %v1364 = vpop.f32.mrf.mxu0
    %v1365 = vadd.f32 %v1128, %v1364
    %v1366 = vpop.f32.mrf.mxu0
    %v1367 = vpop.f32.mrf.mxu0
    %v1368 = vadd.f32 %v1128, %v1367
    %v1369 = vpop.f32.mrf.mxu0
    %1370 = vmatprep.mubr.bf16.mxu0 0
    %1371 = vmatmul.mubr.bf16.gmra.mxu0 %v1188
    %v1372 = vpop.f32.mrf.mxu0
    %v1373 = vadd.f32 %v1128, %v1372
    %v1374 = vpop.f32.mrf.mxu0
    %v1375 = vpop.f32.mrf.mxu0
    %v1376 = vadd.f32 %v1128, %v1375
    %v1377 = vpop.f32.mrf.mxu0
    %1378 = vmatprep.mubr.bf16.mxu0 0
    %1379 = vmatmul.mubr.bf16.gmra.mxu0 %v1191
    %v1380 = vpop.f32.mrf.mxu0
    %v1381 = vadd.f32 %v1128, %v1380
    %v1382 = vpop.f32.mrf.mxu0
    %v1383 = vpop.f32.mrf.mxu0
    %v1384 = vadd.f32 %v1128, %v1383
    %v1385 = vpop.f32.mrf.mxu0
    %1386 = vmatprep.mubr.bf16.mxu0 0
    %1387 = vmatmul.mubr.bf16.gmra.mxu0 %v1194
    %v1388 = vpop.f32.mrf.mxu0
    %v1389 = vadd.f32 %v1128, %v1388
    %v1390 = vpop.f32.mrf.mxu0
    %v1391 = vpop.f32.mrf.mxu0
    %v1392 = vadd.f32 %v1128, %v1391
    %v1393 = vpop.f32.mrf.mxu0
    %1394 = vmatprep.mubr.bf16.mxu0 0
    %1395 = vmatmul.mubr.bf16.gmra.mxu0 %v1197
    %v1396 = vpop.f32.mrf.mxu0
    %v1397 = vadd.f32 %v1128, %v1396
    %v1398 = vpop.f32.mrf.mxu0
    %v1399 = vpop.f32.mrf.mxu0
    %v1400 = vadd.f32 %v1128, %v1399
    %v1401 = vpop.f32.mrf.mxu0
    %1402 = vmatprep.mubr.bf16.mxu0 0
    %1403 = vmatmul.mubr.bf16.gmra.mxu0 %v1200
    %v1404 = vpop.f32.mrf.mxu0
    %v1405 = vadd.f32 %v1128, %v1404
    %v1406 = vpop.f32.mrf.mxu0
    %v1407 = vpop.f32.mrf.mxu0
    %v1408 = vadd.f32 %v1128, %v1407
    %v1409 = vpop.f32.mrf.mxu0
    %1410 = vmatprep.mubr.bf16.mxu0 0
    %1411 = vmatmul.mubr.bf16.gmra.mxu0 %v1203
    %v1412 = vpop.f32.mrf.mxu0
    %v1413 = vadd.f32 %v1128, %v1412
    %v1414 = vpop.f32.mrf.mxu0
    %v1415 = vpop.f32.mrf.mxu0
    %v1416 = vadd.f32 %v1128, %v1415
    %v1417 = vpop.f32.mrf.mxu0
    %1418 = vmatprep.mubr.bf16.mxu0 0
    %1419 = vmatmul.mubr.bf16.gmra.mxu0 %v1206
    %v1420 = vpop.f32.mrf.mxu0
    %v1421 = vadd.f32 %v1128, %v1420
    %v1422 = vpop.f32.mrf.mxu0
    %v1423 = vpop.f32.mrf.mxu0
    %v1424 = vadd.f32 %v1128, %v1423
    %v1425 = vpop.f32.mrf.mxu0
    %1426 = vmatprep.mubr.bf16.mxu0 0
    %1427 = vmatmul.mubr.bf16.gmra.mxu0 %v1209
    %v1428 = vpop.f32.mrf.mxu0
    %v1429 = vadd.f32 %v1128, %v1428
    %v1430 = vpop.f32.mrf.mxu0
    %v1431 = vpop.f32.mrf.mxu0
    %v1432 = vadd.f32 %v1128, %v1431
    %v1433 = vpop.f32.mrf.mxu0
    %1434 = vmatprep.mubr.bf16.mxu0 0
    %1435 = vmatmul.mubr.bf16.gmra.mxu0 %v1212
    %v1436 = vpop.f32.mrf.mxu0
    %v1437 = vadd.f32 %v1128, %v1436
    %v1438 = vpop.f32.mrf.mxu0
    %v1439 = vpop.f32.mrf.mxu0
    %v1440 = vadd.f32 %v1128, %v1439
    %v1441 = vpop.f32.mrf.mxu0
    %1442 = vmatprep.mubr.bf16.mxu0 0
    %1443 = vmatmul.mubr.bf16.gmra.mxu0 %v1215
    %v1444 = vpop.f32.mrf.mxu0
    %v1445 = vadd.f32 %v1128, %v1444
    %v1446 = vpop.f32.mrf.mxu0
    %v1447 = vpop.f32.mrf.mxu0
    %v1448 = vadd.f32 %v1128, %v1447
    %v1449 = vpop.f32.mrf.mxu0
    %1450 = vmatprep.mubr.bf16.mxu0 0
    %1451 = vmatmul.mubr.bf16.gmra.mxu0 %v1218
    %v1452 = vpop.f32.mrf.mxu0
    %v1453 = vadd.f32 %v1128, %v1452
    %v1454 = vpop.f32.mrf.mxu0
    %v1455 = vpop.f32.mrf.mxu0
    %v1456 = vadd.f32 %v1128, %v1455
    %v1457 = vpop.f32.mrf.mxu0
    %1458 = vmatprep.mubr.bf16.mxu0 0
    %1459 = vmatmul.mubr.bf16.gmra.mxu0 %v1221
    %v1460 = vpop.f32.mrf.mxu0
    %v1461 = vadd.f32 %v1128, %v1460
    %v1462 = vpop.f32.mrf.mxu0
    %v1463 = vpop.f32.mrf.mxu0
    %v1464 = vadd.f32 %v1128, %v1463
    %v1465 = vpop.f32.mrf.mxu0
    %1466 = vmatprep.mubr.bf16.mxu0 0
    %1467 = vmatmul.mubr.bf16.gmra.mxu0 %v1224
    %v1468 = vpop.f32.mrf.mxu0
    %v1469 = vadd.f32 %v1128, %v1468
    %v1470 = vpop.f32.mrf.mxu0
    %v1471 = vpop.f32.mrf.mxu0
    %v1472 = vadd.f32 %v1128, %v1471
    %v1473 = vpop.f32.mrf.mxu0
    %1474 = vmatprep.mubr.bf16.mxu0 0
    %1475 = vmatmul.mubr.bf16.gmra.mxu0 %v1227
    %v1476 = vpop.f32.mrf.mxu0
    %v1477 = vadd.f32 %v1128, %v1476
    %v1478 = vpop.f32.mrf.mxu0
    %v1479 = vpop.f32.mrf.mxu0
    %v1480 = vadd.f32 %v1128, %v1479
    %v1481 = vpop.f32.mrf.mxu0
    %1482 = vmatprep.mubr.bf16.mxu0 0
    %1483 = vmatmul.mubr.bf16.gmra.mxu0 %v1230
    %v1484 = vpop.f32.mrf.mxu0
    %v1485 = vadd.f32 %v1128, %v1484
    %v1486 = vpop.f32.mrf.mxu0
    %v1487 = vpop.f32.mrf.mxu0
    %v1488 = vadd.f32 %v1128, %v1487
    %v1489 = vpop.f32.mrf.mxu0
    %1490 = vmatprep.mubr.bf16.mxu0 0
    %1491 = vmatmul.mubr.bf16.gmra.mxu0 %v1233
    %v1492 = vpop.f32.mrf.mxu0
    %v1493 = vadd.f32 %v1128, %v1492
    %v1494 = vpop.f32.mrf.mxu0
    %v1495 = vpop.f32.mrf.mxu0
    %v1496 = vadd.f32 %v1128, %v1495
    %v1497 = vpop.f32.mrf.mxu0
    %1498 = vmatprep.mubr.bf16.mxu0 0
    %1499 = vmatmul.mubr.bf16.gmra.mxu0 %v1236
    %v1500 = vpop.f32.mrf.mxu0
    %v1501 = vadd.f32 %v1128, %v1500
    %v1502 = vpop.f32.mrf.mxu0
    %v1503 = vpop.f32.mrf.mxu0
    %v1504 = vadd.f32 %v1128, %v1503
    %v1505 = vpop.f32.mrf.mxu0
    %1506 = vmatprep.mubr.bf16.mxu0 0
    %1507 = vmatmul.mubr.bf16.gmra.mxu0 %v1239
    %v1508 = vpop.f32.mrf.mxu0
    %v1509 = vadd.f32 %v1128, %v1508
    %v1510 = vpop.f32.mrf.mxu0
    %v1511 = vpop.f32.mrf.mxu0
    %v1512 = vadd.f32 %v1128, %v1511
    %v1513 = vpop.f32.mrf.mxu0
    %1514 = vmatprep.mubr.bf16.mxu0 0
    %1515 = vmatmul.mubr.bf16.gmra.mxu0 %v1242
    %v1516 = vpop.f32.mrf.mxu0
    %v1517 = vadd.f32 %v1128, %v1516
    %v1518 = vpop.f32.mrf.mxu0
    %v1519 = vpop.f32.mrf.mxu0
    %v1520 = vadd.f32 %v1128, %v1519
    %v1521 = vpop.f32.mrf.mxu0
    %1522 = vmatprep.mubr.bf16.mxu0 0
    %1523 = vmatmul.mubr.bf16.gmra.mxu0 %v1245
    %v1524 = vpop.f32.mrf.mxu0
    %v1525 = vadd.f32 %v1128, %v1524
    %v1526 = vpop.f32.mrf.mxu0
    %v1527 = vpop.f32.mrf.mxu0
    %v1528 = vadd.f32 %v1128, %v1527
    %v1529 = vpop.f32.mrf.mxu0
    %1530 = vmatprep.mubr.bf16.mxu0 0
    %1531 = vmatmul.mubr.bf16.gmra.mxu0 %v1248
    %v1532 = vpop.f32.mrf.mxu0
    %v1533 = vadd.f32 %v1128, %v1532
    %v1534 = vpop.f32.mrf.mxu0
    %v1535 = vpop.f32.mrf.mxu0
    %v1536 = vadd.f32 %v1128, %v1535
    %v1537 = vpop.f32.mrf.mxu0
    %1538 = vdwg.mxu0
    %1539 = vst.msk [vmem:[%s7] sm:$0xff] %vm107, %v1285
    %1540 = vst.msk [vmem:[%s7 + $0x8] sm:$0xff] %vm107, %v1288
    %1541 = vst.msk [vmem:[%s7 + $0x10] sm:$0xff] %vm107, %v1293
    %1542 = vst.msk [vmem:[%s7 + $0x18] sm:$0xff] %vm107, %v1296
    %1543 = vst.msk [vmem:[%s7 + $0x20] sm:$0xff] %vm107, %v1301
    %1544 = vst.msk [vmem:[%s7 + $0x28] sm:$0xff] %vm107, %v1304
    %1545 = vst.msk [vmem:[%s7 + $0x30] sm:$0xff] %vm107, %v1309
    %1546 = vst.msk [vmem:[%s7 + $0x38] sm:$0xff] %vm107, %v1312
    %1547 = vst.msk [vmem:[%s7 + $0x40] sm:$0xff] %vm107, %v1317
    %1548 = vst.msk [vmem:[%s7 + $0x48] sm:$0xff] %vm107, %v1320
    %1549 = vst.msk [vmem:[%s7 + $0x50] sm:$0xff] %vm107, %v1325
    %1550 = vst.msk [vmem:[%s7 + $0x58] sm:$0xff] %vm107, %v1328
    %1551 = vst.msk [vmem:[%s7 + $0x60] sm:$0xff] %vm107, %v1333
    %1552 = vst.msk [vmem:[%s7 + $0x68] sm:$0xff] %vm107, %v1336
    %1553 = vst.msk [vmem:[%s7 + $0x70] sm:$0xff] %vm107, %v1341
    %1554 = vst.msk [vmem:[%s7 + $0x78] sm:$0xff] %vm107, %v1344
    %1555 = vst.msk [vmem:[%s7 + $0x80] sm:$0xff] %vm107, %v1349
    %1556 = vst.msk [vmem:[%s7 + $0x88] sm:$0xff] %vm107, %v1352
    %1557 = vst.msk [vmem:[%s7 + $0x90] sm:$0xff] %vm107, %v1357
    %1558 = vst.msk [vmem:[%s7 + $0x98] sm:$0xff] %vm107, %v1360
    %1559 = vst.msk [vmem:[%s7 + $0xa0] sm:$0xff] %vm107, %v1365
    %1560 = vst.msk [vmem:[%s7 + $0xa8] sm:$0xff] %vm107, %v1368
    %1561 = vst.msk [vmem:[%s7 + $0xb0] sm:$0xff] %vm107, %v1373
    %1562 = vst.msk [vmem:[%s7 + $0xb8] sm:$0xff] %vm107, %v1376
    %1563 = vst.msk [vmem:[%s7 + $0xc0] sm:$0xff] %vm107, %v1381
    %1564 = vst.msk [vmem:[%s7 + $0xc8] sm:$0xff] %vm107, %v1384
    %1565 = vst.msk [vmem:[%s7 + $0xd0] sm:$0xff] %vm107, %v1389
    %1566 = vst.msk [vmem:[%s7 + $0xd8] sm:$0xff] %vm107, %v1392
    %1567 = vst.msk [vmem:[%s7 + $0xe0] sm:$0xff] %vm107, %v1397
    %1568 = vst.msk [vmem:[%s7 + $0xe8] sm:$0xff] %vm107, %v1400
    %1569 = vst.msk [vmem:[%s7 + $0xf0] sm:$0xff] %vm107, %v1405
    %1570 = vst.msk [vmem:[%s7 + $0xf8] sm:$0xff] %vm107, %v1408
    %1571 = vst.msk [vmem:[%s7 + $0x100] sm:$0xff] %vm107, %v1413
    %1572 = vst.msk [vmem:[%s7 + $0x108] sm:$0xff] %vm107, %v1416
    %1573 = vst.msk [vmem:[%s7 + $0x110] sm:$0xff] %vm107, %v1421
    %1574 = vst.msk [vmem:[%s7 + $0x118] sm:$0xff] %vm107, %v1424
    %1575 = vst.msk [vmem:[%s7 + $0x120] sm:$0xff] %vm107, %v1429
    %1576 = vst.msk [vmem:[%s7 + $0x128] sm:$0xff] %vm107, %v1432
    %1577 = vst.msk [vmem:[%s7 + $0x130] sm:$0xff] %vm107, %v1437
    %1578 = vst.msk [vmem:[%s7 + $0x138] sm:$0xff] %vm107, %v1440
    %1579 = vst.msk [vmem:[%s7 + $0x140] sm:$0xff] %vm107, %v1445
    %1580 = vst.msk [vmem:[%s7 + $0x148] sm:$0xff] %vm107, %v1448
    %1581 = vst.msk [vmem:[%s7 + $0x150] sm:$0xff] %vm107, %v1453
    %1582 = vst.msk [vmem:[%s7 + $0x158] sm:$0xff] %vm107, %v1456
    %1583 = vst.msk [vmem:[%s7 + $0x160] sm:$0xff] %vm107, %v1461
    %1584 = vst.msk [vmem:[%s7 + $0x168] sm:$0xff] %vm107, %v1464
    %1585 = vst.msk [vmem:[%s7 + $0x170] sm:$0xff] %vm107, %v1469
    %1586 = vst.msk [vmem:[%s7 + $0x178] sm:$0xff] %vm107, %v1472
    %1587 = vst.msk [vmem:[%s7 + $0x180] sm:$0xff] %vm107, %v1477
    %1588 = vst.msk [vmem:[%s7 + $0x188] sm:$0xff] %vm107, %v1480
    %1589 = vst.msk [vmem:[%s7 + $0x190] sm:$0xff] %vm107, %v1485
    %1590 = vst.msk [vmem:[%s7 + $0x198] sm:$0xff] %vm107, %v1488
    %1591 = vst.msk [vmem:[%s7 + $0x1a0] sm:$0xff] %vm107, %v1493
    %1592 = vst.msk [vmem:[%s7 + $0x1a8] sm:$0xff] %vm107, %v1496
    %1593 = vst.msk [vmem:[%s7 + $0x1b0] sm:$0xff] %vm107, %v1501
    %1594 = vst.msk [vmem:[%s7 + $0x1b8] sm:$0xff] %vm107, %v1504
    %1595 = vst.msk [vmem:[%s7 + $0x1c0] sm:$0xff] %vm107, %v1509
    %1596 = vst.msk [vmem:[%s7 + $0x1c8] sm:$0xff] %vm107, %v1512
    %1597 = vst.msk [vmem:[%s7 + $0x1d0] sm:$0xff] %vm107, %v1517
    %1598 = vst.msk [vmem:[%s7 + $0x1d8] sm:$0xff] %vm107, %v1520
    %1599 = vst.msk [vmem:[%s7 + $0x1e0] sm:$0xff] %vm107, %v1525
    %1600 = vst.msk [vmem:[%s7 + $0x1e8] sm:$0xff] %vm107, %v1528
    %1601 = vst.msk [vmem:[%s7 + $0x1f0] sm:$0xff] %vm107, %v1533
    %1602 = vst.msk [vmem:[%s7 + $0x1f8] sm:$0xff] %vm107, %v1536
    %v1603 = vld [vmem:[%s5] sm:$0xff]
    %v1604 = vld [vmem:[%s5 + $0x8] sm:$0xff]
    %v1605 = vld [vmem:[%s5 + $0x10] sm:$0xff]
    %v1606 = vld [vmem:[%s5 + $0x18] sm:$0xff]
    %v1607 = vld [vmem:[%s5 + $0x20] sm:$0xff]
    %v1608 = vld [vmem:[%s5 + $0x28] sm:$0xff]
    %v1609 = vld [vmem:[%s5 + $0x30] sm:$0xff]
    %v1610 = vld [vmem:[%s5 + $0x38] sm:$0xff]
    %v1611 = vld [vmem:[%s6] sm:$0x3]
    %v1613 = vlaneseq
    %v1614 = vshrl.u32 %v1613, 7
    %v1615 = vsub.s32 0, %v1614
    %v1616 = vrot.slane %v1611, %v1615
    %v1617 = vlaneseq
    %v1618 = vshrl.u32 %v1617, 7
    %v1619 = vsub.s32 1, %v1618
    %v1620 = vrot.slane %v1611, %v1619
    %v1631 = vunpack.c.l.b16 %v1603
    %v1632 = vunpack.c.h.b16 %v1603
    %v1633 = vunpack.c.l.b16 %v1604
    %v1634 = vunpack.c.h.b16 %v1604
    %v1635 = vunpack.c.l.b16 %v1605
    %v1636 = vunpack.c.h.b16 %v1605
    %v1637 = vunpack.c.l.b16 %v1606
    %v1638 = vunpack.c.h.b16 %v1606
    %v1639 = vunpack.c.l.b16 %v1607
    %v1640 = vunpack.c.h.b16 %v1607
    %v1641 = vunpack.c.l.b16 %v1608
    %v1642 = vunpack.c.h.b16 %v1608
    %v1643 = vunpack.c.l.b16 %v1609
    %v1644 = vunpack.c.h.b16 %v1609
    %v1645 = vunpack.c.l.b16 %v1610
    %v1646 = vunpack.c.h.b16 %v1610
    %v1647 = vpack.c.b16 %v1633, %v1631
    %v1648 = vpack.c.b16 %v1634, %v1632
    %v1649 = vpack.c.b16 %v1637, %v1635
    %v1650 = vpack.c.b16 %v1638, %v1636
    %v1651 = vpack.c.b16 %v1641, %v1639
    %v1652 = vpack.c.b16 %v1642, %v1640
    %v1653 = vpack.c.b16 %v1645, %v1643
    %v1654 = vpack.c.b16 %v1646, %v1644
    %1663 = vmatprep.subr.bf16.mxu0 0
    %1664 = vmatpush1.bf16.msra.mxu0 0
    %1665 = vmatprep.subr.bf16.mxu0 0
    %1666 = vmatpush1.bf16.msra.mxu0 0
    %1667 = vmatprep.subr.bf16.mxu0 0
    %1668 = vmatpush1.bf16.msra.mxu0 0
    %1669 = vmatprep.subr.bf16.mxu0 0
    %1670 = vmatpush1.bf16.msra.mxu0 0
    %1671 = vmatprep.subr.bf16.mxu0 %v1654
    %1672 = vmatpush1.bf16.msra.mxu0 %v1653
    %1673 = vmatprep.subr.bf16.mxu0 %v1652
    %1674 = vmatpush1.bf16.msra.mxu0 %v1651
    %1675 = vmatprep.subr.bf16.mxu0 %v1650
    %1676 = vmatpush1.bf16.msra.mxu0 %v1649
    %1677 = vmatprep.subr.bf16.mxu0 %v1648
    %1678 = vmatpush1.bf16.msra.mxu0 %v1647
    %1679 = vmatprep.subr.bf16.mxu0 0
    %1680 = vmatpush2.bf16.msra.mxu0 0
    %1681 = vmatprep.subr.bf16.mxu0 0
    %1682 = vmatpush2.bf16.msra.mxu0 0
    %1683 = vmatprep.subr.bf16.mxu0 0
    %1684 = vmatpush2.bf16.msra.mxu0 0
    %1685 = vmatprep.subr.bf16.mxu0 0
    %1686 = vmatpush2.bf16.msra.mxu0 0
    %1687 = vmatprep.subr.bf16.mxu0 0
    %1688 = vmatpush2.bf16.msra.mxu0 0
    %1689 = vmatprep.subr.bf16.mxu0 0
    %1690 = vmatpush2.bf16.msra.mxu0 0
    %1691 = vmatprep.subr.bf16.mxu0 0
    %1692 = vmatpush2.bf16.msra.mxu0 0
    %1693 = vmatprep.subr.bf16.mxu0 0
    %1694 = vmatpush2.bf16.msra.mxu0 0
    %1695 = vmatprep.mubr.bf16.mxu0 0
    %1696 = vmatmul.mubr.bf16.gmra.mxu0 %v1155
    %v1697 = vpop.f32.mrf.mxu0
    %v1698 = vadd.f32 %v1616, %v1697
    %v1699 = vpop.f32.mrf.mxu0
    %v1700 = vadd.f32 %v1620, %v1699
    %v1701 = vpop.f32.mrf.mxu0
    %v1702 = vadd.f32 %v1616, %v1701
    %v1703 = vpop.f32.mrf.mxu0
    %v1704 = vadd.f32 %v1620, %v1703
    %1705 = vmatprep.mubr.bf16.mxu0 0
    %1706 = vmatmul.mubr.bf16.gmra.mxu0 %v1158
    %v1707 = vpop.f32.mrf.mxu0
    %v1708 = vadd.f32 %v1616, %v1707
    %v1709 = vpop.f32.mrf.mxu0
    %v1710 = vadd.f32 %v1620, %v1709
    %v1711 = vpop.f32.mrf.mxu0
    %v1712 = vadd.f32 %v1616, %v1711
    %v1713 = vpop.f32.mrf.mxu0
    %v1714 = vadd.f32 %v1620, %v1713
    %1715 = vmatprep.mubr.bf16.mxu0 0
    %1716 = vmatmul.mubr.bf16.gmra.mxu0 %v1161
    %v1717 = vpop.f32.mrf.mxu0
    %v1718 = vadd.f32 %v1616, %v1717
    %v1719 = vpop.f32.mrf.mxu0
    %v1720 = vadd.f32 %v1620, %v1719
    %v1721 = vpop.f32.mrf.mxu0
    %v1722 = vadd.f32 %v1616, %v1721
    %v1723 = vpop.f32.mrf.mxu0
    %v1724 = vadd.f32 %v1620, %v1723
    %1725 = vmatprep.mubr.bf16.mxu0 0
    %1726 = vmatmul.mubr.bf16.gmra.mxu0 %v1164
    %v1727 = vpop.f32.mrf.mxu0
    %v1728 = vadd.f32 %v1616, %v1727
    %v1729 = vpop.f32.mrf.mxu0
    %v1730 = vadd.f32 %v1620, %v1729
    %v1731 = vpop.f32.mrf.mxu0
    %v1732 = vadd.f32 %v1616, %v1731
    %v1733 = vpop.f32.mrf.mxu0
    %v1734 = vadd.f32 %v1620, %v1733
    %1735 = vmatprep.mubr.bf16.mxu0 0
    %1736 = vmatmul.mubr.bf16.gmra.mxu0 %v1167
    %v1737 = vpop.f32.mrf.mxu0
    %v1738 = vadd.f32 %v1616, %v1737
    %v1739 = vpop.f32.mrf.mxu0
    %v1740 = vadd.f32 %v1620, %v1739
    %v1741 = vpop.f32.mrf.mxu0
    %v1742 = vadd.f32 %v1616, %v1741
    %v1743 = vpop.f32.mrf.mxu0
    %v1744 = vadd.f32 %v1620, %v1743
    %1745 = vmatprep.mubr.bf16.mxu0 0
    %1746 = vmatmul.mubr.bf16.gmra.mxu0 %v1170
    %v1747 = vpop.f32.mrf.mxu0
    %v1748 = vadd.f32 %v1616, %v1747
    %v1749 = vpop.f32.mrf.mxu0
    %v1750 = vadd.f32 %v1620, %v1749
    %v1751 = vpop.f32.mrf.mxu0
    %v1752 = vadd.f32 %v1616, %v1751
    %v1753 = vpop.f32.mrf.mxu0
    %v1754 = vadd.f32 %v1620, %v1753
    %1755 = vmatprep.mubr.bf16.mxu0 0
    %1756 = vmatmul.mubr.bf16.gmra.mxu0 %v1173
    %v1757 = vpop.f32.mrf.mxu0
    %v1758 = vadd.f32 %v1616, %v1757
    %v1759 = vpop.f32.mrf.mxu0
    %v1760 = vadd.f32 %v1620, %v1759
    %v1761 = vpop.f32.mrf.mxu0
    %v1762 = vadd.f32 %v1616, %v1761
    %v1763 = vpop.f32.mrf.mxu0
    %v1764 = vadd.f32 %v1620, %v1763
    %1765 = vmatprep.mubr.bf16.mxu0 0
    %1766 = vmatmul.mubr.bf16.gmra.mxu0 %v1176
    %v1767 = vpop.f32.mrf.mxu0
    %v1768 = vadd.f32 %v1616, %v1767
    %v1769 = vpop.f32.mrf.mxu0
    %v1770 = vadd.f32 %v1620, %v1769
    %v1771 = vpop.f32.mrf.mxu0
    %v1772 = vadd.f32 %v1616, %v1771
    %v1773 = vpop.f32.mrf.mxu0
    %v1774 = vadd.f32 %v1620, %v1773
    %1775 = vmatprep.mubr.bf16.mxu0 0
    %1776 = vmatmul.mubr.bf16.gmra.mxu0 %v1179
    %v1777 = vpop.f32.mrf.mxu0
    %v1778 = vadd.f32 %v1616, %v1777
    %v1779 = vpop.f32.mrf.mxu0
    %v1780 = vadd.f32 %v1620, %v1779
    %v1781 = vpop.f32.mrf.mxu0
    %v1782 = vadd.f32 %v1616, %v1781
    %v1783 = vpop.f32.mrf.mxu0
    %v1784 = vadd.f32 %v1620, %v1783
    %1785 = vmatprep.mubr.bf16.mxu0 0
    %1786 = vmatmul.mubr.bf16.gmra.mxu0 %v1182
    %v1787 = vpop.f32.mrf.mxu0
    %v1788 = vadd.f32 %v1616, %v1787
    %v1789 = vpop.f32.mrf.mxu0
    %v1790 = vadd.f32 %v1620, %v1789
    %v1791 = vpop.f32.mrf.mxu0
    %v1792 = vadd.f32 %v1616, %v1791
    %v1793 = vpop.f32.mrf.mxu0
    %v1794 = vadd.f32 %v1620, %v1793
    %1795 = vmatprep.mubr.bf16.mxu0 0
    %1796 = vmatmul.mubr.bf16.gmra.mxu0 %v1185
    %v1797 = vpop.f32.mrf.mxu0
    %v1798 = vadd.f32 %v1616, %v1797
    %v1799 = vpop.f32.mrf.mxu0
    %v1800 = vadd.f32 %v1620, %v1799
    %v1801 = vpop.f32.mrf.mxu0
    %v1802 = vadd.f32 %v1616, %v1801
    %v1803 = vpop.f32.mrf.mxu0
    %v1804 = vadd.f32 %v1620, %v1803
    %1805 = vmatprep.mubr.bf16.mxu0 0
    %1806 = vmatmul.mubr.bf16.gmra.mxu0 %v1188
    %v1807 = vpop.f32.mrf.mxu0
    %v1808 = vadd.f32 %v1616, %v1807
    %v1809 = vpop.f32.mrf.mxu0
    %v1810 = vadd.f32 %v1620, %v1809
    %v1811 = vpop.f32.mrf.mxu0
    %v1812 = vadd.f32 %v1616, %v1811
    %v1813 = vpop.f32.mrf.mxu0
    %v1814 = vadd.f32 %v1620, %v1813
    %1815 = vmatprep.mubr.bf16.mxu0 0
    %1816 = vmatmul.mubr.bf16.gmra.mxu0 %v1191
    %v1817 = vpop.f32.mrf.mxu0
    %v1818 = vadd.f32 %v1616, %v1817
    %v1819 = vpop.f32.mrf.mxu0
    %v1820 = vadd.f32 %v1620, %v1819
    %v1821 = vpop.f32.mrf.mxu0
    %v1822 = vadd.f32 %v1616, %v1821
    %v1823 = vpop.f32.mrf.mxu0
    %v1824 = vadd.f32 %v1620, %v1823
    %1825 = vmatprep.mubr.bf16.mxu0 0
    %1826 = vmatmul.mubr.bf16.gmra.mxu0 %v1194
    %v1827 = vpop.f32.mrf.mxu0
    %v1828 = vadd.f32 %v1616, %v1827
    %v1829 = vpop.f32.mrf.mxu0
    %v1830 = vadd.f32 %v1620, %v1829
    %v1831 = vpop.f32.mrf.mxu0
    %v1832 = vadd.f32 %v1616, %v1831
    %v1833 = vpop.f32.mrf.mxu0
    %v1834 = vadd.f32 %v1620, %v1833
    %1835 = vmatprep.mubr.bf16.mxu0 0
    %1836 = vmatmul.mubr.bf16.gmra.mxu0 %v1197
    %v1837 = vpop.f32.mrf.mxu0
    %v1838 = vadd.f32 %v1616, %v1837
    %v1839 = vpop.f32.mrf.mxu0
    %v1840 = vadd.f32 %v1620, %v1839
    %v1841 = vpop.f32.mrf.mxu0
    %v1842 = vadd.f32 %v1616, %v1841
    %v1843 = vpop.f32.mrf.mxu0
    %v1844 = vadd.f32 %v1620, %v1843
    %1845 = vmatprep.mubr.bf16.mxu0 0
    %1846 = vmatmul.mubr.bf16.gmra.mxu0 %v1200
    %v1847 = vpop.f32.mrf.mxu0
    %v1848 = vadd.f32 %v1616, %v1847
    %v1849 = vpop.f32.mrf.mxu0
    %v1850 = vadd.f32 %v1620, %v1849
    %v1851 = vpop.f32.mrf.mxu0
    %v1852 = vadd.f32 %v1616, %v1851
    %v1853 = vpop.f32.mrf.mxu0
    %v1854 = vadd.f32 %v1620, %v1853
    %1855 = vmatprep.mubr.bf16.mxu0 0
    %1856 = vmatmul.mubr.bf16.gmra.mxu0 %v1203
    %v1857 = vpop.f32.mrf.mxu0
    %v1858 = vadd.f32 %v1616, %v1857
    %v1859 = vpop.f32.mrf.mxu0
    %v1860 = vadd.f32 %v1620, %v1859
    %v1861 = vpop.f32.mrf.mxu0
    %v1862 = vadd.f32 %v1616, %v1861
    %v1863 = vpop.f32.mrf.mxu0
    %v1864 = vadd.f32 %v1620, %v1863
    %1865 = vmatprep.mubr.bf16.mxu0 0
    %1866 = vmatmul.mubr.bf16.gmra.mxu0 %v1206
    %v1867 = vpop.f32.mrf.mxu0
    %v1868 = vadd.f32 %v1616, %v1867
    %v1869 = vpop.f32.mrf.mxu0
    %v1870 = vadd.f32 %v1620, %v1869
    %v1871 = vpop.f32.mrf.mxu0
    %v1872 = vadd.f32 %v1616, %v1871
    %v1873 = vpop.f32.mrf.mxu0
    %v1874 = vadd.f32 %v1620, %v1873
    %1875 = vmatprep.mubr.bf16.mxu0 0
    %1876 = vmatmul.mubr.bf16.gmra.mxu0 %v1209
    %v1877 = vpop.f32.mrf.mxu0
    %v1878 = vadd.f32 %v1616, %v1877
    %v1879 = vpop.f32.mrf.mxu0
    %v1880 = vadd.f32 %v1620, %v1879
    %v1881 = vpop.f32.mrf.mxu0
    %v1882 = vadd.f32 %v1616, %v1881
    %v1883 = vpop.f32.mrf.mxu0
    %v1884 = vadd.f32 %v1620, %v1883
    %1885 = vmatprep.mubr.bf16.mxu0 0
    %1886 = vmatmul.mubr.bf16.gmra.mxu0 %v1212
    %v1887 = vpop.f32.mrf.mxu0
    %v1888 = vadd.f32 %v1616, %v1887
    %v1889 = vpop.f32.mrf.mxu0
    %v1890 = vadd.f32 %v1620, %v1889
    %v1891 = vpop.f32.mrf.mxu0
    %v1892 = vadd.f32 %v1616, %v1891
    %v1893 = vpop.f32.mrf.mxu0
    %v1894 = vadd.f32 %v1620, %v1893
    %1895 = vmatprep.mubr.bf16.mxu0 0
    %1896 = vmatmul.mubr.bf16.gmra.mxu0 %v1215
    %v1897 = vpop.f32.mrf.mxu0
    %v1898 = vadd.f32 %v1616, %v1897
    %v1899 = vpop.f32.mrf.mxu0
    %v1900 = vadd.f32 %v1620, %v1899
    %v1901 = vpop.f32.mrf.mxu0
    %v1902 = vadd.f32 %v1616, %v1901
    %v1903 = vpop.f32.mrf.mxu0
    %v1904 = vadd.f32 %v1620, %v1903
    %1905 = vmatprep.mubr.bf16.mxu0 0
    %1906 = vmatmul.mubr.bf16.gmra.mxu0 %v1218
    %v1907 = vpop.f32.mrf.mxu0
    %v1908 = vadd.f32 %v1616, %v1907
    %v1909 = vpop.f32.mrf.mxu0
    %v1910 = vadd.f32 %v1620, %v1909
    %v1911 = vpop.f32.mrf.mxu0
    %v1912 = vadd.f32 %v1616, %v1911
    %v1913 = vpop.f32.mrf.mxu0
    %v1914 = vadd.f32 %v1620, %v1913
    %1915 = vmatprep.mubr.bf16.mxu0 0
    %1916 = vmatmul.mubr.bf16.gmra.mxu0 %v1221
    %v1917 = vpop.f32.mrf.mxu0
    %v1918 = vadd.f32 %v1616, %v1917
    %v1919 = vpop.f32.mrf.mxu0
    %v1920 = vadd.f32 %v1620, %v1919
    %v1921 = vpop.f32.mrf.mxu0
    %v1922 = vadd.f32 %v1616, %v1921
    %v1923 = vpop.f32.mrf.mxu0
    %v1924 = vadd.f32 %v1620, %v1923
    %1925 = vmatprep.mubr.bf16.mxu0 0
    %1926 = vmatmul.mubr.bf16.gmra.mxu0 %v1224
    %v1927 = vpop.f32.mrf.mxu0
    %v1928 = vadd.f32 %v1616, %v1927
    %v1929 = vpop.f32.mrf.mxu0
    %v1930 = vadd.f32 %v1620, %v1929
    %v1931 = vpop.f32.mrf.mxu0
    %v1932 = vadd.f32 %v1616, %v1931
    %v1933 = vpop.f32.mrf.mxu0
    %v1934 = vadd.f32 %v1620, %v1933
    %1935 = vmatprep.mubr.bf16.mxu0 0
    %1936 = vmatmul.mubr.bf16.gmra.mxu0 %v1227
    %v1937 = vpop.f32.mrf.mxu0
    %v1938 = vadd.f32 %v1616, %v1937
    %v1939 = vpop.f32.mrf.mxu0
    %v1940 = vadd.f32 %v1620, %v1939
    %v1941 = vpop.f32.mrf.mxu0
    %v1942 = vadd.f32 %v1616, %v1941
    %v1943 = vpop.f32.mrf.mxu0
    %v1944 = vadd.f32 %v1620, %v1943
    %1945 = vmatprep.mubr.bf16.mxu0 0
    %1946 = vmatmul.mubr.bf16.gmra.mxu0 %v1230
    %v1947 = vpop.f32.mrf.mxu0
    %v1948 = vadd.f32 %v1616, %v1947
    %v1949 = vpop.f32.mrf.mxu0
    %v1950 = vadd.f32 %v1620, %v1949
    %v1951 = vpop.f32.mrf.mxu0
    %v1952 = vadd.f32 %v1616, %v1951
    %v1953 = vpop.f32.mrf.mxu0
    %v1954 = vadd.f32 %v1620, %v1953
    %1955 = vmatprep.mubr.bf16.mxu0 0
    %1956 = vmatmul.mubr.bf16.gmra.mxu0 %v1233
    %v1957 = vpop.f32.mrf.mxu0
    %v1958 = vadd.f32 %v1616, %v1957
    %v1959 = vpop.f32.mrf.mxu0
    %v1960 = vadd.f32 %v1620, %v1959
    %v1961 = vpop.f32.mrf.mxu0
    %v1962 = vadd.f32 %v1616, %v1961
    %v1963 = vpop.f32.mrf.mxu0
    %v1964 = vadd.f32 %v1620, %v1963
    %1965 = vmatprep.mubr.bf16.mxu0 0
    %1966 = vmatmul.mubr.bf16.gmra.mxu0 %v1236
    %v1967 = vpop.f32.mrf.mxu0
    %v1968 = vadd.f32 %v1616, %v1967
    %v1969 = vpop.f32.mrf.mxu0
    %v1970 = vadd.f32 %v1620, %v1969
    %v1971 = vpop.f32.mrf.mxu0
    %v1972 = vadd.f32 %v1616, %v1971
    %v1973 = vpop.f32.mrf.mxu0
    %v1974 = vadd.f32 %v1620, %v1973
    %1975 = vmatprep.mubr.bf16.mxu0 0
    %1976 = vmatmul.mubr.bf16.gmra.mxu0 %v1239
    %v1977 = vpop.f32.mrf.mxu0
    %v1978 = vadd.f32 %v1616, %v1977
    %v1979 = vpop.f32.mrf.mxu0
    %v1980 = vadd.f32 %v1620, %v1979
    %v1981 = vpop.f32.mrf.mxu0
    %v1982 = vadd.f32 %v1616, %v1981
    %v1983 = vpop.f32.mrf.mxu0
    %v1984 = vadd.f32 %v1620, %v1983
    %1985 = vmatprep.mubr.bf16.mxu0 0
    %1986 = vmatmul.mubr.bf16.gmra.mxu0 %v1242
    %v1987 = vpop.f32.mrf.mxu0
    %v1988 = vadd.f32 %v1616, %v1987
    %v1989 = vpop.f32.mrf.mxu0
    %v1990 = vadd.f32 %v1620, %v1989
    %v1991 = vpop.f32.mrf.mxu0
    %v1992 = vadd.f32 %v1616, %v1991
    %v1993 = vpop.f32.mrf.mxu0
    %v1994 = vadd.f32 %v1620, %v1993
    %1995 = vmatprep.mubr.bf16.mxu0 0
    %1996 = vmatmul.mubr.bf16.gmra.mxu0 %v1245
    %v1997 = vpop.f32.mrf.mxu0
    %v1998 = vadd.f32 %v1616, %v1997
    %v1999 = vpop.f32.mrf.mxu0
    %v2000 = vadd.f32 %v1620, %v1999
    %v2001 = vpop.f32.mrf.mxu0
    %v2002 = vadd.f32 %v1616, %v2001
    %v2003 = vpop.f32.mrf.mxu0
    %v2004 = vadd.f32 %v1620, %v2003
    %2005 = vmatprep.mubr.bf16.mxu0 0
    %2006 = vmatmul.mubr.bf16.gmra.mxu0 %v1248
    %v2007 = vpop.f32.mrf.mxu0
    %v2008 = vadd.f32 %v1616, %v2007
    %v2009 = vpop.f32.mrf.mxu0
    %v2010 = vadd.f32 %v1620, %v2009
    %v2011 = vpop.f32.mrf.mxu0
    %v2012 = vadd.f32 %v1616, %v2011
    %v2013 = vpop.f32.mrf.mxu0
    %v2014 = vadd.f32 %v1620, %v2013
    %2015 = vdwg.mxu0
    %2016 = vst [vmem:[%s8] sm:$0xff] %v1698
    %2017 = vst.msk [vmem:[%s8 + $0x8] sm:$0xff] %vm107, %v1700
    %2018 = vst [vmem:[%s8 + $0x10] sm:$0xff] %v1702
    %2019 = vst.msk [vmem:[%s8 + $0x18] sm:$0xff] %vm107, %v1704
    %2020 = vst [vmem:[%s8 + $0x20] sm:$0xff] %v1708
    %2021 = vst.msk [vmem:[%s8 + $0x28] sm:$0xff] %vm107, %v1710
    %2022 = vst [vmem:[%s8 + $0x30] sm:$0xff] %v1712
    %2023 = vst.msk [vmem:[%s8 + $0x38] sm:$0xff] %vm107, %v1714
    %2024 = vst [vmem:[%s8 + $0x40] sm:$0xff] %v1718
    %2025 = vst.msk [vmem:[%s8 + $0x48] sm:$0xff] %vm107, %v1720
    %2026 = vst [vmem:[%s8 + $0x50] sm:$0xff] %v1722
    %2027 = vst.msk [vmem:[%s8 + $0x58] sm:$0xff] %vm107, %v1724
    %2028 = vst [vmem:[%s8 + $0x60] sm:$0xff] %v1728
    %2029 = vst.msk [vmem:[%s8 + $0x68] sm:$0xff] %vm107, %v1730
    %2030 = vst [vmem:[%s8 + $0x70] sm:$0xff] %v1732
    %2031 = vst.msk [vmem:[%s8 + $0x78] sm:$0xff] %vm107, %v1734
    %2032 = vst [vmem:[%s8 + $0x80] sm:$0xff] %v1738
    %2033 = vst.msk [vmem:[%s8 + $0x88] sm:$0xff] %vm107, %v1740
    %2034 = vst [vmem:[%s8 + $0x90] sm:$0xff] %v1742
    %2035 = vst.msk [vmem:[%s8 + $0x98] sm:$0xff] %vm107, %v1744
    %2036 = vst [vmem:[%s8 + $0xa0] sm:$0xff] %v1748
    %2037 = vst.msk [vmem:[%s8 + $0xa8] sm:$0xff] %vm107, %v1750
    %2038 = vst [vmem:[%s8 + $0xb0] sm:$0xff] %v1752
    %2039 = vst.msk [vmem:[%s8 + $0xb8] sm:$0xff] %vm107, %v1754
    %2040 = vst [vmem:[%s8 + $0xc0] sm:$0xff] %v1758
    %2041 = vst.msk [vmem:[%s8 + $0xc8] sm:$0xff] %vm107, %v1760
    %2042 = vst [vmem:[%s8 + $0xd0] sm:$0xff] %v1762
    %2043 = vst.msk [vmem:[%s8 + $0xd8] sm:$0xff] %vm107, %v1764
    %2044 = vst [vmem:[%s8 + $0xe0] sm:$0xff] %v1768
    %2045 = vst.msk [vmem:[%s8 + $0xe8] sm:$0xff] %vm107, %v1770
    %2046 = vst [vmem:[%s8 + $0xf0] sm:$0xff] %v1772
    %2047 = vst.msk [vmem:[%s8 + $0xf8] sm:$0xff] %vm107, %v1774
    %2048 = vst [vmem:[%s8 + $0x100] sm:$0xff] %v1778
    %2049 = vst.msk [vmem:[%s8 + $0x108] sm:$0xff] %vm107, %v1780
    %2050 = vst [vmem:[%s8 + $0x110] sm:$0xff] %v1782
    %2051 = vst.msk [vmem:[%s8 + $0x118] sm:$0xff] %vm107, %v1784
    %2052 = vst [vmem:[%s8 + $0x120] sm:$0xff] %v1788
    %2053 = vst.msk [vmem:[%s8 + $0x128] sm:$0xff] %vm107, %v1790
    %2054 = vst [vmem:[%s8 + $0x130] sm:$0xff] %v1792
    %2055 = vst.msk [vmem:[%s8 + $0x138] sm:$0xff] %vm107, %v1794
    %2056 = vst [vmem:[%s8 + $0x140] sm:$0xff] %v1798
    %2057 = vst.msk [vmem:[%s8 + $0x148] sm:$0xff] %vm107, %v1800
    %2058 = vst [vmem:[%s8 + $0x150] sm:$0xff] %v1802
    %2059 = vst.msk [vmem:[%s8 + $0x158] sm:$0xff] %vm107, %v1804
    %2060 = vst [vmem:[%s8 + $0x160] sm:$0xff] %v1808
    %2061 = vst.msk [vmem:[%s8 + $0x168] sm:$0xff] %vm107, %v1810
    %2062 = vst [vmem:[%s8 + $0x170] sm:$0xff] %v1812
    %2063 = vst.msk [vmem:[%s8 + $0x178] sm:$0xff] %vm107, %v1814
    %2064 = vst [vmem:[%s8 + $0x180] sm:$0xff] %v1818
    %2065 = vst.msk [vmem:[%s8 + $0x188] sm:$0xff] %vm107, %v1820
    %2066 = vst [vmem:[%s8 + $0x190] sm:$0xff] %v1822
    %2067 = vst.msk [vmem:[%s8 + $0x198] sm:$0xff] %vm107, %v1824
    %2068 = vst [vmem:[%s8 + $0x1a0] sm:$0xff] %v1828
    %2069 = vst.msk [vmem:[%s8 + $0x1a8] sm:$0xff] %vm107, %v1830
    %2070 = vst [vmem:[%s8 + $0x1b0] sm:$0xff] %v1832
    %2071 = vst.msk [vmem:[%s8 + $0x1b8] sm:$0xff] %vm107, %v1834
    %2072 = vst [vmem:[%s8 + $0x1c0] sm:$0xff] %v1838
    %2073 = vst.msk [vmem:[%s8 + $0x1c8] sm:$0xff] %vm107, %v1840
    %2074 = vst [vmem:[%s8 + $0x1d0] sm:$0xff] %v1842
    %2075 = vst.msk [vmem:[%s8 + $0x1d8] sm:$0xff] %vm107, %v1844
    %2076 = vst [vmem:[%s8 + $0x1e0] sm:$0xff] %v1848
    %2077 = vst.msk [vmem:[%s8 + $0x1e8] sm:$0xff] %vm107, %v1850
    %2078 = vst [vmem:[%s8 + $0x1f0] sm:$0xff] %v1852
    %2079 = vst.msk [vmem:[%s8 + $0x1f8] sm:$0xff] %vm107, %v1854
    %2080 = vst [vmem:[%s8 + $0x200] sm:$0xff] %v1858
    %2081 = vst.msk [vmem:[%s8 + $0x208] sm:$0xff] %vm107, %v1860
    %2082 = vst [vmem:[%s8 + $0x210] sm:$0xff] %v1862
    %2083 = vst.msk [vmem:[%s8 + $0x218] sm:$0xff] %vm107, %v1864
    %2084 = vst [vmem:[%s8 + $0x220] sm:$0xff] %v1868
    %2085 = vst.msk [vmem:[%s8 + $0x228] sm:$0xff] %vm107, %v1870
    %2086 = vst [vmem:[%s8 + $0x230] sm:$0xff] %v1872
    %2087 = vst.msk [vmem:[%s8 + $0x238] sm:$0xff] %vm107, %v1874
    %2088 = vst [vmem:[%s8 + $0x240] sm:$0xff] %v1878
    %2089 = vst.msk [vmem:[%s8 + $0x248] sm:$0xff] %vm107, %v1880
    %2090 = vst [vmem:[%s8 + $0x250] sm:$0xff] %v1882
    %2091 = vst.msk [vmem:[%s8 + $0x258] sm:$0xff] %vm107, %v1884
    %2092 = vst [vmem:[%s8 + $0x260] sm:$0xff] %v1888
    %2093 = vst.msk [vmem:[%s8 + $0x268] sm:$0xff] %vm107, %v1890
    %2094 = vst [vmem:[%s8 + $0x270] sm:$0xff] %v1892
    %2095 = vst.msk [vmem:[%s8 + $0x278] sm:$0xff] %vm107, %v1894
    %2096 = vst [vmem:[%s8 + $0x280] sm:$0xff] %v1898
    %2097 = vst.msk [vmem:[%s8 + $0x288] sm:$0xff] %vm107, %v1900
    %2098 = vst [vmem:[%s8 + $0x290] sm:$0xff] %v1902
    %2099 = vst.msk [vmem:[%s8 + $0x298] sm:$0xff] %vm107, %v1904
    %2100 = vst [vmem:[%s8 + $0x2a0] sm:$0xff] %v1908
    %2101 = vst.msk [vmem:[%s8 + $0x2a8] sm:$0xff] %vm107, %v1910
    %2102 = vst [vmem:[%s8 + $0x2b0] sm:$0xff] %v1912
    %2103 = vst.msk [vmem:[%s8 + $0x2b8] sm:$0xff] %vm107, %v1914
    %2104 = vst [vmem:[%s8 + $0x2c0] sm:$0xff] %v1918
    %2105 = vst.msk [vmem:[%s8 + $0x2c8] sm:$0xff] %vm107, %v1920
    %2106 = vst [vmem:[%s8 + $0x2d0] sm:$0xff] %v1922
    %2107 = vst.msk [vmem:[%s8 + $0x2d8] sm:$0xff] %vm107, %v1924
    %2108 = vst [vmem:[%s8 + $0x2e0] sm:$0xff] %v1928
    %2109 = vst.msk [vmem:[%s8 + $0x2e8] sm:$0xff] %vm107, %v1930
    %2110 = vst [vmem:[%s8 + $0x2f0] sm:$0xff] %v1932
    %2111 = vst.msk [vmem:[%s8 + $0x2f8] sm:$0xff] %vm107, %v1934
    %2112 = vst [vmem:[%s8 + $0x300] sm:$0xff] %v1938
    %2113 = vst.msk [vmem:[%s8 + $0x308] sm:$0xff] %vm107, %v1940
    %2114 = vst [vmem:[%s8 + $0x310] sm:$0xff] %v1942
    %2115 = vst.msk [vmem:[%s8 + $0x318] sm:$0xff] %vm107, %v1944
    %2116 = vst [vmem:[%s8 + $0x320] sm:$0xff] %v1948
    %2117 = vst.msk [vmem:[%s8 + $0x328] sm:$0xff] %vm107, %v1950
    %2118 = vst [vmem:[%s8 + $0x330] sm:$0xff] %v1952
    %2119 = vst.msk [vmem:[%s8 + $0x338] sm:$0xff] %vm107, %v1954
    %2120 = vst [vmem:[%s8 + $0x340] sm:$0xff] %v1958
    %2121 = vst.msk [vmem:[%s8 + $0x348] sm:$0xff] %vm107, %v1960
    %2122 = vst [vmem:[%s8 + $0x350] sm:$0xff] %v1962
    %2123 = vst.msk [vmem:[%s8 + $0x358] sm:$0xff] %vm107, %v1964
    %2124 = vst [vmem:[%s8 + $0x360] sm:$0xff] %v1968
    %2125 = vst.msk [vmem:[%s8 + $0x368] sm:$0xff] %vm107, %v1970
    %2126 = vst [vmem:[%s8 + $0x370] sm:$0xff] %v1972
    %2127 = vst.msk [vmem:[%s8 + $0x378] sm:$0xff] %vm107, %v1974
    %2128 = vst [vmem:[%s8 + $0x380] sm:$0xff] %v1978
    %2129 = vst.msk [vmem:[%s8 + $0x388] sm:$0xff] %vm107, %v1980
    %2130 = vst [vmem:[%s8 + $0x390] sm:$0xff] %v1982
    %2131 = vst.msk [vmem:[%s8 + $0x398] sm:$0xff] %vm107, %v1984
    %2132 = vst [vmem:[%s8 + $0x3a0] sm:$0xff] %v1988
    %2133 = vst.msk [vmem:[%s8 + $0x3a8] sm:$0xff] %vm107, %v1990
    %2134 = vst [vmem:[%s8 + $0x3b0] sm:$0xff] %v1992
    %2135 = vst.msk [vmem:[%s8 + $0x3b8] sm:$0xff] %vm107, %v1994
    %2136 = vst [vmem:[%s8 + $0x3c0] sm:$0xff] %v1998
    %2137 = vst.msk [vmem:[%s8 + $0x3c8] sm:$0xff] %vm107, %v2000
    %2138 = vst [vmem:[%s8 + $0x3d0] sm:$0xff] %v2002
    %2139 = vst.msk [vmem:[%s8 + $0x3d8] sm:$0xff] %vm107, %v2004
    %2140 = vst [vmem:[%s8 + $0x3e0] sm:$0xff] %v2008
    %2141 = vst.msk [vmem:[%s8 + $0x3e8] sm:$0xff] %vm107, %v2010
    %2142 = vst [vmem:[%s8 + $0x3f0] sm:$0xff] %v2012
    %2143 = vst.msk [vmem:[%s8 + $0x3f8] sm:$0xff] %vm107, %v2014
    // Predicated region
    $region34: #{attention_c_m_forward.3} parent=1 // pred_check
      _
    $region35: #{attention_c_m_forward.3} parent=1 // pred_check_branch
      %2145 = sbr.rel (0) target = $region37
    $region36: #{attention_c_m_forward.3} parent=1 // pred_region
      _
    $region37: #{attention_c_m_forward.3} parent=1 // pred_fallthru
      _
    // Predicated region
    $region38: #{attention_c_m_forward.3} parent=1 // pred_check
      _
    $region39: #{attention_c_m_forward.3} parent=1 // pred_check_branch
      %2147 = sbr.rel (0) target = $region41
    $region40: #{attention_c_m_forward.3} parent=1 // pred_region
      _
    $region41: #{attention_c_m_forward.3} parent=1 // pred_fallthru
      _
    // Predicated region
    $region42: #{attention_c_m_forward.3} parent=1 // pred_check
      _
    $region43: #{attention_c_m_forward.3} parent=1 // pred_check_branch
      %2149 = sbr.rel (0) target = $region45
    $region44: #{attention_c_m_forward.3} parent=1 // pred_region
      _
    $region45: #{attention_c_m_forward.3} parent=1 // pred_fallthru
      _
    // Predicated region
    $region46: #{attention_c_m_forward.3} parent=1 // pred_check
      _
    $region47: #{attention_c_m_forward.3} parent=1 // pred_check_branch
      %2151 = sbr.rel (0) target = $region49
    $region48: #{attention_c_m_forward.3} parent=1 // pred_region
      _
    $region49: #{attention_c_m_forward.3} parent=1 // pred_fallthru
      _
    %2152 = vsyncpa [#allocation3], 1

// kernel: attention_c_m_forward.4
$region0: #{attention_c_m_forward.4}
  #allocation0 [shape = 'u32[]', space=smem, size = 0x4, offset = 0x4, fixed_abs, tag = 'smem constant byte address 0x4 - core index']
  #allocation1 [shape = 'u32[144,128]{1,0:T(1,128)}', space=vmem, size = 0x12000, scoped, tag = 'internal scratch']
  %s0 = inlined_call_operand.vmem [shape: f32[4], index: 0, kind: input, shape index: {}]
  %s1 = inlined_call_operand.vmem [shape: f32[2,256,192], index: 1, kind: input, shape index: {}]
  %s2 = inlined_call_operand.vmem [shape: f32[2,256,64], index: 2, kind: output, shape index: {}]
  %s3 = sld [smem:[#allocation0]]
  $region45: #{attention_c_m_forward.4} parent=0
    _
  %s5 = ssub.s32 1, %s3
  %s6 = scalar_select 0, %s5, %s3
  $region1: #{attention_c_m_forward.4} parent=0
    #allocation2 [shape = 'u8[512]{0}', space=smem, size = 0x200, scoped, tag = 'input window, operand 0, single buffered']
    #allocation3 [shape = 's32[2]{0}', space=sflag, size = 0x8, scoped, tag = 'scoped memory for attention_c_m_forward.4']
    %7 = vsyncpa [#allocation3], 0
    loop: start=0, step=1, limit=4
    $region2: #{attention_c_m_forward.4} parent=1 // loop_pre_header
      _
    $region3: #{attention_c_m_forward.4} parent=1 // loop_header
      %s9 = sphi 0, %s13
      %p10 = scmp.ge.s32.totalorder %s9, 4
      %s17 = sphi 0, %s17
      %s19 = sphi 0, %s17
      %s20 = sphi 0, %s19
      %s34 = sphi 0, %s20
      %s40 = sphi 0, %s42
      %s43 = sphi 0, %s40
      %s44 = sphi 0, %s43
      %s60 = sphi 0, %s44
      %s66 = sphi 0, %s68
      %s69 = sphi 0, %s66
      %s70 = sphi 0, %s69
      %s86 = sphi 0, %s70
    $region4: #{attention_c_m_forward.4} parent=1 // loop_header_branch
      %12 = sbr.rel (%p10) target = $region8
    $region5: #{attention_c_m_forward.4} parent=1 // loop_body
      %s14 = ssub.s32 %s9, 1
      %s15 = ssub.s32 %s9, 2
      %s16 = sadd.s32 %s9, 1
      %s18 = sadd.s32 %s17, 1
      %p21 = scmp.eq.s32.totalorder %s9, 1
      %p22 = scmp.ne.s32.totalorder %s17, %s19
      %p23 = scmp.eq.s32.totalorder %s9, 0
      %p24 = por %p22, %p23
      %p25 = scmp.ne.s32.totalorder %s17, %s19
      %p26 = scmp.eq.s32.totalorder %s14, 1
      %p27 = por %p25, %p26
      %p28 = scmp.ne.s32.totalorder %s19, %s20
      %p29 = scmp.eq.s32.totalorder %s14, 0
      %p30 = por %p28, %p29
      %p31 = scmp.ne.s32.totalorder %s19, %s20
      %p32 = scmp.eq.s32.totalorder %s15, 1
      %p33 = por %p31, %p32
      %p35 = scmp.ne.s32.totalorder %s20, %s34
      %p36 = scmp.eq.s32.totalorder %s15, 0
      %p37 = por %p35, %p36
      %s38 = ssub.s32 %s9, %s16
      %p39 = scmp.eq.s32.totalorder %s38, 0
      %s41 = sadd.s32 %s40, 1
      %s42 = scalar_select %p39, %s40, %s41
      %p45 = pneg %p39
      %p46 = scmp.eq.s32.totalorder %s9, 1
      %p47 = por %p45, %p46
      %p48 = scmp.ne.s32.totalorder %s40, %s43
      %p49 = scmp.eq.s32.totalorder %s9, 0
      %p50 = por %p48, %p49
      %p51 = scmp.ne.s32.totalorder %s40, %s43
      %p52 = scmp.eq.s32.totalorder %s14, 1
      %p53 = por %p51, %p52
      %p54 = scmp.ne.s32.totalorder %s43, %s44
      %p55 = scmp.eq.s32.totalorder %s14, 0
      %p56 = por %p54, %p55
      %p57 = scmp.ne.s32.totalorder %s43, %s44
      %p58 = scmp.eq.s32.totalorder %s15, 1
      %p59 = por %p57, %p58
      %p61 = scmp.ne.s32.totalorder %s44, %s60
      %p62 = scmp.eq.s32.totalorder %s15, 0
      %p63 = por %p61, %p62
      %s64 = ssub.s32 %s9, %s16
      %p65 = scmp.eq.s32.totalorder %s64, 0
      %s67 = sadd.s32 %s66, 1
      %s68 = scalar_select %p65, %s66, %s67
      %p71 = pneg %p65
      %p72 = scmp.eq.s32.totalorder %s9, 1
      %p73 = por %p71, %p72
      %p74 = scmp.ne.s32.totalorder %s66, %s69
      %p75 = scmp.eq.s32.totalorder %s9, 0
      %p76 = por %p74, %p75
      %p77 = scmp.ne.s32.totalorder %s66, %s69
      %p78 = scmp.eq.s32.totalorder %s14, 1
      %p79 = por %p77, %p78
      %p80 = scmp.ne.s32.totalorder %s69, %s70
      %p81 = scmp.eq.s32.totalorder %s14, 0
      %p82 = por %p80, %p81
      %p83 = scmp.ne.s32.totalorder %s69, %s70
      %p84 = scmp.eq.s32.totalorder %s15, 1
      %p85 = por %p83, %p84
      %p87 = scmp.ne.s32.totalorder %s70, %s86
      %p88 = scmp.eq.s32.totalorder %s15, 0
      %p89 = por %p87, %p88
      %p90 = scmp.le.s32.totalorder 1, %s9
      %p91 = scmp.lt.s32.totalorder %s9, 3
      %p92 = pnand %p90, %p91
      %p93 = pneg %p92
      // Predicated region
      $region9: #{attention_c_m_forward.4} parent=5 // pred_check
        _
      $region10: #{attention_c_m_forward.4} parent=5 // pred_check_branch
        %95 = sbr.rel (%p92) target = $region12
      $region11: #{attention_c_m_forward.4} parent=5 // pred_region
        %s96 = ssub.s32 %s9, 1
        // Predicated region
        $region13: #{attention_c_m_forward.4} parent=11 // pred_check
          %p97 = pneg %p30
        $region14: #{attention_c_m_forward.4} parent=11 // pred_check_branch
          %99 = sbr.rel (%p97) target = $region16
        $region15: #{attention_c_m_forward.4} parent=11 // pred_region
          %s101 = ssub.s32 16, 16
          %102 = vsyncadd [#allocation3], %s101
          %s104 = sshll.u32 %s0, 4
          %s105 = int_to_ptr.vmem [resolvable:$true] %s104
          %107 = dma.vmem_to_smem %s105, 16, [#allocation2], [#allocation3]
        $region16: #{attention_c_m_forward.4} parent=11 // pred_fallthru
          _
      $region12: #{attention_c_m_forward.4} parent=5 // pred_fallthru
        _
      %p108 = scmp.lt.s32.totalorder %s9, 2
      // Predicated region
      $region17: #{attention_c_m_forward.4} parent=5 // pred_check
        %p109 = pneg %p108
      $region18: #{attention_c_m_forward.4} parent=5 // pred_check_branch
        %111 = sbr.rel (%p109) target = $region20
      $region19: #{attention_c_m_forward.4} parent=5 // pred_region
        // Predicated region
        $region21: #{attention_c_m_forward.4} parent=19 // pred_check
          %p112 = pneg %p50
        $region22: #{attention_c_m_forward.4} parent=19 // pred_check_branch
          %114 = sbr.rel (%p112) target = $region24
        $region23: #{attention_c_m_forward.4} parent=19 // pred_region
          %p115 = scmp.lt.s32.totalorder %s9, 1
          %s116 = scalar_select %p115, %s9, 1
          %s117 = smul.addr %s116, 64
          %s118 = smul.addr %s117, 8
          %s119 = scalar_lea.vmem %s1, %s118
        $region24: #{attention_c_m_forward.4} parent=19 // pred_fallthru
          _
      $region20: #{attention_c_m_forward.4} parent=5 // pred_fallthru
        _
      %p120 = scmp.le.s32.totalorder 1, %s9
      %p121 = scmp.lt.s32.totalorder %s9, 3
      %p122 = pnand %p120, %p121
      %p123 = pneg %p122
      // Predicated region
      $region25: #{attention_c_m_forward.4} parent=5 // pred_check
        _
      $region26: #{attention_c_m_forward.4} parent=5 // pred_check_branch
        %125 = sbr.rel (%p122) target = $region28
      $region27: #{attention_c_m_forward.4} parent=5 // pred_region
        %s126 = ssub.s32 %s9, 1
        // Predicated region
        $region29: #{attention_c_m_forward.4} parent=27 // pred_check
          %p127 = pneg %p30
        $region30: #{attention_c_m_forward.4} parent=27 // pred_check_branch
          %129 = sbr.rel (%p127) target = $region32
        $region31: #{attention_c_m_forward.4} parent=27 // pred_region
          %130 = dma.done [#allocation3], 16
        $region32: #{attention_c_m_forward.4} parent=27 // pred_fallthru
          _
        %131 = sfence
        %p132 = pneg %p30
        %p133 = pneg %p27
        %p134 = scmp.lt.s32.totalorder %s14, 1
        %s135 = scalar_select %p134, %s14, 1
        %s136 = smul.addr %s135, 64
        %s137 = smul.addr %s136, 8
        %s138 = scalar_lea.vmem %s1, %s137
        %p139 = pneg %p56
        %p140 = pneg %p53
        %p141 = pneg %p82
        %p142 = pneg %p79
        %p143 = scmp.lt.s32.totalorder %s14, 1
        %s144 = scalar_select %p143, %s14, 1
        %s145 = smul.addr %s144, 32
        %s146 = smul.addr %s145, 8
        %s147 = scalar_lea.vmem %s2, %s146
        %p148 = scmp.lt.s32.totalorder %s14, 1
        %s149 = scalar_select %p148, %s14, 1
        %s150 = smul.addr %s149, 64
        %s151 = smul.addr %s150, 8
        %s152 = scalar_lea.vmem %s1, %s151
        %p153 = scmp.lt.s32.totalorder %s14, 1
        %s154 = scalar_select %p153, %s14, 1
        %s155 = smul.addr %s154, 32
        %s156 = smul.addr %s155, 8
        %s157 = scalar_lea.vmem %s2, %s156
        %v159 = vld [vmem:[%s152] sm:$0xff]
        %v160 = vld [vmem:[%s152 + $0x10] sm:$0xff]
        %v161 = vld [vmem:[%s152 + $0x20] sm:$0xff]
        %v162 = vld [vmem:[%s152 + $0x30] sm:$0xff]
        %v163 = vld [vmem:[%s152 + $0x40] sm:$0xff]
        %v164 = vld [vmem:[%s152 + $0x50] sm:$0xff]
        %v165 = vld [vmem:[%s152 + $0x60] sm:$0xff]
        %v166 = vld [vmem:[%s152 + $0x70] sm:$0xff]
        %v167 = vld [vmem:[%s152 + $0x80] sm:$0xff]
        %v168 = vld [vmem:[%s152 + $0x90] sm:$0xff]
        %v169 = vld [vmem:[%s152 + $0xa0] sm:$0xff]
        %v170 = vld [vmem:[%s152 + $0xb0] sm:$0xff]
        %v171 = vld [vmem:[%s152 + $0xc0] sm:$0xff]
        %v172 = vld [vmem:[%s152 + $0xd0] sm:$0xff]
        %v173 = vld [vmem:[%s152 + $0xe0] sm:$0xff]
        %v174 = vld [vmem:[%s152 + $0xf0] sm:$0xff]
        %v175 = vld [vmem:[%s152 + $0x100] sm:$0xff]
        %v176 = vld [vmem:[%s152 + $0x110] sm:$0xff]
        %v177 = vld [vmem:[%s152 + $0x120] sm:$0xff]
        %v178 = vld [vmem:[%s152 + $0x130] sm:$0xff]
        %v179 = vld [vmem:[%s152 + $0x140] sm:$0xff]
        %v180 = vld [vmem:[%s152 + $0x150] sm:$0xff]
        %v181 = vld [vmem:[%s152 + $0x160] sm:$0xff]
        %v182 = vld [vmem:[%s152 + $0x170] sm:$0xff]
        %v183 = vld [vmem:[%s152 + $0x180] sm:$0xff]
        %v184 = vld [vmem:[%s152 + $0x190] sm:$0xff]
        %v185 = vld [vmem:[%s152 + $0x1a0] sm:$0xff]
        %v186 = vld [vmem:[%s152 + $0x1b0] sm:$0xff]
        %v187 = vld [vmem:[%s152 + $0x1c0] sm:$0xff]
        %v188 = vld [vmem:[%s152 + $0x1d0] sm:$0xff]
        %v189 = vld [vmem:[%s152 + $0x1e0] sm:$0xff]
        %v190 = vld [vmem:[%s152 + $0x1f0] sm:$0xff]
        %v191 = vld [vmem:[%s152 + $0x8] sm:$0xff]
        %v192 = vld [vmem:[%s152 + $0x18] sm:$0xff]
        %v193 = vld [vmem:[%s152 + $0x28] sm:$0xff]
        %v194 = vld [vmem:[%s152 + $0x38] sm:$0xff]
        %v195 = vld [vmem:[%s152 + $0x48] sm:$0xff]
        %v196 = vld [vmem:[%s152 + $0x58] sm:$0xff]
        %v197 = vld [vmem:[%s152 + $0x68] sm:$0xff]
        %v198 = vld [vmem:[%s152 + $0x78] sm:$0xff]
        %v199 = vld [vmem:[%s152 + $0x88] sm:$0xff]
        %v200 = vld [vmem:[%s152 + $0x98] sm:$0xff]
        %v201 = vld [vmem:[%s152 + $0xa8] sm:$0xff]
        %v202 = vld [vmem:[%s152 + $0xb8] sm:$0xff]
        %v203 = vld [vmem:[%s152 + $0xc8] sm:$0xff]
        %v204 = vld [vmem:[%s152 + $0xd8] sm:$0xff]
        %v205 = vld [vmem:[%s152 + $0xe8] sm:$0xff]
        %v206 = vld [vmem:[%s152 + $0xf8] sm:$0xff]
        %v207 = vld [vmem:[%s152 + $0x108] sm:$0xff]
        %v208 = vld [vmem:[%s152 + $0x118] sm:$0xff]
        %v209 = vld [vmem:[%s152 + $0x128] sm:$0xff]
        %v210 = vld [vmem:[%s152 + $0x138] sm:$0xff]
        %v211 = vld [vmem:[%s152 + $0x148] sm:$0xff]
        %v212 = vld [vmem:[%s152 + $0x158] sm:$0xff]
        %v213 = vld [vmem:[%s152 + $0x168] sm:$0xff]
        %v214 = vld [vmem:[%s152 + $0x178] sm:$0xff]
        %v215 = vld [vmem:[%s152 + $0x188] sm:$0xff]
        %v216 = vld [vmem:[%s152 + $0x198] sm:$0xff]
        %v217 = vld [vmem:[%s152 + $0x1a8] sm:$0xff]
        %v218 = vld [vmem:[%s152 + $0x1b8] sm:$0xff]
        %v219 = vld [vmem:[%s152 + $0x1c8] sm:$0xff]
        %v220 = vld [vmem:[%s152 + $0x1d8] sm:$0xff]
        %v221 = vld [vmem:[%s152 + $0x1e8] sm:$0xff]
        %v222 = vld [vmem:[%s152 + $0x1f8] sm:$0xff]
        %v223 = vmul.f32 %v159, %v159
        %v224 = vmul.f32 %v160, %v160
        %v225 = vmul.f32 %v161, %v161
        %v226 = vmul.f32 %v162, %v162
        %v227 = vmul.f32 %v163, %v163
        %v228 = vmul.f32 %v164, %v164
        %v229 = vmul.f32 %v165, %v165
        %v230 = vmul.f32 %v166, %v166
        %v231 = vmul.f32 %v167, %v167
        %v232 = vmul.f32 %v168, %v168
        %v233 = vmul.f32 %v169, %v169
        %v234 = vmul.f32 %v170, %v170
        %v235 = vmul.f32 %v171, %v171
        %v236 = vmul.f32 %v172, %v172
        %v237 = vmul.f32 %v173, %v173
        %v238 = vmul.f32 %v174, %v174
        %v239 = vmul.f32 %v175, %v175
        %v240 = vmul.f32 %v176, %v176
        %v241 = vmul.f32 %v177, %v177
        %v242 = vmul.f32 %v178, %v178
        %v243 = vmul.f32 %v179, %v179
        %v244 = vmul.f32 %v180, %v180
        %v245 = vmul.f32 %v181, %v181
        %v246 = vmul.f32 %v182, %v182
        %v247 = vmul.f32 %v183, %v183
        %v248 = vmul.f32 %v184, %v184
        %v249 = vmul.f32 %v185, %v185
        %v250 = vmul.f32 %v186, %v186
        %v251 = vmul.f32 %v187, %v187
        %v252 = vmul.f32 %v188, %v188
        %v253 = vmul.f32 %v189, %v189
        %v254 = vmul.f32 %v190, %v190
        %vm255 = vcmask 130048
        %v256 = vsel %vm255, %v223, 0.0
        %v257 = vsel %vm255, %v224, 0.0
        %v258 = vadd.f32 %v256, %v257
        %v259 = vsel %vm255, %v225, 0.0
        %v260 = vadd.f32 %v258, %v259
        %v261 = vsel %vm255, %v226, 0.0
        %v262 = vadd.f32 %v260, %v261
        %v263 = vsel %vm255, %v227, 0.0
        %v264 = vadd.f32 %v262, %v263
        %v265 = vsel %vm255, %v228, 0.0
        %v266 = vadd.f32 %v264, %v265
        %v267 = vsel %vm255, %v229, 0.0
        %v268 = vadd.f32 %v266, %v267
        %v269 = vsel %vm255, %v230, 0.0
        %v270 = vadd.f32 %v268, %v269
        %v271 = vsel %vm255, %v231, 0.0
        %v272 = vadd.f32 %v270, %v271
        %v273 = vsel %vm255, %v232, 0.0
        %v274 = vadd.f32 %v272, %v273
        %v275 = vsel %vm255, %v233, 0.0
        %v276 = vadd.f32 %v274, %v275
        %v277 = vsel %vm255, %v234, 0.0
        %v278 = vadd.f32 %v276, %v277
        %v279 = vsel %vm255, %v235, 0.0
        %v280 = vadd.f32 %v278, %v279
        %v281 = vsel %vm255, %v236, 0.0
        %v282 = vadd.f32 %v280, %v281
        %v283 = vsel %vm255, %v237, 0.0
        %v284 = vadd.f32 %v282, %v283
        %v285 = vsel %vm255, %v238, 0.0
        %v286 = vadd.f32 %v284, %v285
        %v287 = vsel %vm255, %v239, 0.0
        %v288 = vadd.f32 %v286, %v287
        %v289 = vsel %vm255, %v240, 0.0
        %v290 = vadd.f32 %v288, %v289
        %v291 = vsel %vm255, %v241, 0.0
        %v292 = vadd.f32 %v290, %v291
        %v293 = vsel %vm255, %v242, 0.0
        %v294 = vadd.f32 %v292, %v293
        %v295 = vsel %vm255, %v243, 0.0
        %v296 = vadd.f32 %v294, %v295
        %v297 = vsel %vm255, %v244, 0.0
        %v298 = vadd.f32 %v296, %v297
        %v299 = vsel %vm255, %v245, 0.0
        %v300 = vadd.f32 %v298, %v299
        %v301 = vsel %vm255, %v246, 0.0
        %v302 = vadd.f32 %v300, %v301
        %v303 = vsel %vm255, %v247, 0.0
        %v304 = vadd.f32 %v302, %v303
        %v305 = vsel %vm255, %v248, 0.0
        %v306 = vadd.f32 %v304, %v305
        %v307 = vsel %vm255, %v249, 0.0
        %v308 = vadd.f32 %v306, %v307
        %v309 = vsel %vm255, %v250, 0.0
        %v310 = vadd.f32 %v308, %v309
        %v311 = vsel %vm255, %v251, 0.0
        %v312 = vadd.f32 %v310, %v311
        %v313 = vsel %vm255, %v252, 0.0
        %v314 = vadd.f32 %v312, %v313
        %v315 = vsel %vm255, %v253, 0.0
        %v316 = vadd.f32 %v314, %v315
        %v317 = vsel %vm255, %v254, 0.0
        %v318 = vadd.f32 %v316, %v317
        %v319 = vrot.slane %v318, 4
        %v320 = vadd.f32 %v318, %v319
        %v321 = vrot.slane %v320, 2
        %v322 = vadd.f32 %v320, %v321
        %v323 = vrot.slane %v322, 1
        %v324 = vadd.f32 %v322, %v323
        %v325 = vmax.f32 %v324, 1e-24
        %v326 = vrsqrt.pop %v325
        %v327 = vmul.f32 %v159, %v326
        %v328 = vmul.f32 %v160, %v326
        %v329 = vmul.f32 %v161, %v326
        %v330 = vmul.f32 %v162, %v326
        %v331 = vmul.f32 %v163, %v326
        %v332 = vmul.f32 %v164, %v326
        %v333 = vmul.f32 %v165, %v326
        %v334 = vmul.f32 %v166, %v326
        %v335 = vmul.f32 %v167, %v326
        %v336 = vmul.f32 %v168, %v326
        %v337 = vmul.f32 %v169, %v326
        %v338 = vmul.f32 %v170, %v326
        %v339 = vmul.f32 %v171, %v326
        %v340 = vmul.f32 %v172, %v326
        %v341 = vmul.f32 %v173, %v326
        %v342 = vmul.f32 %v174, %v326
        %v343 = vmul.f32 %v175, %v326
        %v344 = vmul.f32 %v176, %v326
        %v345 = vmul.f32 %v177, %v326
        %v346 = vmul.f32 %v178, %v326
        %v347 = vmul.f32 %v179, %v326
        %v348 = vmul.f32 %v180, %v326
        %v349 = vmul.f32 %v181, %v326
        %v350 = vmul.f32 %v182, %v326
        %v351 = vmul.f32 %v183, %v326
        %v352 = vmul.f32 %v184, %v326
        %v353 = vmul.f32 %v185, %v326
        %v354 = vmul.f32 %v186, %v326
        %v355 = vmul.f32 %v187, %v326
        %v356 = vmul.f32 %v188, %v326
        %v357 = vmul.f32 %v189, %v326
        %v358 = vmul.f32 %v190, %v326
        %vm359 = vcmask 654848
        %v360 = vsel %vm359, %v223, 0.0
        %v361 = vsel %vm359, %v224, 0.0
        %v362 = vadd.f32 %v360, %v361
        %v363 = vsel %vm359, %v225, 0.0
        %v364 = vadd.f32 %v362, %v363
        %v365 = vsel %vm359, %v226, 0.0
        %v366 = vadd.f32 %v364, %v365
        %v367 = vsel %vm359, %v227, 0.0
        %v368 = vadd.f32 %v366, %v367
        %v369 = vsel %vm359, %v228, 0.0
        %v370 = vadd.f32 %v368, %v369
        %v371 = vsel %vm359, %v229, 0.0
        %v372 = vadd.f32 %v370, %v371
        %v373 = vsel %vm359, %v230, 0.0
        %v374 = vadd.f32 %v372, %v373
        %v375 = vsel %vm359, %v231, 0.0
        %v376 = vadd.f32 %v374, %v375
        %v377 = vsel %vm359, %v232, 0.0
        %v378 = vadd.f32 %v376, %v377
        %v379 = vsel %vm359, %v233, 0.0
        %v380 = vadd.f32 %v378, %v379
        %v381 = vsel %vm359, %v234, 0.0
        %v382 = vadd.f32 %v380, %v381
        %v383 = vsel %vm359, %v235, 0.0
        %v384 = vadd.f32 %v382, %v383
        %v385 = vsel %vm359, %v236, 0.0
        %v386 = vadd.f32 %v384, %v385
        %v387 = vsel %vm359, %v237, 0.0
        %v388 = vadd.f32 %v386, %v387
        %v389 = vsel %vm359, %v238, 0.0
        %v390 = vadd.f32 %v388, %v389
        %v391 = vsel %vm359, %v239, 0.0
        %v392 = vadd.f32 %v390, %v391
        %v393 = vsel %vm359, %v240, 0.0
        %v394 = vadd.f32 %v392, %v393
        %v395 = vsel %vm359, %v241, 0.0
        %v396 = vadd.f32 %v394, %v395
        %v397 = vsel %vm359, %v242, 0.0
        %v398 = vadd.f32 %v396, %v397
        %v399 = vsel %vm359, %v243, 0.0
        %v400 = vadd.f32 %v398, %v399
        %v401 = vsel %vm359, %v244, 0.0
        %v402 = vadd.f32 %v400, %v401
        %v403 = vsel %vm359, %v245, 0.0
        %v404 = vadd.f32 %v402, %v403
        %v405 = vsel %vm359, %v246, 0.0
        %v406 = vadd.f32 %v404, %v405
        %v407 = vsel %vm359, %v247, 0.0
        %v408 = vadd.f32 %v406, %v407
        %v409 = vsel %vm359, %v248, 0.0
        %v410 = vadd.f32 %v408, %v409
        %v411 = vsel %vm359, %v249, 0.0
        %v412 = vadd.f32 %v410, %v411
        %v413 = vsel %vm359, %v250, 0.0
        %v414 = vadd.f32 %v412, %v413
        %v415 = vsel %vm359, %v251, 0.0
        %v416 = vadd.f32 %v414, %v415
        %v417 = vsel %vm359, %v252, 0.0
        %v418 = vadd.f32 %v416, %v417
        %v419 = vsel %vm359, %v253, 0.0
        %v420 = vadd.f32 %v418, %v419
        %v421 = vsel %vm359, %v254, 0.0
        %v422 = vadd.f32 %v420, %v421
        %v423 = vrot.slane %v422, 4
        %v424 = vadd.f32 %v422, %v423
        %v425 = vrot.slane %v424, 2
        %v426 = vadd.f32 %v424, %v425
        %v427 = vrot.slane %v426, 1
        %v428 = vadd.f32 %v426, %v427
        %v429 = vmax.f32 %v428, 1e-24
        %v430 = vrsqrt.pop %v429
        %v431 = vmul.f32 %v159, %v430
        %v432 = vmul.f32 %v160, %v430
        %v433 = vmul.f32 %v161, %v430
        %v434 = vmul.f32 %v162, %v430
        %v435 = vmul.f32 %v163, %v430
        %v436 = vmul.f32 %v164, %v430
        %v437 = vmul.f32 %v165, %v430
        %v438 = vmul.f32 %v166, %v430
        %v439 = vmul.f32 %v167, %v430
        %v440 = vmul.f32 %v168, %v430
        %v441 = vmul.f32 %v169, %v430
        %v442 = vmul.f32 %v170, %v430
        %v443 = vmul.f32 %v171, %v430
        %v444 = vmul.f32 %v172, %v430
        %v445 = vmul.f32 %v173, %v430
        %v446 = vmul.f32 %v174, %v430
        %v447 = vmul.f32 %v175, %v430
        %v448 = vmul.f32 %v176, %v430
        %v449 = vmul.f32 %v177, %v430
        %v450 = vmul.f32 %v178, %v430
        %v451 = vmul.f32 %v179, %v430
        %v452 = vmul.f32 %v180, %v430
        %v453 = vmul.f32 %v181, %v430
        %v454 = vmul.f32 %v182, %v430
        %v455 = vmul.f32 %v183, %v430
        %v456 = vmul.f32 %v184, %v430
        %v457 = vmul.f32 %v185, %v430
        %v458 = vmul.f32 %v186, %v430
        %v459 = vmul.f32 %v187, %v430
        %v460 = vmul.f32 %v188, %v430
        %v461 = vmul.f32 %v189, %v430
        %v462 = vmul.f32 %v190, %v430
        %v463 = vpack.c.bf16 %v328, %v327
        %v464 = vpack.c.bf16 %v330, %v329
        %v465 = vpack.c.bf16 %v332, %v331
        %v466 = vpack.c.bf16 %v334, %v333
        %v467 = vpack.c.bf16 %v336, %v335
        %v468 = vpack.c.bf16 %v338, %v337
        %v469 = vpack.c.bf16 %v340, %v339
        %v470 = vpack.c.bf16 %v342, %v341
        %v471 = vpack.c.bf16 %v344, %v343
        %v472 = vpack.c.bf16 %v346, %v345
        %v473 = vpack.c.bf16 %v348, %v347
        %v474 = vpack.c.bf16 %v350, %v349
        %v475 = vpack.c.bf16 %v352, %v351
        %v476 = vpack.c.bf16 %v354, %v353
        %v477 = vpack.c.bf16 %v356, %v355
        %v478 = vpack.c.bf16 %v358, %v357
        %v479 = vpack.c.bf16 %v432, %v431
        %v480 = vpack.c.bf16 %v434, %v433
        %v481 = vpack.c.bf16 %v436, %v435
        %v482 = vpack.c.bf16 %v438, %v437
        %v483 = vpack.c.bf16 %v440, %v439
        %v484 = vpack.c.bf16 %v442, %v441
        %v485 = vpack.c.bf16 %v444, %v443
        %v486 = vpack.c.bf16 %v446, %v445
        %v487 = vpack.c.bf16 %v448, %v447
        %v488 = vpack.c.bf16 %v450, %v449
        %v489 = vpack.c.bf16 %v452, %v451
        %v490 = vpack.c.bf16 %v454, %v453
        %v491 = vpack.c.bf16 %v456, %v455
        %v492 = vpack.c.bf16 %v458, %v457
        %v493 = vpack.c.bf16 %v460, %v459
        %v494 = vpack.c.bf16 %v462, %v461
        %495 = vxpose.xlu0.c.b16.start [1/8] %v463, 128
        %496 = vxpose.xlu0.c.b16.cont [2/8] %v464, 128
        %497 = vxpose.xlu0.c.b16.cont [3/8] %v465, 128
        %498 = vxpose.xlu0.c.b16.cont [4/8] %v466, 128
        %499 = vxpose.xlu0.c.b16.cont [5/8] %v467, 128
        %500 = vxpose.xlu0.c.b16.cont [6/8] %v468, 128
        %501 = vxpose.xlu0.c.b16.cont [7/8] %v469, 128
        %502 = vxpose.xlu0.c.b16.end [8/8] %v470, 128
        %v503 = vpop.trf.xlu0
        %v504 = vpop.trf.xlu0
        %v505 = vpop.trf.xlu0
        %v506 = vpop.trf.xlu0
        %v507 = vpop.trf.xlu0
        %v508 = vpop.trf.xlu0
        %v509 = vpop.trf.xlu0
        %v510 = vpop.trf.xlu0
        %511 = vxpose.xlu0.c.b16.start [1/8] %v471, 128
        %512 = vxpose.xlu0.c.b16.cont [2/8] %v472, 128
        %513 = vxpose.xlu0.c.b16.cont [3/8] %v473, 128
        %514 = vxpose.xlu0.c.b16.cont [4/8] %v474, 128
        %515 = vxpose.xlu0.c.b16.cont [5/8] %v475, 128
        %516 = vxpose.xlu0.c.b16.cont [6/8] %v476, 128
        %517 = vxpose.xlu0.c.b16.cont [7/8] %v477, 128
        %518 = vxpose.xlu0.c.b16.end [8/8] %v478, 128
        %v519 = vpop.trf.xlu0
        %v520 = vpop.trf.xlu0
        %v521 = vpop.trf.xlu0
        %v522 = vpop.trf.xlu0
        %v523 = vpop.trf.xlu0
        %v524 = vpop.trf.xlu0
        %v525 = vpop.trf.xlu0
        %v526 = vpop.trf.xlu0
        %543 = vrot.lane.b32.xlu0 %v479, 64
        %v544 = vpop.permute.xlu0 %543
        %545 = vrot.lane.b32.xlu0 %v480, 64
        %v546 = vpop.permute.xlu0 %545
        %547 = vrot.lane.b32.xlu0 %v481, 64
        %v548 = vpop.permute.xlu0 %547
        %549 = vrot.lane.b32.xlu0 %v482, 64
        %v550 = vpop.permute.xlu0 %549
        %551 = vrot.lane.b32.xlu0 %v483, 64
        %v552 = vpop.permute.xlu0 %551
        %553 = vrot.lane.b32.xlu0 %v484, 64
        %v554 = vpop.permute.xlu0 %553
        %555 = vrot.lane.b32.xlu0 %v485, 64
        %v556 = vpop.permute.xlu0 %555
        %557 = vrot.lane.b32.xlu0 %v486, 64
        %v558 = vpop.permute.xlu0 %557
        %559 = vrot.lane.b32.xlu0 %v487, 64
        %v560 = vpop.permute.xlu0 %559
        %561 = vrot.lane.b32.xlu0 %v488, 64
        %v562 = vpop.permute.xlu0 %561
        %563 = vrot.lane.b32.xlu0 %v489, 64
        %v564 = vpop.permute.xlu0 %563
        %565 = vrot.lane.b32.xlu0 %v490, 64
        %v566 = vpop.permute.xlu0 %565
        %567 = vrot.lane.b32.xlu0 %v491, 64
        %v568 = vpop.permute.xlu0 %567
        %569 = vrot.lane.b32.xlu0 %v492, 64
        %v570 = vpop.permute.xlu0 %569
        %571 = vrot.lane.b32.xlu0 %v493, 64
        %v572 = vpop.permute.xlu0 %571
        %573 = vrot.lane.b32.xlu0 %v494, 64
        %v574 = vpop.permute.xlu0 %573
        %591 = vmatprep.subr.bf16.mxu0 0
        %592 = vmatpush1.bf16.msra.mxu0 %v558
        %593 = vmatprep.subr.bf16.mxu0 0
        %594 = vmatpush1.bf16.msra.mxu0 %v556
        %595 = vmatprep.subr.bf16.mxu0 0
        %596 = vmatpush1.bf16.msra.mxu0 %v554
        %597 = vmatprep.subr.bf16.mxu0 0
        %598 = vmatpush1.bf16.msra.mxu0 %v552
        %599 = vmatprep.subr.bf16.mxu0 0
        %600 = vmatpush1.bf16.msra.mxu0 %v550
        %601 = vmatprep.subr.bf16.mxu0 0
        %602 = vmatpush1.bf16.msra.mxu0 %v548
        %603 = vmatprep.subr.bf16.mxu0 0
        %604 = vmatpush1.bf16.msra.mxu0 %v546
        %605 = vmatprep.subr.bf16.mxu0 0
        %606 = vmatpush1.bf16.msra.mxu0 %v544
        %607 = vmatprep.subr.bf16.mxu0 0
        %608 = vmatpush2.bf16.msra.mxu0 %v574
        %609 = vmatprep.subr.bf16.mxu0 0
        %610 = vmatpush2.bf16.msra.mxu0 %v572
        %611 = vmatprep.subr.bf16.mxu0 0
        %612 = vmatpush2.bf16.msra.mxu0 %v570
        %613 = vmatprep.subr.bf16.mxu0 0
        %614 = vmatpush2.bf16.msra.mxu0 %v568
        %615 = vmatprep.subr.bf16.mxu0 0
        %616 = vmatpush2.bf16.msra.mxu0 %v566
        %617 = vmatprep.subr.bf16.mxu0 0
        %618 = vmatpush2.bf16.msra.mxu0 %v564
        %619 = vmatprep.subr.bf16.mxu0 0
        %620 = vmatpush2.bf16.msra.mxu0 %v562
        %621 = vmatprep.subr.bf16.mxu0 0
        %622 = vmatpush2.bf16.msra.mxu0 %v560
        %623 = vmatprep.mubr.bf16.mxu0 %v519
        %624 = vmatmul.mubr.bf16.gmra.mxu0 %v503
        %v625 = vpop.f32.mrf.mxu0
        %v626 = vadd.f32 0.0, %v625
        %v627 = vpop.f32.mrf.mxu0
        %v628 = vpop.f32.mrf.mxu0
        %v629 = vadd.f32 0.0, %v628
        %v630 = vpop.f32.mrf.mxu0
        %631 = vdwg.mxu0
        %s632 = sld [smem:[#allocation2]]
        %v633 = vstv %s632
        %v634 = vmul.f32 %v626, %v633
        %v635 = vmul.f32 %v629, %v633
        %v636 = vmax.f32 %v634, 0.0
        %v637 = vmax.f32 %v635, 0.0
        %v638 = vpack.c.bf16 %v192, %v191
        %v639 = vpack.c.bf16 %v194, %v193
        %v640 = vpack.c.bf16 %v196, %v195
        %v641 = vpack.c.bf16 %v198, %v197
        %v642 = vpack.c.bf16 %v200, %v199
        %v643 = vpack.c.bf16 %v202, %v201
        %v644 = vpack.c.bf16 %v204, %v203
        %v645 = vpack.c.bf16 %v206, %v205
        %v646 = vpack.c.bf16 %v208, %v207
        %v647 = vpack.c.bf16 %v210, %v209
        %v648 = vpack.c.bf16 %v212, %v211
        %v649 = vpack.c.bf16 %v214, %v213
        %v650 = vpack.c.bf16 %v216, %v215
        %v651 = vpack.c.bf16 %v218, %v217
        %v652 = vpack.c.bf16 %v220, %v219
        %v653 = vpack.c.bf16 %v222, %v221
        %v654 = vpack.c.bf16 %v637, %v636
        %v656 = vsel %vm255, %v638, 0
        %v659 = vsel %vm255, %v639, 0
        %v662 = vsel %vm255, %v640, 0
        %v665 = vsel %vm255, %v641, 0
        %v668 = vsel %vm255, %v642, 0
        %v671 = vsel %vm255, %v643, 0
        %v674 = vsel %vm255, %v644, 0
        %v677 = vsel %vm255, %v645, 0
        %v680 = vsel %vm255, %v646, 0
        %v683 = vsel %vm255, %v647, 0
        %v686 = vsel %vm255, %v648, 0
        %v689 = vsel %vm255, %v649, 0
        %v692 = vsel %vm255, %v650, 0
        %v695 = vsel %vm255, %v651, 0
        %v698 = vsel %vm255, %v652, 0
        %v701 = vsel %vm255, %v653, 0
        %v704 = vsel %vm255, %v654, 0
        %706 = vmatprep.subr.bf16.mxu0 0
        %707 = vmatpush1.bf16.xpose.msra.mxu0 0
        %708 = vmatprep.subr.bf16.mxu0 0
        %709 = vmatpush1.bf16.xpose.msra.mxu0 0
        %710 = vmatprep.subr.bf16.mxu0 0
        %711 = vmatpush1.bf16.xpose.msra.mxu0 0
        %712 = vmatprep.subr.bf16.mxu0 0
        %713 = vmatpush1.bf16.xpose.msra.mxu0 0
        %714 = vmatprep.subr.bf16.mxu0 0
        %715 = vmatpush1.bf16.xpose.msra.mxu0 0
        %716 = vmatprep.subr.bf16.mxu0 0
        %717 = vmatpush1.bf16.xpose.msra.mxu0 0
        %718 = vmatprep.subr.bf16.mxu0 0
        %719 = vmatpush1.bf16.xpose.msra.mxu0 0
        %720 = vmatprep.subr.bf16.mxu0 0
        %721 = vmatpush1.bf16.xpose.msra.mxu0 %v704
        %722 = vmatprep.subr.bf16.mxu0 0
        %723 = vmatpush2.bf16.xpose.msra.mxu0 0
        %724 = vmatprep.subr.bf16.mxu0 0
        %725 = vmatpush2.bf16.xpose.msra.mxu0 0
        %726 = vmatprep.subr.bf16.mxu0 0
        %727 = vmatpush2.bf16.xpose.msra.mxu0 0
        %728 = vmatprep.subr.bf16.mxu0 0
        %729 = vmatpush2.bf16.xpose.msra.mxu0 0
        %730 = vmatprep.subr.bf16.mxu0 0
        %731 = vmatpush2.bf16.xpose.msra.mxu0 0
        %732 = vmatprep.subr.bf16.mxu0 0
        %733 = vmatpush2.bf16.xpose.msra.mxu0 0
        %734 = vmatprep.subr.bf16.mxu0 0
        %735 = vmatpush2.bf16.xpose.msra.mxu0 0
        %736 = vmatprep.subr.bf16.mxu0 0
        %737 = vmatpush2.bf16.xpose.msra.mxu0 0
        %738 = vmatprep.mubr.bf16.mxu0 0
        %739 = vmatmul.mubr.bf16.gmra.mxu0 %v656
        %v740 = vpop.f32.mrf.mxu0
        %v741 = vadd.f32 0.0, %v740
        %v742 = vpop.f32.mrf.mxu0
        %v743 = vpop.f32.mrf.mxu0
        %v744 = vadd.f32 0.0, %v743
        %v745 = vpop.f32.mrf.mxu0
        %746 = vmatprep.mubr.bf16.mxu0 0
        %747 = vmatmul.mubr.bf16.gmra.mxu0 %v659
        %v748 = vpop.f32.mrf.mxu0
        %v749 = vadd.f32 0.0, %v748
        %v750 = vpop.f32.mrf.mxu0
        %v751 = vpop.f32.mrf.mxu0
        %v752 = vadd.f32 0.0, %v751
        %v753 = vpop.f32.mrf.mxu0
        %754 = vmatprep.mubr.bf16.mxu0 0
        %755 = vmatmul.mubr.bf16.gmra.mxu0 %v662
        %v756 = vpop.f32.mrf.mxu0
        %v757 = vadd.f32 0.0, %v756
        %v758 = vpop.f32.mrf.mxu0
        %v759 = vpop.f32.mrf.mxu0
        %v760 = vadd.f32 0.0, %v759
        %v761 = vpop.f32.mrf.mxu0
        %762 = vmatprep.mubr.bf16.mxu0 0
        %763 = vmatmul.mubr.bf16.gmra.mxu0 %v665
        %v764 = vpop.f32.mrf.mxu0
        %v765 = vadd.f32 0.0, %v764
        %v766 = vpop.f32.mrf.mxu0
        %v767 = vpop.f32.mrf.mxu0
        %v768 = vadd.f32 0.0, %v767
        %v769 = vpop.f32.mrf.mxu0
        %770 = vmatprep.mubr.bf16.mxu0 0
        %771 = vmatmul.mubr.bf16.gmra.mxu0 %v668
        %v772 = vpop.f32.mrf.mxu0
        %v773 = vadd.f32 0.0, %v772
        %v774 = vpop.f32.mrf.mxu0
        %v775 = vpop.f32.mrf.mxu0
        %v776 = vadd.f32 0.0, %v775
        %v777 = vpop.f32.mrf.mxu0
        %778 = vmatprep.mubr.bf16.mxu0 0
        %779 = vmatmul.mubr.bf16.gmra.mxu0 %v671
        %v780 = vpop.f32.mrf.mxu0
        %v781 = vadd.f32 0.0, %v780
        %v782 = vpop.f32.mrf.mxu0
        %v783 = vpop.f32.mrf.mxu0
        %v784 = vadd.f32 0.0, %v783
        %v785 = vpop.f32.mrf.mxu0
        %786 = vmatprep.mubr.bf16.mxu0 0
        %787 = vmatmul.mubr.bf16.gmra.mxu0 %v674
        %v788 = vpop.f32.mrf.mxu0
        %v789 = vadd.f32 0.0, %v788
        %v790 = vpop.f32.mrf.mxu0
        %v791 = vpop.f32.mrf.mxu0
        %v792 = vadd.f32 0.0, %v791
        %v793 = vpop.f32.mrf.mxu0
        %794 = vmatprep.mubr.bf16.mxu0 0
        %795 = vmatmul.mubr.bf16.gmra.mxu0 %v677
        %v796 = vpop.f32.mrf.mxu0
        %v797 = vadd.f32 0.0, %v796
        %v798 = vpop.f32.mrf.mxu0
        %v799 = vpop.f32.mrf.mxu0
        %v800 = vadd.f32 0.0, %v799
        %v801 = vpop.f32.mrf.mxu0
        %802 = vmatprep.mubr.bf16.mxu0 0
        %803 = vmatmul.mubr.bf16.gmra.mxu0 %v680
        %v804 = vpop.f32.mrf.mxu0
        %v805 = vadd.f32 0.0, %v804
        %v806 = vpop.f32.mrf.mxu0
        %v807 = vpop.f32.mrf.mxu0
        %v808 = vadd.f32 0.0, %v807
        %v809 = vpop.f32.mrf.mxu0
        %810 = vmatprep.mubr.bf16.mxu0 0
        %811 = vmatmul.mubr.bf16.gmra.mxu0 %v683
        %v812 = vpop.f32.mrf.mxu0
        %v813 = vadd.f32 0.0, %v812
        %v814 = vpop.f32.mrf.mxu0
        %v815 = vpop.f32.mrf.mxu0
        %v816 = vadd.f32 0.0, %v815
        %v817 = vpop.f32.mrf.mxu0
        %818 = vmatprep.mubr.bf16.mxu0 0
        %819 = vmatmul.mubr.bf16.gmra.mxu0 %v686
        %v820 = vpop.f32.mrf.mxu0
        %v821 = vadd.f32 0.0, %v820
        %v822 = vpop.f32.mrf.mxu0
        %v823 = vpop.f32.mrf.mxu0
        %v824 = vadd.f32 0.0, %v823
        %v825 = vpop.f32.mrf.mxu0
        %826 = vmatprep.mubr.bf16.mxu0 0
        %827 = vmatmul.mubr.bf16.gmra.mxu0 %v689
        %v828 = vpop.f32.mrf.mxu0
        %v829 = vadd.f32 0.0, %v828
        %v830 = vpop.f32.mrf.mxu0
        %v831 = vpop.f32.mrf.mxu0
        %v832 = vadd.f32 0.0, %v831
        %v833 = vpop.f32.mrf.mxu0
        %834 = vmatprep.mubr.bf16.mxu0 0
        %835 = vmatmul.mubr.bf16.gmra.mxu0 %v692
        %v836 = vpop.f32.mrf.mxu0
        %v837 = vadd.f32 0.0, %v836
        %v838 = vpop.f32.mrf.mxu0
        %v839 = vpop.f32.mrf.mxu0
        %v840 = vadd.f32 0.0, %v839
        %v841 = vpop.f32.mrf.mxu0
        %842 = vmatprep.mubr.bf16.mxu0 0
        %843 = vmatmul.mubr.bf16.gmra.mxu0 %v695
        %v844 = vpop.f32.mrf.mxu0
        %v845 = vadd.f32 0.0, %v844
        %v846 = vpop.f32.mrf.mxu0
        %v847 = vpop.f32.mrf.mxu0
        %v848 = vadd.f32 0.0, %v847
        %v849 = vpop.f32.mrf.mxu0
        %850 = vmatprep.mubr.bf16.mxu0 0
        %851 = vmatmul.mubr.bf16.gmra.mxu0 %v698
        %v852 = vpop.f32.mrf.mxu0
        %v853 = vadd.f32 0.0, %v852
        %v854 = vpop.f32.mrf.mxu0
        %v855 = vpop.f32.mrf.mxu0
        %v856 = vadd.f32 0.0, %v855
        %v857 = vpop.f32.mrf.mxu0
        %858 = vmatprep.mubr.bf16.mxu0 0
        %859 = vmatmul.mubr.bf16.gmra.mxu0 %v701
        %v860 = vpop.f32.mrf.mxu0
        %v861 = vadd.f32 0.0, %v860
        %v862 = vpop.f32.mrf.mxu0
        %v863 = vpop.f32.mrf.mxu0
        %v864 = vadd.f32 0.0, %v863
        %v865 = vpop.f32.mrf.mxu0
        %866 = vdwg.mxu0
        %867 = vst.msk [vmem:[%s157] sm:$0xff] %vm255, %v741
        %868 = vst.msk [vmem:[%s157 + $0x8] sm:$0xff] %vm255, %v744
        %869 = vst.msk [vmem:[%s157 + $0x10] sm:$0xff] %vm255, %v749
        %870 = vst.msk [vmem:[%s157 + $0x18] sm:$0xff] %vm255, %v752
        %871 = vst.msk [vmem:[%s157 + $0x20] sm:$0xff] %vm255, %v757
        %872 = vst.msk [vmem:[%s157 + $0x28] sm:$0xff] %vm255, %v760
        %873 = vst.msk [vmem:[%s157 + $0x30] sm:$0xff] %vm255, %v765
        %874 = vst.msk [vmem:[%s157 + $0x38] sm:$0xff] %vm255, %v768
        %875 = vst.msk [vmem:[%s157 + $0x40] sm:$0xff] %vm255, %v773
        %876 = vst.msk [vmem:[%s157 + $0x48] sm:$0xff] %vm255, %v776
        %877 = vst.msk [vmem:[%s157 + $0x50] sm:$0xff] %vm255, %v781
        %878 = vst.msk [vmem:[%s157 + $0x58] sm:$0xff] %vm255, %v784
        %879 = vst.msk [vmem:[%s157 + $0x60] sm:$0xff] %vm255, %v789
        %880 = vst.msk [vmem:[%s157 + $0x68] sm:$0xff] %vm255, %v792
        %881 = vst.msk [vmem:[%s157 + $0x70] sm:$0xff] %vm255, %v797
        %882 = vst.msk [vmem:[%s157 + $0x78] sm:$0xff] %vm255, %v800
        %883 = vst.msk [vmem:[%s157 + $0x80] sm:$0xff] %vm255, %v805
        %884 = vst.msk [vmem:[%s157 + $0x88] sm:$0xff] %vm255, %v808
        %885 = vst.msk [vmem:[%s157 + $0x90] sm:$0xff] %vm255, %v813
        %886 = vst.msk [vmem:[%s157 + $0x98] sm:$0xff] %vm255, %v816
        %887 = vst.msk [vmem:[%s157 + $0xa0] sm:$0xff] %vm255, %v821
        %888 = vst.msk [vmem:[%s157 + $0xa8] sm:$0xff] %vm255, %v824
        %889 = vst.msk [vmem:[%s157 + $0xb0] sm:$0xff] %vm255, %v829
        %890 = vst.msk [vmem:[%s157 + $0xb8] sm:$0xff] %vm255, %v832
        %891 = vst.msk [vmem:[%s157 + $0xc0] sm:$0xff] %vm255, %v837
        %892 = vst.msk [vmem:[%s157 + $0xc8] sm:$0xff] %vm255, %v840
        %893 = vst.msk [vmem:[%s157 + $0xd0] sm:$0xff] %vm255, %v845
        %894 = vst.msk [vmem:[%s157 + $0xd8] sm:$0xff] %vm255, %v848
        %895 = vst.msk [vmem:[%s157 + $0xe0] sm:$0xff] %vm255, %v853
        %896 = vst.msk [vmem:[%s157 + $0xe8] sm:$0xff] %vm255, %v856
        %897 = vst.msk [vmem:[%s157 + $0xf0] sm:$0xff] %vm255, %v861
        %898 = vst.msk [vmem:[%s157 + $0xf8] sm:$0xff] %vm255, %v864
        %v899 = vld [vmem:[%s152] sm:$0xff]
        %v900 = vld [vmem:[%s152 + $0x10] sm:$0xff]
        %v901 = vld [vmem:[%s152 + $0x20] sm:$0xff]
        %v902 = vld [vmem:[%s152 + $0x30] sm:$0xff]
        %v903 = vld [vmem:[%s152 + $0x40] sm:$0xff]
        %v904 = vld [vmem:[%s152 + $0x50] sm:$0xff]
        %v905 = vld [vmem:[%s152 + $0x60] sm:$0xff]
        %v906 = vld [vmem:[%s152 + $0x70] sm:$0xff]
        %v907 = vld [vmem:[%s152 + $0x80] sm:$0xff]
        %v908 = vld [vmem:[%s152 + $0x90] sm:$0xff]
        %v909 = vld [vmem:[%s152 + $0xa0] sm:$0xff]
        %v910 = vld [vmem:[%s152 + $0xb0] sm:$0xff]
        %v911 = vld [vmem:[%s152 + $0xc0] sm:$0xff]
        %v912 = vld [vmem:[%s152 + $0xd0] sm:$0xff]
        %v913 = vld [vmem:[%s152 + $0xe0] sm:$0xff]
        %v914 = vld [vmem:[%s152 + $0xf0] sm:$0xff]
        %v915 = vld [vmem:[%s152 + $0x100] sm:$0xff]
        %v916 = vld [vmem:[%s152 + $0x110] sm:$0xff]
        %v917 = vld [vmem:[%s152 + $0x120] sm:$0xff]
        %v918 = vld [vmem:[%s152 + $0x130] sm:$0xff]
        %v919 = vld [vmem:[%s152 + $0x140] sm:$0xff]
        %v920 = vld [vmem:[%s152 + $0x150] sm:$0xff]
        %v921 = vld [vmem:[%s152 + $0x160] sm:$0xff]
        %v922 = vld [vmem:[%s152 + $0x170] sm:$0xff]
        %v923 = vld [vmem:[%s152 + $0x180] sm:$0xff]
        %v924 = vld [vmem:[%s152 + $0x190] sm:$0xff]
        %v925 = vld [vmem:[%s152 + $0x1a0] sm:$0xff]
        %v926 = vld [vmem:[%s152 + $0x1b0] sm:$0xff]
        %v927 = vld [vmem:[%s152 + $0x1c0] sm:$0xff]
        %v928 = vld [vmem:[%s152 + $0x1d0] sm:$0xff]
        %v929 = vld [vmem:[%s152 + $0x1e0] sm:$0xff]
        %v930 = vld [vmem:[%s152 + $0x1f0] sm:$0xff]
        %v931 = vld [vmem:[%s152 + $0x8] sm:$0xff]
        %v932 = vld [vmem:[%s152 + $0x18] sm:$0xff]
        %v933 = vld [vmem:[%s152 + $0x28] sm:$0xff]
        %v934 = vld [vmem:[%s152 + $0x38] sm:$0xff]
        %v935 = vld [vmem:[%s152 + $0x48] sm:$0xff]
        %v936 = vld [vmem:[%s152 + $0x58] sm:$0xff]
        %v937 = vld [vmem:[%s152 + $0x68] sm:$0xff]
        %v938 = vld [vmem:[%s152 + $0x78] sm:$0xff]
        %v939 = vld [vmem:[%s152 + $0x88] sm:$0xff]
        %v940 = vld [vmem:[%s152 + $0x98] sm:$0xff]
        %v941 = vld [vmem:[%s152 + $0xa8] sm:$0xff]
        %v942 = vld [vmem:[%s152 + $0xb8] sm:$0xff]
        %v943 = vld [vmem:[%s152 + $0xc8] sm:$0xff]
        %v944 = vld [vmem:[%s152 + $0xd8] sm:$0xff]
        %v945 = vld [vmem:[%s152 + $0xe8] sm:$0xff]
        %v946 = vld [vmem:[%s152 + $0xf8] sm:$0xff]
        %v947 = vld [vmem:[%s152 + $0x108] sm:$0xff]
        %v948 = vld [vmem:[%s152 + $0x118] sm:$0xff]
        %v949 = vld [vmem:[%s152 + $0x128] sm:$0xff]
        %v950 = vld [vmem:[%s152 + $0x138] sm:$0xff]
        %v951 = vld [vmem:[%s152 + $0x148] sm:$0xff]
        %v952 = vld [vmem:[%s152 + $0x158] sm:$0xff]
        %v953 = vld [vmem:[%s152 + $0x168] sm:$0xff]
        %v954 = vld [vmem:[%s152 + $0x178] sm:$0xff]
        %v955 = vld [vmem:[%s152 + $0x188] sm:$0xff]
        %v956 = vld [vmem:[%s152 + $0x198] sm:$0xff]
        %v957 = vld [vmem:[%s152 + $0x1a8] sm:$0xff]
        %v958 = vld [vmem:[%s152 + $0x1b8] sm:$0xff]
        %v959 = vld [vmem:[%s152 + $0x1c8] sm:$0xff]
        %v960 = vld [vmem:[%s152 + $0x1d8] sm:$0xff]
        %v961 = vld [vmem:[%s152 + $0x1e8] sm:$0xff]
        %v962 = vld [vmem:[%s152 + $0x1f8] sm:$0xff]
        %v963 = vmul.f32 %v899, %v899
        %v964 = vmul.f32 %v900, %v900
        %v965 = vmul.f32 %v901, %v901
        %v966 = vmul.f32 %v902, %v902
        %v967 = vmul.f32 %v903, %v903
        %v968 = vmul.f32 %v904, %v904
        %v969 = vmul.f32 %v905, %v905
        %v970 = vmul.f32 %v906, %v906
        %v971 = vmul.f32 %v907, %v907
        %v972 = vmul.f32 %v908, %v908
        %v973 = vmul.f32 %v909, %v909
        %v974 = vmul.f32 %v910, %v910
        %v975 = vmul.f32 %v911, %v911
        %v976 = vmul.f32 %v912, %v912
        %v977 = vmul.f32 %v913, %v913
        %v978 = vmul.f32 %v914, %v914
        %v979 = vmul.f32 %v915, %v915
        %v980 = vmul.f32 %v916, %v916
        %v981 = vmul.f32 %v917, %v917
        %v982 = vmul.f32 %v918, %v918
        %v983 = vmul.f32 %v919, %v919
        %v984 = vmul.f32 %v920, %v920
        %v985 = vmul.f32 %v921, %v921
        %v986 = vmul.f32 %v922, %v922
        %v987 = vmul.f32 %v923, %v923
        %v988 = vmul.f32 %v924, %v924
        %v989 = vmul.f32 %v925, %v925
        %v990 = vmul.f32 %v926, %v926
        %v991 = vmul.f32 %v927, %v927
        %v992 = vmul.f32 %v928, %v928
        %v993 = vmul.f32 %v929, %v929
        %v994 = vmul.f32 %v930, %v930
        %vm995 = vcmask 261248
        %v996 = vsel %vm995, %v963, 0.0
        %v997 = vsel %vm995, %v964, 0.0
        %v998 = vadd.f32 %v996, %v997
        %v999 = vsel %vm995, %v965, 0.0
        %v1000 = vadd.f32 %v998, %v999
        %v1001 = vsel %vm995, %v966, 0.0
        %v1002 = vadd.f32 %v1000, %v1001
        %v1003 = vsel %vm995, %v967, 0.0
        %v1004 = vadd.f32 %v1002, %v1003
        %v1005 = vsel %vm995, %v968, 0.0
        %v1006 = vadd.f32 %v1004, %v1005
        %v1007 = vsel %vm995, %v969, 0.0
        %v1008 = vadd.f32 %v1006, %v1007
        %v1009 = vsel %vm995, %v970, 0.0
        %v1010 = vadd.f32 %v1008, %v1009
        %v1011 = vsel %vm995, %v971, 0.0
        %v1012 = vadd.f32 %v1010, %v1011
        %v1013 = vsel %vm995, %v972, 0.0
        %v1014 = vadd.f32 %v1012, %v1013
        %v1015 = vsel %vm995, %v973, 0.0
        %v1016 = vadd.f32 %v1014, %v1015
        %v1017 = vsel %vm995, %v974, 0.0
        %v1018 = vadd.f32 %v1016, %v1017
        %v1019 = vsel %vm995, %v975, 0.0
        %v1020 = vadd.f32 %v1018, %v1019
        %v1021 = vsel %vm995, %v976, 0.0
        %v1022 = vadd.f32 %v1020, %v1021
        %v1023 = vsel %vm995, %v977, 0.0
        %v1024 = vadd.f32 %v1022, %v1023
        %v1025 = vsel %vm995, %v978, 0.0
        %v1026 = vadd.f32 %v1024, %v1025
        %v1027 = vsel %vm995, %v979, 0.0
        %v1028 = vadd.f32 %v1026, %v1027
        %v1029 = vsel %vm995, %v980, 0.0
        %v1030 = vadd.f32 %v1028, %v1029
        %v1031 = vsel %vm995, %v981, 0.0
        %v1032 = vadd.f32 %v1030, %v1031
        %v1033 = vsel %vm995, %v982, 0.0
        %v1034 = vadd.f32 %v1032, %v1033
        %v1035 = vsel %vm995, %v983, 0.0
        %v1036 = vadd.f32 %v1034, %v1035
        %v1037 = vsel %vm995, %v984, 0.0
        %v1038 = vadd.f32 %v1036, %v1037
        %v1039 = vsel %vm995, %v985, 0.0
        %v1040 = vadd.f32 %v1038, %v1039
        %v1041 = vsel %vm995, %v986, 0.0
        %v1042 = vadd.f32 %v1040, %v1041
        %v1043 = vsel %vm995, %v987, 0.0
        %v1044 = vadd.f32 %v1042, %v1043
        %v1045 = vsel %vm995, %v988, 0.0
        %v1046 = vadd.f32 %v1044, %v1045
        %v1047 = vsel %vm995, %v989, 0.0
        %v1048 = vadd.f32 %v1046, %v1047
        %v1049 = vsel %vm995, %v990, 0.0
        %v1050 = vadd.f32 %v1048, %v1049
        %v1051 = vsel %vm995, %v991, 0.0
        %v1052 = vadd.f32 %v1050, %v1051
        %v1053 = vsel %vm995, %v992, 0.0
        %v1054 = vadd.f32 %v1052, %v1053
        %v1055 = vsel %vm995, %v993, 0.0
        %v1056 = vadd.f32 %v1054, %v1055
        %v1057 = vsel %vm995, %v994, 0.0
        %v1058 = vadd.f32 %v1056, %v1057
        %v1059 = vrot.slane %v1058, 4
        %v1060 = vadd.f32 %v1058, %v1059
        %v1061 = vrot.slane %v1060, 2
        %v1062 = vadd.f32 %v1060, %v1061
        %v1063 = vrot.slane %v1062, 1
        %v1064 = vadd.f32 %v1062, %v1063
        %v1065 = vmax.f32 %v1064, 1e-24
        %v1066 = vrsqrt.pop %v1065
        %v1067 = vmul.f32 %v899, %v1066
        %v1068 = vmul.f32 %v900, %v1066
        %v1069 = vmul.f32 %v901, %v1066
        %v1070 = vmul.f32 %v902, %v1066
        %v1071 = vmul.f32 %v903, %v1066
        %v1072 = vmul.f32 %v904, %v1066
        %v1073 = vmul.f32 %v905, %v1066
        %v1074 = vmul.f32 %v906, %v1066
        %v1075 = vmul.f32 %v907, %v1066
        %v1076 = vmul.f32 %v908, %v1066
        %v1077 = vmul.f32 %v909, %v1066
        %v1078 = vmul.f32 %v910, %v1066
        %v1079 = vmul.f32 %v911, %v1066
        %v1080 = vmul.f32 %v912, %v1066
        %v1081 = vmul.f32 %v913, %v1066
        %v1082 = vmul.f32 %v914, %v1066
        %v1083 = vmul.f32 %v915, %v1066
        %v1084 = vmul.f32 %v916, %v1066
        %v1085 = vmul.f32 %v917, %v1066
        %v1086 = vmul.f32 %v918, %v1066
        %v1087 = vmul.f32 %v919, %v1066
        %v1088 = vmul.f32 %v920, %v1066
        %v1089 = vmul.f32 %v921, %v1066
        %v1090 = vmul.f32 %v922, %v1066
        %v1091 = vmul.f32 %v923, %v1066
        %v1092 = vmul.f32 %v924, %v1066
        %v1093 = vmul.f32 %v925, %v1066
        %v1094 = vmul.f32 %v926, %v1066
        %v1095 = vmul.f32 %v927, %v1066
        %v1096 = vmul.f32 %v928, %v1066
        %v1097 = vmul.f32 %v929, %v1066
        %v1098 = vmul.f32 %v930, %v1066
        %vm1099 = vcmask 786048
        %v1100 = vsel %vm1099, %v963, 0.0
        %v1101 = vsel %vm1099, %v964, 0.0
        %v1102 = vadd.f32 %v1100, %v1101
        %v1103 = vsel %vm1099, %v965, 0.0
        %v1104 = vadd.f32 %v1102, %v1103
        %v1105 = vsel %vm1099, %v966, 0.0
        %v1106 = vadd.f32 %v1104, %v1105
        %v1107 = vsel %vm1099, %v967, 0.0
        %v1108 = vadd.f32 %v1106, %v1107
        %v1109 = vsel %vm1099, %v968, 0.0
        %v1110 = vadd.f32 %v1108, %v1109
        %v1111 = vsel %vm1099, %v969, 0.0
        %v1112 = vadd.f32 %v1110, %v1111
        %v1113 = vsel %vm1099, %v970, 0.0
        %v1114 = vadd.f32 %v1112, %v1113
        %v1115 = vsel %vm1099, %v971, 0.0
        %v1116 = vadd.f32 %v1114, %v1115
        %v1117 = vsel %vm1099, %v972, 0.0
        %v1118 = vadd.f32 %v1116, %v1117
        %v1119 = vsel %vm1099, %v973, 0.0
        %v1120 = vadd.f32 %v1118, %v1119
        %v1121 = vsel %vm1099, %v974, 0.0
        %v1122 = vadd.f32 %v1120, %v1121
        %v1123 = vsel %vm1099, %v975, 0.0
        %v1124 = vadd.f32 %v1122, %v1123
        %v1125 = vsel %vm1099, %v976, 0.0
        %v1126 = vadd.f32 %v1124, %v1125
        %v1127 = vsel %vm1099, %v977, 0.0
        %v1128 = vadd.f32 %v1126, %v1127
        %v1129 = vsel %vm1099, %v978, 0.0
        %v1130 = vadd.f32 %v1128, %v1129
        %v1131 = vsel %vm1099, %v979, 0.0
        %v1132 = vadd.f32 %v1130, %v1131
        %v1133 = vsel %vm1099, %v980, 0.0
        %v1134 = vadd.f32 %v1132, %v1133
        %v1135 = vsel %vm1099, %v981, 0.0
        %v1136 = vadd.f32 %v1134, %v1135
        %v1137 = vsel %vm1099, %v982, 0.0
        %v1138 = vadd.f32 %v1136, %v1137
        %v1139 = vsel %vm1099, %v983, 0.0
        %v1140 = vadd.f32 %v1138, %v1139
        %v1141 = vsel %vm1099, %v984, 0.0
        %v1142 = vadd.f32 %v1140, %v1141
        %v1143 = vsel %vm1099, %v985, 0.0
        %v1144 = vadd.f32 %v1142, %v1143
        %v1145 = vsel %vm1099, %v986, 0.0
        %v1146 = vadd.f32 %v1144, %v1145
        %v1147 = vsel %vm1099, %v987, 0.0
        %v1148 = vadd.f32 %v1146, %v1147
        %v1149 = vsel %vm1099, %v988, 0.0
        %v1150 = vadd.f32 %v1148, %v1149
        %v1151 = vsel %vm1099, %v989, 0.0
        %v1152 = vadd.f32 %v1150, %v1151
        %v1153 = vsel %vm1099, %v990, 0.0
        %v1154 = vadd.f32 %v1152, %v1153
        %v1155 = vsel %vm1099, %v991, 0.0
        %v1156 = vadd.f32 %v1154, %v1155
        %v1157 = vsel %vm1099, %v992, 0.0
        %v1158 = vadd.f32 %v1156, %v1157
        %v1159 = vsel %vm1099, %v993, 0.0
        %v1160 = vadd.f32 %v1158, %v1159
        %v1161 = vsel %vm1099, %v994, 0.0
        %v1162 = vadd.f32 %v1160, %v1161
        %v1163 = vrot.slane %v1162, 4
        %v1164 = vadd.f32 %v1162, %v1163
        %v1165 = vrot.slane %v1164, 2
        %v1166 = vadd.f32 %v1164, %v1165
        %v1167 = vrot.slane %v1166, 1
        %v1168 = vadd.f32 %v1166, %v1167
        %v1169 = vmax.f32 %v1168, 1e-24
        %v1170 = vrsqrt.pop %v1169
        %v1171 = vmul.f32 %v899, %v1170
        %v1172 = vmul.f32 %v900, %v1170
        %v1173 = vmul.f32 %v901, %v1170
        %v1174 = vmul.f32 %v902, %v1170
        %v1175 = vmul.f32 %v903, %v1170
        %v1176 = vmul.f32 %v904, %v1170
        %v1177 = vmul.f32 %v905, %v1170
        %v1178 = vmul.f32 %v906, %v1170
        %v1179 = vmul.f32 %v907, %v1170
        %v1180 = vmul.f32 %v908, %v1170
        %v1181 = vmul.f32 %v909, %v1170
        %v1182 = vmul.f32 %v910, %v1170
        %v1183 = vmul.f32 %v911, %v1170
        %v1184 = vmul.f32 %v912, %v1170
        %v1185 = vmul.f32 %v913, %v1170
        %v1186 = vmul.f32 %v914, %v1170
        %v1187 = vmul.f32 %v915, %v1170
        %v1188 = vmul.f32 %v916, %v1170
        %v1189 = vmul.f32 %v917, %v1170
        %v1190 = vmul.f32 %v918, %v1170
        %v1191 = vmul.f32 %v919, %v1170
        %v1192 = vmul.f32 %v920, %v1170
        %v1193 = vmul.f32 %v921, %v1170
        %v1194 = vmul.f32 %v922, %v1170
        %v1195 = vmul.f32 %v923, %v1170
        %v1196 = vmul.f32 %v924, %v1170
        %v1197 = vmul.f32 %v925, %v1170
        %v1198 = vmul.f32 %v926, %v1170
        %v1199 = vmul.f32 %v927, %v1170
        %v1200 = vmul.f32 %v928, %v1170
        %v1201 = vmul.f32 %v929, %v1170
        %v1202 = vmul.f32 %v930, %v1170
        %v1203 = vpack.c.bf16 %v1068, %v1067
        %v1204 = vpack.c.bf16 %v1070, %v1069
        %v1205 = vpack.c.bf16 %v1072, %v1071
        %v1206 = vpack.c.bf16 %v1074, %v1073
        %v1207 = vpack.c.bf16 %v1076, %v1075
        %v1208 = vpack.c.bf16 %v1078, %v1077
        %v1209 = vpack.c.bf16 %v1080, %v1079
        %v1210 = vpack.c.bf16 %v1082, %v1081
        %v1211 = vpack.c.bf16 %v1084, %v1083
        %v1212 = vpack.c.bf16 %v1086, %v1085
        %v1213 = vpack.c.bf16 %v1088, %v1087
        %v1214 = vpack.c.bf16 %v1090, %v1089
        %v1215 = vpack.c.bf16 %v1092, %v1091
        %v1216 = vpack.c.bf16 %v1094, %v1093
        %v1217 = vpack.c.bf16 %v1096, %v1095
        %v1218 = vpack.c.bf16 %v1098, %v1097
        %v1219 = vpack.c.bf16 %v1172, %v1171
        %v1220 = vpack.c.bf16 %v1174, %v1173
        %v1221 = vpack.c.bf16 %v1176, %v1175
        %v1222 = vpack.c.bf16 %v1178, %v1177
        %v1223 = vpack.c.bf16 %v1180, %v1179
        %v1224 = vpack.c.bf16 %v1182, %v1181
        %v1225 = vpack.c.bf16 %v1184, %v1183
        %v1226 = vpack.c.bf16 %v1186, %v1185
        %v1227 = vpack.c.bf16 %v1188, %v1187
        %v1228 = vpack.c.bf16 %v1190, %v1189
        %v1229 = vpack.c.bf16 %v1192, %v1191
        %v1230 = vpack.c.bf16 %v1194, %v1193
        %v1231 = vpack.c.bf16 %v1196, %v1195
        %v1232 = vpack.c.bf16 %v1198, %v1197
        %v1233 = vpack.c.bf16 %v1200, %v1199
        %v1234 = vpack.c.bf16 %v1202, %v1201
        %1251 = vrot.lane.b32.xlu0 %v1203, 112
        %v1252 = vpop.permute.xlu0 %1251
        %1253 = vrot.lane.b32.xlu0 %v1204, 112
        %v1254 = vpop.permute.xlu0 %1253
        %1255 = vrot.lane.b32.xlu0 %v1205, 112
        %v1256 = vpop.permute.xlu0 %1255
        %1257 = vrot.lane.b32.xlu0 %v1206, 112
        %v1258 = vpop.permute.xlu0 %1257
        %1259 = vrot.lane.b32.xlu0 %v1207, 112
        %v1260 = vpop.permute.xlu0 %1259
        %1261 = vrot.lane.b32.xlu0 %v1208, 112
        %v1262 = vpop.permute.xlu0 %1261
        %1263 = vrot.lane.b32.xlu0 %v1209, 112
        %v1264 = vpop.permute.xlu0 %1263
        %1265 = vrot.lane.b32.xlu0 %v1210, 112
        %v1266 = vpop.permute.xlu0 %1265
        %1267 = vrot.lane.b32.xlu0 %v1211, 112
        %v1268 = vpop.permute.xlu0 %1267
        %1269 = vrot.lane.b32.xlu0 %v1212, 112
        %v1270 = vpop.permute.xlu0 %1269
        %1271 = vrot.lane.b32.xlu0 %v1213, 112
        %v1272 = vpop.permute.xlu0 %1271
        %1273 = vrot.lane.b32.xlu0 %v1214, 112
        %v1274 = vpop.permute.xlu0 %1273
        %1275 = vrot.lane.b32.xlu0 %v1215, 112
        %v1276 = vpop.permute.xlu0 %1275
        %1277 = vrot.lane.b32.xlu0 %v1216, 112
        %v1278 = vpop.permute.xlu0 %1277
        %1279 = vrot.lane.b32.xlu0 %v1217, 112
        %v1280 = vpop.permute.xlu0 %1279
        %1281 = vrot.lane.b32.xlu0 %v1218, 112
        %v1282 = vpop.permute.xlu0 %1281
        %1299 = vxpose.xlu0.c.b16.start [1/8] %v1252, 128
        %1300 = vxpose.xlu0.c.b16.cont [2/8] %v1254, 128
        %1301 = vxpose.xlu0.c.b16.cont [3/8] %v1256, 128
        %1302 = vxpose.xlu0.c.b16.cont [4/8] %v1258, 128
        %1303 = vxpose.xlu0.c.b16.cont [5/8] %v1260, 128
        %1304 = vxpose.xlu0.c.b16.cont [6/8] %v1262, 128
        %1305 = vxpose.xlu0.c.b16.cont [7/8] %v1264, 128
        %1306 = vxpose.xlu0.c.b16.end [8/8] %v1266, 128
        %v1307 = vpop.trf.xlu0
        %v1308 = vpop.trf.xlu0
        %v1309 = vpop.trf.xlu0
        %v1310 = vpop.trf.xlu0
        %v1311 = vpop.trf.xlu0
        %v1312 = vpop.trf.xlu0
        %v1313 = vpop.trf.xlu0
        %v1314 = vpop.trf.xlu0
        %1315 = vxpose.xlu0.c.b16.start [1/8] %v1268, 128
        %1316 = vxpose.xlu0.c.b16.cont [2/8] %v1270, 128
        %1317 = vxpose.xlu0.c.b16.cont [3/8] %v1272, 128
        %1318 = vxpose.xlu0.c.b16.cont [4/8] %v1274, 128
        %1319 = vxpose.xlu0.c.b16.cont [5/8] %v1276, 128
        %1320 = vxpose.xlu0.c.b16.cont [6/8] %v1278, 128
        %1321 = vxpose.xlu0.c.b16.cont [7/8] %v1280, 128
        %1322 = vxpose.xlu0.c.b16.end [8/8] %v1282, 128
        %v1323 = vpop.trf.xlu0
        %v1324 = vpop.trf.xlu0
        %v1325 = vpop.trf.xlu0
        %v1326 = vpop.trf.xlu0
        %v1327 = vpop.trf.xlu0
        %v1328 = vpop.trf.xlu0
        %v1329 = vpop.trf.xlu0
        %v1330 = vpop.trf.xlu0
        %1347 = vrot.lane.b32.xlu0 %v1219, 48
        %v1348 = vpop.permute.xlu0 %1347
        %1349 = vrot.lane.b32.xlu0 %v1220, 48
        %v1350 = vpop.permute.xlu0 %1349
        %1351 = vrot.lane.b32.xlu0 %v1221, 48
        %v1352 = vpop.permute.xlu0 %1351
        %1353 = vrot.lane.b32.xlu0 %v1222, 48
        %v1354 = vpop.permute.xlu0 %1353
        %1355 = vrot.lane.b32.xlu0 %v1223, 48
        %v1356 = vpop.permute.xlu0 %1355
        %1357 = vrot.lane.b32.xlu0 %v1224, 48
        %v1358 = vpop.permute.xlu0 %1357
        %1359 = vrot.lane.b32.xlu0 %v1225, 48
        %v1360 = vpop.permute.xlu0 %1359
        %1361 = vrot.lane.b32.xlu0 %v1226, 48
        %v1362 = vpop.permute.xlu0 %1361
        %1363 = vrot.lane.b32.xlu0 %v1227, 48
        %v1364 = vpop.permute.xlu0 %1363
        %1365 = vrot.lane.b32.xlu0 %v1228, 48
        %v1366 = vpop.permute.xlu0 %1365
        %1367 = vrot.lane.b32.xlu0 %v1229, 48
        %v1368 = vpop.permute.xlu0 %1367
        %1369 = vrot.lane.b32.xlu0 %v1230, 48
        %v1370 = vpop.permute.xlu0 %1369
        %1371 = vrot.lane.b32.xlu0 %v1231, 48
        %v1372 = vpop.permute.xlu0 %1371
        %1373 = vrot.lane.b32.xlu0 %v1232, 48
        %v1374 = vpop.permute.xlu0 %1373
        %1375 = vrot.lane.b32.xlu0 %v1233, 48
        %v1376 = vpop.permute.xlu0 %1375
        %1377 = vrot.lane.b32.xlu0 %v1234, 48
        %v1378 = vpop.permute.xlu0 %1377
        %1395 = vmatprep.subr.bf16.mxu0 0
        %1396 = vmatpush1.bf16.msra.mxu0 %v1362
        %1397 = vmatprep.subr.bf16.mxu0 0
        %1398 = vmatpush1.bf16.msra.mxu0 %v1360
        %1399 = vmatprep.subr.bf16.mxu0 0
        %1400 = vmatpush1.bf16.msra.mxu0 %v1358
        %1401 = vmatprep.subr.bf16.mxu0 0
        %1402 = vmatpush1.bf16.msra.mxu0 %v1356
        %1403 = vmatprep.subr.bf16.mxu0 0
        %1404 = vmatpush1.bf16.msra.mxu0 %v1354
        %1405 = vmatprep.subr.bf16.mxu0 0
        %1406 = vmatpush1.bf16.msra.mxu0 %v1352
        %1407 = vmatprep.subr.bf16.mxu0 0
        %1408 = vmatpush1.bf16.msra.mxu0 %v1350
        %1409 = vmatprep.subr.bf16.mxu0 0
        %1410 = vmatpush1.bf16.msra.mxu0 %v1348
        %1411 = vmatprep.subr.bf16.mxu0 0
        %1412 = vmatpush2.bf16.msra.mxu0 %v1378
        %1413 = vmatprep.subr.bf16.mxu0 0
        %1414 = vmatpush2.bf16.msra.mxu0 %v1376
        %1415 = vmatprep.subr.bf16.mxu0 0
        %1416 = vmatpush2.bf16.msra.mxu0 %v1374
        %1417 = vmatprep.subr.bf16.mxu0 0
        %1418 = vmatpush2.bf16.msra.mxu0 %v1372
        %1419 = vmatprep.subr.bf16.mxu0 0
        %1420 = vmatpush2.bf16.msra.mxu0 %v1370
        %1421 = vmatprep.subr.bf16.mxu0 0
        %1422 = vmatpush2.bf16.msra.mxu0 %v1368
        %1423 = vmatprep.subr.bf16.mxu0 0
        %1424 = vmatpush2.bf16.msra.mxu0 %v1366
        %1425 = vmatprep.subr.bf16.mxu0 0
        %1426 = vmatpush2.bf16.msra.mxu0 %v1364
        %1427 = vmatprep.mubr.bf16.mxu0 %v1323
        %1428 = vmatmul.mubr.bf16.gmra.mxu0 %v1307
        %v1429 = vpop.f32.mrf.mxu0
        %v1430 = vadd.f32 0.0, %v1429
        %v1431 = vpop.f32.mrf.mxu0
        %v1432 = vpop.f32.mrf.mxu0
        %v1433 = vadd.f32 0.0, %v1432
        %v1434 = vpop.f32.mrf.mxu0
        %1435 = vdwg.mxu0
        %s1436 = sld [smem:[#allocation2 + $0x1]]
        %v1437 = vstv %s1436
        %v1438 = vmul.f32 %v1430, %v1437
        %v1439 = vmul.f32 %v1433, %v1437
        %v1440 = vmax.f32 %v1438, 0.0
        %v1441 = vmax.f32 %v1439, 0.0
        %v1442 = vpack.c.bf16 %v932, %v931
        %v1443 = vpack.c.bf16 %v934, %v933
        %v1444 = vpack.c.bf16 %v936, %v935
        %v1445 = vpack.c.bf16 %v938, %v937
        %v1446 = vpack.c.bf16 %v940, %v939
        %v1447 = vpack.c.bf16 %v942, %v941
        %v1448 = vpack.c.bf16 %v944, %v943
        %v1449 = vpack.c.bf16 %v946, %v945
        %v1450 = vpack.c.bf16 %v948, %v947
        %v1451 = vpack.c.bf16 %v950, %v949
        %v1452 = vpack.c.bf16 %v952, %v951
        %v1453 = vpack.c.bf16 %v954, %v953
        %v1454 = vpack.c.bf16 %v956, %v955
        %v1455 = vpack.c.bf16 %v958, %v957
        %v1456 = vpack.c.bf16 %v960, %v959
        %v1457 = vpack.c.bf16 %v962, %v961
        %v1458 = vpack.c.bf16 %v1441, %v1440
        %1475 = vrot.lane.b32.xlu0 %v1442, 112
        %v1476 = vpop.permute.xlu0 %1475
        %1477 = vrot.lane.b32.xlu0 %v1443, 112
        %v1478 = vpop.permute.xlu0 %1477
        %1479 = vrot.lane.b32.xlu0 %v1444, 112
        %v1480 = vpop.permute.xlu0 %1479
        %1481 = vrot.lane.b32.xlu0 %v1445, 112
        %v1482 = vpop.permute.xlu0 %1481
        %1483 = vrot.lane.b32.xlu0 %v1446, 112
        %v1484 = vpop.permute.xlu0 %1483
        %1485 = vrot.lane.b32.xlu0 %v1447, 112
        %v1486 = vpop.permute.xlu0 %1485
        %1487 = vrot.lane.b32.xlu0 %v1448, 112
        %v1488 = vpop.permute.xlu0 %1487
        %1489 = vrot.lane.b32.xlu0 %v1449, 112
        %v1490 = vpop.permute.xlu0 %1489
        %1491 = vrot.lane.b32.xlu0 %v1450, 112
        %v1492 = vpop.permute.xlu0 %1491
        %1493 = vrot.lane.b32.xlu0 %v1451, 112
        %v1494 = vpop.permute.xlu0 %1493
        %1495 = vrot.lane.b32.xlu0 %v1452, 112
        %v1496 = vpop.permute.xlu0 %1495
        %1497 = vrot.lane.b32.xlu0 %v1453, 112
        %v1498 = vpop.permute.xlu0 %1497
        %1499 = vrot.lane.b32.xlu0 %v1454, 112
        %v1500 = vpop.permute.xlu0 %1499
        %1501 = vrot.lane.b32.xlu0 %v1455, 112
        %v1502 = vpop.permute.xlu0 %1501
        %1503 = vrot.lane.b32.xlu0 %v1456, 112
        %v1504 = vpop.permute.xlu0 %1503
        %1505 = vrot.lane.b32.xlu0 %v1457, 112
        %v1506 = vpop.permute.xlu0 %1505
        %v1508 = vsel %vm255, %v1476, 0
        %v1511 = vsel %vm255, %v1478, 0
        %v1514 = vsel %vm255, %v1480, 0
        %v1517 = vsel %vm255, %v1482, 0
        %v1520 = vsel %vm255, %v1484, 0
        %v1523 = vsel %vm255, %v1486, 0
        %v1526 = vsel %vm255, %v1488, 0
        %v1529 = vsel %vm255, %v1490, 0
        %v1532 = vsel %vm255, %v1492, 0
        %v1535 = vsel %vm255, %v1494, 0
        %v1538 = vsel %vm255, %v1496, 0
        %v1541 = vsel %vm255, %v1498, 0
        %v1544 = vsel %vm255, %v1500, 0
        %v1547 = vsel %vm255, %v1502, 0
        %v1550 = vsel %vm255, %v1504, 0
        %v1553 = vsel %vm255, %v1506, 0
        %v1556 = vsel %vm255, %v1458, 0
        %1558 = vmatprep.subr.bf16.mxu0 0
        %1559 = vmatpush1.bf16.xpose.msra.mxu0 0
        %1560 = vmatprep.subr.bf16.mxu0 0
        %1561 = vmatpush1.bf16.xpose.msra.mxu0 0
        %1562 = vmatprep.subr.bf16.mxu0 0
        %1563 = vmatpush1.bf16.xpose.msra.mxu0 0
        %1564 = vmatprep.subr.bf16.mxu0 0
        %1565 = vmatpush1.bf16.xpose.msra.mxu0 0
        %1566 = vmatprep.subr.bf16.mxu0 0
        %1567 = vmatpush1.bf16.xpose.msra.mxu0 0
        %1568 = vmatprep.subr.bf16.mxu0 0
        %1569 = vmatpush1.bf16.xpose.msra.mxu0 0
        %1570 = vmatprep.subr.bf16.mxu0 0
        %1571 = vmatpush1.bf16.xpose.msra.mxu0 0
        %1572 = vmatprep.subr.bf16.mxu0 0
        %1573 = vmatpush1.bf16.xpose.msra.mxu0 %v1556
        %1574 = vmatprep.subr.bf16.mxu0 0
        %1575 = vmatpush2.bf16.xpose.msra.mxu0 0
        %1576 = vmatprep.subr.bf16.mxu0 0
        %1577 = vmatpush2.bf16.xpose.msra.mxu0 0
        %1578 = vmatprep.subr.bf16.mxu0 0
        %1579 = vmatpush2.bf16.xpose.msra.mxu0 0
        %1580 = vmatprep.subr.bf16.mxu0 0
        %1581 = vmatpush2.bf16.xpose.msra.mxu0 0
        %1582 = vmatprep.subr.bf16.mxu0 0
        %1583 = vmatpush2.bf16.xpose.msra.mxu0 0
        %1584 = vmatprep.subr.bf16.mxu0 0
        %1585 = vmatpush2.bf16.xpose.msra.mxu0 0
        %1586 = vmatprep.subr.bf16.mxu0 0
        %1587 = vmatpush2.bf16.xpose.msra.mxu0 0
        %1588 = vmatprep.subr.bf16.mxu0 0
        %1589 = vmatpush2.bf16.xpose.msra.mxu0 0
        %1590 = vmatprep.mubr.bf16.mxu0 0
        %1591 = vmatmul.mubr.bf16.gmra.mxu0 %v1508
        %v1592 = vpop.f32.mrf.mxu0
        %v1593 = vadd.f32 0.0, %v1592
        %v1594 = vpop.f32.mrf.mxu0
        %v1595 = vpop.f32.mrf.mxu0
        %v1596 = vadd.f32 0.0, %v1595
        %v1597 = vpop.f32.mrf.mxu0
        %1598 = vmatprep.mubr.bf16.mxu0 0
        %1599 = vmatmul.mubr.bf16.gmra.mxu0 %v1511
        %v1600 = vpop.f32.mrf.mxu0
        %v1601 = vadd.f32 0.0, %v1600
        %v1602 = vpop.f32.mrf.mxu0
        %v1603 = vpop.f32.mrf.mxu0
        %v1604 = vadd.f32 0.0, %v1603
        %v1605 = vpop.f32.mrf.mxu0
        %1606 = vmatprep.mubr.bf16.mxu0 0
        %1607 = vmatmul.mubr.bf16.gmra.mxu0 %v1514
        %v1608 = vpop.f32.mrf.mxu0
        %v1609 = vadd.f32 0.0, %v1608
        %v1610 = vpop.f32.mrf.mxu0
        %v1611 = vpop.f32.mrf.mxu0
        %v1612 = vadd.f32 0.0, %v1611
        %v1613 = vpop.f32.mrf.mxu0
        %1614 = vmatprep.mubr.bf16.mxu0 0
        %1615 = vmatmul.mubr.bf16.gmra.mxu0 %v1517
        %v1616 = vpop.f32.mrf.mxu0
        %v1617 = vadd.f32 0.0, %v1616
        %v1618 = vpop.f32.mrf.mxu0
        %v1619 = vpop.f32.mrf.mxu0
        %v1620 = vadd.f32 0.0, %v1619
        %v1621 = vpop.f32.mrf.mxu0
        %1622 = vmatprep.mubr.bf16.mxu0 0
        %1623 = vmatmul.mubr.bf16.gmra.mxu0 %v1520
        %v1624 = vpop.f32.mrf.mxu0
        %v1625 = vadd.f32 0.0, %v1624
        %v1626 = vpop.f32.mrf.mxu0
        %v1627 = vpop.f32.mrf.mxu0
        %v1628 = vadd.f32 0.0, %v1627
        %v1629 = vpop.f32.mrf.mxu0
        %1630 = vmatprep.mubr.bf16.mxu0 0
        %1631 = vmatmul.mubr.bf16.gmra.mxu0 %v1523
        %v1632 = vpop.f32.mrf.mxu0
        %v1633 = vadd.f32 0.0, %v1632
        %v1634 = vpop.f32.mrf.mxu0
        %v1635 = vpop.f32.mrf.mxu0
        %v1636 = vadd.f32 0.0, %v1635
        %v1637 = vpop.f32.mrf.mxu0
        %1638 = vmatprep.mubr.bf16.mxu0 0
        %1639 = vmatmul.mubr.bf16.gmra.mxu0 %v1526
        %v1640 = vpop.f32.mrf.mxu0
        %v1641 = vadd.f32 0.0, %v1640
        %v1642 = vpop.f32.mrf.mxu0
        %v1643 = vpop.f32.mrf.mxu0
        %v1644 = vadd.f32 0.0, %v1643
        %v1645 = vpop.f32.mrf.mxu0
        %1646 = vmatprep.mubr.bf16.mxu0 0
        %1647 = vmatmul.mubr.bf16.gmra.mxu0 %v1529
        %v1648 = vpop.f32.mrf.mxu0
        %v1649 = vadd.f32 0.0, %v1648
        %v1650 = vpop.f32.mrf.mxu0
        %v1651 = vpop.f32.mrf.mxu0
        %v1652 = vadd.f32 0.0, %v1651
        %v1653 = vpop.f32.mrf.mxu0
        %1654 = vmatprep.mubr.bf16.mxu0 0
        %1655 = vmatmul.mubr.bf16.gmra.mxu0 %v1532
        %v1656 = vpop.f32.mrf.mxu0
        %v1657 = vadd.f32 0.0, %v1656
        %v1658 = vpop.f32.mrf.mxu0
        %v1659 = vpop.f32.mrf.mxu0
        %v1660 = vadd.f32 0.0, %v1659
        %v1661 = vpop.f32.mrf.mxu0
        %1662 = vmatprep.mubr.bf16.mxu0 0
        %1663 = vmatmul.mubr.bf16.gmra.mxu0 %v1535
        %v1664 = vpop.f32.mrf.mxu0
        %v1665 = vadd.f32 0.0, %v1664
        %v1666 = vpop.f32.mrf.mxu0
        %v1667 = vpop.f32.mrf.mxu0
        %v1668 = vadd.f32 0.0, %v1667
        %v1669 = vpop.f32.mrf.mxu0
        %1670 = vmatprep.mubr.bf16.mxu0 0
        %1671 = vmatmul.mubr.bf16.gmra.mxu0 %v1538
        %v1672 = vpop.f32.mrf.mxu0
        %v1673 = vadd.f32 0.0, %v1672
        %v1674 = vpop.f32.mrf.mxu0
        %v1675 = vpop.f32.mrf.mxu0
        %v1676 = vadd.f32 0.0, %v1675
        %v1677 = vpop.f32.mrf.mxu0
        %1678 = vmatprep.mubr.bf16.mxu0 0
        %1679 = vmatmul.mubr.bf16.gmra.mxu0 %v1541
        %v1680 = vpop.f32.mrf.mxu0
        %v1681 = vadd.f32 0.0, %v1680
        %v1682 = vpop.f32.mrf.mxu0
        %v1683 = vpop.f32.mrf.mxu0
        %v1684 = vadd.f32 0.0, %v1683
        %v1685 = vpop.f32.mrf.mxu0
        %1686 = vmatprep.mubr.bf16.mxu0 0
        %1687 = vmatmul.mubr.bf16.gmra.mxu0 %v1544
        %v1688 = vpop.f32.mrf.mxu0
        %v1689 = vadd.f32 0.0, %v1688
        %v1690 = vpop.f32.mrf.mxu0
        %v1691 = vpop.f32.mrf.mxu0
        %v1692 = vadd.f32 0.0, %v1691
        %v1693 = vpop.f32.mrf.mxu0
        %1694 = vmatprep.mubr.bf16.mxu0 0
        %1695 = vmatmul.mubr.bf16.gmra.mxu0 %v1547
        %v1696 = vpop.f32.mrf.mxu0
        %v1697 = vadd.f32 0.0, %v1696
        %v1698 = vpop.f32.mrf.mxu0
        %v1699 = vpop.f32.mrf.mxu0
        %v1700 = vadd.f32 0.0, %v1699
        %v1701 = vpop.f32.mrf.mxu0
        %1702 = vmatprep.mubr.bf16.mxu0 0
        %1703 = vmatmul.mubr.bf16.gmra.mxu0 %v1550
        %v1704 = vpop.f32.mrf.mxu0
        %v1705 = vadd.f32 0.0, %v1704
        %v1706 = vpop.f32.mrf.mxu0
        %v1707 = vpop.f32.mrf.mxu0
        %v1708 = vadd.f32 0.0, %v1707
        %v1709 = vpop.f32.mrf.mxu0
        %1710 = vmatprep.mubr.bf16.mxu0 0
        %1711 = vmatmul.mubr.bf16.gmra.mxu0 %v1553
        %v1712 = vpop.f32.mrf.mxu0
        %v1713 = vadd.f32 0.0, %v1712
        %v1714 = vpop.f32.mrf.mxu0
        %v1715 = vpop.f32.mrf.mxu0
        %v1716 = vadd.f32 0.0, %v1715
        %v1717 = vpop.f32.mrf.mxu0
        %1718 = vdwg.mxu0
        %1751 = vrot.lane.b32.xlu0 %v1593, 16
        %v1752 = vpop.permute.xlu0 %1751
        %1753 = vrot.lane.b32.xlu0 %v1596, 16
        %v1754 = vpop.permute.xlu0 %1753
        %1755 = vrot.lane.b32.xlu0 %v1601, 16
        %v1756 = vpop.permute.xlu0 %1755
        %1757 = vrot.lane.b32.xlu0 %v1604, 16
        %v1758 = vpop.permute.xlu0 %1757
        %1759 = vrot.lane.b32.xlu0 %v1609, 16
        %v1760 = vpop.permute.xlu0 %1759
        %1761 = vrot.lane.b32.xlu0 %v1612, 16
        %v1762 = vpop.permute.xlu0 %1761
        %1763 = vrot.lane.b32.xlu0 %v1617, 16
        %v1764 = vpop.permute.xlu0 %1763
        %1765 = vrot.lane.b32.xlu0 %v1620, 16
        %v1766 = vpop.permute.xlu0 %1765
        %1767 = vrot.lane.b32.xlu0 %v1625, 16
        %v1768 = vpop.permute.xlu0 %1767
        %1769 = vrot.lane.b32.xlu0 %v1628, 16
        %v1770 = vpop.permute.xlu0 %1769
        %1771 = vrot.lane.b32.xlu0 %v1633, 16
        %v1772 = vpop.permute.xlu0 %1771
        %1773 = vrot.lane.b32.xlu0 %v1636, 16
        %v1774 = vpop.permute.xlu0 %1773
        %1775 = vrot.lane.b32.xlu0 %v1641, 16
        %v1776 = vpop.permute.xlu0 %1775
        %1777 = vrot.lane.b32.xlu0 %v1644, 16
        %v1778 = vpop.permute.xlu0 %1777
        %1779 = vrot.lane.b32.xlu0 %v1649, 16
        %v1780 = vpop.permute.xlu0 %1779
        %1781 = vrot.lane.b32.xlu0 %v1652, 16
        %v1782 = vpop.permute.xlu0 %1781
        %1783 = vrot.lane.b32.xlu0 %v1657, 16
        %v1784 = vpop.permute.xlu0 %1783
        %1785 = vrot.lane.b32.xlu0 %v1660, 16
        %v1786 = vpop.permute.xlu0 %1785
        %1787 = vrot.lane.b32.xlu0 %v1665, 16
        %v1788 = vpop.permute.xlu0 %1787
        %1789 = vrot.lane.b32.xlu0 %v1668, 16
        %v1790 = vpop.permute.xlu0 %1789
        %1791 = vrot.lane.b32.xlu0 %v1673, 16
        %v1792 = vpop.permute.xlu0 %1791
        %1793 = vrot.lane.b32.xlu0 %v1676, 16
        %v1794 = vpop.permute.xlu0 %1793
        %1795 = vrot.lane.b32.xlu0 %v1681, 16
        %v1796 = vpop.permute.xlu0 %1795
        %1797 = vrot.lane.b32.xlu0 %v1684, 16
        %v1798 = vpop.permute.xlu0 %1797
        %1799 = vrot.lane.b32.xlu0 %v1689, 16
        %v1800 = vpop.permute.xlu0 %1799
        %1801 = vrot.lane.b32.xlu0 %v1692, 16
        %v1802 = vpop.permute.xlu0 %1801
        %1803 = vrot.lane.b32.xlu0 %v1697, 16
        %v1804 = vpop.permute.xlu0 %1803
        %1805 = vrot.lane.b32.xlu0 %v1700, 16
        %v1806 = vpop.permute.xlu0 %1805
        %1807 = vrot.lane.b32.xlu0 %v1705, 16
        %v1808 = vpop.permute.xlu0 %1807
        %1809 = vrot.lane.b32.xlu0 %v1708, 16
        %v1810 = vpop.permute.xlu0 %1809
        %1811 = vrot.lane.b32.xlu0 %v1713, 16
        %v1812 = vpop.permute.xlu0 %1811
        %1813 = vrot.lane.b32.xlu0 %v1716, 16
        %v1814 = vpop.permute.xlu0 %1813
        %1847 = vst.msk [vmem:[%s157] sm:$0xff] %vm995, %v1752
        %1848 = vst.msk [vmem:[%s157 + $0x8] sm:$0xff] %vm995, %v1754
        %1849 = vst.msk [vmem:[%s157 + $0x10] sm:$0xff] %vm995, %v1756
        %1850 = vst.msk [vmem:[%s157 + $0x18] sm:$0xff] %vm995, %v1758
        %1851 = vst.msk [vmem:[%s157 + $0x20] sm:$0xff] %vm995, %v1760
        %1852 = vst.msk [vmem:[%s157 + $0x28] sm:$0xff] %vm995, %v1762
        %1853 = vst.msk [vmem:[%s157 + $0x30] sm:$0xff] %vm995, %v1764
        %1854 = vst.msk [vmem:[%s157 + $0x38] sm:$0xff] %vm995, %v1766
        %1855 = vst.msk [vmem:[%s157 + $0x40] sm:$0xff] %vm995, %v1768
        %1856 = vst.msk [vmem:[%s157 + $0x48] sm:$0xff] %vm995, %v1770
        %1857 = vst.msk [vmem:[%s157 + $0x50] sm:$0xff] %vm995, %v1772
        %1858 = vst.msk [vmem:[%s157 + $0x58] sm:$0xff] %vm995, %v1774
        %1859 = vst.msk [vmem:[%s157 + $0x60] sm:$0xff] %vm995, %v1776
        %1860 = vst.msk [vmem:[%s157 + $0x68] sm:$0xff] %vm995, %v1778
        %1861 = vst.msk [vmem:[%s157 + $0x70] sm:$0xff] %vm995, %v1780
        %1862 = vst.msk [vmem:[%s157 + $0x78] sm:$0xff] %vm995, %v1782
        %1863 = vst.msk [vmem:[%s157 + $0x80] sm:$0xff] %vm995, %v1784
        %1864 = vst.msk [vmem:[%s157 + $0x88] sm:$0xff] %vm995, %v1786
        %1865 = vst.msk [vmem:[%s157 + $0x90] sm:$0xff] %vm995, %v1788
        %1866 = vst.msk [vmem:[%s157 + $0x98] sm:$0xff] %vm995, %v1790
        %1867 = vst.msk [vmem:[%s157 + $0xa0] sm:$0xff] %vm995, %v1792
        %1868 = vst.msk [vmem:[%s157 + $0xa8] sm:$0xff] %vm995, %v1794
        %1869 = vst.msk [vmem:[%s157 + $0xb0] sm:$0xff] %vm995, %v1796
        %1870 = vst.msk [vmem:[%s157 + $0xb8] sm:$0xff] %vm995, %v1798
        %1871 = vst.msk [vmem:[%s157 + $0xc0] sm:$0xff] %vm995, %v1800
        %1872 = vst.msk [vmem:[%s157 + $0xc8] sm:$0xff] %vm995, %v1802
        %1873 = vst.msk [vmem:[%s157 + $0xd0] sm:$0xff] %vm995, %v1804
        %1874 = vst.msk [vmem:[%s157 + $0xd8] sm:$0xff] %vm995, %v1806
        %1875 = vst.msk [vmem:[%s157 + $0xe0] sm:$0xff] %vm995, %v1808
        %1876 = vst.msk [vmem:[%s157 + $0xe8] sm:$0xff] %vm995, %v1810
        %1877 = vst.msk [vmem:[%s157 + $0xf0] sm:$0xff] %vm995, %v1812
        %1878 = vst.msk [vmem:[%s157 + $0xf8] sm:$0xff] %vm995, %v1814
        %v1879 = vld [vmem:[%s152] sm:$0xff]
        %v1880 = vld [vmem:[%s152 + $0x10] sm:$0xff]
        %v1881 = vld [vmem:[%s152 + $0x20] sm:$0xff]
        %v1882 = vld [vmem:[%s152 + $0x30] sm:$0xff]
        %v1883 = vld [vmem:[%s152 + $0x40] sm:$0xff]
        %v1884 = vld [vmem:[%s152 + $0x50] sm:$0xff]
        %v1885 = vld [vmem:[%s152 + $0x60] sm:$0xff]
        %v1886 = vld [vmem:[%s152 + $0x70] sm:$0xff]
        %v1887 = vld [vmem:[%s152 + $0x80] sm:$0xff]
        %v1888 = vld [vmem:[%s152 + $0x90] sm:$0xff]
        %v1889 = vld [vmem:[%s152 + $0xa0] sm:$0xff]
        %v1890 = vld [vmem:[%s152 + $0xb0] sm:$0xff]
        %v1891 = vld [vmem:[%s152 + $0xc0] sm:$0xff]
        %v1892 = vld [vmem:[%s152 + $0xd0] sm:$0xff]
        %v1893 = vld [vmem:[%s152 + $0xe0] sm:$0xff]
        %v1894 = vld [vmem:[%s152 + $0xf0] sm:$0xff]
        %v1895 = vld [vmem:[%s152 + $0x100] sm:$0xff]
        %v1896 = vld [vmem:[%s152 + $0x110] sm:$0xff]
        %v1897 = vld [vmem:[%s152 + $0x120] sm:$0xff]
        %v1898 = vld [vmem:[%s152 + $0x130] sm:$0xff]
        %v1899 = vld [vmem:[%s152 + $0x140] sm:$0xff]
        %v1900 = vld [vmem:[%s152 + $0x150] sm:$0xff]
        %v1901 = vld [vmem:[%s152 + $0x160] sm:$0xff]
        %v1902 = vld [vmem:[%s152 + $0x170] sm:$0xff]
        %v1903 = vld [vmem:[%s152 + $0x180] sm:$0xff]
        %v1904 = vld [vmem:[%s152 + $0x190] sm:$0xff]
        %v1905 = vld [vmem:[%s152 + $0x1a0] sm:$0xff]
        %v1906 = vld [vmem:[%s152 + $0x1b0] sm:$0xff]
        %v1907 = vld [vmem:[%s152 + $0x1c0] sm:$0xff]
        %v1908 = vld [vmem:[%s152 + $0x1d0] sm:$0xff]
        %v1909 = vld [vmem:[%s152 + $0x1e0] sm:$0xff]
        %v1910 = vld [vmem:[%s152 + $0x1f0] sm:$0xff]
        %v1911 = vld [vmem:[%s152 + $0x8] sm:$0xff]
        %v1912 = vld [vmem:[%s152 + $0x18] sm:$0xff]
        %v1913 = vld [vmem:[%s152 + $0x28] sm:$0xff]
        %v1914 = vld [vmem:[%s152 + $0x38] sm:$0xff]
        %v1915 = vld [vmem:[%s152 + $0x48] sm:$0xff]
        %v1916 = vld [vmem:[%s152 + $0x58] sm:$0xff]
        %v1917 = vld [vmem:[%s152 + $0x68] sm:$0xff]
        %v1918 = vld [vmem:[%s152 + $0x78] sm:$0xff]
        %v1919 = vld [vmem:[%s152 + $0x88] sm:$0xff]
        %v1920 = vld [vmem:[%s152 + $0x98] sm:$0xff]
        %v1921 = vld [vmem:[%s152 + $0xa8] sm:$0xff]
        %v1922 = vld [vmem:[%s152 + $0xb8] sm:$0xff]
        %v1923 = vld [vmem:[%s152 + $0xc8] sm:$0xff]
        %v1924 = vld [vmem:[%s152 + $0xd8] sm:$0xff]
        %v1925 = vld [vmem:[%s152 + $0xe8] sm:$0xff]
        %v1926 = vld [vmem:[%s152 + $0xf8] sm:$0xff]
        %v1927 = vld [vmem:[%s152 + $0x108] sm:$0xff]
        %v1928 = vld [vmem:[%s152 + $0x118] sm:$0xff]
        %v1929 = vld [vmem:[%s152 + $0x128] sm:$0xff]
        %v1930 = vld [vmem:[%s152 + $0x138] sm:$0xff]
        %v1931 = vld [vmem:[%s152 + $0x148] sm:$0xff]
        %v1932 = vld [vmem:[%s152 + $0x158] sm:$0xff]
        %v1933 = vld [vmem:[%s152 + $0x168] sm:$0xff]
        %v1934 = vld [vmem:[%s152 + $0x178] sm:$0xff]
        %v1935 = vld [vmem:[%s152 + $0x188] sm:$0xff]
        %v1936 = vld [vmem:[%s152 + $0x198] sm:$0xff]
        %v1937 = vld [vmem:[%s152 + $0x1a8] sm:$0xff]
        %v1938 = vld [vmem:[%s152 + $0x1b8] sm:$0xff]
        %v1939 = vld [vmem:[%s152 + $0x1c8] sm:$0xff]
        %v1940 = vld [vmem:[%s152 + $0x1d8] sm:$0xff]
        %v1941 = vld [vmem:[%s152 + $0x1e8] sm:$0xff]
        %v1942 = vld [vmem:[%s152 + $0x1f8] sm:$0xff]
        %v1943 = vmul.f32 %v1879, %v1879
        %v1944 = vmul.f32 %v1880, %v1880
        %v1945 = vmul.f32 %v1881, %v1881
        %v1946 = vmul.f32 %v1882, %v1882
        %v1947 = vmul.f32 %v1883, %v1883
        %v1948 = vmul.f32 %v1884, %v1884
        %v1949 = vmul.f32 %v1885, %v1885
        %v1950 = vmul.f32 %v1886, %v1886
        %v1951 = vmul.f32 %v1887, %v1887
        %v1952 = vmul.f32 %v1888, %v1888
        %v1953 = vmul.f32 %v1889, %v1889
        %v1954 = vmul.f32 %v1890, %v1890
        %v1955 = vmul.f32 %v1891, %v1891
        %v1956 = vmul.f32 %v1892, %v1892
        %v1957 = vmul.f32 %v1893, %v1893
        %v1958 = vmul.f32 %v1894, %v1894
        %v1959 = vmul.f32 %v1895, %v1895
        %v1960 = vmul.f32 %v1896, %v1896
        %v1961 = vmul.f32 %v1897, %v1897
        %v1962 = vmul.f32 %v1898, %v1898
        %v1963 = vmul.f32 %v1899, %v1899
        %v1964 = vmul.f32 %v1900, %v1900
        %v1965 = vmul.f32 %v1901, %v1901
        %v1966 = vmul.f32 %v1902, %v1902
        %v1967 = vmul.f32 %v1903, %v1903
        %v1968 = vmul.f32 %v1904, %v1904
        %v1969 = vmul.f32 %v1905, %v1905
        %v1970 = vmul.f32 %v1906, %v1906
        %v1971 = vmul.f32 %v1907, %v1907
        %v1972 = vmul.f32 %v1908, %v1908
        %v1973 = vmul.f32 %v1909, %v1909
        %v1974 = vmul.f32 %v1910, %v1910
        %vm1975 = vcmask 392448
        %v1976 = vsel %vm1975, %v1943, 0.0
        %v1977 = vsel %vm1975, %v1944, 0.0
        %v1978 = vadd.f32 %v1976, %v1977
        %v1979 = vsel %vm1975, %v1945, 0.0
        %v1980 = vadd.f32 %v1978, %v1979
        %v1981 = vsel %vm1975, %v1946, 0.0
        %v1982 = vadd.f32 %v1980, %v1981
        %v1983 = vsel %vm1975, %v1947, 0.0
        %v1984 = vadd.f32 %v1982, %v1983
        %v1985 = vsel %vm1975, %v1948, 0.0
        %v1986 = vadd.f32 %v1984, %v1985
        %v1987 = vsel %vm1975, %v1949, 0.0
        %v1988 = vadd.f32 %v1986, %v1987
        %v1989 = vsel %vm1975, %v1950, 0.0
        %v1990 = vadd.f32 %v1988, %v1989
        %v1991 = vsel %vm1975, %v1951, 0.0
        %v1992 = vadd.f32 %v1990, %v1991
        %v1993 = vsel %vm1975, %v1952, 0.0
        %v1994 = vadd.f32 %v1992, %v1993
        %v1995 = vsel %vm1975, %v1953, 0.0
        %v1996 = vadd.f32 %v1994, %v1995
        %v1997 = vsel %vm1975, %v1954, 0.0
        %v1998 = vadd.f32 %v1996, %v1997
        %v1999 = vsel %vm1975, %v1955, 0.0
        %v2000 = vadd.f32 %v1998, %v1999
        %v2001 = vsel %vm1975, %v1956, 0.0
        %v2002 = vadd.f32 %v2000, %v2001
        %v2003 = vsel %vm1975, %v1957, 0.0
        %v2004 = vadd.f32 %v2002, %v2003
        %v2005 = vsel %vm1975, %v1958, 0.0
        %v2006 = vadd.f32 %v2004, %v2005
        %v2007 = vsel %vm1975, %v1959, 0.0
        %v2008 = vadd.f32 %v2006, %v2007
        %v2009 = vsel %vm1975, %v1960, 0.0
        %v2010 = vadd.f32 %v2008, %v2009
        %v2011 = vsel %vm1975, %v1961, 0.0
        %v2012 = vadd.f32 %v2010, %v2011
        %v2013 = vsel %vm1975, %v1962, 0.0
        %v2014 = vadd.f32 %v2012, %v2013
        %v2015 = vsel %vm1975, %v1963, 0.0
        %v2016 = vadd.f32 %v2014, %v2015
        %v2017 = vsel %vm1975, %v1964, 0.0
        %v2018 = vadd.f32 %v2016, %v2017
        %v2019 = vsel %vm1975, %v1965, 0.0
        %v2020 = vadd.f32 %v2018, %v2019
        %v2021 = vsel %vm1975, %v1966, 0.0
        %v2022 = vadd.f32 %v2020, %v2021
        %v2023 = vsel %vm1975, %v1967, 0.0
        %v2024 = vadd.f32 %v2022, %v2023
        %v2025 = vsel %vm1975, %v1968, 0.0
        %v2026 = vadd.f32 %v2024, %v2025
        %v2027 = vsel %vm1975, %v1969, 0.0
        %v2028 = vadd.f32 %v2026, %v2027
        %v2029 = vsel %vm1975, %v1970, 0.0
        %v2030 = vadd.f32 %v2028, %v2029
        %v2031 = vsel %vm1975, %v1971, 0.0
        %v2032 = vadd.f32 %v2030, %v2031
        %v2033 = vsel %vm1975, %v1972, 0.0
        %v2034 = vadd.f32 %v2032, %v2033
        %v2035 = vsel %vm1975, %v1973, 0.0
        %v2036 = vadd.f32 %v2034, %v2035
        %v2037 = vsel %vm1975, %v1974, 0.0
        %v2038 = vadd.f32 %v2036, %v2037
        %v2039 = vrot.slane %v2038, 4
        %v2040 = vadd.f32 %v2038, %v2039
        %v2041 = vrot.slane %v2040, 2
        %v2042 = vadd.f32 %v2040, %v2041
        %v2043 = vrot.slane %v2042, 1
        %v2044 = vadd.f32 %v2042, %v2043
        %v2045 = vmax.f32 %v2044, 1e-24
        %v2046 = vrsqrt.pop %v2045
        %v2047 = vmul.f32 %v1879, %v2046
        %v2048 = vmul.f32 %v1880, %v2046
        %v2049 = vmul.f32 %v1881, %v2046
        %v2050 = vmul.f32 %v1882, %v2046
        %v2051 = vmul.f32 %v1883, %v2046
        %v2052 = vmul.f32 %v1884, %v2046
        %v2053 = vmul.f32 %v1885, %v2046
        %v2054 = vmul.f32 %v1886, %v2046
        %v2055 = vmul.f32 %v1887, %v2046
        %v2056 = vmul.f32 %v1888, %v2046
        %v2057 = vmul.f32 %v1889, %v2046
        %v2058 = vmul.f32 %v1890, %v2046
        %v2059 = vmul.f32 %v1891, %v2046
        %v2060 = vmul.f32 %v1892, %v2046
        %v2061 = vmul.f32 %v1893, %v2046
        %v2062 = vmul.f32 %v1894, %v2046
        %v2063 = vmul.f32 %v1895, %v2046
        %v2064 = vmul.f32 %v1896, %v2046
        %v2065 = vmul.f32 %v1897, %v2046
        %v2066 = vmul.f32 %v1898, %v2046
        %v2067 = vmul.f32 %v1899, %v2046
        %v2068 = vmul.f32 %v1900, %v2046
        %v2069 = vmul.f32 %v1901, %v2046
        %v2070 = vmul.f32 %v1902, %v2046
        %v2071 = vmul.f32 %v1903, %v2046
        %v2072 = vmul.f32 %v1904, %v2046
        %v2073 = vmul.f32 %v1905, %v2046
        %v2074 = vmul.f32 %v1906, %v2046
        %v2075 = vmul.f32 %v1907, %v2046
        %v2076 = vmul.f32 %v1908, %v2046
        %v2077 = vmul.f32 %v1909, %v2046
        %v2078 = vmul.f32 %v1910, %v2046
        %vm2079 = vcmask 917248
        %v2080 = vsel %vm2079, %v1943, 0.0
        %v2081 = vsel %vm2079, %v1944, 0.0
        %v2082 = vadd.f32 %v2080, %v2081
        %v2083 = vsel %vm2079, %v1945, 0.0
        %v2084 = vadd.f32 %v2082, %v2083
        %v2085 = vsel %vm2079, %v1946, 0.0
        %v2086 = vadd.f32 %v2084, %v2085
        %v2087 = vsel %vm2079, %v1947, 0.0
        %v2088 = vadd.f32 %v2086, %v2087
        %v2089 = vsel %vm2079, %v1948, 0.0
        %v2090 = vadd.f32 %v2088, %v2089
        %v2091 = vsel %vm2079, %v1949, 0.0
        %v2092 = vadd.f32 %v2090, %v2091
        %v2093 = vsel %vm2079, %v1950, 0.0
        %v2094 = vadd.f32 %v2092, %v2093
        %v2095 = vsel %vm2079, %v1951, 0.0
        %v2096 = vadd.f32 %v2094, %v2095
        %v2097 = vsel %vm2079, %v1952, 0.0
        %v2098 = vadd.f32 %v2096, %v2097
        %v2099 = vsel %vm2079, %v1953, 0.0
        %v2100 = vadd.f32 %v2098, %v2099
        %v2101 = vsel %vm2079, %v1954, 0.0
        %v2102 = vadd.f32 %v2100, %v2101
        %v2103 = vsel %vm2079, %v1955, 0.0
        %v2104 = vadd.f32 %v2102, %v2103
        %v2105 = vsel %vm2079, %v1956, 0.0
        %v2106 = vadd.f32 %v2104, %v2105
        %v2107 = vsel %vm2079, %v1957, 0.0
        %v2108 = vadd.f32 %v2106, %v2107
        %v2109 = vsel %vm2079, %v1958, 0.0
        %v2110 = vadd.f32 %v2108, %v2109
        %v2111 = vsel %vm2079, %v1959, 0.0
        %v2112 = vadd.f32 %v2110, %v2111
        %v2113 = vsel %vm2079, %v1960, 0.0
        %v2114 = vadd.f32 %v2112, %v2113
        %v2115 = vsel %vm2079, %v1961, 0.0
        %v2116 = vadd.f32 %v2114, %v2115
        %v2117 = vsel %vm2079, %v1962, 0.0
        %v2118 = vadd.f32 %v2116, %v2117
        %v2119 = vsel %vm2079, %v1963, 0.0
        %v2120 = vadd.f32 %v2118, %v2119
        %v2121 = vsel %vm2079, %v1964, 0.0
        %v2122 = vadd.f32 %v2120, %v2121
        %v2123 = vsel %vm2079, %v1965, 0.0
        %v2124 = vadd.f32 %v2122, %v2123
        %v2125 = vsel %vm2079, %v1966, 0.0
        %v2126 = vadd.f32 %v2124, %v2125
        %v2127 = vsel %vm2079, %v1967, 0.0
        %v2128 = vadd.f32 %v2126, %v2127
        %v2129 = vsel %vm2079, %v1968, 0.0
        %v2130 = vadd.f32 %v2128, %v2129
        %v2131 = vsel %vm2079, %v1969, 0.0
        %v2132 = vadd.f32 %v2130, %v2131
        %v2133 = vsel %vm2079, %v1970, 0.0
        %v2134 = vadd.f32 %v2132, %v2133
        %v2135 = vsel %vm2079, %v1971, 0.0
        %v2136 = vadd.f32 %v2134, %v2135
        %v2137 = vsel %vm2079, %v1972, 0.0
        %v2138 = vadd.f32 %v2136, %v2137
        %v2139 = vsel %vm2079, %v1973, 0.0
        %v2140 = vadd.f32 %v2138, %v2139
        %v2141 = vsel %vm2079, %v1974, 0.0
        %v2142 = vadd.f32 %v2140, %v2141
        %v2143 = vrot.slane %v2142, 4
        %v2144 = vadd.f32 %v2142, %v2143
        %v2145 = vrot.slane %v2144, 2
        %v2146 = vadd.f32 %v2144, %v2145
        %v2147 = vrot.slane %v2146, 1
        %v2148 = vadd.f32 %v2146, %v2147
        %v2149 = vmax.f32 %v2148, 1e-24
        %v2150 = vrsqrt.pop %v2149
        %v2151 = vmul.f32 %v1879, %v2150
        %v2152 = vmul.f32 %v1880, %v2150
        %v2153 = vmul.f32 %v1881, %v2150
        %v2154 = vmul.f32 %v1882, %v2150
        %v2155 = vmul.f32 %v1883, %v2150
        %v2156 = vmul.f32 %v1884, %v2150
        %v2157 = vmul.f32 %v1885, %v2150
        %v2158 = vmul.f32 %v1886, %v2150
        %v2159 = vmul.f32 %v1887, %v2150
        %v2160 = vmul.f32 %v1888, %v2150
        %v2161 = vmul.f32 %v1889, %v2150
        %v2162 = vmul.f32 %v1890, %v2150
        %v2163 = vmul.f32 %v1891, %v2150
        %v2164 = vmul.f32 %v1892, %v2150
        %v2165 = vmul.f32 %v1893, %v2150
        %v2166 = vmul.f32 %v1894, %v2150
        %v2167 = vmul.f32 %v1895, %v2150
        %v2168 = vmul.f32 %v1896, %v2150
        %v2169 = vmul.f32 %v1897, %v2150
        %v2170 = vmul.f32 %v1898, %v2150
        %v2171 = vmul.f32 %v1899, %v2150
        %v2172 = vmul.f32 %v1900, %v2150
        %v2173 = vmul.f32 %v1901, %v2150
        %v2174 = vmul.f32 %v1902, %v2150
        %v2175 = vmul.f32 %v1903, %v2150
        %v2176 = vmul.f32 %v1904, %v2150
        %v2177 = vmul.f32 %v1905, %v2150
        %v2178 = vmul.f32 %v1906, %v2150
        %v2179 = vmul.f32 %v1907, %v2150
        %v2180 = vmul.f32 %v1908, %v2150
        %v2181 = vmul.f32 %v1909, %v2150
        %v2182 = vmul.f32 %v1910, %v2150
        %v2183 = vpack.c.bf16 %v2048, %v2047
        %v2184 = vpack.c.bf16 %v2050, %v2049
        %v2185 = vpack.c.bf16 %v2052, %v2051
        %v2186 = vpack.c.bf16 %v2054, %v2053
        %v2187 = vpack.c.bf16 %v2056, %v2055
        %v2188 = vpack.c.bf16 %v2058, %v2057
        %v2189 = vpack.c.bf16 %v2060, %v2059
        %v2190 = vpack.c.bf16 %v2062, %v2061
        %v2191 = vpack.c.bf16 %v2064, %v2063
        %v2192 = vpack.c.bf16 %v2066, %v2065
        %v2193 = vpack.c.bf16 %v2068, %v2067
        %v2194 = vpack.c.bf16 %v2070, %v2069
        %v2195 = vpack.c.bf16 %v2072, %v2071
        %v2196 = vpack.c.bf16 %v2074, %v2073
        %v2197 = vpack.c.bf16 %v2076, %v2075
        %v2198 = vpack.c.bf16 %v2078, %v2077
        %v2199 = vpack.c.bf16 %v2152, %v2151
        %v2200 = vpack.c.bf16 %v2154, %v2153
        %v2201 = vpack.c.bf16 %v2156, %v2155
        %v2202 = vpack.c.bf16 %v2158, %v2157
        %v2203 = vpack.c.bf16 %v2160, %v2159
        %v2204 = vpack.c.bf16 %v2162, %v2161
        %v2205 = vpack.c.bf16 %v2164, %v2163
        %v2206 = vpack.c.bf16 %v2166, %v2165
        %v2207 = vpack.c.bf16 %v2168, %v2167
        %v2208 = vpack.c.bf16 %v2170, %v2169
        %v2209 = vpack.c.bf16 %v2172, %v2171
        %v2210 = vpack.c.bf16 %v2174, %v2173
        %v2211 = vpack.c.bf16 %v2176, %v2175
        %v2212 = vpack.c.bf16 %v2178, %v2177
        %v2213 = vpack.c.bf16 %v2180, %v2179
        %v2214 = vpack.c.bf16 %v2182, %v2181
        %2231 = vrot.lane.b32.xlu0 %v2183, 96
        %v2232 = vpop.permute.xlu0 %2231
        %2233 = vrot.lane.b32.xlu0 %v2184, 96
        %v2234 = vpop.permute.xlu0 %2233
        %2235 = vrot.lane.b32.xlu0 %v2185, 96
        %v2236 = vpop.permute.xlu0 %2235
        %2237 = vrot.lane.b32.xlu0 %v2186, 96
        %v2238 = vpop.permute.xlu0 %2237
        %2239 = vrot.lane.b32.xlu0 %v2187, 96
        %v2240 = vpop.permute.xlu0 %2239
        %2241 = vrot.lane.b32.xlu0 %v2188, 96
        %v2242 = vpop.permute.xlu0 %2241
        %2243 = vrot.lane.b32.xlu0 %v2189, 96
        %v2244 = vpop.permute.xlu0 %2243
        %2245 = vrot.lane.b32.xlu0 %v2190, 96
        %v2246 = vpop.permute.xlu0 %2245
        %2247 = vrot.lane.b32.xlu0 %v2191, 96
        %v2248 = vpop.permute.xlu0 %2247
        %2249 = vrot.lane.b32.xlu0 %v2192, 96
        %v2250 = vpop.permute.xlu0 %2249
        %2251 = vrot.lane.b32.xlu0 %v2193, 96
        %v2252 = vpop.permute.xlu0 %2251
        %2253 = vrot.lane.b32.xlu0 %v2194, 96
        %v2254 = vpop.permute.xlu0 %2253
        %2255 = vrot.lane.b32.xlu0 %v2195, 96
        %v2256 = vpop.permute.xlu0 %2255
        %2257 = vrot.lane.b32.xlu0 %v2196, 96
        %v2258 = vpop.permute.xlu0 %2257
        %2259 = vrot.lane.b32.xlu0 %v2197, 96
        %v2260 = vpop.permute.xlu0 %2259
        %2261 = vrot.lane.b32.xlu0 %v2198, 96
        %v2262 = vpop.permute.xlu0 %2261
        %2279 = vxpose.xlu0.c.b16.start [1/8] %v2232, 128
        %2280 = vxpose.xlu0.c.b16.cont [2/8] %v2234, 128
        %2281 = vxpose.xlu0.c.b16.cont [3/8] %v2236, 128
        %2282 = vxpose.xlu0.c.b16.cont [4/8] %v2238, 128
        %2283 = vxpose.xlu0.c.b16.cont [5/8] %v2240, 128
        %2284 = vxpose.xlu0.c.b16.cont [6/8] %v2242, 128
        %2285 = vxpose.xlu0.c.b16.cont [7/8] %v2244, 128
        %2286 = vxpose.xlu0.c.b16.end [8/8] %v2246, 128
        %v2287 = vpop.trf.xlu0
        %v2288 = vpop.trf.xlu0
        %v2289 = vpop.trf.xlu0
        %v2290 = vpop.trf.xlu0
        %v2291 = vpop.trf.xlu0
        %v2292 = vpop.trf.xlu0
        %v2293 = vpop.trf.xlu0
        %v2294 = vpop.trf.xlu0
        %2295 = vxpose.xlu0.c.b16.start [1/8] %v2248, 128
        %2296 = vxpose.xlu0.c.b16.cont [2/8] %v2250, 128
        %2297 = vxpose.xlu0.c.b16.cont [3/8] %v2252, 128
        %2298 = vxpose.xlu0.c.b16.cont [4/8] %v2254, 128
        %2299 = vxpose.xlu0.c.b16.cont [5/8] %v2256, 128
        %2300 = vxpose.xlu0.c.b16.cont [6/8] %v2258, 128
        %2301 = vxpose.xlu0.c.b16.cont [7/8] %v2260, 128
        %2302 = vxpose.xlu0.c.b16.end [8/8] %v2262, 128
        %v2303 = vpop.trf.xlu0
        %v2304 = vpop.trf.xlu0
        %v2305 = vpop.trf.xlu0
        %v2306 = vpop.trf.xlu0
        %v2307 = vpop.trf.xlu0
        %v2308 = vpop.trf.xlu0
        %v2309 = vpop.trf.xlu0
        %v2310 = vpop.trf.xlu0
        %2327 = vrot.lane.b32.xlu0 %v2199, 32
        %v2328 = vpop.permute.xlu0 %2327
        %2329 = vrot.lane.b32.xlu0 %v2200, 32
        %v2330 = vpop.permute.xlu0 %2329
        %2331 = vrot.lane.b32.xlu0 %v2201, 32
        %v2332 = vpop.permute.xlu0 %2331
        %2333 = vrot.lane.b32.xlu0 %v2202, 32
        %v2334 = vpop.permute.xlu0 %2333
        %2335 = vrot.lane.b32.xlu0 %v2203, 32
        %v2336 = vpop.permute.xlu0 %2335
        %2337 = vrot.lane.b32.xlu0 %v2204, 32
        %v2338 = vpop.permute.xlu0 %2337
        %2339 = vrot.lane.b32.xlu0 %v2205, 32
        %v2340 = vpop.permute.xlu0 %2339
        %2341 = vrot.lane.b32.xlu0 %v2206, 32
        %v2342 = vpop.permute.xlu0 %2341
        %2343 = vrot.lane.b32.xlu0 %v2207, 32
        %v2344 = vpop.permute.xlu0 %2343
        %2345 = vrot.lane.b32.xlu0 %v2208, 32
        %v2346 = vpop.permute.xlu0 %2345
        %2347 = vrot.lane.b32.xlu0 %v2209, 32
        %v2348 = vpop.permute.xlu0 %2347
        %2349 = vrot.lane.b32.xlu0 %v2210, 32
        %v2350 = vpop.permute.xlu0 %2349
        %2351 = vrot.lane.b32.xlu0 %v2211, 32
        %v2352 = vpop.permute.xlu0 %2351
        %2353 = vrot.lane.b32.xlu0 %v2212, 32
        %v2354 = vpop.permute.xlu0 %2353
        %2355 = vrot.lane.b32.xlu0 %v2213, 32
        %v2356 = vpop.permute.xlu0 %2355
        %2357 = vrot.lane.b32.xlu0 %v2214, 32
        %v2358 = vpop.permute.xlu0 %2357
        %2375 = vmatprep.subr.bf16.mxu0 0
        %2376 = vmatpush1.bf16.msra.mxu0 %v2342
        %2377 = vmatprep.subr.bf16.mxu0 0
        %2378 = vmatpush1.bf16.msra.mxu0 %v2340
        %2379 = vmatprep.subr.bf16.mxu0 0
        %2380 = vmatpush1.bf16.msra.mxu0 %v2338
        %2381 = vmatprep.subr.bf16.mxu0 0
        %2382 = vmatpush1.bf16.msra.mxu0 %v2336
        %2383 = vmatprep.subr.bf16.mxu0 0
        %2384 = vmatpush1.bf16.msra.mxu0 %v2334
        %2385 = vmatprep.subr.bf16.mxu0 0
        %2386 = vmatpush1.bf16.msra.mxu0 %v2332
        %2387 = vmatprep.subr.bf16.mxu0 0
        %2388 = vmatpush1.bf16.msra.mxu0 %v2330
        %2389 = vmatprep.subr.bf16.mxu0 0
        %2390 = vmatpush1.bf16.msra.mxu0 %v2328
        %2391 = vmatprep.subr.bf16.mxu0 0
        %2392 = vmatpush2.bf16.msra.mxu0 %v2358
        %2393 = vmatprep.subr.bf16.mxu0 0
        %2394 = vmatpush2.bf16.msra.mxu0 %v2356
        %2395 = vmatprep.subr.bf16.mxu0 0
        %2396 = vmatpush2.bf16.msra.mxu0 %v2354
        %2397 = vmatprep.subr.bf16.mxu0 0
        %2398 = vmatpush2.bf16.msra.mxu0 %v2352
        %2399 = vmatprep.subr.bf16.mxu0 0
        %2400 = vmatpush2.bf16.msra.mxu0 %v2350
        %2401 = vmatprep.subr.bf16.mxu0 0
        %2402 = vmatpush2.bf16.msra.mxu0 %v2348
        %2403 = vmatprep.subr.bf16.mxu0 0
        %2404 = vmatpush2.bf16.msra.mxu0 %v2346
        %2405 = vmatprep.subr.bf16.mxu0 0
        %2406 = vmatpush2.bf16.msra.mxu0 %v2344
        %2407 = vmatprep.mubr.bf16.mxu0 %v2303
        %2408 = vmatmul.mubr.bf16.gmra.mxu0 %v2287
        %v2409 = vpop.f32.mrf.mxu0
        %v2410 = vadd.f32 0.0, %v2409
        %v2411 = vpop.f32.mrf.mxu0
        %v2412 = vpop.f32.mrf.mxu0
        %v2413 = vadd.f32 0.0, %v2412
        %v2414 = vpop.f32.mrf.mxu0
        %2415 = vdwg.mxu0
        %s2416 = sld [smem:[#allocation2 + $0x2]]
        %v2417 = vstv %s2416
        %v2418 = vmul.f32 %v2410, %v2417
        %v2419 = vmul.f32 %v2413, %v2417
        %v2420 = vmax.f32 %v2418, 0.0
        %v2421 = vmax.f32 %v2419, 0.0
        %v2422 = vpack.c.bf16 %v1912, %v1911
        %v2423 = vpack.c.bf16 %v1914, %v1913
        %v2424 = vpack.c.bf16 %v1916, %v1915
        %v2425 = vpack.c.bf16 %v1918, %v1917
        %v2426 = vpack.c.bf16 %v1920, %v1919
        %v2427 = vpack.c.bf16 %v1922, %v1921
        %v2428 = vpack.c.bf16 %v1924, %v1923
        %v2429 = vpack.c.bf16 %v1926, %v1925
        %v2430 = vpack.c.bf16 %v1928, %v1927
        %v2431 = vpack.c.bf16 %v1930, %v1929
        %v2432 = vpack.c.bf16 %v1932, %v1931
        %v2433 = vpack.c.bf16 %v1934, %v1933
        %v2434 = vpack.c.bf16 %v1936, %v1935
        %v2435 = vpack.c.bf16 %v1938, %v1937
        %v2436 = vpack.c.bf16 %v1940, %v1939
        %v2437 = vpack.c.bf16 %v1942, %v1941
        %v2438 = vpack.c.bf16 %v2421, %v2420
        %2455 = vrot.lane.b32.xlu0 %v2422, 96
        %v2456 = vpop.permute.xlu0 %2455
        %2457 = vrot.lane.b32.xlu0 %v2423, 96
        %v2458 = vpop.permute.xlu0 %2457
        %2459 = vrot.lane.b32.xlu0 %v2424, 96
        %v2460 = vpop.permute.xlu0 %2459
        %2461 = vrot.lane.b32.xlu0 %v2425, 96
        %v2462 = vpop.permute.xlu0 %2461
        %2463 = vrot.lane.b32.xlu0 %v2426, 96
        %v2464 = vpop.permute.xlu0 %2463
        %2465 = vrot.lane.b32.xlu0 %v2427, 96
        %v2466 = vpop.permute.xlu0 %2465
        %2467 = vrot.lane.b32.xlu0 %v2428, 96
        %v2468 = vpop.permute.xlu0 %2467
        %2469 = vrot.lane.b32.xlu0 %v2429, 96
        %v2470 = vpop.permute.xlu0 %2469
        %2471 = vrot.lane.b32.xlu0 %v2430, 96
        %v2472 = vpop.permute.xlu0 %2471
        %2473 = vrot.lane.b32.xlu0 %v2431, 96
        %v2474 = vpop.permute.xlu0 %2473
        %2475 = vrot.lane.b32.xlu0 %v2432, 96
        %v2476 = vpop.permute.xlu0 %2475
        %2477 = vrot.lane.b32.xlu0 %v2433, 96
        %v2478 = vpop.permute.xlu0 %2477
        %2479 = vrot.lane.b32.xlu0 %v2434, 96
        %v2480 = vpop.permute.xlu0 %2479
        %2481 = vrot.lane.b32.xlu0 %v2435, 96
        %v2482 = vpop.permute.xlu0 %2481
        %2483 = vrot.lane.b32.xlu0 %v2436, 96
        %v2484 = vpop.permute.xlu0 %2483
        %2485 = vrot.lane.b32.xlu0 %v2437, 96
        %v2486 = vpop.permute.xlu0 %2485
        %v2488 = vsel %vm255, %v2456, 0
        %v2491 = vsel %vm255, %v2458, 0
        %v2494 = vsel %vm255, %v2460, 0
        %v2497 = vsel %vm255, %v2462, 0
        %v2500 = vsel %vm255, %v2464, 0
        %v2503 = vsel %vm255, %v2466, 0
        %v2506 = vsel %vm255, %v2468, 0
        %v2509 = vsel %vm255, %v2470, 0
        %v2512 = vsel %vm255, %v2472, 0
        %v2515 = vsel %vm255, %v2474, 0
        %v2518 = vsel %vm255, %v2476, 0
        %v2521 = vsel %vm255, %v2478, 0
        %v2524 = vsel %vm255, %v2480, 0
        %v2527 = vsel %vm255, %v2482, 0
        %v2530 = vsel %vm255, %v2484, 0
        %v2533 = vsel %vm255, %v2486, 0
        %v2536 = vsel %vm255, %v2438, 0
        %2538 = vmatprep.subr.bf16.mxu0 0
        %2539 = vmatpush1.bf16.xpose.msra.mxu0 0
        %2540 = vmatprep.subr.bf16.mxu0 0
        %2541 = vmatpush1.bf16.xpose.msra.mxu0 0
        %2542 = vmatprep.subr.bf16.mxu0 0
        %2543 = vmatpush1.bf16.xpose.msra.mxu0 0
        %2544 = vmatprep.subr.bf16.mxu0 0
        %2545 = vmatpush1.bf16.xpose.msra.mxu0 0
        %2546 = vmatprep.subr.bf16.mxu0 0
        %2547 = vmatpush1.bf16.xpose.msra.mxu0 0
        %2548 = vmatprep.subr.bf16.mxu0 0
        %2549 = vmatpush1.bf16.xpose.msra.mxu0 0
        %2550 = vmatprep.subr.bf16.mxu0 0
        %2551 = vmatpush1.bf16.xpose.msra.mxu0 0
        %2552 = vmatprep.subr.bf16.mxu0 0
        %2553 = vmatpush1.bf16.xpose.msra.mxu0 %v2536
        %2554 = vmatprep.subr.bf16.mxu0 0
        %2555 = vmatpush2.bf16.xpose.msra.mxu0 0
        %2556 = vmatprep.subr.bf16.mxu0 0
        %2557 = vmatpush2.bf16.xpose.msra.mxu0 0
        %2558 = vmatprep.subr.bf16.mxu0 0
        %2559 = vmatpush2.bf16.xpose.msra.mxu0 0
        %2560 = vmatprep.subr.bf16.mxu0 0
        %2561 = vmatpush2.bf16.xpose.msra.mxu0 0
        %2562 = vmatprep.subr.bf16.mxu0 0
        %2563 = vmatpush2.bf16.xpose.msra.mxu0 0
        %2564 = vmatprep.subr.bf16.mxu0 0
        %2565 = vmatpush2.bf16.xpose.msra.mxu0 0
        %2566 = vmatprep.subr.bf16.mxu0 0
        %2567 = vmatpush2.bf16.xpose.msra.mxu0 0
        %2568 = vmatprep.subr.bf16.mxu0 0
        %2569 = vmatpush2.bf16.xpose.msra.mxu0 0
        %2570 = vmatprep.mubr.bf16.mxu0 0
        %2571 = vmatmul.mubr.bf16.gmra.mxu0 %v2488
        %v2572 = vpop.f32.mrf.mxu0
        %v2573 = vadd.f32 0.0, %v2572
        %v2574 = vpop.f32.mrf.mxu0
        %v2575 = vpop.f32.mrf.mxu0
        %v2576 = vadd.f32 0.0, %v2575
        %v2577 = vpop.f32.mrf.mxu0
        %2578 = vmatprep.mubr.bf16.mxu0 0
        %2579 = vmatmul.mubr.bf16.gmra.mxu0 %v2491
        %v2580 = vpop.f32.mrf.mxu0
        %v2581 = vadd.f32 0.0, %v2580
        %v2582 = vpop.f32.mrf.mxu0
        %v2583 = vpop.f32.mrf.mxu0
        %v2584 = vadd.f32 0.0, %v2583
        %v2585 = vpop.f32.mrf.mxu0
        %2586 = vmatprep.mubr.bf16.mxu0 0
        %2587 = vmatmul.mubr.bf16.gmra.mxu0 %v2494
        %v2588 = vpop.f32.mrf.mxu0
        %v2589 = vadd.f32 0.0, %v2588
        %v2590 = vpop.f32.mrf.mxu0
        %v2591 = vpop.f32.mrf.mxu0
        %v2592 = vadd.f32 0.0, %v2591
        %v2593 = vpop.f32.mrf.mxu0
        %2594 = vmatprep.mubr.bf16.mxu0 0
        %2595 = vmatmul.mubr.bf16.gmra.mxu0 %v2497
        %v2596 = vpop.f32.mrf.mxu0
        %v2597 = vadd.f32 0.0, %v2596
        %v2598 = vpop.f32.mrf.mxu0
        %v2599 = vpop.f32.mrf.mxu0
        %v2600 = vadd.f32 0.0, %v2599
        %v2601 = vpop.f32.mrf.mxu0
        %2602 = vmatprep.mubr.bf16.mxu0 0
        %2603 = vmatmul.mubr.bf16.gmra.mxu0 %v2500
        %v2604 = vpop.f32.mrf.mxu0
        %v2605 = vadd.f32 0.0, %v2604
        %v2606 = vpop.f32.mrf.mxu0
        %v2607 = vpop.f32.mrf.mxu0
        %v2608 = vadd.f32 0.0, %v2607
        %v2609 = vpop.f32.mrf.mxu0
        %2610 = vmatprep.mubr.bf16.mxu0 0
        %2611 = vmatmul.mubr.bf16.gmra.mxu0 %v2503
        %v2612 = vpop.f32.mrf.mxu0
        %v2613 = vadd.f32 0.0, %v2612
        %v2614 = vpop.f32.mrf.mxu0
        %v2615 = vpop.f32.mrf.mxu0
        %v2616 = vadd.f32 0.0, %v2615
        %v2617 = vpop.f32.mrf.mxu0
        %2618 = vmatprep.mubr.bf16.mxu0 0
        %2619 = vmatmul.mubr.bf16.gmra.mxu0 %v2506
        %v2620 = vpop.f32.mrf.mxu0
        %v2621 = vadd.f32 0.0, %v2620
        %v2622 = vpop.f32.mrf.mxu0
        %v2623 = vpop.f32.mrf.mxu0
        %v2624 = vadd.f32 0.0, %v2623
        %v2625 = vpop.f32.mrf.mxu0
        %2626 = vmatprep.mubr.bf16.mxu0 0
        %2627 = vmatmul.mubr.bf16.gmra.mxu0 %v2509
        %v2628 = vpop.f32.mrf.mxu0
        %v2629 = vadd.f32 0.0, %v2628
        %v2630 = vpop.f32.mrf.mxu0
        %v2631 = vpop.f32.mrf.mxu0
        %v2632 = vadd.f32 0.0, %v2631
        %v2633 = vpop.f32.mrf.mxu0
        %2634 = vmatprep.mubr.bf16.mxu0 0
        %2635 = vmatmul.mubr.bf16.gmra.mxu0 %v2512
        %v2636 = vpop.f32.mrf.mxu0
        %v2637 = vadd.f32 0.0, %v2636
        %v2638 = vpop.f32.mrf.mxu0
        %v2639 = vpop.f32.mrf.mxu0
        %v2640 = vadd.f32 0.0, %v2639
        %v2641 = vpop.f32.mrf.mxu0
        %2642 = vmatprep.mubr.bf16.mxu0 0
        %2643 = vmatmul.mubr.bf16.gmra.mxu0 %v2515
        %v2644 = vpop.f32.mrf.mxu0
        %v2645 = vadd.f32 0.0, %v2644
        %v2646 = vpop.f32.mrf.mxu0
        %v2647 = vpop.f32.mrf.mxu0
        %v2648 = vadd.f32 0.0, %v2647
        %v2649 = vpop.f32.mrf.mxu0
        %2650 = vmatprep.mubr.bf16.mxu0 0
        %2651 = vmatmul.mubr.bf16.gmra.mxu0 %v2518
        %v2652 = vpop.f32.mrf.mxu0
        %v2653 = vadd.f32 0.0, %v2652
        %v2654 = vpop.f32.mrf.mxu0
        %v2655 = vpop.f32.mrf.mxu0
        %v2656 = vadd.f32 0.0, %v2655
        %v2657 = vpop.f32.mrf.mxu0
        %2658 = vmatprep.mubr.bf16.mxu0 0
        %2659 = vmatmul.mubr.bf16.gmra.mxu0 %v2521
        %v2660 = vpop.f32.mrf.mxu0
        %v2661 = vadd.f32 0.0, %v2660
        %v2662 = vpop.f32.mrf.mxu0
        %v2663 = vpop.f32.mrf.mxu0
        %v2664 = vadd.f32 0.0, %v2663
        %v2665 = vpop.f32.mrf.mxu0
        %2666 = vmatprep.mubr.bf16.mxu0 0
        %2667 = vmatmul.mubr.bf16.gmra.mxu0 %v2524
        %v2668 = vpop.f32.mrf.mxu0
        %v2669 = vadd.f32 0.0, %v2668
        %v2670 = vpop.f32.mrf.mxu0
        %v2671 = vpop.f32.mrf.mxu0
        %v2672 = vadd.f32 0.0, %v2671
        %v2673 = vpop.f32.mrf.mxu0
        %2674 = vmatprep.mubr.bf16.mxu0 0
        %2675 = vmatmul.mubr.bf16.gmra.mxu0 %v2527
        %v2676 = vpop.f32.mrf.mxu0
        %v2677 = vadd.f32 0.0, %v2676
        %v2678 = vpop.f32.mrf.mxu0
        %v2679 = vpop.f32.mrf.mxu0
        %v2680 = vadd.f32 0.0, %v2679
        %v2681 = vpop.f32.mrf.mxu0
        %2682 = vmatprep.mubr.bf16.mxu0 0
        %2683 = vmatmul.mubr.bf16.gmra.mxu0 %v2530
        %v2684 = vpop.f32.mrf.mxu0
        %v2685 = vadd.f32 0.0, %v2684
        %v2686 = vpop.f32.mrf.mxu0
        %v2687 = vpop.f32.mrf.mxu0
        %v2688 = vadd.f32 0.0, %v2687
        %v2689 = vpop.f32.mrf.mxu0
        %2690 = vmatprep.mubr.bf16.mxu0 0
        %2691 = vmatmul.mubr.bf16.gmra.mxu0 %v2533
        %v2692 = vpop.f32.mrf.mxu0
        %v2693 = vadd.f32 0.0, %v2692
        %v2694 = vpop.f32.mrf.mxu0
        %v2695 = vpop.f32.mrf.mxu0
        %v2696 = vadd.f32 0.0, %v2695
        %v2697 = vpop.f32.mrf.mxu0
        %2698 = vdwg.mxu0
        %2731 = vrot.lane.b32.xlu0 %v2573, 32
        %v2732 = vpop.permute.xlu0 %2731
        %2733 = vrot.lane.b32.xlu0 %v2576, 32
        %v2734 = vpop.permute.xlu0 %2733
        %2735 = vrot.lane.b32.xlu0 %v2581, 32
        %v2736 = vpop.permute.xlu0 %2735
        %2737 = vrot.lane.b32.xlu0 %v2584, 32
        %v2738 = vpop.permute.xlu0 %2737
        %2739 = vrot.lane.b32.xlu0 %v2589, 32
        %v2740 = vpop.permute.xlu0 %2739
        %2741 = vrot.lane.b32.xlu0 %v2592, 32
        %v2742 = vpop.permute.xlu0 %2741
        %2743 = vrot.lane.b32.xlu0 %v2597, 32
        %v2744 = vpop.permute.xlu0 %2743
        %2745 = vrot.lane.b32.xlu0 %v2600, 32
        %v2746 = vpop.permute.xlu0 %2745
        %2747 = vrot.lane.b32.xlu0 %v2605, 32
        %v2748 = vpop.permute.xlu0 %2747
        %2749 = vrot.lane.b32.xlu0 %v2608, 32
        %v2750 = vpop.permute.xlu0 %2749
        %2751 = vrot.lane.b32.xlu0 %v2613, 32
        %v2752 = vpop.permute.xlu0 %2751
        %2753 = vrot.lane.b32.xlu0 %v2616, 32
        %v2754 = vpop.permute.xlu0 %2753
        %2755 = vrot.lane.b32.xlu0 %v2621, 32
        %v2756 = vpop.permute.xlu0 %2755
        %2757 = vrot.lane.b32.xlu0 %v2624, 32
        %v2758 = vpop.permute.xlu0 %2757
        %2759 = vrot.lane.b32.xlu0 %v2629, 32
        %v2760 = vpop.permute.xlu0 %2759
        %2761 = vrot.lane.b32.xlu0 %v2632, 32
        %v2762 = vpop.permute.xlu0 %2761
        %2763 = vrot.lane.b32.xlu0 %v2637, 32
        %v2764 = vpop.permute.xlu0 %2763
        %2765 = vrot.lane.b32.xlu0 %v2640, 32
        %v2766 = vpop.permute.xlu0 %2765
        %2767 = vrot.lane.b32.xlu0 %v2645, 32
        %v2768 = vpop.permute.xlu0 %2767
        %2769 = vrot.lane.b32.xlu0 %v2648, 32
        %v2770 = vpop.permute.xlu0 %2769
        %2771 = vrot.lane.b32.xlu0 %v2653, 32
        %v2772 = vpop.permute.xlu0 %2771
        %2773 = vrot.lane.b32.xlu0 %v2656, 32
        %v2774 = vpop.permute.xlu0 %2773
        %2775 = vrot.lane.b32.xlu0 %v2661, 32
        %v2776 = vpop.permute.xlu0 %2775
        %2777 = vrot.lane.b32.xlu0 %v2664, 32
        %v2778 = vpop.permute.xlu0 %2777
        %2779 = vrot.lane.b32.xlu0 %v2669, 32
        %v2780 = vpop.permute.xlu0 %2779
        %2781 = vrot.lane.b32.xlu0 %v2672, 32
        %v2782 = vpop.permute.xlu0 %2781
        %2783 = vrot.lane.b32.xlu0 %v2677, 32
        %v2784 = vpop.permute.xlu0 %2783
        %2785 = vrot.lane.b32.xlu0 %v2680, 32
        %v2786 = vpop.permute.xlu0 %2785
        %2787 = vrot.lane.b32.xlu0 %v2685, 32
        %v2788 = vpop.permute.xlu0 %2787
        %2789 = vrot.lane.b32.xlu0 %v2688, 32
        %v2790 = vpop.permute.xlu0 %2789
        %2791 = vrot.lane.b32.xlu0 %v2693, 32
        %v2792 = vpop.permute.xlu0 %2791
        %2793 = vrot.lane.b32.xlu0 %v2696, 32
        %v2794 = vpop.permute.xlu0 %2793
        %2827 = vst.msk [vmem:[%s157] sm:$0xff] %vm1975, %v2732
        %2828 = vst.msk [vmem:[%s157 + $0x8] sm:$0xff] %vm1975, %v2734
        %2829 = vst.msk [vmem:[%s157 + $0x10] sm:$0xff] %vm1975, %v2736
        %2830 = vst.msk [vmem:[%s157 + $0x18] sm:$0xff] %vm1975, %v2738
        %2831 = vst.msk [vmem:[%s157 + $0x20] sm:$0xff] %vm1975, %v2740
        %2832 = vst.msk [vmem:[%s157 + $0x28] sm:$0xff] %vm1975, %v2742
        %2833 = vst.msk [vmem:[%s157 + $0x30] sm:$0xff] %vm1975, %v2744
        %2834 = vst.msk [vmem:[%s157 + $0x38] sm:$0xff] %vm1975, %v2746
        %2835 = vst.msk [vmem:[%s157 + $0x40] sm:$0xff] %vm1975, %v2748
        %2836 = vst.msk [vmem:[%s157 + $0x48] sm:$0xff] %vm1975, %v2750
        %2837 = vst.msk [vmem:[%s157 + $0x50] sm:$0xff] %vm1975, %v2752
        %2838 = vst.msk [vmem:[%s157 + $0x58] sm:$0xff] %vm1975, %v2754
        %2839 = vst.msk [vmem:[%s157 + $0x60] sm:$0xff] %vm1975, %v2756
        %2840 = vst.msk [vmem:[%s157 + $0x68] sm:$0xff] %vm1975, %v2758
        %2841 = vst.msk [vmem:[%s157 + $0x70] sm:$0xff] %vm1975, %v2760
        %2842 = vst.msk [vmem:[%s157 + $0x78] sm:$0xff] %vm1975, %v2762
        %2843 = vst.msk [vmem:[%s157 + $0x80] sm:$0xff] %vm1975, %v2764
        %2844 = vst.msk [vmem:[%s157 + $0x88] sm:$0xff] %vm1975, %v2766
        %2845 = vst.msk [vmem:[%s157 + $0x90] sm:$0xff] %vm1975, %v2768
        %2846 = vst.msk [vmem:[%s157 + $0x98] sm:$0xff] %vm1975, %v2770
        %2847 = vst.msk [vmem:[%s157 + $0xa0] sm:$0xff] %vm1975, %v2772
        %2848 = vst.msk [vmem:[%s157 + $0xa8] sm:$0xff] %vm1975, %v2774
        %2849 = vst.msk [vmem:[%s157 + $0xb0] sm:$0xff] %vm1975, %v2776
        %2850 = vst.msk [vmem:[%s157 + $0xb8] sm:$0xff] %vm1975, %v2778
        %2851 = vst.msk [vmem:[%s157 + $0xc0] sm:$0xff] %vm1975, %v2780
        %2852 = vst.msk [vmem:[%s157 + $0xc8] sm:$0xff] %vm1975, %v2782
        %2853 = vst.msk [vmem:[%s157 + $0xd0] sm:$0xff] %vm1975, %v2784
        %2854 = vst.msk [vmem:[%s157 + $0xd8] sm:$0xff] %vm1975, %v2786
        %2855 = vst.msk [vmem:[%s157 + $0xe0] sm:$0xff] %vm1975, %v2788
        %2856 = vst.msk [vmem:[%s157 + $0xe8] sm:$0xff] %vm1975, %v2790
        %2857 = vst.msk [vmem:[%s157 + $0xf0] sm:$0xff] %vm1975, %v2792
        %2858 = vst.msk [vmem:[%s157 + $0xf8] sm:$0xff] %vm1975, %v2794
        %v2859 = vld [vmem:[%s152] sm:$0xff]
        %v2860 = vld [vmem:[%s152 + $0x10] sm:$0xff]
        %v2861 = vld [vmem:[%s152 + $0x20] sm:$0xff]
        %v2862 = vld [vmem:[%s152 + $0x30] sm:$0xff]
        %v2863 = vld [vmem:[%s152 + $0x40] sm:$0xff]
        %v2864 = vld [vmem:[%s152 + $0x50] sm:$0xff]
        %v2865 = vld [vmem:[%s152 + $0x60] sm:$0xff]
        %v2866 = vld [vmem:[%s152 + $0x70] sm:$0xff]
        %v2867 = vld [vmem:[%s152 + $0x80] sm:$0xff]
        %v2868 = vld [vmem:[%s152 + $0x90] sm:$0xff]
        %v2869 = vld [vmem:[%s152 + $0xa0] sm:$0xff]
        %v2870 = vld [vmem:[%s152 + $0xb0] sm:$0xff]
        %v2871 = vld [vmem:[%s152 + $0xc0] sm:$0xff]
        %v2872 = vld [vmem:[%s152 + $0xd0] sm:$0xff]
        %v2873 = vld [vmem:[%s152 + $0xe0] sm:$0xff]
        %v2874 = vld [vmem:[%s152 + $0xf0] sm:$0xff]
        %v2875 = vld [vmem:[%s152 + $0x100] sm:$0xff]
        %v2876 = vld [vmem:[%s152 + $0x110] sm:$0xff]
        %v2877 = vld [vmem:[%s152 + $0x120] sm:$0xff]
        %v2878 = vld [vmem:[%s152 + $0x130] sm:$0xff]
        %v2879 = vld [vmem:[%s152 + $0x140] sm:$0xff]
        %v2880 = vld [vmem:[%s152 + $0x150] sm:$0xff]
        %v2881 = vld [vmem:[%s152 + $0x160] sm:$0xff]
        %v2882 = vld [vmem:[%s152 + $0x170] sm:$0xff]
        %v2883 = vld [vmem:[%s152 + $0x180] sm:$0xff]
        %v2884 = vld [vmem:[%s152 + $0x190] sm:$0xff]
        %v2885 = vld [vmem:[%s152 + $0x1a0] sm:$0xff]
        %v2886 = vld [vmem:[%s152 + $0x1b0] sm:$0xff]
        %v2887 = vld [vmem:[%s152 + $0x1c0] sm:$0xff]
        %v2888 = vld [vmem:[%s152 + $0x1d0] sm:$0xff]
        %v2889 = vld [vmem:[%s152 + $0x1e0] sm:$0xff]
        %v2890 = vld [vmem:[%s152 + $0x1f0] sm:$0xff]
        %v2891 = vld [vmem:[%s152 + $0x8] sm:$0xff]
        %v2892 = vld [vmem:[%s152 + $0x18] sm:$0xff]
        %v2893 = vld [vmem:[%s152 + $0x28] sm:$0xff]
        %v2894 = vld [vmem:[%s152 + $0x38] sm:$0xff]
        %v2895 = vld [vmem:[%s152 + $0x48] sm:$0xff]
        %v2896 = vld [vmem:[%s152 + $0x58] sm:$0xff]
        %v2897 = vld [vmem:[%s152 + $0x68] sm:$0xff]
        %v2898 = vld [vmem:[%s152 + $0x78] sm:$0xff]
        %v2899 = vld [vmem:[%s152 + $0x88] sm:$0xff]
        %v2900 = vld [vmem:[%s152 + $0x98] sm:$0xff]
        %v2901 = vld [vmem:[%s152 + $0xa8] sm:$0xff]
        %v2902 = vld [vmem:[%s152 + $0xb8] sm:$0xff]
        %v2903 = vld [vmem:[%s152 + $0xc8] sm:$0xff]
        %v2904 = vld [vmem:[%s152 + $0xd8] sm:$0xff]
        %v2905 = vld [vmem:[%s152 + $0xe8] sm:$0xff]
        %v2906 = vld [vmem:[%s152 + $0xf8] sm:$0xff]
        %v2907 = vld [vmem:[%s152 + $0x108] sm:$0xff]
        %v2908 = vld [vmem:[%s152 + $0x118] sm:$0xff]
        %v2909 = vld [vmem:[%s152 + $0x128] sm:$0xff]
        %v2910 = vld [vmem:[%s152 + $0x138] sm:$0xff]
        %v2911 = vld [vmem:[%s152 + $0x148] sm:$0xff]
        %v2912 = vld [vmem:[%s152 + $0x158] sm:$0xff]
        %v2913 = vld [vmem:[%s152 + $0x168] sm:$0xff]
        %v2914 = vld [vmem:[%s152 + $0x178] sm:$0xff]
        %v2915 = vld [vmem:[%s152 + $0x188] sm:$0xff]
        %v2916 = vld [vmem:[%s152 + $0x198] sm:$0xff]
        %v2917 = vld [vmem:[%s152 + $0x1a8] sm:$0xff]
        %v2918 = vld [vmem:[%s152 + $0x1b8] sm:$0xff]
        %v2919 = vld [vmem:[%s152 + $0x1c8] sm:$0xff]
        %v2920 = vld [vmem:[%s152 + $0x1d8] sm:$0xff]
        %v2921 = vld [vmem:[%s152 + $0x1e8] sm:$0xff]
        %v2922 = vld [vmem:[%s152 + $0x1f8] sm:$0xff]
        %v2923 = vmul.f32 %v2859, %v2859
        %v2924 = vmul.f32 %v2860, %v2860
        %v2925 = vmul.f32 %v2861, %v2861
        %v2926 = vmul.f32 %v2862, %v2862
        %v2927 = vmul.f32 %v2863, %v2863
        %v2928 = vmul.f32 %v2864, %v2864
        %v2929 = vmul.f32 %v2865, %v2865
        %v2930 = vmul.f32 %v2866, %v2866
        %v2931 = vmul.f32 %v2867, %v2867
        %v2932 = vmul.f32 %v2868, %v2868
        %v2933 = vmul.f32 %v2869, %v2869
        %v2934 = vmul.f32 %v2870, %v2870
        %v2935 = vmul.f32 %v2871, %v2871
        %v2936 = vmul.f32 %v2872, %v2872
        %v2937 = vmul.f32 %v2873, %v2873
        %v2938 = vmul.f32 %v2874, %v2874
        %v2939 = vmul.f32 %v2875, %v2875
        %v2940 = vmul.f32 %v2876, %v2876
        %v2941 = vmul.f32 %v2877, %v2877
        %v2942 = vmul.f32 %v2878, %v2878
        %v2943 = vmul.f32 %v2879, %v2879
        %v2944 = vmul.f32 %v2880, %v2880
        %v2945 = vmul.f32 %v2881, %v2881
        %v2946 = vmul.f32 %v2882, %v2882
        %v2947 = vmul.f32 %v2883, %v2883
        %v2948 = vmul.f32 %v2884, %v2884
        %v2949 = vmul.f32 %v2885, %v2885
        %v2950 = vmul.f32 %v2886, %v2886
        %v2951 = vmul.f32 %v2887, %v2887
        %v2952 = vmul.f32 %v2888, %v2888
        %v2953 = vmul.f32 %v2889, %v2889
        %v2954 = vmul.f32 %v2890, %v2890
        %vm2955 = vcmask 523648
        %v2956 = vsel %vm2955, %v2923, 0.0
        %v2957 = vsel %vm2955, %v2924, 0.0
        %v2958 = vadd.f32 %v2956, %v2957
        %v2959 = vsel %vm2955, %v2925, 0.0
        %v2960 = vadd.f32 %v2958, %v2959
        %v2961 = vsel %vm2955, %v2926, 0.0
        %v2962 = vadd.f32 %v2960, %v2961
        %v2963 = vsel %vm2955, %v2927, 0.0
        %v2964 = vadd.f32 %v2962, %v2963
        %v2965 = vsel %vm2955, %v2928, 0.0
        %v2966 = vadd.f32 %v2964, %v2965
        %v2967 = vsel %vm2955, %v2929, 0.0
        %v2968 = vadd.f32 %v2966, %v2967
        %v2969 = vsel %vm2955, %v2930, 0.0
        %v2970 = vadd.f32 %v2968, %v2969
        %v2971 = vsel %vm2955, %v2931, 0.0
        %v2972 = vadd.f32 %v2970, %v2971
        %v2973 = vsel %vm2955, %v2932, 0.0
        %v2974 = vadd.f32 %v2972, %v2973
        %v2975 = vsel %vm2955, %v2933, 0.0
        %v2976 = vadd.f32 %v2974, %v2975
        %v2977 = vsel %vm2955, %v2934, 0.0
        %v2978 = vadd.f32 %v2976, %v2977
        %v2979 = vsel %vm2955, %v2935, 0.0
        %v2980 = vadd.f32 %v2978, %v2979
        %v2981 = vsel %vm2955, %v2936, 0.0
        %v2982 = vadd.f32 %v2980, %v2981
        %v2983 = vsel %vm2955, %v2937, 0.0
        %v2984 = vadd.f32 %v2982, %v2983
        %v2985 = vsel %vm2955, %v2938, 0.0
        %v2986 = vadd.f32 %v2984, %v2985
        %v2987 = vsel %vm2955, %v2939, 0.0
        %v2988 = vadd.f32 %v2986, %v2987
        %v2989 = vsel %vm2955, %v2940, 0.0
        %v2990 = vadd.f32 %v2988, %v2989
        %v2991 = vsel %vm2955, %v2941, 0.0
        %v2992 = vadd.f32 %v2990, %v2991
        %v2993 = vsel %vm2955, %v2942, 0.0
        %v2994 = vadd.f32 %v2992, %v2993
        %v2995 = vsel %vm2955, %v2943, 0.0
        %v2996 = vadd.f32 %v2994, %v2995
        %v2997 = vsel %vm2955, %v2944, 0.0
        %v2998 = vadd.f32 %v2996, %v2997
        %v2999 = vsel %vm2955, %v2945, 0.0
        %v3000 = vadd.f32 %v2998, %v2999
        %v3001 = vsel %vm2955, %v2946, 0.0
        %v3002 = vadd.f32 %v3000, %v3001
        %v3003 = vsel %vm2955, %v2947, 0.0
        %v3004 = vadd.f32 %v3002, %v3003
        %v3005 = vsel %vm2955, %v2948, 0.0
        %v3006 = vadd.f32 %v3004, %v3005
        %v3007 = vsel %vm2955, %v2949, 0.0
        %v3008 = vadd.f32 %v3006, %v3007
        %v3009 = vsel %vm2955, %v2950, 0.0
        %v3010 = vadd.f32 %v3008, %v3009
        %v3011 = vsel %vm2955, %v2951, 0.0
        %v3012 = vadd.f32 %v3010, %v3011
        %v3013 = vsel %vm2955, %v2952, 0.0
        %v3014 = vadd.f32 %v3012, %v3013
        %v3015 = vsel %vm2955, %v2953, 0.0
        %v3016 = vadd.f32 %v3014, %v3015
        %v3017 = vsel %vm2955, %v2954, 0.0
        %v3018 = vadd.f32 %v3016, %v3017
        %v3019 = vrot.slane %v3018, 4
        %v3020 = vadd.f32 %v3018, %v3019
        %v3021 = vrot.slane %v3020, 2
        %v3022 = vadd.f32 %v3020, %v3021
        %v3023 = vrot.slane %v3022, 1
        %v3024 = vadd.f32 %v3022, %v3023
        %v3025 = vmax.f32 %v3024, 1e-24
        %v3026 = vrsqrt.pop %v3025
        %v3027 = vmul.f32 %v2859, %v3026
        %v3028 = vmul.f32 %v2860, %v3026
        %v3029 = vmul.f32 %v2861, %v3026
        %v3030 = vmul.f32 %v2862, %v3026
        %v3031 = vmul.f32 %v2863, %v3026
        %v3032 = vmul.f32 %v2864, %v3026
        %v3033 = vmul.f32 %v2865, %v3026
        %v3034 = vmul.f32 %v2866, %v3026
        %v3035 = vmul.f32 %v2867, %v3026
        %v3036 = vmul.f32 %v2868, %v3026
        %v3037 = vmul.f32 %v2869, %v3026
        %v3038 = vmul.f32 %v2870, %v3026
        %v3039 = vmul.f32 %v2871, %v3026
        %v3040 = vmul.f32 %v2872, %v3026
        %v3041 = vmul.f32 %v2873, %v3026
        %v3042 = vmul.f32 %v2874, %v3026
        %v3043 = vmul.f32 %v2875, %v3026
        %v3044 = vmul.f32 %v2876, %v3026
        %v3045 = vmul.f32 %v2877, %v3026
        %v3046 = vmul.f32 %v2878, %v3026
        %v3047 = vmul.f32 %v2879, %v3026
        %v3048 = vmul.f32 %v2880, %v3026
        %v3049 = vmul.f32 %v2881, %v3026
        %v3050 = vmul.f32 %v2882, %v3026
        %v3051 = vmul.f32 %v2883, %v3026
        %v3052 = vmul.f32 %v2884, %v3026
        %v3053 = vmul.f32 %v2885, %v3026
        %v3054 = vmul.f32 %v2886, %v3026
        %v3055 = vmul.f32 %v2887, %v3026
        %v3056 = vmul.f32 %v2888, %v3026
        %v3057 = vmul.f32 %v2889, %v3026
        %v3058 = vmul.f32 %v2890, %v3026
        %vm3059 = vcmask 1048448
        %v3060 = vsel %vm3059, %v2923, 0.0
        %v3061 = vsel %vm3059, %v2924, 0.0
        %v3062 = vadd.f32 %v3060, %v3061
        %v3063 = vsel %vm3059, %v2925, 0.0
        %v3064 = vadd.f32 %v3062, %v3063
        %v3065 = vsel %vm3059, %v2926, 0.0
        %v3066 = vadd.f32 %v3064, %v3065
        %v3067 = vsel %vm3059, %v2927, 0.0
        %v3068 = vadd.f32 %v3066, %v3067
        %v3069 = vsel %vm3059, %v2928, 0.0
        %v3070 = vadd.f32 %v3068, %v3069
        %v3071 = vsel %vm3059, %v2929, 0.0
        %v3072 = vadd.f32 %v3070, %v3071
        %v3073 = vsel %vm3059, %v2930, 0.0
        %v3074 = vadd.f32 %v3072, %v3073
        %v3075 = vsel %vm3059, %v2931, 0.0
        %v3076 = vadd.f32 %v3074, %v3075
        %v3077 = vsel %vm3059, %v2932, 0.0
        %v3078 = vadd.f32 %v3076, %v3077
        %v3079 = vsel %vm3059, %v2933, 0.0
        %v3080 = vadd.f32 %v3078, %v3079
        %v3081 = vsel %vm3059, %v2934, 0.0
        %v3082 = vadd.f32 %v3080, %v3081
        %v3083 = vsel %vm3059, %v2935, 0.0
        %v3084 = vadd.f32 %v3082, %v3083
        %v3085 = vsel %vm3059, %v2936, 0.0
        %v3086 = vadd.f32 %v3084, %v3085
        %v3087 = vsel %vm3059, %v2937, 0.0
        %v3088 = vadd.f32 %v3086, %v3087
        %v3089 = vsel %vm3059, %v2938, 0.0
        %v3090 = vadd.f32 %v3088, %v3089
        %v3091 = vsel %vm3059, %v2939, 0.0
        %v3092 = vadd.f32 %v3090, %v3091
        %v3093 = vsel %vm3059, %v2940, 0.0
        %v3094 = vadd.f32 %v3092, %v3093
        %v3095 = vsel %vm3059, %v2941, 0.0
        %v3096 = vadd.f32 %v3094, %v3095
        %v3097 = vsel %vm3059, %v2942, 0.0
        %v3098 = vadd.f32 %v3096, %v3097
        %v3099 = vsel %vm3059, %v2943, 0.0
        %v3100 = vadd.f32 %v3098, %v3099
        %v3101 = vsel %vm3059, %v2944, 0.0
        %v3102 = vadd.f32 %v3100, %v3101
        %v3103 = vsel %vm3059, %v2945, 0.0
        %v3104 = vadd.f32 %v3102, %v3103
        %v3105 = vsel %vm3059, %v2946, 0.0
        %v3106 = vadd.f32 %v3104, %v3105
        %v3107 = vsel %vm3059, %v2947, 0.0
        %v3108 = vadd.f32 %v3106, %v3107
        %v3109 = vsel %vm3059, %v2948, 0.0
        %v3110 = vadd.f32 %v3108, %v3109
        %v3111 = vsel %vm3059, %v2949, 0.0
        %v3112 = vadd.f32 %v3110, %v3111
        %v3113 = vsel %vm3059, %v2950, 0.0
        %v3114 = vadd.f32 %v3112, %v3113
        %v3115 = vsel %vm3059, %v2951, 0.0
        %v3116 = vadd.f32 %v3114, %v3115
        %v3117 = vsel %vm3059, %v2952, 0.0
        %v3118 = vadd.f32 %v3116, %v3117
        %v3119 = vsel %vm3059, %v2953, 0.0
        %v3120 = vadd.f32 %v3118, %v3119
        %v3121 = vsel %vm3059, %v2954, 0.0
        %v3122 = vadd.f32 %v3120, %v3121
        %v3123 = vrot.slane %v3122, 4
        %v3124 = vadd.f32 %v3122, %v3123
        %v3125 = vrot.slane %v3124, 2
        %v3126 = vadd.f32 %v3124, %v3125
        %v3127 = vrot.slane %v3126, 1
        %v3128 = vadd.f32 %v3126, %v3127
        %v3129 = vmax.f32 %v3128, 1e-24
        %v3130 = vrsqrt.pop %v3129
        %v3131 = vmul.f32 %v2859, %v3130
        %v3132 = vmul.f32 %v2860, %v3130
        %v3133 = vmul.f32 %v2861, %v3130
        %v3134 = vmul.f32 %v2862, %v3130
        %v3135 = vmul.f32 %v2863, %v3130
        %v3136 = vmul.f32 %v2864, %v3130
        %v3137 = vmul.f32 %v2865, %v3130
        %v3138 = vmul.f32 %v2866, %v3130
        %v3139 = vmul.f32 %v2867, %v3130
        %v3140 = vmul.f32 %v2868, %v3130
        %v3141 = vmul.f32 %v2869, %v3130
        %v3142 = vmul.f32 %v2870, %v3130
        %v3143 = vmul.f32 %v2871, %v3130
        %v3144 = vmul.f32 %v2872, %v3130
        %v3145 = vmul.f32 %v2873, %v3130
        %v3146 = vmul.f32 %v2874, %v3130
        %v3147 = vmul.f32 %v2875, %v3130
        %v3148 = vmul.f32 %v2876, %v3130
        %v3149 = vmul.f32 %v2877, %v3130
        %v3150 = vmul.f32 %v2878, %v3130
        %v3151 = vmul.f32 %v2879, %v3130
        %v3152 = vmul.f32 %v2880, %v3130
        %v3153 = vmul.f32 %v2881, %v3130
        %v3154 = vmul.f32 %v2882, %v3130
        %v3155 = vmul.f32 %v2883, %v3130
        %v3156 = vmul.f32 %v2884, %v3130
        %v3157 = vmul.f32 %v2885, %v3130
        %v3158 = vmul.f32 %v2886, %v3130
        %v3159 = vmul.f32 %v2887, %v3130
        %v3160 = vmul.f32 %v2888, %v3130
        %v3161 = vmul.f32 %v2889, %v3130
        %v3162 = vmul.f32 %v2890, %v3130
        %v3163 = vpack.c.bf16 %v3028, %v3027
        %v3164 = vpack.c.bf16 %v3030, %v3029
        %v3165 = vpack.c.bf16 %v3032, %v3031
        %v3166 = vpack.c.bf16 %v3034, %v3033
        %v3167 = vpack.c.bf16 %v3036, %v3035
        %v3168 = vpack.c.bf16 %v3038, %v3037
        %v3169 = vpack.c.bf16 %v3040, %v3039
        %v3170 = vpack.c.bf16 %v3042, %v3041
        %v3171 = vpack.c.bf16 %v3044, %v3043
        %v3172 = vpack.c.bf16 %v3046, %v3045
        %v3173 = vpack.c.bf16 %v3048, %v3047
        %v3174 = vpack.c.bf16 %v3050, %v3049
        %v3175 = vpack.c.bf16 %v3052, %v3051
        %v3176 = vpack.c.bf16 %v3054, %v3053
        %v3177 = vpack.c.bf16 %v3056, %v3055
        %v3178 = vpack.c.bf16 %v3058, %v3057
        %v3179 = vpack.c.bf16 %v3132, %v3131
        %v3180 = vpack.c.bf16 %v3134, %v3133
        %v3181 = vpack.c.bf16 %v3136, %v3135
        %v3182 = vpack.c.bf16 %v3138, %v3137
        %v3183 = vpack.c.bf16 %v3140, %v3139
        %v3184 = vpack.c.bf16 %v3142, %v3141
        %v3185 = vpack.c.bf16 %v3144, %v3143
        %v3186 = vpack.c.bf16 %v3146, %v3145
        %v3187 = vpack.c.bf16 %v3148, %v3147
        %v3188 = vpack.c.bf16 %v3150, %v3149
        %v3189 = vpack.c.bf16 %v3152, %v3151
        %v3190 = vpack.c.bf16 %v3154, %v3153
        %v3191 = vpack.c.bf16 %v3156, %v3155
        %v3192 = vpack.c.bf16 %v3158, %v3157
        %v3193 = vpack.c.bf16 %v3160, %v3159
        %v3194 = vpack.c.bf16 %v3162, %v3161
        %3211 = vrot.lane.b32.xlu0 %v3163, 80
        %v3212 = vpop.permute.xlu0 %3211
        %3213 = vrot.lane.b32.xlu0 %v3164, 80
        %v3214 = vpop.permute.xlu0 %3213
        %3215 = vrot.lane.b32.xlu0 %v3165, 80
        %v3216 = vpop.permute.xlu0 %3215
        %3217 = vrot.lane.b32.xlu0 %v3166, 80
        %v3218 = vpop.permute.xlu0 %3217
        %3219 = vrot.lane.b32.xlu0 %v3167, 80
        %v3220 = vpop.permute.xlu0 %3219
        %3221 = vrot.lane.b32.xlu0 %v3168, 80
        %v3222 = vpop.permute.xlu0 %3221
        %3223 = vrot.lane.b32.xlu0 %v3169, 80
        %v3224 = vpop.permute.xlu0 %3223
        %3225 = vrot.lane.b32.xlu0 %v3170, 80
        %v3226 = vpop.permute.xlu0 %3225
        %3227 = vrot.lane.b32.xlu0 %v3171, 80
        %v3228 = vpop.permute.xlu0 %3227
        %3229 = vrot.lane.b32.xlu0 %v3172, 80
        %v3230 = vpop.permute.xlu0 %3229
        %3231 = vrot.lane.b32.xlu0 %v3173, 80
        %v3232 = vpop.permute.xlu0 %3231
        %3233 = vrot.lane.b32.xlu0 %v3174, 80
        %v3234 = vpop.permute.xlu0 %3233
        %3235 = vrot.lane.b32.xlu0 %v3175, 80
        %v3236 = vpop.permute.xlu0 %3235
        %3237 = vrot.lane.b32.xlu0 %v3176, 80
        %v3238 = vpop.permute.xlu0 %3237
        %3239 = vrot.lane.b32.xlu0 %v3177, 80
        %v3240 = vpop.permute.xlu0 %3239
        %3241 = vrot.lane.b32.xlu0 %v3178, 80
        %v3242 = vpop.permute.xlu0 %3241
        %3259 = vxpose.xlu0.c.b16.start [1/8] %v3212, 128
        %3260 = vxpose.xlu0.c.b16.cont [2/8] %v3214, 128
        %3261 = vxpose.xlu0.c.b16.cont [3/8] %v3216, 128
        %3262 = vxpose.xlu0.c.b16.cont [4/8] %v3218, 128
        %3263 = vxpose.xlu0.c.b16.cont [5/8] %v3220, 128
        %3264 = vxpose.xlu0.c.b16.cont [6/8] %v3222, 128
        %3265 = vxpose.xlu0.c.b16.cont [7/8] %v3224, 128
        %3266 = vxpose.xlu0.c.b16.end [8/8] %v3226, 128
        %v3267 = vpop.trf.xlu0
        %v3268 = vpop.trf.xlu0
        %v3269 = vpop.trf.xlu0
        %v3270 = vpop.trf.xlu0
        %v3271 = vpop.trf.xlu0
        %v3272 = vpop.trf.xlu0
        %v3273 = vpop.trf.xlu0
        %v3274 = vpop.trf.xlu0
        %3275 = vxpose.xlu0.c.b16.start [1/8] %v3228, 128
        %3276 = vxpose.xlu0.c.b16.cont [2/8] %v3230, 128
        %3277 = vxpose.xlu0.c.b16.cont [3/8] %v3232, 128
        %3278 = vxpose.xlu0.c.b16.cont [4/8] %v3234, 128
        %3279 = vxpose.xlu0.c.b16.cont [5/8] %v3236, 128
        %3280 = vxpose.xlu0.c.b16.cont [6/8] %v3238, 128
        %3281 = vxpose.xlu0.c.b16.cont [7/8] %v3240, 128
        %3282 = vxpose.xlu0.c.b16.end [8/8] %v3242, 128
        %v3283 = vpop.trf.xlu0
        %v3284 = vpop.trf.xlu0
        %v3285 = vpop.trf.xlu0
        %v3286 = vpop.trf.xlu0
        %v3287 = vpop.trf.xlu0
        %v3288 = vpop.trf.xlu0
        %v3289 = vpop.trf.xlu0
        %v3290 = vpop.trf.xlu0
        %3307 = vrot.lane.b32.xlu0 %v3179, 16
        %v3308 = vpop.permute.xlu0 %3307
        %3309 = vrot.lane.b32.xlu0 %v3180, 16
        %v3310 = vpop.permute.xlu0 %3309
        %3311 = vrot.lane.b32.xlu0 %v3181, 16
        %v3312 = vpop.permute.xlu0 %3311
        %3313 = vrot.lane.b32.xlu0 %v3182, 16
        %v3314 = vpop.permute.xlu0 %3313
        %3315 = vrot.lane.b32.xlu0 %v3183, 16
        %v3316 = vpop.permute.xlu0 %3315
        %3317 = vrot.lane.b32.xlu0 %v3184, 16
        %v3318 = vpop.permute.xlu0 %3317
        %3319 = vrot.lane.b32.xlu0 %v3185, 16
        %v3320 = vpop.permute.xlu0 %3319
        %3321 = vrot.lane.b32.xlu0 %v3186, 16
        %v3322 = vpop.permute.xlu0 %3321
        %3323 = vrot.lane.b32.xlu0 %v3187, 16
        %v3324 = vpop.permute.xlu0 %3323
        %3325 = vrot.lane.b32.xlu0 %v3188, 16
        %v3326 = vpop.permute.xlu0 %3325
        %3327 = vrot.lane.b32.xlu0 %v3189, 16
        %v3328 = vpop.permute.xlu0 %3327
        %3329 = vrot.lane.b32.xlu0 %v3190, 16
        %v3330 = vpop.permute.xlu0 %3329
        %3331 = vrot.lane.b32.xlu0 %v3191, 16
        %v3332 = vpop.permute.xlu0 %3331
        %3333 = vrot.lane.b32.xlu0 %v3192, 16
        %v3334 = vpop.permute.xlu0 %3333
        %3335 = vrot.lane.b32.xlu0 %v3193, 16
        %v3336 = vpop.permute.xlu0 %3335
        %3337 = vrot.lane.b32.xlu0 %v3194, 16
        %v3338 = vpop.permute.xlu0 %3337
        %3355 = vmatprep.subr.bf16.mxu0 0
        %3356 = vmatpush1.bf16.msra.mxu0 %v3322
        %3357 = vmatprep.subr.bf16.mxu0 0
        %3358 = vmatpush1.bf16.msra.mxu0 %v3320
        %3359 = vmatprep.subr.bf16.mxu0 0
        %3360 = vmatpush1.bf16.msra.mxu0 %v3318
        %3361 = vmatprep.subr.bf16.mxu0 0
        %3362 = vmatpush1.bf16.msra.mxu0 %v3316
        %3363 = vmatprep.subr.bf16.mxu0 0
        %3364 = vmatpush1.bf16.msra.mxu0 %v3314
        %3365 = vmatprep.subr.bf16.mxu0 0
        %3366 = vmatpush1.bf16.msra.mxu0 %v3312
        %3367 = vmatprep.subr.bf16.mxu0 0
        %3368 = vmatpush1.bf16.msra.mxu0 %v3310
        %3369 = vmatprep.subr.bf16.mxu0 0
        %3370 = vmatpush1.bf16.msra.mxu0 %v3308
        %3371 = vmatprep.subr.bf16.mxu0 0
        %3372 = vmatpush2.bf16.msra.mxu0 %v3338
        %3373 = vmatprep.subr.bf16.mxu0 0
        %3374 = vmatpush2.bf16.msra.mxu0 %v3336
        %3375 = vmatprep.subr.bf16.mxu0 0
        %3376 = vmatpush2.bf16.msra.mxu0 %v3334
        %3377 = vmatprep.subr.bf16.mxu0 0
        %3378 = vmatpush2.bf16.msra.mxu0 %v3332
        %3379 = vmatprep.subr.bf16.mxu0 0
        %3380 = vmatpush2.bf16.msra.mxu0 %v3330
        %3381 = vmatprep.subr.bf16.mxu0 0
        %3382 = vmatpush2.bf16.msra.mxu0 %v3328
        %3383 = vmatprep.subr.bf16.mxu0 0
        %3384 = vmatpush2.bf16.msra.mxu0 %v3326
        %3385 = vmatprep.subr.bf16.mxu0 0
        %3386 = vmatpush2.bf16.msra.mxu0 %v3324
        %3387 = vmatprep.mubr.bf16.mxu0 %v3283
        %3388 = vmatmul.mubr.bf16.gmra.mxu0 %v3267
        %v3389 = vpop.f32.mrf.mxu0
        %v3390 = vadd.f32 0.0, %v3389
        %v3391 = vpop.f32.mrf.mxu0
        %v3392 = vpop.f32.mrf.mxu0
        %v3393 = vadd.f32 0.0, %v3392
        %v3394 = vpop.f32.mrf.mxu0
        %3395 = vdwg.mxu0
        %s3396 = sld [smem:[#allocation2 + $0x3]]
        %v3397 = vstv %s3396
        %v3398 = vmul.f32 %v3390, %v3397
        %v3399 = vmul.f32 %v3393, %v3397
        %v3400 = vmax.f32 %v3398, 0.0
        %v3401 = vmax.f32 %v3399, 0.0
        %v3402 = vpack.c.bf16 %v2892, %v2891
        %v3403 = vpack.c.bf16 %v2894, %v2893
        %v3404 = vpack.c.bf16 %v2896, %v2895
        %v3405 = vpack.c.bf16 %v2898, %v2897
        %v3406 = vpack.c.bf16 %v2900, %v2899
        %v3407 = vpack.c.bf16 %v2902, %v2901
        %v3408 = vpack.c.bf16 %v2904, %v2903
        %v3409 = vpack.c.bf16 %v2906, %v2905
        %v3410 = vpack.c.bf16 %v2908, %v2907
        %v3411 = vpack.c.bf16 %v2910, %v2909
        %v3412 = vpack.c.bf16 %v2912, %v2911
        %v3413 = vpack.c.bf16 %v2914, %v2913
        %v3414 = vpack.c.bf16 %v2916, %v2915
        %v3415 = vpack.c.bf16 %v2918, %v2917
        %v3416 = vpack.c.bf16 %v2920, %v2919
        %v3417 = vpack.c.bf16 %v2922, %v2921
        %v3418 = vpack.c.bf16 %v3401, %v3400
        %3435 = vrot.lane.b32.xlu0 %v3402, 80
        %v3436 = vpop.permute.xlu0 %3435
        %3437 = vrot.lane.b32.xlu0 %v3403, 80
        %v3438 = vpop.permute.xlu0 %3437
        %3439 = vrot.lane.b32.xlu0 %v3404, 80
        %v3440 = vpop.permute.xlu0 %3439
        %3441 = vrot.lane.b32.xlu0 %v3405, 80
        %v3442 = vpop.permute.xlu0 %3441
        %3443 = vrot.lane.b32.xlu0 %v3406, 80
        %v3444 = vpop.permute.xlu0 %3443
        %3445 = vrot.lane.b32.xlu0 %v3407, 80
        %v3446 = vpop.permute.xlu0 %3445
        %3447 = vrot.lane.b32.xlu0 %v3408, 80
        %v3448 = vpop.permute.xlu0 %3447
        %3449 = vrot.lane.b32.xlu0 %v3409, 80
        %v3450 = vpop.permute.xlu0 %3449
        %3451 = vrot.lane.b32.xlu0 %v3410, 80
        %v3452 = vpop.permute.xlu0 %3451
        %3453 = vrot.lane.b32.xlu0 %v3411, 80
        %v3454 = vpop.permute.xlu0 %3453
        %3455 = vrot.lane.b32.xlu0 %v3412, 80
        %v3456 = vpop.permute.xlu0 %3455
        %3457 = vrot.lane.b32.xlu0 %v3413, 80
        %v3458 = vpop.permute.xlu0 %3457
        %3459 = vrot.lane.b32.xlu0 %v3414, 80
        %v3460 = vpop.permute.xlu0 %3459
        %3461 = vrot.lane.b32.xlu0 %v3415, 80
        %v3462 = vpop.permute.xlu0 %3461
        %3463 = vrot.lane.b32.xlu0 %v3416, 80
        %v3464 = vpop.permute.xlu0 %3463
        %3465 = vrot.lane.b32.xlu0 %v3417, 80
        %v3466 = vpop.permute.xlu0 %3465
        %v3468 = vsel %vm255, %v3436, 0
        %v3471 = vsel %vm255, %v3438, 0
        %v3474 = vsel %vm255, %v3440, 0
        %v3477 = vsel %vm255, %v3442, 0
        %v3480 = vsel %vm255, %v3444, 0
        %v3483 = vsel %vm255, %v3446, 0
        %v3486 = vsel %vm255, %v3448, 0
        %v3489 = vsel %vm255, %v3450, 0
        %v3492 = vsel %vm255, %v3452, 0
        %v3495 = vsel %vm255, %v3454, 0
        %v3498 = vsel %vm255, %v3456, 0
        %v3501 = vsel %vm255, %v3458, 0
        %v3504 = vsel %vm255, %v3460, 0
        %v3507 = vsel %vm255, %v3462, 0
        %v3510 = vsel %vm255, %v3464, 0
        %v3513 = vsel %vm255, %v3466, 0
        %v3516 = vsel %vm255, %v3418, 0
        %3518 = vmatprep.subr.bf16.mxu0 0
        %3519 = vmatpush1.bf16.xpose.msra.mxu0 0
        %3520 = vmatprep.subr.bf16.mxu0 0
        %3521 = vmatpush1.bf16.xpose.msra.mxu0 0
        %3522 = vmatprep.subr.bf16.mxu0 0
        %3523 = vmatpush1.bf16.xpose.msra.mxu0 0
        %3524 = vmatprep.subr.bf16.mxu0 0
        %3525 = vmatpush1.bf16.xpose.msra.mxu0 0
        %3526 = vmatprep.subr.bf16.mxu0 0
        %3527 = vmatpush1.bf16.xpose.msra.mxu0 0
        %3528 = vmatprep.subr.bf16.mxu0 0
        %3529 = vmatpush1.bf16.xpose.msra.mxu0 0
        %3530 = vmatprep.subr.bf16.mxu0 0
        %3531 = vmatpush1.bf16.xpose.msra.mxu0 0
        %3532 = vmatprep.subr.bf16.mxu0 0
        %3533 = vmatpush1.bf16.xpose.msra.mxu0 %v3516
        %3534 = vmatprep.subr.bf16.mxu0 0
        %3535 = vmatpush2.bf16.xpose.msra.mxu0 0
        %3536 = vmatprep.subr.bf16.mxu0 0
        %3537 = vmatpush2.bf16.xpose.msra.mxu0 0
        %3538 = vmatprep.subr.bf16.mxu0 0
        %3539 = vmatpush2.bf16.xpose.msra.mxu0 0
        %3540 = vmatprep.subr.bf16.mxu0 0
        %3541 = vmatpush2.bf16.xpose.msra.mxu0 0
        %3542 = vmatprep.subr.bf16.mxu0 0
        %3543 = vmatpush2.bf16.xpose.msra.mxu0 0
        %3544 = vmatprep.subr.bf16.mxu0 0
        %3545 = vmatpush2.bf16.xpose.msra.mxu0 0
        %3546 = vmatprep.subr.bf16.mxu0 0
        %3547 = vmatpush2.bf16.xpose.msra.mxu0 0
        %3548 = vmatprep.subr.bf16.mxu0 0
        %3549 = vmatpush2.bf16.xpose.msra.mxu0 0
        %3550 = vmatprep.mubr.bf16.mxu0 0
        %3551 = vmatmul.mubr.bf16.gmra.mxu0 %v3468
        %v3552 = vpop.f32.mrf.mxu0
        %v3553 = vadd.f32 0.0, %v3552
        %v3554 = vpop.f32.mrf.mxu0
        %v3555 = vpop.f32.mrf.mxu0
        %v3556 = vadd.f32 0.0, %v3555
        %v3557 = vpop.f32.mrf.mxu0
        %3558 = vmatprep.mubr.bf16.mxu0 0
        %3559 = vmatmul.mubr.bf16.gmra.mxu0 %v3471
        %v3560 = vpop.f32.mrf.mxu0
        %v3561 = vadd.f32 0.0, %v3560
        %v3562 = vpop.f32.mrf.mxu0
        %v3563 = vpop.f32.mrf.mxu0
        %v3564 = vadd.f32 0.0, %v3563
        %v3565 = vpop.f32.mrf.mxu0
        %3566 = vmatprep.mubr.bf16.mxu0 0
        %3567 = vmatmul.mubr.bf16.gmra.mxu0 %v3474
        %v3568 = vpop.f32.mrf.mxu0
        %v3569 = vadd.f32 0.0, %v3568
        %v3570 = vpop.f32.mrf.mxu0
        %v3571 = vpop.f32.mrf.mxu0
        %v3572 = vadd.f32 0.0, %v3571
        %v3573 = vpop.f32.mrf.mxu0
        %3574 = vmatprep.mubr.bf16.mxu0 0
        %3575 = vmatmul.mubr.bf16.gmra.mxu0 %v3477
        %v3576 = vpop.f32.mrf.mxu0
        %v3577 = vadd.f32 0.0, %v3576
        %v3578 = vpop.f32.mrf.mxu0
        %v3579 = vpop.f32.mrf.mxu0
        %v3580 = vadd.f32 0.0, %v3579
        %v3581 = vpop.f32.mrf.mxu0
        %3582 = vmatprep.mubr.bf16.mxu0 0
        %3583 = vmatmul.mubr.bf16.gmra.mxu0 %v3480
        %v3584 = vpop.f32.mrf.mxu0
        %v3585 = vadd.f32 0.0, %v3584
        %v3586 = vpop.f32.mrf.mxu0
        %v3587 = vpop.f32.mrf.mxu0
        %v3588 = vadd.f32 0.0, %v3587
        %v3589 = vpop.f32.mrf.mxu0
        %3590 = vmatprep.mubr.bf16.mxu0 0
        %3591 = vmatmul.mubr.bf16.gmra.mxu0 %v3483
        %v3592 = vpop.f32.mrf.mxu0
        %v3593 = vadd.f32 0.0, %v3592
        %v3594 = vpop.f32.mrf.mxu0
        %v3595 = vpop.f32.mrf.mxu0
        %v3596 = vadd.f32 0.0, %v3595
        %v3597 = vpop.f32.mrf.mxu0
        %3598 = vmatprep.mubr.bf16.mxu0 0
        %3599 = vmatmul.mubr.bf16.gmra.mxu0 %v3486
        %v3600 = vpop.f32.mrf.mxu0
        %v3601 = vadd.f32 0.0, %v3600
        %v3602 = vpop.f32.mrf.mxu0
        %v3603 = vpop.f32.mrf.mxu0
        %v3604 = vadd.f32 0.0, %v3603
        %v3605 = vpop.f32.mrf.mxu0
        %3606 = vmatprep.mubr.bf16.mxu0 0
        %3607 = vmatmul.mubr.bf16.gmra.mxu0 %v3489
        %v3608 = vpop.f32.mrf.mxu0
        %v3609 = vadd.f32 0.0, %v3608
        %v3610 = vpop.f32.mrf.mxu0
        %v3611 = vpop.f32.mrf.mxu0
        %v3612 = vadd.f32 0.0, %v3611
        %v3613 = vpop.f32.mrf.mxu0
        %3614 = vmatprep.mubr.bf16.mxu0 0
        %3615 = vmatmul.mubr.bf16.gmra.mxu0 %v3492
        %v3616 = vpop.f32.mrf.mxu0
        %v3617 = vadd.f32 0.0, %v3616
        %v3618 = vpop.f32.mrf.mxu0
        %v3619 = vpop.f32.mrf.mxu0
        %v3620 = vadd.f32 0.0, %v3619
        %v3621 = vpop.f32.mrf.mxu0
        %3622 = vmatprep.mubr.bf16.mxu0 0
        %3623 = vmatmul.mubr.bf16.gmra.mxu0 %v3495
        %v3624 = vpop.f32.mrf.mxu0
        %v3625 = vadd.f32 0.0, %v3624
        %v3626 = vpop.f32.mrf.mxu0
        %v3627 = vpop.f32.mrf.mxu0
        %v3628 = vadd.f32 0.0, %v3627
        %v3629 = vpop.f32.mrf.mxu0
        %3630 = vmatprep.mubr.bf16.mxu0 0
        %3631 = vmatmul.mubr.bf16.gmra.mxu0 %v3498
        %v3632 = vpop.f32.mrf.mxu0
        %v3633 = vadd.f32 0.0, %v3632
        %v3634 = vpop.f32.mrf.mxu0
        %v3635 = vpop.f32.mrf.mxu0
        %v3636 = vadd.f32 0.0, %v3635
        %v3637 = vpop.f32.mrf.mxu0
        %3638 = vmatprep.mubr.bf16.mxu0 0
        %3639 = vmatmul.mubr.bf16.gmra.mxu0 %v3501
        %v3640 = vpop.f32.mrf.mxu0
        %v3641 = vadd.f32 0.0, %v3640
        %v3642 = vpop.f32.mrf.mxu0
        %v3643 = vpop.f32.mrf.mxu0
        %v3644 = vadd.f32 0.0, %v3643
        %v3645 = vpop.f32.mrf.mxu0
        %3646 = vmatprep.mubr.bf16.mxu0 0
        %3647 = vmatmul.mubr.bf16.gmra.mxu0 %v3504
        %v3648 = vpop.f32.mrf.mxu0
        %v3649 = vadd.f32 0.0, %v3648
        %v3650 = vpop.f32.mrf.mxu0
        %v3651 = vpop.f32.mrf.mxu0
        %v3652 = vadd.f32 0.0, %v3651
        %v3653 = vpop.f32.mrf.mxu0
        %3654 = vmatprep.mubr.bf16.mxu0 0
        %3655 = vmatmul.mubr.bf16.gmra.mxu0 %v3507
        %v3656 = vpop.f32.mrf.mxu0
        %v3657 = vadd.f32 0.0, %v3656
        %v3658 = vpop.f32.mrf.mxu0
        %v3659 = vpop.f32.mrf.mxu0
        %v3660 = vadd.f32 0.0, %v3659
        %v3661 = vpop.f32.mrf.mxu0
        %3662 = vmatprep.mubr.bf16.mxu0 0
        %3663 = vmatmul.mubr.bf16.gmra.mxu0 %v3510
        %v3664 = vpop.f32.mrf.mxu0
        %v3665 = vadd.f32 0.0, %v3664
        %v3666 = vpop.f32.mrf.mxu0
        %v3667 = vpop.f32.mrf.mxu0
        %v3668 = vadd.f32 0.0, %v3667
        %v3669 = vpop.f32.mrf.mxu0
        %3670 = vmatprep.mubr.bf16.mxu0 0
        %3671 = vmatmul.mubr.bf16.gmra.mxu0 %v3513
        %v3672 = vpop.f32.mrf.mxu0
        %v3673 = vadd.f32 0.0, %v3672
        %v3674 = vpop.f32.mrf.mxu0
        %v3675 = vpop.f32.mrf.mxu0
        %v3676 = vadd.f32 0.0, %v3675
        %v3677 = vpop.f32.mrf.mxu0
        %3678 = vdwg.mxu0
        %3711 = vrot.lane.b32.xlu0 %v3553, 48
        %v3712 = vpop.permute.xlu0 %3711
        %3713 = vrot.lane.b32.xlu0 %v3556, 48
        %v3714 = vpop.permute.xlu0 %3713
        %3715 = vrot.lane.b32.xlu0 %v3561, 48
        %v3716 = vpop.permute.xlu0 %3715
        %3717 = vrot.lane.b32.xlu0 %v3564, 48
        %v3718 = vpop.permute.xlu0 %3717
        %3719 = vrot.lane.b32.xlu0 %v3569, 48
        %v3720 = vpop.permute.xlu0 %3719
        %3721 = vrot.lane.b32.xlu0 %v3572, 48
        %v3722 = vpop.permute.xlu0 %3721
        %3723 = vrot.lane.b32.xlu0 %v3577, 48
        %v3724 = vpop.permute.xlu0 %3723
        %3725 = vrot.lane.b32.xlu0 %v3580, 48
        %v3726 = vpop.permute.xlu0 %3725
        %3727 = vrot.lane.b32.xlu0 %v3585, 48
        %v3728 = vpop.permute.xlu0 %3727
        %3729 = vrot.lane.b32.xlu0 %v3588, 48
        %v3730 = vpop.permute.xlu0 %3729
        %3731 = vrot.lane.b32.xlu0 %v3593, 48
        %v3732 = vpop.permute.xlu0 %3731
        %3733 = vrot.lane.b32.xlu0 %v3596, 48
        %v3734 = vpop.permute.xlu0 %3733
        %3735 = vrot.lane.b32.xlu0 %v3601, 48
        %v3736 = vpop.permute.xlu0 %3735
        %3737 = vrot.lane.b32.xlu0 %v3604, 48
        %v3738 = vpop.permute.xlu0 %3737
        %3739 = vrot.lane.b32.xlu0 %v3609, 48
        %v3740 = vpop.permute.xlu0 %3739
        %3741 = vrot.lane.b32.xlu0 %v3612, 48
        %v3742 = vpop.permute.xlu0 %3741
        %3743 = vrot.lane.b32.xlu0 %v3617, 48
        %v3744 = vpop.permute.xlu0 %3743
        %3745 = vrot.lane.b32.xlu0 %v3620, 48
        %v3746 = vpop.permute.xlu0 %3745
        %3747 = vrot.lane.b32.xlu0 %v3625, 48
        %v3748 = vpop.permute.xlu0 %3747
        %3749 = vrot.lane.b32.xlu0 %v3628, 48
        %v3750 = vpop.permute.xlu0 %3749
        %3751 = vrot.lane.b32.xlu0 %v3633, 48
        %v3752 = vpop.permute.xlu0 %3751
        %3753 = vrot.lane.b32.xlu0 %v3636, 48
        %v3754 = vpop.permute.xlu0 %3753
        %3755 = vrot.lane.b32.xlu0 %v3641, 48
        %v3756 = vpop.permute.xlu0 %3755
        %3757 = vrot.lane.b32.xlu0 %v3644, 48
        %v3758 = vpop.permute.xlu0 %3757
        %3759 = vrot.lane.b32.xlu0 %v3649, 48
        %v3760 = vpop.permute.xlu0 %3759
        %3761 = vrot.lane.b32.xlu0 %v3652, 48
        %v3762 = vpop.permute.xlu0 %3761
        %3763 = vrot.lane.b32.xlu0 %v3657, 48
        %v3764 = vpop.permute.xlu0 %3763
        %3765 = vrot.lane.b32.xlu0 %v3660, 48
        %v3766 = vpop.permute.xlu0 %3765
        %3767 = vrot.lane.b32.xlu0 %v3665, 48
        %v3768 = vpop.permute.xlu0 %3767
        %3769 = vrot.lane.b32.xlu0 %v3668, 48
        %v3770 = vpop.permute.xlu0 %3769
        %3771 = vrot.lane.b32.xlu0 %v3673, 48
        %v3772 = vpop.permute.xlu0 %3771
        %3773 = vrot.lane.b32.xlu0 %v3676, 48
        %v3774 = vpop.permute.xlu0 %3773
        %3807 = vst.msk [vmem:[%s157] sm:$0xff] %vm2955, %v3712
        %3808 = vst.msk [vmem:[%s157 + $0x8] sm:$0xff] %vm2955, %v3714
        %3809 = vst.msk [vmem:[%s157 + $0x10] sm:$0xff] %vm2955, %v3716
        %3810 = vst.msk [vmem:[%s157 + $0x18] sm:$0xff] %vm2955, %v3718
        %3811 = vst.msk [vmem:[%s157 + $0x20] sm:$0xff] %vm2955, %v3720
        %3812 = vst.msk [vmem:[%s157 + $0x28] sm:$0xff] %vm2955, %v3722
        %3813 = vst.msk [vmem:[%s157 + $0x30] sm:$0xff] %vm2955, %v3724
        %3814 = vst.msk [vmem:[%s157 + $0x38] sm:$0xff] %vm2955, %v3726
        %3815 = vst.msk [vmem:[%s157 + $0x40] sm:$0xff] %vm2955, %v3728
        %3816 = vst.msk [vmem:[%s157 + $0x48] sm:$0xff] %vm2955, %v3730
        %3817 = vst.msk [vmem:[%s157 + $0x50] sm:$0xff] %vm2955, %v3732
        %3818 = vst.msk [vmem:[%s157 + $0x58] sm:$0xff] %vm2955, %v3734
        %3819 = vst.msk [vmem:[%s157 + $0x60] sm:$0xff] %vm2955, %v3736
        %3820 = vst.msk [vmem:[%s157 + $0x68] sm:$0xff] %vm2955, %v3738
        %3821 = vst.msk [vmem:[%s157 + $0x70] sm:$0xff] %vm2955, %v3740
        %3822 = vst.msk [vmem:[%s157 + $0x78] sm:$0xff] %vm2955, %v3742
        %3823 = vst.msk [vmem:[%s157 + $0x80] sm:$0xff] %vm2955, %v3744
        %3824 = vst.msk [vmem:[%s157 + $0x88] sm:$0xff] %vm2955, %v3746
        %3825 = vst.msk [vmem:[%s157 + $0x90] sm:$0xff] %vm2955, %v3748
        %3826 = vst.msk [vmem:[%s157 + $0x98] sm:$0xff] %vm2955, %v3750
        %3827 = vst.msk [vmem:[%s157 + $0xa0] sm:$0xff] %vm2955, %v3752
        %3828 = vst.msk [vmem:[%s157 + $0xa8] sm:$0xff] %vm2955, %v3754
        %3829 = vst.msk [vmem:[%s157 + $0xb0] sm:$0xff] %vm2955, %v3756
        %3830 = vst.msk [vmem:[%s157 + $0xb8] sm:$0xff] %vm2955, %v3758
        %3831 = vst.msk [vmem:[%s157 + $0xc0] sm:$0xff] %vm2955, %v3760
        %3832 = vst.msk [vmem:[%s157 + $0xc8] sm:$0xff] %vm2955, %v3762
        %3833 = vst.msk [vmem:[%s157 + $0xd0] sm:$0xff] %vm2955, %v3764
        %3834 = vst.msk [vmem:[%s157 + $0xd8] sm:$0xff] %vm2955, %v3766
        %3835 = vst.msk [vmem:[%s157 + $0xe0] sm:$0xff] %vm2955, %v3768
        %3836 = vst.msk [vmem:[%s157 + $0xe8] sm:$0xff] %vm2955, %v3770
        %3837 = vst.msk [vmem:[%s157 + $0xf0] sm:$0xff] %vm2955, %v3772
        %3838 = vst.msk [vmem:[%s157 + $0xf8] sm:$0xff] %vm2955, %v3774
        %p3839 = scmp.lt.s32.totalorder %s14, 1
        %s3840 = scalar_select %p3839, %s14, 1
        %s3841 = smul.addr %s3840, 32
        %s3842 = smul.addr %s3841, 8
        %s3843 = scalar_lea.vmem %s2, %s3842
        // Predicated region
        $region33: #{attention_c_m_forward.4} parent=27 // pred_check
          %p3844 = pneg %p79
        $region34: #{attention_c_m_forward.4} parent=27 // pred_check_branch
          %3846 = sbr.rel (%p3844) target = $region36
        $region35: #{attention_c_m_forward.4} parent=27 // pred_region
          _
        $region36: #{attention_c_m_forward.4} parent=27 // pred_fallthru
          _
      $region28: #{attention_c_m_forward.4} parent=5 // pred_fallthru
        _
      %p3847 = scmp.le.s32.totalorder 2, %s9
      // Predicated region
      $region37: #{attention_c_m_forward.4} parent=5 // pred_check
        %p3848 = pneg %p3847
      $region38: #{attention_c_m_forward.4} parent=5 // pred_check_branch
        %3850 = sbr.rel (%p3848) target = $region40
      $region39: #{attention_c_m_forward.4} parent=5 // pred_region
        %s3851 = ssub.s32 %s9, 2
        // Predicated region
        $region41: #{attention_c_m_forward.4} parent=39 // pred_check
          %p3852 = pneg %p85
        $region42: #{attention_c_m_forward.4} parent=39 // pred_check_branch
          %3854 = sbr.rel (%p3852) target = $region44
        $region43: #{attention_c_m_forward.4} parent=39 // pred_region
          %p3855 = scmp.lt.s32.totalorder %s15, 1
          %s3856 = scalar_select %p3855, %s15, 1
          %s3857 = smul.addr %s3856, 32
          %s3858 = smul.addr %s3857, 8
          %s3859 = scalar_lea.vmem %s2, %s3858
        $region44: #{attention_c_m_forward.4} parent=39 // pred_fallthru
          _
      $region40: #{attention_c_m_forward.4} parent=5 // pred_fallthru
        _
    $region6: #{attention_c_m_forward.4} parent=1 // loop_footer
      %s13 = sadd.s32 1, %s9
    $region7: #{attention_c_m_forward.4} parent=1 // loop_footer_branch
      %8 = sbr.rel target = $region3
    $region8: #{attention_c_m_forward.4} parent=1 // loop_exit
      _
    %3860 = vsyncpa [#allocation3], 1
    %s3861 = scalar_lea.sflag [#allocation3], 1
    %3862 = vsyncpa %s3861, 1

// kernel: attention_c_m_forward.5
$region0: #{attention_c_m_forward.5}
  #allocation0 [shape = 'u32[]', space=smem, size = 0x4, offset = 0x4, fixed_abs, tag = 'smem constant byte address 0x4 - core index']
  #allocation1 [shape = 'u32[144,128]{1,0:T(1,128)}', space=vmem, size = 0x12000, scoped, tag = 'internal scratch']
  %s0 = inlined_call_operand.vmem [shape: f32[512,64], index: 0, kind: input, shape index: {}]
  %s1 = inlined_call_operand.vmem [shape: f32[512,64], index: 1, kind: input, shape index: {}]
  %s2 = inlined_call_operand.vmem [shape: bf16[64,64], index: 2, kind: input, shape index: {}]
  %s3 = inlined_call_operand.vmem [shape: f32[1,64], index: 3, kind: input, shape index: {}]
  %s4 = inlined_call_operand.hbm [shape: f32[512,64], index: 4, kind: output, shape index: {}]
  %s5 = sld [smem:[#allocation0]]
  $region26: #{attention_c_m_forward.5} parent=0
    _
  %s7 = ssub.s32 1, %s5
  %s8 = scalar_select 0, %s7, %s5
  $region1: #{attention_c_m_forward.5} parent=0
    #allocation2 [shape = 'u8[262144]{0}', space=vmem, size = 0x40000, scoped, tag = 'output window, operand 0, single buffered']
    #allocation3 [shape = 's32[1]{0}', space=sflag, size = 0x4, scoped, tag = 'scoped memory for attention_c_m_forward.5']
    %9 = vsyncpa [#allocation3], 0
    // Predicated region
    $region2: #{attention_c_m_forward.5} parent=1 // pred_check
      _
    $region3: #{attention_c_m_forward.5} parent=1 // pred_check_branch
      %11 = sbr.rel (0) target = $region5
    $region4: #{attention_c_m_forward.5} parent=1 // pred_region
      _
    $region5: #{attention_c_m_forward.5} parent=1 // pred_fallthru
      _
    // Predicated region
    $region6: #{attention_c_m_forward.5} parent=1 // pred_check
      _
    $region7: #{attention_c_m_forward.5} parent=1 // pred_check_branch
      %13 = sbr.rel (0) target = $region9
    $region8: #{attention_c_m_forward.5} parent=1 // pred_region
      _
    $region9: #{attention_c_m_forward.5} parent=1 // pred_fallthru
      _
    // Predicated region
    $region10: #{attention_c_m_forward.5} parent=1 // pred_check
      _
    $region11: #{attention_c_m_forward.5} parent=1 // pred_check_branch
      %15 = sbr.rel (0) target = $region13
    $region12: #{attention_c_m_forward.5} parent=1 // pred_region
      _
    $region13: #{attention_c_m_forward.5} parent=1 // pred_fallthru
      _
    // Predicated region
    $region14: #{attention_c_m_forward.5} parent=1 // pred_check
      _
    $region15: #{attention_c_m_forward.5} parent=1 // pred_check_branch
      %17 = sbr.rel (0) target = $region17
    $region16: #{attention_c_m_forward.5} parent=1 // pred_region
      _
    $region17: #{attention_c_m_forward.5} parent=1 // pred_fallthru
      _
    %v19 = vld [vmem:[%s0] sm:$0xff]
    %v20 = vld [vmem:[%s0 + $0x8] sm:$0xff]
    %v21 = vld [vmem:[%s0 + $0x10] sm:$0xff]
    %v22 = vld [vmem:[%s0 + $0x18] sm:$0xff]
    %v23 = vld [vmem:[%s0 + $0x20] sm:$0xff]
    %v24 = vld [vmem:[%s0 + $0x28] sm:$0xff]
    %v25 = vld [vmem:[%s0 + $0x30] sm:$0xff]
    %v26 = vld [vmem:[%s0 + $0x38] sm:$0xff]
    %v27 = vld [vmem:[%s0 + $0x40] sm:$0xff]
    %v28 = vld [vmem:[%s0 + $0x48] sm:$0xff]
    %v29 = vld [vmem:[%s0 + $0x50] sm:$0xff]
    %v30 = vld [vmem:[%s0 + $0x58] sm:$0xff]
    %v31 = vld [vmem:[%s0 + $0x60] sm:$0xff]
    %v32 = vld [vmem:[%s0 + $0x68] sm:$0xff]
    %v33 = vld [vmem:[%s0 + $0x70] sm:$0xff]
    %v34 = vld [vmem:[%s0 + $0x78] sm:$0xff]
    %v35 = vld [vmem:[%s0 + $0x80] sm:$0xff]
    %v36 = vld [vmem:[%s0 + $0x88] sm:$0xff]
    %v37 = vld [vmem:[%s0 + $0x90] sm:$0xff]
    %v38 = vld [vmem:[%s0 + $0x98] sm:$0xff]
    %v39 = vld [vmem:[%s0 + $0xa0] sm:$0xff]
    %v40 = vld [vmem:[%s0 + $0xa8] sm:$0xff]
    %v41 = vld [vmem:[%s0 + $0xb0] sm:$0xff]
    %v42 = vld [vmem:[%s0 + $0xb8] sm:$0xff]
    %v43 = vld [vmem:[%s0 + $0xc0] sm:$0xff]
    %v44 = vld [vmem:[%s0 + $0xc8] sm:$0xff]
    %v45 = vld [vmem:[%s0 + $0xd0] sm:$0xff]
    %v46 = vld [vmem:[%s0 + $0xd8] sm:$0xff]
    %v47 = vld [vmem:[%s0 + $0xe0] sm:$0xff]
    %v48 = vld [vmem:[%s0 + $0xe8] sm:$0xff]
    %v49 = vld [vmem:[%s0 + $0xf0] sm:$0xff]
    %v50 = vld [vmem:[%s0 + $0xf8] sm:$0xff]
    %v51 = vld [vmem:[%s0 + $0x100] sm:$0xff]
    %v52 = vld [vmem:[%s0 + $0x108] sm:$0xff]
    %v53 = vld [vmem:[%s0 + $0x110] sm:$0xff]
    %v54 = vld [vmem:[%s0 + $0x118] sm:$0xff]
    %v55 = vld [vmem:[%s0 + $0x120] sm:$0xff]
    %v56 = vld [vmem:[%s0 + $0x128] sm:$0xff]
    %v57 = vld [vmem:[%s0 + $0x130] sm:$0xff]
    %v58 = vld [vmem:[%s0 + $0x138] sm:$0xff]
    %v59 = vld [vmem:[%s0 + $0x140] sm:$0xff]
    %v60 = vld [vmem:[%s0 + $0x148] sm:$0xff]
    %v61 = vld [vmem:[%s0 + $0x150] sm:$0xff]
    %v62 = vld [vmem:[%s0 + $0x158] sm:$0xff]
    %v63 = vld [vmem:[%s0 + $0x160] sm:$0xff]
    %v64 = vld [vmem:[%s0 + $0x168] sm:$0xff]
    %v65 = vld [vmem:[%s0 + $0x170] sm:$0xff]
    %v66 = vld [vmem:[%s0 + $0x178] sm:$0xff]
    %v67 = vld [vmem:[%s0 + $0x180] sm:$0xff]
    %v68 = vld [vmem:[%s0 + $0x188] sm:$0xff]
    %v69 = vld [vmem:[%s0 + $0x190] sm:$0xff]
    %v70 = vld [vmem:[%s0 + $0x198] sm:$0xff]
    %v71 = vld [vmem:[%s0 + $0x1a0] sm:$0xff]
    %v72 = vld [vmem:[%s0 + $0x1a8] sm:$0xff]
    %v73 = vld [vmem:[%s0 + $0x1b0] sm:$0xff]
    %v74 = vld [vmem:[%s0 + $0x1b8] sm:$0xff]
    %v75 = vld [vmem:[%s0 + $0x1c0] sm:$0xff]
    %v76 = vld [vmem:[%s0 + $0x1c8] sm:$0xff]
    %v77 = vld [vmem:[%s0 + $0x1d0] sm:$0xff]
    %v78 = vld [vmem:[%s0 + $0x1d8] sm:$0xff]
    %v79 = vld [vmem:[%s0 + $0x1e0] sm:$0xff]
    %v80 = vld [vmem:[%s0 + $0x1e8] sm:$0xff]
    %v81 = vld [vmem:[%s0 + $0x1f0] sm:$0xff]
    %v82 = vld [vmem:[%s0 + $0x1f8] sm:$0xff]
    %v83 = vld [vmem:[%s1] sm:$0xff]
    %v84 = vld [vmem:[%s1 + $0x8] sm:$0xff]
    %v85 = vld [vmem:[%s1 + $0x10] sm:$0xff]
    %v86 = vld [vmem:[%s1 + $0x18] sm:$0xff]
    %v87 = vld [vmem:[%s1 + $0x20] sm:$0xff]
    %v88 = vld [vmem:[%s1 + $0x28] sm:$0xff]
    %v89 = vld [vmem:[%s1 + $0x30] sm:$0xff]
    %v90 = vld [vmem:[%s1 + $0x38] sm:$0xff]
    %v91 = vld [vmem:[%s1 + $0x40] sm:$0xff]
    %v92 = vld [vmem:[%s1 + $0x48] sm:$0xff]
    %v93 = vld [vmem:[%s1 + $0x50] sm:$0xff]
    %v94 = vld [vmem:[%s1 + $0x58] sm:$0xff]
    %v95 = vld [vmem:[%s1 + $0x60] sm:$0xff]
    %v96 = vld [vmem:[%s1 + $0x68] sm:$0xff]
    %v97 = vld [vmem:[%s1 + $0x70] sm:$0xff]
    %v98 = vld [vmem:[%s1 + $0x78] sm:$0xff]
    %v99 = vld [vmem:[%s1 + $0x80] sm:$0xff]
    %v100 = vld [vmem:[%s1 + $0x88] sm:$0xff]
    %v101 = vld [vmem:[%s1 + $0x90] sm:$0xff]
    %v102 = vld [vmem:[%s1 + $0x98] sm:$0xff]
    %v103 = vld [vmem:[%s1 + $0xa0] sm:$0xff]
    %v104 = vld [vmem:[%s1 + $0xa8] sm:$0xff]
    %v105 = vld [vmem:[%s1 + $0xb0] sm:$0xff]
    %v106 = vld [vmem:[%s1 + $0xb8] sm:$0xff]
    %v107 = vld [vmem:[%s1 + $0xc0] sm:$0xff]
    %v108 = vld [vmem:[%s1 + $0xc8] sm:$0xff]
    %v109 = vld [vmem:[%s1 + $0xd0] sm:$0xff]
    %v110 = vld [vmem:[%s1 + $0xd8] sm:$0xff]
    %v111 = vld [vmem:[%s1 + $0xe0] sm:$0xff]
    %v112 = vld [vmem:[%s1 + $0xe8] sm:$0xff]
    %v113 = vld [vmem:[%s1 + $0xf0] sm:$0xff]
    %v114 = vld [vmem:[%s1 + $0xf8] sm:$0xff]
    %v115 = vld [vmem:[%s1 + $0x100] sm:$0xff]
    %v116 = vld [vmem:[%s1 + $0x108] sm:$0xff]
    %v117 = vld [vmem:[%s1 + $0x110] sm:$0xff]
    %v118 = vld [vmem:[%s1 + $0x118] sm:$0xff]
    %v119 = vld [vmem:[%s1 + $0x120] sm:$0xff]
    %v120 = vld [vmem:[%s1 + $0x128] sm:$0xff]
    %v121 = vld [vmem:[%s1 + $0x130] sm:$0xff]
    %v122 = vld [vmem:[%s1 + $0x138] sm:$0xff]
    %v123 = vld [vmem:[%s1 + $0x140] sm:$0xff]
    %v124 = vld [vmem:[%s1 + $0x148] sm:$0xff]
    %v125 = vld [vmem:[%s1 + $0x150] sm:$0xff]
    %v126 = vld [vmem:[%s1 + $0x158] sm:$0xff]
    %v127 = vld [vmem:[%s1 + $0x160] sm:$0xff]
    %v128 = vld [vmem:[%s1 + $0x168] sm:$0xff]
    %v129 = vld [vmem:[%s1 + $0x170] sm:$0xff]
    %v130 = vld [vmem:[%s1 + $0x178] sm:$0xff]
    %v131 = vld [vmem:[%s1 + $0x180] sm:$0xff]
    %v132 = vld [vmem:[%s1 + $0x188] sm:$0xff]
    %v133 = vld [vmem:[%s1 + $0x190] sm:$0xff]
    %v134 = vld [vmem:[%s1 + $0x198] sm:$0xff]
    %v135 = vld [vmem:[%s1 + $0x1a0] sm:$0xff]
    %v136 = vld [vmem:[%s1 + $0x1a8] sm:$0xff]
    %v137 = vld [vmem:[%s1 + $0x1b0] sm:$0xff]
    %v138 = vld [vmem:[%s1 + $0x1b8] sm:$0xff]
    %v139 = vld [vmem:[%s1 + $0x1c0] sm:$0xff]
    %v140 = vld [vmem:[%s1 + $0x1c8] sm:$0xff]
    %v141 = vld [vmem:[%s1 + $0x1d0] sm:$0xff]
    %v142 = vld [vmem:[%s1 + $0x1d8] sm:$0xff]
    %v143 = vld [vmem:[%s1 + $0x1e0] sm:$0xff]
    %v144 = vld [vmem:[%s1 + $0x1e8] sm:$0xff]
    %v145 = vld [vmem:[%s1 + $0x1f0] sm:$0xff]
    %v146 = vld [vmem:[%s1 + $0x1f8] sm:$0xff]
    %v147 = vmul.f32 %v19, %v83
    %v148 = vmul.f32 %v20, %v84
    %v149 = vmul.f32 %v21, %v85
    %v150 = vmul.f32 %v22, %v86
    %v151 = vmul.f32 %v23, %v87
    %v152 = vmul.f32 %v24, %v88
    %v153 = vmul.f32 %v25, %v89
    %v154 = vmul.f32 %v26, %v90
    %v155 = vmul.f32 %v27, %v91
    %v156 = vmul.f32 %v28, %v92
    %v157 = vmul.f32 %v29, %v93
    %v158 = vmul.f32 %v30, %v94
    %v159 = vmul.f32 %v31, %v95
    %v160 = vmul.f32 %v32, %v96
    %v161 = vmul.f32 %v33, %v97
    %v162 = vmul.f32 %v34, %v98
    %v163 = vmul.f32 %v35, %v99
    %v164 = vmul.f32 %v36, %v100
    %v165 = vmul.f32 %v37, %v101
    %v166 = vmul.f32 %v38, %v102
    %v167 = vmul.f32 %v39, %v103
    %v168 = vmul.f32 %v40, %v104
    %v169 = vmul.f32 %v41, %v105
    %v170 = vmul.f32 %v42, %v106
    %v171 = vmul.f32 %v43, %v107
    %v172 = vmul.f32 %v44, %v108
    %v173 = vmul.f32 %v45, %v109
    %v174 = vmul.f32 %v46, %v110
    %v175 = vmul.f32 %v47, %v111
    %v176 = vmul.f32 %v48, %v112
    %v177 = vmul.f32 %v49, %v113
    %v178 = vmul.f32 %v50, %v114
    %v179 = vmul.f32 %v51, %v115
    %v180 = vmul.f32 %v52, %v116
    %v181 = vmul.f32 %v53, %v117
    %v182 = vmul.f32 %v54, %v118
    %v183 = vmul.f32 %v55, %v119
    %v184 = vmul.f32 %v56, %v120
    %v185 = vmul.f32 %v57, %v121
    %v186 = vmul.f32 %v58, %v122
    %v187 = vmul.f32 %v59, %v123
    %v188 = vmul.f32 %v60, %v124
    %v189 = vmul.f32 %v61, %v125
    %v190 = vmul.f32 %v62, %v126
    %v191 = vmul.f32 %v63, %v127
    %v192 = vmul.f32 %v64, %v128
    %v193 = vmul.f32 %v65, %v129
    %v194 = vmul.f32 %v66, %v130
    %v195 = vmul.f32 %v67, %v131
    %v196 = vmul.f32 %v68, %v132
    %v197 = vmul.f32 %v69, %v133
    %v198 = vmul.f32 %v70, %v134
    %v199 = vmul.f32 %v71, %v135
    %v200 = vmul.f32 %v72, %v136
    %v201 = vmul.f32 %v73, %v137
    %v202 = vmul.f32 %v74, %v138
    %v203 = vmul.f32 %v75, %v139
    %v204 = vmul.f32 %v76, %v140
    %v205 = vmul.f32 %v77, %v141
    %v206 = vmul.f32 %v78, %v142
    %v207 = vmul.f32 %v79, %v143
    %v208 = vmul.f32 %v80, %v144
    %v209 = vmul.f32 %v81, %v145
    %v210 = vmul.f32 %v82, %v146
    %v211 = vpack.c.bf16 %v148, %v147
    %v212 = vpack.c.bf16 %v150, %v149
    %v213 = vpack.c.bf16 %v152, %v151
    %v214 = vpack.c.bf16 %v154, %v153
    %v215 = vpack.c.bf16 %v156, %v155
    %v216 = vpack.c.bf16 %v158, %v157
    %v217 = vpack.c.bf16 %v160, %v159
    %v218 = vpack.c.bf16 %v162, %v161
    %v219 = vpack.c.bf16 %v164, %v163
    %v220 = vpack.c.bf16 %v166, %v165
    %v221 = vpack.c.bf16 %v168, %v167
    %v222 = vpack.c.bf16 %v170, %v169
    %v223 = vpack.c.bf16 %v172, %v171
    %v224 = vpack.c.bf16 %v174, %v173
    %v225 = vpack.c.bf16 %v176, %v175
    %v226 = vpack.c.bf16 %v178, %v177
    %v227 = vpack.c.bf16 %v180, %v179
    %v228 = vpack.c.bf16 %v182, %v181
    %v229 = vpack.c.bf16 %v184, %v183
    %v230 = vpack.c.bf16 %v186, %v185
    %v231 = vpack.c.bf16 %v188, %v187
    %v232 = vpack.c.bf16 %v190, %v189
    %v233 = vpack.c.bf16 %v192, %v191
    %v234 = vpack.c.bf16 %v194, %v193
    %v235 = vpack.c.bf16 %v196, %v195
    %v236 = vpack.c.bf16 %v198, %v197
    %v237 = vpack.c.bf16 %v200, %v199
    %v238 = vpack.c.bf16 %v202, %v201
    %v239 = vpack.c.bf16 %v204, %v203
    %v240 = vpack.c.bf16 %v206, %v205
    %v241 = vpack.c.bf16 %v208, %v207
    %v242 = vpack.c.bf16 %v210, %v209
    %v243 = vld [vmem:[%s2] sm:$0xf]
    %v244 = vld [vmem:[%s2 + $0x4] sm:$0xf]
    %v245 = vld [vmem:[%s2 + $0x8] sm:$0xf]
    %v246 = vld [vmem:[%s2 + $0xc] sm:$0xf]
    %v247 = vld [vmem:[%s2 + $0x10] sm:$0xf]
    %v248 = vld [vmem:[%s2 + $0x14] sm:$0xf]
    %v249 = vld [vmem:[%s2 + $0x18] sm:$0xf]
    %v250 = vld [vmem:[%s2 + $0x1c] sm:$0xf]
    %v251 = vld [vmem:[%s3] sm:$0x1]
    %v253 = vlaneseq
    %v254 = vshrl.u32 %v253, 7
    %v255 = vsub.s32 0, %v254
    %v256 = vrot.slane %v251, %v255
    %v266 = vunpack.c.l.b16 %v243
    %v267 = vunpack.c.l.b16 %v244
    %v268 = vunpack.c.l.b16 %v245
    %v269 = vunpack.c.l.b16 %v246
    %v270 = vunpack.c.l.b16 %v247
    %v271 = vunpack.c.l.b16 %v248
    %v272 = vunpack.c.l.b16 %v249
    %v273 = vunpack.c.l.b16 %v250
    %v274 = vpack.c.b16 %v267, %v266
    %v275 = vpack.c.b16 %v269, %v268
    %v276 = vpack.c.b16 %v271, %v270
    %v277 = vpack.c.b16 %v273, %v272
    %vm282 = vcmask 523264
    %v284 = vsel %vm282, %v211, 0
    %v287 = vsel %vm282, %v212, 0
    %v290 = vsel %vm282, %v213, 0
    %v293 = vsel %vm282, %v214, 0
    %v296 = vsel %vm282, %v215, 0
    %v299 = vsel %vm282, %v216, 0
    %v302 = vsel %vm282, %v217, 0
    %v305 = vsel %vm282, %v218, 0
    %v308 = vsel %vm282, %v219, 0
    %v311 = vsel %vm282, %v220, 0
    %v314 = vsel %vm282, %v221, 0
    %v317 = vsel %vm282, %v222, 0
    %v320 = vsel %vm282, %v223, 0
    %v323 = vsel %vm282, %v224, 0
    %v326 = vsel %vm282, %v225, 0
    %v329 = vsel %vm282, %v226, 0
    %v332 = vsel %vm282, %v227, 0
    %v335 = vsel %vm282, %v228, 0
    %v338 = vsel %vm282, %v229, 0
    %v341 = vsel %vm282, %v230, 0
    %v344 = vsel %vm282, %v231, 0
    %v347 = vsel %vm282, %v232, 0
    %v350 = vsel %vm282, %v233, 0
    %v353 = vsel %vm282, %v234, 0
    %v356 = vsel %vm282, %v235, 0
    %v359 = vsel %vm282, %v236, 0
    %v362 = vsel %vm282, %v237, 0
    %v365 = vsel %vm282, %v238, 0
    %v368 = vsel %vm282, %v239, 0
    %v371 = vsel %vm282, %v240, 0
    %v374 = vsel %vm282, %v241, 0
    %v377 = vsel %vm282, %v242, 0
    %379 = vmatprep.subr.bf16.mxu0 0
    %380 = vmatpush1.bf16.msra.mxu0 0
    %381 = vmatprep.subr.bf16.mxu0 0
    %382 = vmatpush1.bf16.msra.mxu0 0
    %383 = vmatprep.subr.bf16.mxu0 0
    %384 = vmatpush1.bf16.msra.mxu0 0
    %385 = vmatprep.subr.bf16.mxu0 0
    %386 = vmatpush1.bf16.msra.mxu0 0
    %387 = vmatprep.subr.bf16.mxu0 0
    %388 = vmatpush1.bf16.msra.mxu0 %v277
    %389 = vmatprep.subr.bf16.mxu0 0
    %390 = vmatpush1.bf16.msra.mxu0 %v276
    %391 = vmatprep.subr.bf16.mxu0 0
    %392 = vmatpush1.bf16.msra.mxu0 %v275
    %393 = vmatprep.subr.bf16.mxu0 0
    %394 = vmatpush1.bf16.msra.mxu0 %v274
    %395 = vmatprep.subr.bf16.mxu0 0
    %396 = vmatpush2.bf16.msra.mxu0 0
    %397 = vmatprep.subr.bf16.mxu0 0
    %398 = vmatpush2.bf16.msra.mxu0 0
    %399 = vmatprep.subr.bf16.mxu0 0
    %400 = vmatpush2.bf16.msra.mxu0 0
    %401 = vmatprep.subr.bf16.mxu0 0
    %402 = vmatpush2.bf16.msra.mxu0 0
    %403 = vmatprep.subr.bf16.mxu0 0
    %404 = vmatpush2.bf16.msra.mxu0 0
    %405 = vmatprep.subr.bf16.mxu0 0
    %406 = vmatpush2.bf16.msra.mxu0 0
    %407 = vmatprep.subr.bf16.mxu0 0
    %408 = vmatpush2.bf16.msra.mxu0 0
    %409 = vmatprep.subr.bf16.mxu0 0
    %410 = vmatpush2.bf16.msra.mxu0 0
    %411 = vmatprep.mubr.bf16.mxu0 0
    %412 = vmatmul.mubr.bf16.gmra.mxu0 %v284
    %v413 = vpop.f32.mrf.mxu0
    %v414 = vadd.f32 %v256, %v413
    %v415 = vpop.f32.mrf.mxu0
    %v416 = vpop.f32.mrf.mxu0
    %v417 = vadd.f32 %v256, %v416
    %v418 = vpop.f32.mrf.mxu0
    %419 = vmatprep.mubr.bf16.mxu0 0
    %420 = vmatmul.mubr.bf16.gmra.mxu0 %v287
    %v421 = vpop.f32.mrf.mxu0
    %v422 = vadd.f32 %v256, %v421
    %v423 = vpop.f32.mrf.mxu0
    %v424 = vpop.f32.mrf.mxu0
    %v425 = vadd.f32 %v256, %v424
    %v426 = vpop.f32.mrf.mxu0
    %427 = vmatprep.mubr.bf16.mxu0 0
    %428 = vmatmul.mubr.bf16.gmra.mxu0 %v290
    %v429 = vpop.f32.mrf.mxu0
    %v430 = vadd.f32 %v256, %v429
    %v431 = vpop.f32.mrf.mxu0
    %v432 = vpop.f32.mrf.mxu0
    %v433 = vadd.f32 %v256, %v432
    %v434 = vpop.f32.mrf.mxu0
    %435 = vmatprep.mubr.bf16.mxu0 0
    %436 = vmatmul.mubr.bf16.gmra.mxu0 %v293
    %v437 = vpop.f32.mrf.mxu0
    %v438 = vadd.f32 %v256, %v437
    %v439 = vpop.f32.mrf.mxu0
    %v440 = vpop.f32.mrf.mxu0
    %v441 = vadd.f32 %v256, %v440
    %v442 = vpop.f32.mrf.mxu0
    %443 = vmatprep.mubr.bf16.mxu0 0
    %444 = vmatmul.mubr.bf16.gmra.mxu0 %v296
    %v445 = vpop.f32.mrf.mxu0
    %v446 = vadd.f32 %v256, %v445
    %v447 = vpop.f32.mrf.mxu0
    %v448 = vpop.f32.mrf.mxu0
    %v449 = vadd.f32 %v256, %v448
    %v450 = vpop.f32.mrf.mxu0
    %451 = vmatprep.mubr.bf16.mxu0 0
    %452 = vmatmul.mubr.bf16.gmra.mxu0 %v299
    %v453 = vpop.f32.mrf.mxu0
    %v454 = vadd.f32 %v256, %v453
    %v455 = vpop.f32.mrf.mxu0
    %v456 = vpop.f32.mrf.mxu0
    %v457 = vadd.f32 %v256, %v456
    %v458 = vpop.f32.mrf.mxu0
    %459 = vmatprep.mubr.bf16.mxu0 0
    %460 = vmatmul.mubr.bf16.gmra.mxu0 %v302
    %v461 = vpop.f32.mrf.mxu0
    %v462 = vadd.f32 %v256, %v461
    %v463 = vpop.f32.mrf.mxu0
    %v464 = vpop.f32.mrf.mxu0
    %v465 = vadd.f32 %v256, %v464
    %v466 = vpop.f32.mrf.mxu0
    %467 = vmatprep.mubr.bf16.mxu0 0
    %468 = vmatmul.mubr.bf16.gmra.mxu0 %v305
    %v469 = vpop.f32.mrf.mxu0
    %v470 = vadd.f32 %v256, %v469
    %v471 = vpop.f32.mrf.mxu0
    %v472 = vpop.f32.mrf.mxu0
    %v473 = vadd.f32 %v256, %v472
    %v474 = vpop.f32.mrf.mxu0
    %475 = vmatprep.mubr.bf16.mxu0 0
    %476 = vmatmul.mubr.bf16.gmra.mxu0 %v308
    %v477 = vpop.f32.mrf.mxu0
    %v478 = vadd.f32 %v256, %v477
    %v479 = vpop.f32.mrf.mxu0
    %v480 = vpop.f32.mrf.mxu0
    %v481 = vadd.f32 %v256, %v480
    %v482 = vpop.f32.mrf.mxu0
    %483 = vmatprep.mubr.bf16.mxu0 0
    %484 = vmatmul.mubr.bf16.gmra.mxu0 %v311
    %v485 = vpop.f32.mrf.mxu0
    %v486 = vadd.f32 %v256, %v485
    %v487 = vpop.f32.mrf.mxu0
    %v488 = vpop.f32.mrf.mxu0
    %v489 = vadd.f32 %v256, %v488
    %v490 = vpop.f32.mrf.mxu0
    %491 = vmatprep.mubr.bf16.mxu0 0
    %492 = vmatmul.mubr.bf16.gmra.mxu0 %v314
    %v493 = vpop.f32.mrf.mxu0
    %v494 = vadd.f32 %v256, %v493
    %v495 = vpop.f32.mrf.mxu0
    %v496 = vpop.f32.mrf.mxu0
    %v497 = vadd.f32 %v256, %v496
    %v498 = vpop.f32.mrf.mxu0
    %499 = vmatprep.mubr.bf16.mxu0 0
    %500 = vmatmul.mubr.bf16.gmra.mxu0 %v317
    %v501 = vpop.f32.mrf.mxu0
    %v502 = vadd.f32 %v256, %v501
    %v503 = vpop.f32.mrf.mxu0
    %v504 = vpop.f32.mrf.mxu0
    %v505 = vadd.f32 %v256, %v504
    %v506 = vpop.f32.mrf.mxu0
    %507 = vmatprep.mubr.bf16.mxu0 0
    %508 = vmatmul.mubr.bf16.gmra.mxu0 %v320
    %v509 = vpop.f32.mrf.mxu0
    %v510 = vadd.f32 %v256, %v509
    %v511 = vpop.f32.mrf.mxu0
    %v512 = vpop.f32.mrf.mxu0
    %v513 = vadd.f32 %v256, %v512
    %v514 = vpop.f32.mrf.mxu0
    %515 = vmatprep.mubr.bf16.mxu0 0
    %516 = vmatmul.mubr.bf16.gmra.mxu0 %v323
    %v517 = vpop.f32.mrf.mxu0
    %v518 = vadd.f32 %v256, %v517
    %v519 = vpop.f32.mrf.mxu0
    %v520 = vpop.f32.mrf.mxu0
    %v521 = vadd.f32 %v256, %v520
    %v522 = vpop.f32.mrf.mxu0
    %523 = vmatprep.mubr.bf16.mxu0 0
    %524 = vmatmul.mubr.bf16.gmra.mxu0 %v326
    %v525 = vpop.f32.mrf.mxu0
    %v526 = vadd.f32 %v256, %v525
    %v527 = vpop.f32.mrf.mxu0
    %v528 = vpop.f32.mrf.mxu0
    %v529 = vadd.f32 %v256, %v528
    %v530 = vpop.f32.mrf.mxu0
    %531 = vmatprep.mubr.bf16.mxu0 0
    %532 = vmatmul.mubr.bf16.gmra.mxu0 %v329
    %v533 = vpop.f32.mrf.mxu0
    %v534 = vadd.f32 %v256, %v533
    %v535 = vpop.f32.mrf.mxu0
    %v536 = vpop.f32.mrf.mxu0
    %v537 = vadd.f32 %v256, %v536
    %v538 = vpop.f32.mrf.mxu0
    %539 = vmatprep.mubr.bf16.mxu0 0
    %540 = vmatmul.mubr.bf16.gmra.mxu0 %v332
    %v541 = vpop.f32.mrf.mxu0
    %v542 = vadd.f32 %v256, %v541
    %v543 = vpop.f32.mrf.mxu0
    %v544 = vpop.f32.mrf.mxu0
    %v545 = vadd.f32 %v256, %v544
    %v546 = vpop.f32.mrf.mxu0
    %547 = vmatprep.mubr.bf16.mxu0 0
    %548 = vmatmul.mubr.bf16.gmra.mxu0 %v335
    %v549 = vpop.f32.mrf.mxu0
    %v550 = vadd.f32 %v256, %v549
    %v551 = vpop.f32.mrf.mxu0
    %v552 = vpop.f32.mrf.mxu0
    %v553 = vadd.f32 %v256, %v552
    %v554 = vpop.f32.mrf.mxu0
    %555 = vmatprep.mubr.bf16.mxu0 0
    %556 = vmatmul.mubr.bf16.gmra.mxu0 %v338
    %v557 = vpop.f32.mrf.mxu0
    %v558 = vadd.f32 %v256, %v557
    %v559 = vpop.f32.mrf.mxu0
    %v560 = vpop.f32.mrf.mxu0
    %v561 = vadd.f32 %v256, %v560
    %v562 = vpop.f32.mrf.mxu0
    %563 = vmatprep.mubr.bf16.mxu0 0
    %564 = vmatmul.mubr.bf16.gmra.mxu0 %v341
    %v565 = vpop.f32.mrf.mxu0
    %v566 = vadd.f32 %v256, %v565
    %v567 = vpop.f32.mrf.mxu0
    %v568 = vpop.f32.mrf.mxu0
    %v569 = vadd.f32 %v256, %v568
    %v570 = vpop.f32.mrf.mxu0
    %571 = vmatprep.mubr.bf16.mxu0 0
    %572 = vmatmul.mubr.bf16.gmra.mxu0 %v344
    %v573 = vpop.f32.mrf.mxu0
    %v574 = vadd.f32 %v256, %v573
    %v575 = vpop.f32.mrf.mxu0
    %v576 = vpop.f32.mrf.mxu0
    %v577 = vadd.f32 %v256, %v576
    %v578 = vpop.f32.mrf.mxu0
    %579 = vmatprep.mubr.bf16.mxu0 0
    %580 = vmatmul.mubr.bf16.gmra.mxu0 %v347
    %v581 = vpop.f32.mrf.mxu0
    %v582 = vadd.f32 %v256, %v581
    %v583 = vpop.f32.mrf.mxu0
    %v584 = vpop.f32.mrf.mxu0
    %v585 = vadd.f32 %v256, %v584
    %v586 = vpop.f32.mrf.mxu0
    %587 = vmatprep.mubr.bf16.mxu0 0
    %588 = vmatmul.mubr.bf16.gmra.mxu0 %v350
    %v589 = vpop.f32.mrf.mxu0
    %v590 = vadd.f32 %v256, %v589
    %v591 = vpop.f32.mrf.mxu0
    %v592 = vpop.f32.mrf.mxu0
    %v593 = vadd.f32 %v256, %v592
    %v594 = vpop.f32.mrf.mxu0
    %595 = vmatprep.mubr.bf16.mxu0 0
    %596 = vmatmul.mubr.bf16.gmra.mxu0 %v353
    %v597 = vpop.f32.mrf.mxu0
    %v598 = vadd.f32 %v256, %v597
    %v599 = vpop.f32.mrf.mxu0
    %v600 = vpop.f32.mrf.mxu0
    %v601 = vadd.f32 %v256, %v600
    %v602 = vpop.f32.mrf.mxu0
    %603 = vmatprep.mubr.bf16.mxu0 0
    %604 = vmatmul.mubr.bf16.gmra.mxu0 %v356
    %v605 = vpop.f32.mrf.mxu0
    %v606 = vadd.f32 %v256, %v605
    %v607 = vpop.f32.mrf.mxu0
    %v608 = vpop.f32.mrf.mxu0
    %v609 = vadd.f32 %v256, %v608
    %v610 = vpop.f32.mrf.mxu0
    %611 = vmatprep.mubr.bf16.mxu0 0
    %612 = vmatmul.mubr.bf16.gmra.mxu0 %v359
    %v613 = vpop.f32.mrf.mxu0
    %v614 = vadd.f32 %v256, %v613
    %v615 = vpop.f32.mrf.mxu0
    %v616 = vpop.f32.mrf.mxu0
    %v617 = vadd.f32 %v256, %v616
    %v618 = vpop.f32.mrf.mxu0
    %619 = vmatprep.mubr.bf16.mxu0 0
    %620 = vmatmul.mubr.bf16.gmra.mxu0 %v362
    %v621 = vpop.f32.mrf.mxu0
    %v622 = vadd.f32 %v256, %v621
    %v623 = vpop.f32.mrf.mxu0
    %v624 = vpop.f32.mrf.mxu0
    %v625 = vadd.f32 %v256, %v624
    %v626 = vpop.f32.mrf.mxu0
    %627 = vmatprep.mubr.bf16.mxu0 0
    %628 = vmatmul.mubr.bf16.gmra.mxu0 %v365
    %v629 = vpop.f32.mrf.mxu0
    %v630 = vadd.f32 %v256, %v629
    %v631 = vpop.f32.mrf.mxu0
    %v632 = vpop.f32.mrf.mxu0
    %v633 = vadd.f32 %v256, %v632
    %v634 = vpop.f32.mrf.mxu0
    %635 = vmatprep.mubr.bf16.mxu0 0
    %636 = vmatmul.mubr.bf16.gmra.mxu0 %v368
    %v637 = vpop.f32.mrf.mxu0
    %v638 = vadd.f32 %v256, %v637
    %v639 = vpop.f32.mrf.mxu0
    %v640 = vpop.f32.mrf.mxu0
    %v641 = vadd.f32 %v256, %v640
    %v642 = vpop.f32.mrf.mxu0
    %643 = vmatprep.mubr.bf16.mxu0 0
    %644 = vmatmul.mubr.bf16.gmra.mxu0 %v371
    %v645 = vpop.f32.mrf.mxu0
    %v646 = vadd.f32 %v256, %v645
    %v647 = vpop.f32.mrf.mxu0
    %v648 = vpop.f32.mrf.mxu0
    %v649 = vadd.f32 %v256, %v648
    %v650 = vpop.f32.mrf.mxu0
    %651 = vmatprep.mubr.bf16.mxu0 0
    %652 = vmatmul.mubr.bf16.gmra.mxu0 %v374
    %v653 = vpop.f32.mrf.mxu0
    %v654 = vadd.f32 %v256, %v653
    %v655 = vpop.f32.mrf.mxu0
    %v656 = vpop.f32.mrf.mxu0
    %v657 = vadd.f32 %v256, %v656
    %v658 = vpop.f32.mrf.mxu0
    %659 = vmatprep.mubr.bf16.mxu0 0
    %660 = vmatmul.mubr.bf16.gmra.mxu0 %v377
    %v661 = vpop.f32.mrf.mxu0
    %v662 = vadd.f32 %v256, %v661
    %v663 = vpop.f32.mrf.mxu0
    %v664 = vpop.f32.mrf.mxu0
    %v665 = vadd.f32 %v256, %v664
    %v666 = vpop.f32.mrf.mxu0
    %667 = vdwg.mxu0
    %668 = vst.msk [vmem:[#allocation2] sm:$0xff] %vm282, %v414
    %669 = vst.msk [vmem:[#allocation2 + $0x8] sm:$0xff] %vm282, %v417
    %670 = vst.msk [vmem:[#allocation2 + $0x10] sm:$0xff] %vm282, %v422
    %671 = vst.msk [vmem:[#allocation2 + $0x18] sm:$0xff] %vm282, %v425
    %672 = vst.msk [vmem:[#allocation2 + $0x20] sm:$0xff] %vm282, %v430
    %673 = vst.msk [vmem:[#allocation2 + $0x28] sm:$0xff] %vm282, %v433
    %674 = vst.msk [vmem:[#allocation2 + $0x30] sm:$0xff] %vm282, %v438
    %675 = vst.msk [vmem:[#allocation2 + $0x38] sm:$0xff] %vm282, %v441
    %676 = vst.msk [vmem:[#allocation2 + $0x40] sm:$0xff] %vm282, %v446
    %677 = vst.msk [vmem:[#allocation2 + $0x48] sm:$0xff] %vm282, %v449
    %678 = vst.msk [vmem:[#allocation2 + $0x50] sm:$0xff] %vm282, %v454
    %679 = vst.msk [vmem:[#allocation2 + $0x58] sm:$0xff] %vm282, %v457
    %680 = vst.msk [vmem:[#allocation2 + $0x60] sm:$0xff] %vm282, %v462
    %681 = vst.msk [vmem:[#allocation2 + $0x68] sm:$0xff] %vm282, %v465
    %682 = vst.msk [vmem:[#allocation2 + $0x70] sm:$0xff] %vm282, %v470
    %683 = vst.msk [vmem:[#allocation2 + $0x78] sm:$0xff] %vm282, %v473
    %684 = vst.msk [vmem:[#allocation2 + $0x80] sm:$0xff] %vm282, %v478
    %685 = vst.msk [vmem:[#allocation2 + $0x88] sm:$0xff] %vm282, %v481
    %686 = vst.msk [vmem:[#allocation2 + $0x90] sm:$0xff] %vm282, %v486
    %687 = vst.msk [vmem:[#allocation2 + $0x98] sm:$0xff] %vm282, %v489
    %688 = vst.msk [vmem:[#allocation2 + $0xa0] sm:$0xff] %vm282, %v494
    %689 = vst.msk [vmem:[#allocation2 + $0xa8] sm:$0xff] %vm282, %v497
    %690 = vst.msk [vmem:[#allocation2 + $0xb0] sm:$0xff] %vm282, %v502
    %691 = vst.msk [vmem:[#allocation2 + $0xb8] sm:$0xff] %vm282, %v505
    %692 = vst.msk [vmem:[#allocation2 + $0xc0] sm:$0xff] %vm282, %v510
    %693 = vst.msk [vmem:[#allocation2 + $0xc8] sm:$0xff] %vm282, %v513
    %694 = vst.msk [vmem:[#allocation2 + $0xd0] sm:$0xff] %vm282, %v518
    %695 = vst.msk [vmem:[#allocation2 + $0xd8] sm:$0xff] %vm282, %v521
    %696 = vst.msk [vmem:[#allocation2 + $0xe0] sm:$0xff] %vm282, %v526
    %697 = vst.msk [vmem:[#allocation2 + $0xe8] sm:$0xff] %vm282, %v529
    %698 = vst.msk [vmem:[#allocation2 + $0xf0] sm:$0xff] %vm282, %v534
    %699 = vst.msk [vmem:[#allocation2 + $0xf8] sm:$0xff] %vm282, %v537
    %700 = vst.msk [vmem:[#allocation2 + $0x100] sm:$0xff] %vm282, %v542
    %701 = vst.msk [vmem:[#allocation2 + $0x108] sm:$0xff] %vm282, %v545
    %702 = vst.msk [vmem:[#allocation2 + $0x110] sm:$0xff] %vm282, %v550
    %703 = vst.msk [vmem:[#allocation2 + $0x118] sm:$0xff] %vm282, %v553
    %704 = vst.msk [vmem:[#allocation2 + $0x120] sm:$0xff] %vm282, %v558
    %705 = vst.msk [vmem:[#allocation2 + $0x128] sm:$0xff] %vm282, %v561
    %706 = vst.msk [vmem:[#allocation2 + $0x130] sm:$0xff] %vm282, %v566
    %707 = vst.msk [vmem:[#allocation2 + $0x138] sm:$0xff] %vm282, %v569
    %708 = vst.msk [vmem:[#allocation2 + $0x140] sm:$0xff] %vm282, %v574
    %709 = vst.msk [vmem:[#allocation2 + $0x148] sm:$0xff] %vm282, %v577
    %710 = vst.msk [vmem:[#allocation2 + $0x150] sm:$0xff] %vm282, %v582
    %711 = vst.msk [vmem:[#allocation2 + $0x158] sm:$0xff] %vm282, %v585
    %712 = vst.msk [vmem:[#allocation2 + $0x160] sm:$0xff] %vm282, %v590
    %713 = vst.msk [vmem:[#allocation2 + $0x168] sm:$0xff] %vm282, %v593
    %714 = vst.msk [vmem:[#allocation2 + $0x170] sm:$0xff] %vm282, %v598
    %715 = vst.msk [vmem:[#allocation2 + $0x178] sm:$0xff] %vm282, %v601
    %716 = vst.msk [vmem:[#allocation2 + $0x180] sm:$0xff] %vm282, %v606
    %717 = vst.msk [vmem:[#allocation2 + $0x188] sm:$0xff] %vm282, %v609
    %718 = vst.msk [vmem:[#allocation2 + $0x190] sm:$0xff] %vm282, %v614
    %719 = vst.msk [vmem:[#allocation2 + $0x198] sm:$0xff] %vm282, %v617
    %720 = vst.msk [vmem:[#allocation2 + $0x1a0] sm:$0xff] %vm282, %v622
    %721 = vst.msk [vmem:[#allocation2 + $0x1a8] sm:$0xff] %vm282, %v625
    %722 = vst.msk [vmem:[#allocation2 + $0x1b0] sm:$0xff] %vm282, %v630
    %723 = vst.msk [vmem:[#allocation2 + $0x1b8] sm:$0xff] %vm282, %v633
    %724 = vst.msk [vmem:[#allocation2 + $0x1c0] sm:$0xff] %vm282, %v638
    %725 = vst.msk [vmem:[#allocation2 + $0x1c8] sm:$0xff] %vm282, %v641
    %726 = vst.msk [vmem:[#allocation2 + $0x1d0] sm:$0xff] %vm282, %v646
    %727 = vst.msk [vmem:[#allocation2 + $0x1d8] sm:$0xff] %vm282, %v649
    %728 = vst.msk [vmem:[#allocation2 + $0x1e0] sm:$0xff] %vm282, %v654
    %729 = vst.msk [vmem:[#allocation2 + $0x1e8] sm:$0xff] %vm282, %v657
    %730 = vst.msk [vmem:[#allocation2 + $0x1f0] sm:$0xff] %vm282, %v662
    %731 = vst.msk [vmem:[#allocation2 + $0x1f8] sm:$0xff] %vm282, %v665
    // Predicated region
    $region18: #{attention_c_m_forward.5} parent=1 // pred_check
      _
    $region19: #{attention_c_m_forward.5} parent=1 // pred_check_branch
      %733 = sbr.rel (0) target = $region21
    $region20: #{attention_c_m_forward.5} parent=1 // pred_region
      %s735 = ssub.s32 8192, 8192
      %736 = vsyncadd [#allocation3], %s735
      %s737 = sshll.u32 [#allocation2], 4
      %s738 = int_to_ptr.vmem [resolvable:$true] %s737
      %743 = dma.vmem_to_hbm [thread:$0]  %s738, 8192, %s4, [#allocation3], 128, 128, 8
    $region21: #{attention_c_m_forward.5} parent=1 // pred_fallthru
      _
    // Predicated region
    $region22: #{attention_c_m_forward.5} parent=1 // pred_check
      _
    $region23: #{attention_c_m_forward.5} parent=1 // pred_check_branch
      %745 = sbr.rel (0) target = $region25
    $region24: #{attention_c_m_forward.5} parent=1 // pred_region
      %746 = dma.done [#allocation3], 8192
    $region25: #{attention_c_m_forward.5} parent=1 // pred_fallthru
      _
    %747 = vsyncpa [#allocation3], 1

</llo_original>
